<compile_context>
chip_gen: v7x
topology: tpu7x:2x2x1
jax: 0.10.0
libtpu: 0.0.40
codegen_flags: <defaults>
</compile_context>

<pallas_src>
import functools

import jax
import jax.numpy as jnp
from jax.experimental import pallas as pl
from jax.experimental.pallas import tpu as pltpu

INPUT_SIZE = 2
HIDDEN = 64                     # lstm_hidden_size
NUM_LAYERS = 2
NUM_HEADS = 4
EMBED = 2 * HIDDEN              # 128 (bidirectional output width; one lane tile)
HEAD_DIM = EMBED // NUM_HEADS   # 32
GATES = 8 * HIDDEN              # 512 = 4 gates x 2 directions, packed
LN_EPS = 1e-5
ROWPAD = 8                      # rows reserved per timestep in the 2-D scratch


# ----------------------------------------------------------------------------
# helpers
# ----------------------------------------------------------------------------
def _spec(shape):
    """Full-array BlockSpec for a grid=(1,) pallas_call (whole array in VMEM)."""
    nd = len(shape)
    return pl.BlockSpec(shape, lambda i, nd=nd: (0,) * nd)


# ----------------------------------------------------------------------------
# The single fused kernel
# ----------------------------------------------------------------------------
def fused_model_kernel(B, T,
                       cx_ref, cy_ref,
                       w0_ih_ref, w0_hh_ref, b0_ref,
                       w1_ih_ref, w1_hh_ref, b1_ref,
                       ln_g_ref, ln_b_ref,
                       wqkv_ref, bqkv_ref, wo_ref, bo_ref,
                       fc1_w_ref, fc1_b_ref, fc2_w_ref, fc2_b_ref,
                       o_ref,
                       hs0_ref, hsr0_ref, hs1_ref, hsr1_ref):
    """Whole LSTMModel forward.

    cx_ref / cy_ref : (B, T, 1) context_x / context_y.
    LSTM weights are pre-packed (see pack_params):
      w*_ih : (Din, 8H)  columns [i_f|i_b|f_f|f_b|o_f|o_b|g_f|g_b] (each H=64)
      w*_hh : (2H, 8H)   block-diagonal per gate (rows 0:H -> fwd, H:2H -> bwd)
      b*    : (1, 8H)    b_ih + b_hh, same column layout
    o_ref : (B, HIDDEN).
    Scratch:
      hs0/hsr0 : (T*8, 2H) padded time-major slabs (layer-0 output, fwd/rev indexed)
      hs1/hsr1 : (T, B, 2H) layer-1 output (fwd/rev indexed)
    """
    H = HIDDEN
    E = EMBED
    f32 = jnp.float32

    # Lane masks (fwd half of each gate / output block).
    gate_lane = jax.lax.broadcasted_iota(jnp.int32, (1, GATES), 1)
    fwd_gate = (gate_lane % E) < H
    out_lane2 = jax.lax.broadcasted_iota(jnp.int32, (1, E), 1)
    fwd_out2 = out_lane2 < H
    out_lane3 = jax.lax.broadcasted_iota(jnp.int32, (1, 1, E), 2)
    fwd_out3 = out_lane3 < H

    # Padding rows of the 2-D slabs are read by the layer-1 hoisted matmul
    # (rows of a matmul are independent, but keep them clean/finite).
    hs0_ref[...] = jnp.zeros_like(hs0_ref)
    hsr0_ref[...] = jnp.zeros_like(hsr0_ref)

    def run_bilstm(get_gx, w_hh, store):
        """One bidirectional LSTM layer, both directions fused per step.

        get_gx(s) -> (B, 8H) packed input-part pre-activations (bias included)
        for time index s; fwd lanes of each gate block are consumed at step s,
        bwd lanes at step T-1-s (time reversal via loop index, no array flips).
        """
        h = jnp.zeros((B, E), f32)          # [h_fwd | h_bwd]
        c = jnp.zeros((B, E), f32)
        for s in range(T):                  # fully unrolled serial recurrence
            pre = jnp.where(fwd_gate, get_gx(s), get_gx(T - 1 - s))
            pre = pre + jnp.dot(h, w_hh, preferred_element_type=f32)   # (B, 8H)
            sg = jax.nn.sigmoid(pre[:, 0:3 * E])      # only i, f, o (contiguous)
            i_t = sg[:, 0:E]
            f_t = sg[:, E:2 * E]
            o_t = sg[:, 2 * E:3 * E]
            g_t = jnp.tanh(pre[:, 3 * E:4 * E])
            c = f_t * c + i_t * g_t
            h = o_t * jnp.tanh(c)
            store(s, h)
        # TODO(synk): inter-layer LSTM dropout omitted (inference semantics).

    # ------------------------------ layer 0 ---------------------------------
    w0 = w0_ih_ref[...]                                       # (2, 8H)
    # Hoisted input projection as a broadcast-FMA (Din == 2; fuses the
    # context_x/context_y concat and skips a wasteful K=2 MXU pass):
    gx0 = (cx_ref[...] * w0[0:1, :]
           + cy_ref[...] * w0[1:2, :]
           + b0_ref[...])                                     # (B, T, 8H)

    def store0(s, h):
        # padded time-major 2-D slab: timestep s owns rows [s*8, s*8+B)
        hs0_ref[s * ROWPAD:s * ROWPAD + B, :] = h
        hsr0_ref[(T - 1 - s) * ROWPAD:(T - 1 - s) * ROWPAD + B, :] = h

    run_bilstm(lambda s: gx0[:, s, :], w0_hh_ref[...], store0)

    # Layer-0 output: single lane-select assembles [h_f(t) | h_b(t)] per row.
    cur1 = jnp.where(fwd_out2, hs0_ref[...], hsr0_ref[...])   # (T*8, E)

    # ------------------------------ layer 1 ---------------------------------
    # ONE hoisted (T*8, E) x (E, 8H) matmul for the whole layer-1 input proj.
    gx1 = jnp.dot(cur1, w1_ih_ref[...],
                  preferred_element_type=f32) + b1_ref[...]   # (T*8, 8H)

    def store1(s, h):
        hs1_ref[s, :, :] = h
        hsr1_ref[T - 1 - s, :, :] = h

    run_bilstm(lambda s: gx1[s * ROWPAD:s * ROWPAD + B, :],   # 8-aligned slices
               w1_hh_ref[...], store1)

    lstm_out = jnp.where(fwd_out3, hs1_ref[...], hsr1_ref[...])   # (T, B, E)

    # ------------------------------ LayerNorm -------------------------------
    mu = jnp.mean(lstm_out, axis=-1, keepdims=True)
    var = jnp.mean((lstm_out - mu) ** 2, axis=-1, keepdims=True)  # biased var
    xn = ((lstm_out - mu) * jax.lax.rsqrt(var + LN_EPS)
          * ln_g_ref[...] + ln_b_ref[...])                        # (T, B, E)

    # ------------------ MultiheadAttention + mean(T) + FC head --------------
    wqkv = wqkv_ref[...]                                      # (E, 3E) cols [q|k|v]
    bqkv = bqkv_ref[...]
    wo = wo_ref[...]                                          # (E, E)
    scale = f32(1.0 / (HEAD_DIM ** 0.5))

    rows = []
    for b in range(B):                                        # tiny static loop
        xb = xn[:, b, :]                                      # (T, E)
        qkvb = jnp.dot(xb, wqkv, preferred_element_type=f32) + bqkv   # (T, 3E)
        qb = qkvb[:, 0:E] * scale                             # fold 1/sqrt(hd) once
        kb = qkvb[:, E:2 * E]
        vb = qkvb[:, 2 * E:3 * E]
        acc = jnp.zeros((1, E), f32)
        for hd_i in range(NUM_HEADS):
            lo, hi = hd_i * HEAD_DIM, (hd_i + 1) * HEAD_DIM
            qh = qb[:, lo:hi]                                 # (T, hd)
            kh = kb[:, lo:hi]
            vh = vb[:, lo:hi]
            s_bh = jax.lax.dot_general(                       # q @ k^T without kh.T
                qh, kh, (((1,), (1,)), ((), ())),
                preferred_element_type=f32)                   # (T, T)
            p_bh = jax.nn.softmax(s_bh, axis=-1)
            o_bh = jnp.dot(p_bh, vh, preferred_element_type=f32)   # (T, hd)
            # mean over time commutes with the (linear) out-projection:
            o_mean = jnp.mean(o_bh, axis=0, keepdims=True)          # (1, hd)
            acc = acc + jnp.dot(o_mean, wo[lo:hi, :],
                                preferred_element_type=f32)          # (1, E)
        rows.append(acc)
    # TODO(synk): attention-weight / fc dropout omitted (inference semantics).
    m = jnp.concatenate(rows, axis=0) + bo_ref[...]            # (B, E)

    h1 = jnp.maximum(
        jnp.dot(m, fc1_w_ref[...], preferred_element_type=f32) + fc1_b_ref[...],
        0.0)                                                   # (B, H), ReLU
    o_ref[...] = (jnp.dot(h1, fc2_w_ref[...], preferred_element_type=f32)
                  + fc2_b_ref[...])                            # (B, H)


# ----------------------------------------------------------------------------
# Wrapper: one pallas_call for the whole model
# ----------------------------------------------------------------------------
def fused_forward(packed, context_x, context_y):
    B, T, _ = context_x.shape
    assert B <= ROWPAD, "kernel assumes batch <= 8 rows per timestep block"

    args = (context_x.astype(jnp.float32), context_y.astype(jnp.float32),
            packed["w0_ih"], packed["w0_hh"], packed["b0"],
            packed["w1_ih"], packed["w1_hh"], packed["b1"],
            packed["ln_gamma"], packed["ln_beta"],
            packed["wqkv"], packed["bqkv"], packed["wo"], packed["bo"],
            packed["fc1_w"], packed["fc1_b"], packed["fc2_w"], packed["fc2_b"])

    flops = (4 * B * T * GATES                                  # layer-0 input FMA
             + NUM_LAYERS * T * 2 * B * EMBED * GATES           # recurrent matmuls
             + 2 * (T * ROWPAD) * EMBED * GATES                 # layer-1 input proj
             + 2 * B * T * EMBED * 3 * EMBED                    # QKV
             + B * NUM_HEADS * (4 * T * T * HEAD_DIM + 2 * HEAD_DIM * EMBED)
             + 2 * B * EMBED * HIDDEN + 2 * B * HIDDEN * HIDDEN)
    transcendentals = (NUM_LAYERS * T * B * GATES
                       + B * NUM_HEADS * T * T + T * B)
    bytes_accessed = 4 * (sum(int(a.size) for a in args) + B * HIDDEN)

    return pl.pallas_call(
        functools.partial(fused_model_kernel, B, T),
        out_shape=jax.ShapeDtypeStruct((B, HIDDEN), jnp.float32),
        grid=(1,),
        in_specs=[_spec(a.shape) for a in args],
        out_specs=_spec((B, HIDDEN)),
        scratch_shapes=[
            pltpu.VMEM((T * ROWPAD, EMBED), jnp.float32),   # hs0  (layer 0, fwd-indexed)
            pltpu.VMEM((T * ROWPAD, EMBED), jnp.float32),   # hsr0 (layer 0, rev-indexed)
            pltpu.VMEM((T, B, EMBED), jnp.float32),         # hs1  (layer 1, fwd-indexed)
            pltpu.VMEM((T, B, EMBED), jnp.float32),         # hsr1 (layer 1, rev-indexed)
        ],
        compiler_params=pltpu.CompilerParams(dimension_semantics=("arbitrary",)),
        cost_estimate=pl.CostEstimate(flops=flops,
                                      transcendentals=transcendentals,
                                      bytes_accessed=bytes_accessed),
    )(*args)


# ----------------------------------------------------------------------------
# Parameter init (torch layout) and packing into the kernel layout
# ----------------------------------------------------------------------------
def _xavier(key, shape):
    fan_out, fan_in = shape[0], shape[1]
    a = (6.0 / (fan_in + fan_out)) ** 0.5
    return jax.random.uniform(key, shape, jnp.float32, -a, a)


def init_torch_params(key):
    """Deterministic params in PyTorch layout (xavier_uniform weights, zero biases)."""
    ks = iter(jax.random.split(key, 16))
    p = {}
    for layer in range(NUM_LAYERS):
        d_in = INPUT_SIZE if layer == 0 else 2 * HIDDEN
        for suf in ("", "_reverse"):
            p[f"lstm.weight_ih_l{layer}{suf}"] = _xavier(next(ks), (4 * HIDDEN, d_in))
            p[f"lstm.weight_hh_l{layer}{suf}"] = _xavier(next(ks), (4 * HIDDEN, HIDDEN))
            p[f"lstm.bias_ih_l{layer}{suf}"] = jnp.zeros((4 * HIDDEN,), jnp.float32)
            p[f"lstm.bias_hh_l{layer}{suf}"] = jnp.zeros((4 * HIDDEN,), jnp.float32)
    p["layer_norm.weight"] = jnp.ones((EMBED,), jnp.float32)
    p["layer_norm.bias"] = jnp.zeros((EMBED,), jnp.float32)
    p["attention.in_proj_weight"] = _xavier(next(ks), (3 * EMBED, EMBED))
    p["attention.in_proj_bias"] = jnp.zeros((3 * EMBED,), jnp.float32)
    p["attention.out_proj.weight"] = _xavier(next(ks), (EMBED, EMBED))
    p["attention.out_proj.bias"] = jnp.zeros((EMBED,), jnp.float32)
    p["fc.0.weight"] = _xavier(next(ks), (HIDDEN, EMBED))
    p["fc.0.bias"] = jnp.zeros((HIDDEN,), jnp.float32)
    p["fc.3.weight"] = _xavier(next(ks), (HIDDEN, HIDDEN))
    p["fc.3.bias"] = jnp.zeros((HIDDEN,), jnp.float32)
    return p


def _pack_bilstm_layer(p, layer):
    """Pack one bidirectional layer: gate order [i, f, o, g] (PyTorch stores
    [i, f, g, o]); within each gate block: [fwd(64) | bwd(64)]. W_hh becomes
    block-diagonal over the [h_fwd | h_bwd] state. Biases = b_ih + b_hh."""
    H = HIDDEN
    w_ih_f = p[f"lstm.weight_ih_l{layer}"].T                    # (Din, 4H) cols [i|f|g|o]
    w_hh_f = p[f"lstm.weight_hh_l{layer}"].T                    # (H,   4H)
    b_f = (p[f"lstm.bias_ih_l{layer}"] + p[f"lstm.bias_hh_l{layer}"])[None, :]
    w_ih_b = p[f"lstm.weight_ih_l{layer}_reverse"].T
    w_hh_b = p[f"lstm.weight_hh_l{layer}_reverse"].T
    b_b = (p[f"lstm.bias_ih_l{layer}_reverse"]
           + p[f"lstm.bias_hh_l{layer}_reverse"])[None, :]

    order = (0, 1, 3, 2)                # torch gate indices for [i, f, o, g]
    zero = jnp.zeros((H, H), jnp.float32)
    ih_blocks, hh_blocks, b_blocks = [], [], []
    for g in order:
        sl = slice(g * H, (g + 1) * H)
        ih_blocks += [w_ih_f[:, sl], w_ih_b[:, sl]]
        hh_blocks += [jnp.concatenate([w_hh_f[:, sl], zero], axis=0),
                      jnp.concatenate([zero, w_hh_b[:, sl]], axis=0)]
        b_blocks += [b_f[:, sl], b_b[:, sl]]
    return (jnp.concatenate(ih_blocks, axis=1),                 # (Din, 8H)
            jnp.concatenate(hh_blocks, axis=1),                 # (2H,  8H)
            jnp.concatenate(b_blocks, axis=1))                  # (1,   8H)


def pack_params(p):
    q = {}
    for layer in range(NUM_LAYERS):
        w_ih, w_hh, b = _pack_bilstm_layer(p, layer)
        q[f"w{layer}_ih"], q[f"w{layer}_hh"], q[f"b{layer}"] = w_ih, w_hh, b
    q["ln_gamma"] = p["layer_norm.weight"][None, :]
    q["ln_beta"] = p["layer_norm.bias"][None, :]
    q["wqkv"] = p["attention.in_proj_weight"].T                 # (E, 3E) cols [q|k|v]
    q["bqkv"] = p["attention.in_proj_bias"][None, :]
    q["wo"] = p["attention.out_proj.weight"].T                  # (E, E)
    q["bo"] = p["attention.out_proj.bias"][None, :]
    q["fc1_w"] = p["fc.0.weight"].T                             # (E, H)
    q["fc1_b"] = p["fc.0.bias"][None, :]
    q["fc2_w"] = p["fc.3.weight"].T                             # (H, H)
    q["fc2_b"] = p["fc.3.bias"][None, :]
    return q


# ----------------------------------------------------------------------------
# Full forward pass (ONE pallas_call launch)
# ----------------------------------------------------------------------------
@jax.jit
def model_forward(packed, context_x, context_y, target_x):
    del target_x                     # unused by the reference forward
    return fused_forward(packed, context_x, context_y)


# ----------------------------------------------------------------------------
if __name__ == "__main__":
    key = jax.random.PRNGKey(0)
    pkey, k1, k2, k3 = jax.random.split(key, 4)
    torch_params = init_torch_params(pkey)
    packed = jax.tree_util.tree_map(jnp.asarray, pack_params(torch_params))

    B, T = 2, 8
    context_x = jax.random.normal(k1, (B, T, 1), jnp.float32)
    context_y = jax.random.normal(k2, (B, T, 1), jnp.float32)
    target_x = jax.random.normal(k3, (B, T, 1), jnp.float32)

    out = model_forward(packed, context_x, context_y, target_x)
    out = jax.block_until_ready(out)
    assert out.shape == (B, HIDDEN), out.shape
    assert bool(jnp.all(jnp.isfinite(out)))
    print("KERNEL_OK")
</pallas_src>

<mosaic_0001>
module attributes {stable_mosaic.version = 11 : i64} {
  func.func @fused_model_kernel(%arg0: i32, %arg1: memref<2x8x1xf32, #tpu.memory_space<vmem>>, %arg2: memref<2x8x1xf32, #tpu.memory_space<vmem>>, %arg3: memref<2x512xf32, #tpu.memory_space<vmem>>, %arg4: memref<128x512xf32, #tpu.memory_space<vmem>>, %arg5: memref<1x512xf32, #tpu.memory_space<vmem>>, %arg6: memref<128x512xf32, #tpu.memory_space<vmem>>, %arg7: memref<128x512xf32, #tpu.memory_space<vmem>>, %arg8: memref<1x512xf32, #tpu.memory_space<vmem>>, %arg9: memref<1x128xf32, #tpu.memory_space<vmem>>, %arg10: memref<1x128xf32, #tpu.memory_space<vmem>>, %arg11: memref<128x384xf32, #tpu.memory_space<vmem>>, %arg12: memref<1x384xf32, #tpu.memory_space<vmem>>, %arg13: memref<128x128xf32, #tpu.memory_space<vmem>>, %arg14: memref<1x128xf32, #tpu.memory_space<vmem>>, %arg15: memref<128x64xf32, #tpu.memory_space<vmem>>, %arg16: memref<1x64xf32, #tpu.memory_space<vmem>>, %arg17: memref<64x64xf32, #tpu.memory_space<vmem>>, %arg18: memref<1x64xf32, #tpu.memory_space<vmem>>, %arg19: memref<2x64xf32, #tpu.memory_space<vmem>>, %arg20: memref<64x128xf32, #tpu.memory_space<vmem>>, %arg21: memref<64x128xf32, #tpu.memory_space<vmem>>, %arg22: memref<8x2x128xf32, #tpu.memory_space<vmem>>, %arg23: memref<8x2x128xf32, #tpu.memory_space<vmem>>) attributes {dimension_semantics = [#tpu.dimension_semantics<arbitrary>], iteration_bounds = array<i64: 1>, scalar_prefetch = 0 : i64, scratch_operands = 4 : i64, tpu.core_type = #tpu.core_type<tc>, window_params = [{pipeline_mode = #tpu.pipeline_mode<synchronous>, transform_indices = @transform_0, window_bounds = array<i64: 2, 8, 1>}, {pipeline_mode = #tpu.pipeline_mode<synchronous>, transform_indices = @transform_1, window_bounds = array<i64: 2, 8, 1>}, {pipeline_mode = #tpu.pipeline_mode<synchronous>, transform_indices = @transform_2, window_bounds = array<i64: 2, 512>}, {pipeline_mode = #tpu.pipeline_mode<synchronous>, transform_indices = @transform_3, window_bounds = array<i64: 128, 512>}, {pipeline_mode = #tpu.pipeline_mode<synchronous>, transform_indices = @transform_4, window_bounds = array<i64: 1, 512>}, {pipeline_mode = #tpu.pipeline_mode<synchronous>, transform_indices = @transform_5, window_bounds = array<i64: 128, 512>}, {pipeline_mode = #tpu.pipeline_mode<synchronous>, transform_indices = @transform_6, window_bounds = array<i64: 128, 512>}, {pipeline_mode = #tpu.pipeline_mode<synchronous>, transform_indices = @transform_7, window_bounds = array<i64: 1, 512>}, {pipeline_mode = #tpu.pipeline_mode<synchronous>, transform_indices = @transform_8, window_bounds = array<i64: 1, 128>}, {pipeline_mode = #tpu.pipeline_mode<synchronous>, transform_indices = @transform_9, window_bounds = array<i64: 1, 128>}, {pipeline_mode = #tpu.pipeline_mode<synchronous>, transform_indices = @transform_10, window_bounds = array<i64: 128, 384>}, {pipeline_mode = #tpu.pipeline_mode<synchronous>, transform_indices = @transform_11, window_bounds = array<i64: 1, 384>}, {pipeline_mode = #tpu.pipeline_mode<synchronous>, transform_indices = @transform_12, window_bounds = array<i64: 128, 128>}, {pipeline_mode = #tpu.pipeline_mode<synchronous>, transform_indices = @transform_13, window_bounds = array<i64: 1, 128>}, {pipeline_mode = #tpu.pipeline_mode<synchronous>, transform_indices = @transform_14, window_bounds = array<i64: 128, 64>}, {pipeline_mode = #tpu.pipeline_mode<synchronous>, transform_indices = @transform_15, window_bounds = array<i64: 1, 64>}, {pipeline_mode = #tpu.pipeline_mode<synchronous>, transform_indices = @transform_16, window_bounds = array<i64: 64, 64>}, {pipeline_mode = #tpu.pipeline_mode<synchronous>, transform_indices = @transform_17, window_bounds = array<i64: 1, 64>}, {pipeline_mode = #tpu.pipeline_mode<synchronous>, transform_indices = @transform_18, window_bounds = array<i64: 2, 64>}]} {
    %0 = tpu.iota {dimensions = array<i32: 1>} : vector<1x512xi32>
    %c128_i32 = arith.constant 128 : i32
    %c0_i32 = arith.constant 0 : i32
    %1 = arith.cmpi eq, %c128_i32, %c0_i32 : i32
    %c1_i32 = arith.constant 1 : i32
    %2 = arith.select %1, %c1_i32, %c128_i32 : i32
    %3 = vector.broadcast %2 : i32 to vector<1x512xi32>
    %4 = arith.remsi %0, %3 : vector<1x512xi32>
    %c0_i32_0 = arith.constant 0 : i32
    %5 = vector.broadcast %c0_i32_0 : i32 to vector<1x512xi32>
    %6 = arith.cmpi ne, %4, %5 : vector<1x512xi32>
    %c0_i32_1 = arith.constant 0 : i32
    %7 = vector.broadcast %c0_i32_1 : i32 to vector<1x512xi32>
    %8 = arith.cmpi slt, %4, %7 : vector<1x512xi32>
    %c0_i32_2 = arith.constant 0 : i32
    %9 = arith.cmpi slt, %2, %c0_i32_2 : i32
    %10 = vector.broadcast %9 : i1 to vector<1x512xi1>
    %11 = vector.broadcast %10 : vector<1x512xi1> to vector<1x512xi1>
    %12 = arith.xori %8, %11 : vector<1x512xi1>
    %13 = arith.andi %12, %6 : vector<1x512xi1>
    %14 = vector.broadcast %2 : i32 to vector<1x512xi32>
    %15 = arith.addi %4, %14 : vector<1x512xi32>
    %16 = arith.select %13, %15, %4 : vector<1x512xi1>, vector<1x512xi32>
    %c64_i32 = arith.constant 64 : i32
    %17 = vector.broadcast %c64_i32 : i32 to vector<1x512xi32>
    %18 = arith.cmpi slt, %16, %17 : vector<1x512xi32>
    %19 = tpu.iota {dimensions = array<i32: 1>} : vector<1x128xi32>
    %c64_i32_3 = arith.constant 64 : i32
    %20 = vector.broadcast %c64_i32_3 : i32 to vector<1x128xi32>
    %21 = arith.cmpi slt, %19, %20 : vector<1x128xi32>
    %22 = tpu.iota {dimensions = array<i32: 2>} : vector<1x1x128xi32>
    %c64_i32_4 = arith.constant 64 : i32
    %23 = vector.broadcast %c64_i32_4 : i32 to vector<1x1x128xi32>
    %24 = arith.cmpi slt, %22, %23 : vector<1x1x128xi32>
    %cst = arith.constant 0.000000e+00 : f32
    %25 = vector.broadcast %cst : f32 to vector<64x128xf32>
    %c0 = arith.constant 0 : index
    %c0_5 = arith.constant 0 : index
    %26 = vector.load %arg20[%c0, %c0_5] : memref<64x128xf32, #tpu.memory_space<vmem>>, vector<64x128xf32>
    tpu.vector_store %arg20[%c0, %c0_5], %25 {strides = array<i32>} : memref<64x128xf32, #tpu.memory_space<vmem>>, vector<64x128xf32>,
    %cst_6 = arith.constant 0.000000e+00 : f32
    %27 = vector.broadcast %cst_6 : f32 to vector<64x128xf32>
    %c0_7 = arith.constant 0 : index
    %c0_8 = arith.constant 0 : index
    %28 = vector.load %arg21[%c0_7, %c0_8] : memref<64x128xf32, #tpu.memory_space<vmem>>, vector<64x128xf32>
    tpu.vector_store %arg21[%c0_7, %c0_8], %27 {strides = array<i32>} : memref<64x128xf32, #tpu.memory_space<vmem>>, vector<64x128xf32>,
    %c0_9 = arith.constant 0 : index
    %c0_10 = arith.constant 0 : index
    %29 = vector.load %arg3[%c0_9, %c0_10] : memref<2x512xf32, #tpu.memory_space<vmem>>, vector<2x512xf32>
    %c0_11 = arith.constant 0 : index
    %c0_12 = arith.constant 0 : index
    %c0_13 = arith.constant 0 : index
    %30 = vector.load %arg1[%c0_11, %c0_12, %c0_13] : memref<2x8x1xf32, #tpu.memory_space<vmem>>, vector<2x8x1xf32>
    %31 = vector.extract_strided_slice %29 {offsets = [0, 0], sizes = [1, 512], strides = [1, 1]} : vector<2x512xf32> to vector<1x512xf32>
    %32 = vector.shape_cast %31 : vector<1x512xf32> to vector<1x1x512xf32>
    %33 = vector.broadcast %30 : vector<2x8x1xf32> to vector<2x8x512xf32>
    %34 = vector.broadcast %32 : vector<1x1x512xf32> to vector<2x8x512xf32>
    %35 = arith.mulf %33, %34 : vector<2x8x512xf32>
    %c0_14 = arith.constant 0 : index
    %c0_15 = arith.constant 0 : index
    %c0_16 = arith.constant 0 : index
    %36 = vector.load %arg2[%c0_14, %c0_15, %c0_16] : memref<2x8x1xf32, #tpu.memory_space<vmem>>, vector<2x8x1xf32>
    %37 = vector.extract_strided_slice %29 {offsets = [1, 0], sizes = [1, 512], strides = [1, 1]} : vector<2x512xf32> to vector<1x512xf32>
    %38 = vector.shape_cast %37 : vector<1x512xf32> to vector<1x1x512xf32>
    %39 = vector.broadcast %36 : vector<2x8x1xf32> to vector<2x8x512xf32>
    %40 = vector.broadcast %38 : vector<1x1x512xf32> to vector<2x8x512xf32>
    %41 = arith.mulf %39, %40 : vector<2x8x512xf32>
    %42 = arith.addf %35, %41 : vector<2x8x512xf32>
    %c0_17 = arith.constant 0 : index
    %c0_18 = arith.constant 0 : index
    %43 = vector.load %arg5[%c0_17, %c0_18] : memref<1x512xf32, #tpu.memory_space<vmem>>, vector<1x512xf32>
    %44 = vector.shape_cast %43 : vector<1x512xf32> to vector<1x1x512xf32>
    %45 = vector.broadcast %44 : vector<1x1x512xf32> to vector<2x8x512xf32>
    %46 = arith.addf %42, %45 : vector<2x8x512xf32>
    %c0_19 = arith.constant 0 : index
    %c0_20 = arith.constant 0 : index
    %47 = vector.load %arg4[%c0_19, %c0_20] : memref<128x512xf32, #tpu.memory_space<vmem>>, vector<128x512xf32>
    %cst_21 = arith.constant 0.000000e+00 : f32
    %48 = vector.broadcast %cst_21 : f32 to vector<2x128xf32>
    %cst_22 = arith.constant 0.000000e+00 : f32
    %49 = vector.broadcast %cst_22 : f32 to vector<2x128xf32>
    %50 = vector.extract_strided_slice %46 {offsets = [0, 0, 0], sizes = [2, 1, 512], strides = [1, 1, 1]} : vector<2x8x512xf32> to vector<2x1x512xf32>
    %51 = vector.shape_cast %50 : vector<2x1x512xf32> to vector<2x512xf32>
    %52 = vector.extract_strided_slice %46 {offsets = [0, 7, 0], sizes = [2, 1, 512], strides = [1, 1, 1]} : vector<2x8x512xf32> to vector<2x1x512xf32>
    %53 = vector.shape_cast %52 : vector<2x1x512xf32> to vector<2x512xf32>
    %54 = vector.shape_cast %18 : vector<1x512xi1> to vector<1x512xi1>
    %55 = vector.broadcast %54 : vector<1x512xi1> to vector<2x512xi1>
    %56 = arith.select %55, %51, %53 : vector<2x512xi1>, vector<2x512xf32>
    %cst_23 = arith.constant dense<0.000000e+00> : vector<2x512xf32>
    %57 = tpu.matmul %48, %47, %cst_23 {dimension_numbers = #tpu.dot_dimension_numbers<[1], [0], [0], [1], [0, 0, 1, 1], [], []>} : vector<2x128xf32>, vector<128x512xf32>, vector<2x512xf32> -> vector<2x512xf32>
    %58 = arith.addf %56, %57 : vector<2x512xf32>
    %59 = vector.extract_strided_slice %58 {offsets = [0, 0], sizes = [2, 384], strides = [1, 1]} : vector<2x512xf32> to vector<2x384xf32>
    %60 = arith.negf %59 : vector<2x384xf32>
    %61 = math.exp %60 : vector<2x384xf32>
    %cst_24 = arith.constant 1.000000e+00 : f32
    %62 = vector.broadcast %cst_24 : f32 to vector<2x384xf32>
    %63 = arith.addf %62, %61 : vector<2x384xf32>
    %64 = arith.divf %62, %63 : vector<2x384xf32>
    %65 = vector.extract_strided_slice %64 {offsets = [0, 0], sizes = [2, 128], strides = [1, 1]} : vector<2x384xf32> to vector<2x128xf32>
    %66 = vector.extract_strided_slice %64 {offsets = [0, 128], sizes = [2, 128], strides = [1, 1]} : vector<2x384xf32> to vector<2x128xf32>
    %67 = vector.extract_strided_slice %64 {offsets = [0, 256], sizes = [2, 128], strides = [1, 1]} : vector<2x384xf32> to vector<2x128xf32>
    %68 = vector.extract_strided_slice %58 {offsets = [0, 384], sizes = [2, 128], strides = [1, 1]} : vector<2x512xf32> to vector<2x128xf32>
    %69 = math.tanh %68 : vector<2x128xf32>
    %70 = arith.mulf %66, %49 : vector<2x128xf32>
    %71 = arith.mulf %65, %69 : vector<2x128xf32>
    %72 = arith.addf %70, %71 : vector<2x128xf32>
    %73 = math.tanh %72 : vector<2x128xf32>
    %74 = arith.mulf %67, %73 : vector<2x128xf32>
    %c0_25 = arith.constant 0 : index
    %c0_26 = arith.constant 0 : index
    %75 = vector.load %arg20[%c0_25, %c0_26] : memref<64x128xf32, #tpu.memory_space<vmem>>, vector<2x128xf32>
    tpu.vector_store %arg20[%c0_25, %c0_26], %74 {strides = array<i32>} : memref<64x128xf32, #tpu.memory_space<vmem>>, vector<2x128xf32>,
    %c56 = arith.constant 56 : index
    %c0_27 = arith.constant 0 : index
    %76 = vector.load %arg21[%c56, %c0_27] : memref<64x128xf32, #tpu.memory_space<vmem>>, vector<2x128xf32>
    tpu.vector_store %arg21[%c56, %c0_27], %74 {strides = array<i32>} : memref<64x128xf32, #tpu.memory_space<vmem>>, vector<2x128xf32>,
    %77 = vector.extract_strided_slice %46 {offsets = [0, 1, 0], sizes = [2, 1, 512], strides = [1, 1, 1]} : vector<2x8x512xf32> to vector<2x1x512xf32>
    %78 = vector.shape_cast %77 : vector<2x1x512xf32> to vector<2x512xf32>
    %79 = vector.extract_strided_slice %46 {offsets = [0, 6, 0], sizes = [2, 1, 512], strides = [1, 1, 1]} : vector<2x8x512xf32> to vector<2x1x512xf32>
    %80 = vector.shape_cast %79 : vector<2x1x512xf32> to vector<2x512xf32>
    %81 = vector.shape_cast %18 : vector<1x512xi1> to vector<1x512xi1>
    %82 = vector.broadcast %81 : vector<1x512xi1> to vector<2x512xi1>
    %83 = arith.select %82, %78, %80 : vector<2x512xi1>, vector<2x512xf32>
    %cst_28 = arith.constant dense<0.000000e+00> : vector<2x512xf32>
    %84 = tpu.matmul %74, %47, %cst_28 {dimension_numbers = #tpu.dot_dimension_numbers<[1], [0], [0], [1], [0, 0, 1, 1], [], []>} : vector<2x128xf32>, vector<128x512xf32>, vector<2x512xf32> -> vector<2x512xf32>
    %85 = arith.addf %83, %84 : vector<2x512xf32>
    %86 = vector.extract_strided_slice %85 {offsets = [0, 0], sizes = [2, 384], strides = [1, 1]} : vector<2x512xf32> to vector<2x384xf32>
    %87 = arith.negf %86 : vector<2x384xf32>
    %88 = math.exp %87 : vector<2x384xf32>
    %cst_29 = arith.constant 1.000000e+00 : f32
    %89 = vector.broadcast %cst_29 : f32 to vector<2x384xf32>
    %90 = arith.addf %89, %88 : vector<2x384xf32>
    %91 = arith.divf %89, %90 : vector<2x384xf32>
    %92 = vector.extract_strided_slice %91 {offsets = [0, 0], sizes = [2, 128], strides = [1, 1]} : vector<2x384xf32> to vector<2x128xf32>
    %93 = vector.extract_strided_slice %91 {offsets = [0, 128], sizes = [2, 128], strides = [1, 1]} : vector<2x384xf32> to vector<2x128xf32>
    %94 = vector.extract_strided_slice %91 {offsets = [0, 256], sizes = [2, 128], strides = [1, 1]} : vector<2x384xf32> to vector<2x128xf32>
    %95 = vector.extract_strided_slice %85 {offsets = [0, 384], sizes = [2, 128], strides = [1, 1]} : vector<2x512xf32> to vector<2x128xf32>
    %96 = math.tanh %95 : vector<2x128xf32>
    %97 = arith.mulf %93, %72 : vector<2x128xf32>
    %98 = arith.mulf %92, %96 : vector<2x128xf32>
    %99 = arith.addf %97, %98 : vector<2x128xf32>
    %100 = math.tanh %99 : vector<2x128xf32>
    %101 = arith.mulf %94, %100 : vector<2x128xf32>
    %c8 = arith.constant 8 : index
    %c0_30 = arith.constant 0 : index
    %102 = vector.load %arg20[%c8, %c0_30] : memref<64x128xf32, #tpu.memory_space<vmem>>, vector<2x128xf32>
    tpu.vector_store %arg20[%c8, %c0_30], %101 {strides = array<i32>} : memref<64x128xf32, #tpu.memory_space<vmem>>, vector<2x128xf32>,
    %c48 = arith.constant 48 : index
    %c0_31 = arith.constant 0 : index
    %103 = vector.load %arg21[%c48, %c0_31] : memref<64x128xf32, #tpu.memory_space<vmem>>, vector<2x128xf32>
    tpu.vector_store %arg21[%c48, %c0_31], %101 {strides = array<i32>} : memref<64x128xf32, #tpu.memory_space<vmem>>, vector<2x128xf32>,
    %104 = vector.extract_strided_slice %46 {offsets = [0, 2, 0], sizes = [2, 1, 512], strides = [1, 1, 1]} : vector<2x8x512xf32> to vector<2x1x512xf32>
    %105 = vector.shape_cast %104 : vector<2x1x512xf32> to vector<2x512xf32>
    %106 = vector.extract_strided_slice %46 {offsets = [0, 5, 0], sizes = [2, 1, 512], strides = [1, 1, 1]} : vector<2x8x512xf32> to vector<2x1x512xf32>
    %107 = vector.shape_cast %106 : vector<2x1x512xf32> to vector<2x512xf32>
    %108 = vector.shape_cast %18 : vector<1x512xi1> to vector<1x512xi1>
    %109 = vector.broadcast %108 : vector<1x512xi1> to vector<2x512xi1>
    %110 = arith.select %109, %105, %107 : vector<2x512xi1>, vector<2x512xf32>
    %cst_32 = arith.constant dense<0.000000e+00> : vector<2x512xf32>
    %111 = tpu.matmul %101, %47, %cst_32 {dimension_numbers = #tpu.dot_dimension_numbers<[1], [0], [0], [1], [0, 0, 1, 1], [], []>} : vector<2x128xf32>, vector<128x512xf32>, vector<2x512xf32> -> vector<2x512xf32>
    %112 = arith.addf %110, %111 : vector<2x512xf32>
    %113 = vector.extract_strided_slice %112 {offsets = [0, 0], sizes = [2, 384], strides = [1, 1]} : vector<2x512xf32> to vector<2x384xf32>
    %114 = arith.negf %113 : vector<2x384xf32>
    %115 = math.exp %114 : vector<2x384xf32>
    %cst_33 = arith.constant 1.000000e+00 : f32
    %116 = vector.broadcast %cst_33 : f32 to vector<2x384xf32>
    %117 = arith.addf %116, %115 : vector<2x384xf32>
    %118 = arith.divf %116, %117 : vector<2x384xf32>
    %119 = vector.extract_strided_slice %118 {offsets = [0, 0], sizes = [2, 128], strides = [1, 1]} : vector<2x384xf32> to vector<2x128xf32>
    %120 = vector.extract_strided_slice %118 {offsets = [0, 128], sizes = [2, 128], strides = [1, 1]} : vector<2x384xf32> to vector<2x128xf32>
    %121 = vector.extract_strided_slice %118 {offsets = [0, 256], sizes = [2, 128], strides = [1, 1]} : vector<2x384xf32> to vector<2x128xf32>
    %122 = vector.extract_strided_slice %112 {offsets = [0, 384], sizes = [2, 128], strides = [1, 1]} : vector<2x512xf32> to vector<2x128xf32>
    %123 = math.tanh %122 : vector<2x128xf32>
    %124 = arith.mulf %120, %99 : vector<2x128xf32>
    %125 = arith.mulf %119, %123 : vector<2x128xf32>
    %126 = arith.addf %124, %125 : vector<2x128xf32>
    %127 = math.tanh %126 : vector<2x128xf32>
    %128 = arith.mulf %121, %127 : vector<2x128xf32>
    %c16 = arith.constant 16 : index
    %c0_34 = arith.constant 0 : index
    %129 = vector.load %arg20[%c16, %c0_34] : memref<64x128xf32, #tpu.memory_space<vmem>>, vector<2x128xf32>
    tpu.vector_store %arg20[%c16, %c0_34], %128 {strides = array<i32>} : memref<64x128xf32, #tpu.memory_space<vmem>>, vector<2x128xf32>,
    %c40 = arith.constant 40 : index
    %c0_35 = arith.constant 0 : index
    %130 = vector.load %arg21[%c40, %c0_35] : memref<64x128xf32, #tpu.memory_space<vmem>>, vector<2x128xf32>
    tpu.vector_store %arg21[%c40, %c0_35], %128 {strides = array<i32>} : memref<64x128xf32, #tpu.memory_space<vmem>>, vector<2x128xf32>,
    %131 = vector.extract_strided_slice %46 {offsets = [0, 3, 0], sizes = [2, 1, 512], strides = [1, 1, 1]} : vector<2x8x512xf32> to vector<2x1x512xf32>
    %132 = vector.shape_cast %131 : vector<2x1x512xf32> to vector<2x512xf32>
    %133 = vector.extract_strided_slice %46 {offsets = [0, 4, 0], sizes = [2, 1, 512], strides = [1, 1, 1]} : vector<2x8x512xf32> to vector<2x1x512xf32>
    %134 = vector.shape_cast %133 : vector<2x1x512xf32> to vector<2x512xf32>
    %135 = vector.shape_cast %18 : vector<1x512xi1> to vector<1x512xi1>
    %136 = vector.broadcast %135 : vector<1x512xi1> to vector<2x512xi1>
    %137 = arith.select %136, %132, %134 : vector<2x512xi1>, vector<2x512xf32>
    %cst_36 = arith.constant dense<0.000000e+00> : vector<2x512xf32>
    %138 = tpu.matmul %128, %47, %cst_36 {dimension_numbers = #tpu.dot_dimension_numbers<[1], [0], [0], [1], [0, 0, 1, 1], [], []>} : vector<2x128xf32>, vector<128x512xf32>, vector<2x512xf32> -> vector<2x512xf32>
    %139 = arith.addf %137, %138 : vector<2x512xf32>
    %140 = vector.extract_strided_slice %139 {offsets = [0, 0], sizes = [2, 384], strides = [1, 1]} : vector<2x512xf32> to vector<2x384xf32>
    %141 = arith.negf %140 : vector<2x384xf32>
    %142 = math.exp %141 : vector<2x384xf32>
    %cst_37 = arith.constant 1.000000e+00 : f32
    %143 = vector.broadcast %cst_37 : f32 to vector<2x384xf32>
    %144 = arith.addf %143, %142 : vector<2x384xf32>
    %145 = arith.divf %143, %144 : vector<2x384xf32>
    %146 = vector.extract_strided_slice %145 {offsets = [0, 0], sizes = [2, 128], strides = [1, 1]} : vector<2x384xf32> to vector<2x128xf32>
    %147 = vector.extract_strided_slice %145 {offsets = [0, 128], sizes = [2, 128], strides = [1, 1]} : vector<2x384xf32> to vector<2x128xf32>
    %148 = vector.extract_strided_slice %145 {offsets = [0, 256], sizes = [2, 128], strides = [1, 1]} : vector<2x384xf32> to vector<2x128xf32>
    %149 = vector.extract_strided_slice %139 {offsets = [0, 384], sizes = [2, 128], strides = [1, 1]} : vector<2x512xf32> to vector<2x128xf32>
    %150 = math.tanh %149 : vector<2x128xf32>
    %151 = arith.mulf %147, %126 : vector<2x128xf32>
    %152 = arith.mulf %146, %150 : vector<2x128xf32>
    %153 = arith.addf %151, %152 : vector<2x128xf32>
    %154 = math.tanh %153 : vector<2x128xf32>
    %155 = arith.mulf %148, %154 : vector<2x128xf32>
    %c24 = arith.constant 24 : index
    %c0_38 = arith.constant 0 : index
    %156 = vector.load %arg20[%c24, %c0_38] : memref<64x128xf32, #tpu.memory_space<vmem>>, vector<2x128xf32>
    tpu.vector_store %arg20[%c24, %c0_38], %155 {strides = array<i32>} : memref<64x128xf32, #tpu.memory_space<vmem>>, vector<2x128xf32>,
    %c32 = arith.constant 32 : index
    %c0_39 = arith.constant 0 : index
    %157 = vector.load %arg21[%c32, %c0_39] : memref<64x128xf32, #tpu.memory_space<vmem>>, vector<2x128xf32>
    tpu.vector_store %arg21[%c32, %c0_39], %155 {strides = array<i32>} : memref<64x128xf32, #tpu.memory_space<vmem>>, vector<2x128xf32>,
    %158 = vector.extract_strided_slice %46 {offsets = [0, 4, 0], sizes = [2, 1, 512], strides = [1, 1, 1]} : vector<2x8x512xf32> to vector<2x1x512xf32>
    %159 = vector.shape_cast %158 : vector<2x1x512xf32> to vector<2x512xf32>
    %160 = vector.extract_strided_slice %46 {offsets = [0, 3, 0], sizes = [2, 1, 512], strides = [1, 1, 1]} : vector<2x8x512xf32> to vector<2x1x512xf32>
    %161 = vector.shape_cast %160 : vector<2x1x512xf32> to vector<2x512xf32>
    %162 = vector.shape_cast %18 : vector<1x512xi1> to vector<1x512xi1>
    %163 = vector.broadcast %162 : vector<1x512xi1> to vector<2x512xi1>
    %164 = arith.select %163, %159, %161 : vector<2x512xi1>, vector<2x512xf32>
    %cst_40 = arith.constant dense<0.000000e+00> : vector<2x512xf32>
    %165 = tpu.matmul %155, %47, %cst_40 {dimension_numbers = #tpu.dot_dimension_numbers<[1], [0], [0], [1], [0, 0, 1, 1], [], []>} : vector<2x128xf32>, vector<128x512xf32>, vector<2x512xf32> -> vector<2x512xf32>
    %166 = arith.addf %164, %165 : vector<2x512xf32>
    %167 = vector.extract_strided_slice %166 {offsets = [0, 0], sizes = [2, 384], strides = [1, 1]} : vector<2x512xf32> to vector<2x384xf32>
    %168 = arith.negf %167 : vector<2x384xf32>
    %169 = math.exp %168 : vector<2x384xf32>
    %cst_41 = arith.constant 1.000000e+00 : f32
    %170 = vector.broadcast %cst_41 : f32 to vector<2x384xf32>
    %171 = arith.addf %170, %169 : vector<2x384xf32>
    %172 = arith.divf %170, %171 : vector<2x384xf32>
    %173 = vector.extract_strided_slice %172 {offsets = [0, 0], sizes = [2, 128], strides = [1, 1]} : vector<2x384xf32> to vector<2x128xf32>
    %174 = vector.extract_strided_slice %172 {offsets = [0, 128], sizes = [2, 128], strides = [1, 1]} : vector<2x384xf32> to vector<2x128xf32>
    %175 = vector.extract_strided_slice %172 {offsets = [0, 256], sizes = [2, 128], strides = [1, 1]} : vector<2x384xf32> to vector<2x128xf32>
    %176 = vector.extract_strided_slice %166 {offsets = [0, 384], sizes = [2, 128], strides = [1, 1]} : vector<2x512xf32> to vector<2x128xf32>
    %177 = math.tanh %176 : vector<2x128xf32>
    %178 = arith.mulf %174, %153 : vector<2x128xf32>
    %179 = arith.mulf %173, %177 : vector<2x128xf32>
    %180 = arith.addf %178, %179 : vector<2x128xf32>
    %181 = math.tanh %180 : vector<2x128xf32>
    %182 = arith.mulf %175, %181 : vector<2x128xf32>
    %c32_42 = arith.constant 32 : index
    %c0_43 = arith.constant 0 : index
    %183 = vector.load %arg20[%c32_42, %c0_43] : memref<64x128xf32, #tpu.memory_space<vmem>>, vector<2x128xf32>
    tpu.vector_store %arg20[%c32_42, %c0_43], %182 {strides = array<i32>} : memref<64x128xf32, #tpu.memory_space<vmem>>, vector<2x128xf32>,
    %c24_44 = arith.constant 24 : index
    %c0_45 = arith.constant 0 : index
    %184 = vector.load %arg21[%c24_44, %c0_45] : memref<64x128xf32, #tpu.memory_space<vmem>>, vector<2x128xf32>
    tpu.vector_store %arg21[%c24_44, %c0_45], %182 {strides = array<i32>} : memref<64x128xf32, #tpu.memory_space<vmem>>, vector<2x128xf32>,
    %185 = vector.extract_strided_slice %46 {offsets = [0, 5, 0], sizes = [2, 1, 512], strides = [1, 1, 1]} : vector<2x8x512xf32> to vector<2x1x512xf32>
    %186 = vector.shape_cast %185 : vector<2x1x512xf32> to vector<2x512xf32>
    %187 = vector.extract_strided_slice %46 {offsets = [0, 2, 0], sizes = [2, 1, 512], strides = [1, 1, 1]} : vector<2x8x512xf32> to vector<2x1x512xf32>
    %188 = vector.shape_cast %187 : vector<2x1x512xf32> to vector<2x512xf32>
    %189 = vector.shape_cast %18 : vector<1x512xi1> to vector<1x512xi1>
    %190 = vector.broadcast %189 : vector<1x512xi1> to vector<2x512xi1>
    %191 = arith.select %190, %186, %188 : vector<2x512xi1>, vector<2x512xf32>
    %cst_46 = arith.constant dense<0.000000e+00> : vector<2x512xf32>
    %192 = tpu.matmul %182, %47, %cst_46 {dimension_numbers = #tpu.dot_dimension_numbers<[1], [0], [0], [1], [0, 0, 1, 1], [], []>} : vector<2x128xf32>, vector<128x512xf32>, vector<2x512xf32> -> vector<2x512xf32>
    %193 = arith.addf %191, %192 : vector<2x512xf32>
    %194 = vector.extract_strided_slice %193 {offsets = [0, 0], sizes = [2, 384], strides = [1, 1]} : vector<2x512xf32> to vector<2x384xf32>
    %195 = arith.negf %194 : vector<2x384xf32>
    %196 = math.exp %195 : vector<2x384xf32>
    %cst_47 = arith.constant 1.000000e+00 : f32
    %197 = vector.broadcast %cst_47 : f32 to vector<2x384xf32>
    %198 = arith.addf %197, %196 : vector<2x384xf32>
    %199 = arith.divf %197, %198 : vector<2x384xf32>
    %200 = vector.extract_strided_slice %199 {offsets = [0, 0], sizes = [2, 128], strides = [1, 1]} : vector<2x384xf32> to vector<2x128xf32>
    %201 = vector.extract_strided_slice %199 {offsets = [0, 128], sizes = [2, 128], strides = [1, 1]} : vector<2x384xf32> to vector<2x128xf32>
    %202 = vector.extract_strided_slice %199 {offsets = [0, 256], sizes = [2, 128], strides = [1, 1]} : vector<2x384xf32> to vector<2x128xf32>
    %203 = vector.extract_strided_slice %193 {offsets = [0, 384], sizes = [2, 128], strides = [1, 1]} : vector<2x512xf32> to vector<2x128xf32>
    %204 = math.tanh %203 : vector<2x128xf32>
    %205 = arith.mulf %201, %180 : vector<2x128xf32>
    %206 = arith.mulf %200, %204 : vector<2x128xf32>
    %207 = arith.addf %205, %206 : vector<2x128xf32>
    %208 = math.tanh %207 : vector<2x128xf32>
    %209 = arith.mulf %202, %208 : vector<2x128xf32>
    %c40_48 = arith.constant 40 : index
    %c0_49 = arith.constant 0 : index
    %210 = vector.load %arg20[%c40_48, %c0_49] : memref<64x128xf32, #tpu.memory_space<vmem>>, vector<2x128xf32>
    tpu.vector_store %arg20[%c40_48, %c0_49], %209 {strides = array<i32>} : memref<64x128xf32, #tpu.memory_space<vmem>>, vector<2x128xf32>,
    %c16_50 = arith.constant 16 : index
    %c0_51 = arith.constant 0 : index
    %211 = vector.load %arg21[%c16_50, %c0_51] : memref<64x128xf32, #tpu.memory_space<vmem>>, vector<2x128xf32>
    tpu.vector_store %arg21[%c16_50, %c0_51], %209 {strides = array<i32>} : memref<64x128xf32, #tpu.memory_space<vmem>>, vector<2x128xf32>,
    %212 = vector.extract_strided_slice %46 {offsets = [0, 6, 0], sizes = [2, 1, 512], strides = [1, 1, 1]} : vector<2x8x512xf32> to vector<2x1x512xf32>
    %213 = vector.shape_cast %212 : vector<2x1x512xf32> to vector<2x512xf32>
    %214 = vector.extract_strided_slice %46 {offsets = [0, 1, 0], sizes = [2, 1, 512], strides = [1, 1, 1]} : vector<2x8x512xf32> to vector<2x1x512xf32>
    %215 = vector.shape_cast %214 : vector<2x1x512xf32> to vector<2x512xf32>
    %216 = vector.shape_cast %18 : vector<1x512xi1> to vector<1x512xi1>
    %217 = vector.broadcast %216 : vector<1x512xi1> to vector<2x512xi1>
    %218 = arith.select %217, %213, %215 : vector<2x512xi1>, vector<2x512xf32>
    %cst_52 = arith.constant dense<0.000000e+00> : vector<2x512xf32>
    %219 = tpu.matmul %209, %47, %cst_52 {dimension_numbers = #tpu.dot_dimension_numbers<[1], [0], [0], [1], [0, 0, 1, 1], [], []>} : vector<2x128xf32>, vector<128x512xf32>, vector<2x512xf32> -> vector<2x512xf32>
    %220 = arith.addf %218, %219 : vector<2x512xf32>
    %221 = vector.extract_strided_slice %220 {offsets = [0, 0], sizes = [2, 384], strides = [1, 1]} : vector<2x512xf32> to vector<2x384xf32>
    %222 = arith.negf %221 : vector<2x384xf32>
    %223 = math.exp %222 : vector<2x384xf32>
    %cst_53 = arith.constant 1.000000e+00 : f32
    %224 = vector.broadcast %cst_53 : f32 to vector<2x384xf32>
    %225 = arith.addf %224, %223 : vector<2x384xf32>
    %226 = arith.divf %224, %225 : vector<2x384xf32>
    %227 = vector.extract_strided_slice %226 {offsets = [0, 0], sizes = [2, 128], strides = [1, 1]} : vector<2x384xf32> to vector<2x128xf32>
    %228 = vector.extract_strided_slice %226 {offsets = [0, 128], sizes = [2, 128], strides = [1, 1]} : vector<2x384xf32> to vector<2x128xf32>
    %229 = vector.extract_strided_slice %226 {offsets = [0, 256], sizes = [2, 128], strides = [1, 1]} : vector<2x384xf32> to vector<2x128xf32>
    %230 = vector.extract_strided_slice %220 {offsets = [0, 384], sizes = [2, 128], strides = [1, 1]} : vector<2x512xf32> to vector<2x128xf32>
    %231 = math.tanh %230 : vector<2x128xf32>
    %232 = arith.mulf %228, %207 : vector<2x128xf32>
    %233 = arith.mulf %227, %231 : vector<2x128xf32>
    %234 = arith.addf %232, %233 : vector<2x128xf32>
    %235 = math.tanh %234 : vector<2x128xf32>
    %236 = arith.mulf %229, %235 : vector<2x128xf32>
    %c48_54 = arith.constant 48 : index
    %c0_55 = arith.constant 0 : index
    %237 = vector.load %arg20[%c48_54, %c0_55] : memref<64x128xf32, #tpu.memory_space<vmem>>, vector<2x128xf32>
    tpu.vector_store %arg20[%c48_54, %c0_55], %236 {strides = array<i32>} : memref<64x128xf32, #tpu.memory_space<vmem>>, vector<2x128xf32>,
    %c8_56 = arith.constant 8 : index
    %c0_57 = arith.constant 0 : index
    %238 = vector.load %arg21[%c8_56, %c0_57] : memref<64x128xf32, #tpu.memory_space<vmem>>, vector<2x128xf32>
    tpu.vector_store %arg21[%c8_56, %c0_57], %236 {strides = array<i32>} : memref<64x128xf32, #tpu.memory_space<vmem>>, vector<2x128xf32>,
    %239 = vector.extract_strided_slice %46 {offsets = [0, 7, 0], sizes = [2, 1, 512], strides = [1, 1, 1]} : vector<2x8x512xf32> to vector<2x1x512xf32>
    %240 = vector.shape_cast %239 : vector<2x1x512xf32> to vector<2x512xf32>
    %241 = vector.extract_strided_slice %46 {offsets = [0, 0, 0], sizes = [2, 1, 512], strides = [1, 1, 1]} : vector<2x8x512xf32> to vector<2x1x512xf32>
    %242 = vector.shape_cast %241 : vector<2x1x512xf32> to vector<2x512xf32>
    %243 = vector.shape_cast %18 : vector<1x512xi1> to vector<1x512xi1>
    %244 = vector.broadcast %243 : vector<1x512xi1> to vector<2x512xi1>
    %245 = arith.select %244, %240, %242 : vector<2x512xi1>, vector<2x512xf32>
    %cst_58 = arith.constant dense<0.000000e+00> : vector<2x512xf32>
    %246 = tpu.matmul %236, %47, %cst_58 {dimension_numbers = #tpu.dot_dimension_numbers<[1], [0], [0], [1], [0, 0, 1, 1], [], []>} : vector<2x128xf32>, vector<128x512xf32>, vector<2x512xf32> -> vector<2x512xf32>
    %247 = arith.addf %245, %246 : vector<2x512xf32>
    %248 = vector.extract_strided_slice %247 {offsets = [0, 0], sizes = [2, 384], strides = [1, 1]} : vector<2x512xf32> to vector<2x384xf32>
    %249 = arith.negf %248 : vector<2x384xf32>
    %250 = math.exp %249 : vector<2x384xf32>
    %cst_59 = arith.constant 1.000000e+00 : f32
    %251 = vector.broadcast %cst_59 : f32 to vector<2x384xf32>
    %252 = arith.addf %251, %250 : vector<2x384xf32>
    %253 = arith.divf %251, %252 : vector<2x384xf32>
    %254 = vector.extract_strided_slice %253 {offsets = [0, 0], sizes = [2, 128], strides = [1, 1]} : vector<2x384xf32> to vector<2x128xf32>
    %255 = vector.extract_strided_slice %253 {offsets = [0, 128], sizes = [2, 128], strides = [1, 1]} : vector<2x384xf32> to vector<2x128xf32>
    %256 = vector.extract_strided_slice %253 {offsets = [0, 256], sizes = [2, 128], strides = [1, 1]} : vector<2x384xf32> to vector<2x128xf32>
    %257 = vector.extract_strided_slice %247 {offsets = [0, 384], sizes = [2, 128], strides = [1, 1]} : vector<2x512xf32> to vector<2x128xf32>
    %258 = math.tanh %257 : vector<2x128xf32>
    %259 = arith.mulf %255, %234 : vector<2x128xf32>
    %260 = arith.mulf %254, %258 : vector<2x128xf32>
    %261 = arith.addf %259, %260 : vector<2x128xf32>
    %262 = math.tanh %261 : vector<2x128xf32>
    %263 = arith.mulf %256, %262 : vector<2x128xf32>
    %c56_60 = arith.constant 56 : index
    %c0_61 = arith.constant 0 : index
    %264 = vector.load %arg20[%c56_60, %c0_61] : memref<64x128xf32, #tpu.memory_space<vmem>>, vector<2x128xf32>
    tpu.vector_store %arg20[%c56_60, %c0_61], %263 {strides = array<i32>} : memref<64x128xf32, #tpu.memory_space<vmem>>, vector<2x128xf32>,
    %c0_62 = arith.constant 0 : index
    %c0_63 = arith.constant 0 : index
    %265 = vector.load %arg21[%c0_62, %c0_63] : memref<64x128xf32, #tpu.memory_space<vmem>>, vector<2x128xf32>
    tpu.vector_store %arg21[%c0_62, %c0_63], %263 {strides = array<i32>} : memref<64x128xf32, #tpu.memory_space<vmem>>, vector<2x128xf32>,
    %c0_64 = arith.constant 0 : index
    %c0_65 = arith.constant 0 : index
    %266 = vector.load %arg20[%c0_64, %c0_65] : memref<64x128xf32, #tpu.memory_space<vmem>>, vector<64x128xf32>
    %c0_66 = arith.constant 0 : index
    %c0_67 = arith.constant 0 : index
    %267 = vector.load %arg21[%c0_66, %c0_67] : memref<64x128xf32, #tpu.memory_space<vmem>>, vector<64x128xf32>
    %268 = vector.shape_cast %21 : vector<1x128xi1> to vector<1x128xi1>
    %269 = vector.broadcast %268 : vector<1x128xi1> to vector<64x128xi1>
    %270 = arith.select %269, %266, %267 : vector<64x128xi1>, vector<64x128xf32>
    %c0_68 = arith.constant 0 : index
    %c0_69 = arith.constant 0 : index
    %271 = vector.load %arg6[%c0_68, %c0_69] : memref<128x512xf32, #tpu.memory_space<vmem>>, vector<128x512xf32>
    %cst_70 = arith.constant dense<0.000000e+00> : vector<64x512xf32>
    %272 = tpu.matmul %270, %271, %cst_70 {dimension_numbers = #tpu.dot_dimension_numbers<[1], [0], [0], [1], [0, 0, 1, 1], [], []>} : vector<64x128xf32>, vector<128x512xf32>, vector<64x512xf32> -> vector<64x512xf32>
    %c0_71 = arith.constant 0 : index
    %c0_72 = arith.constant 0 : index
    %273 = vector.load %arg8[%c0_71, %c0_72] : memref<1x512xf32, #tpu.memory_space<vmem>>, vector<1x512xf32>
    %274 = vector.broadcast %273 : vector<1x512xf32> to vector<64x512xf32>
    %275 = arith.addf %272, %274 : vector<64x512xf32>
    %c0_73 = arith.constant 0 : index
    %c0_74 = arith.constant 0 : index
    %276 = vector.load %arg7[%c0_73, %c0_74] : memref<128x512xf32, #tpu.memory_space<vmem>>, vector<128x512xf32>
    %cst_75 = arith.constant 0.000000e+00 : f32
    %277 = vector.broadcast %cst_75 : f32 to vector<2x128xf32>
    %cst_76 = arith.constant 0.000000e+00 : f32
    %278 = vector.broadcast %cst_76 : f32 to vector<2x128xf32>
    %279 = vector.extract_strided_slice %275 {offsets = [0, 0], sizes = [2, 512], strides = [1, 1]} : vector<64x512xf32> to vector<2x512xf32>
    %280 = vector.extract_strided_slice %275 {offsets = [56, 0], sizes = [2, 512], strides = [1, 1]} : vector<64x512xf32> to vector<2x512xf32>
    %281 = vector.shape_cast %18 : vector<1x512xi1> to vector<1x512xi1>
    %282 = vector.broadcast %281 : vector<1x512xi1> to vector<2x512xi1>
    %283 = arith.select %282, %279, %280 : vector<2x512xi1>, vector<2x512xf32>
    %cst_77 = arith.constant dense<0.000000e+00> : vector<2x512xf32>
    %284 = tpu.matmul %277, %276, %cst_77 {dimension_numbers = #tpu.dot_dimension_numbers<[1], [0], [0], [1], [0, 0, 1, 1], [], []>} : vector<2x128xf32>, vector<128x512xf32>, vector<2x512xf32> -> vector<2x512xf32>
    %285 = arith.addf %283, %284 : vector<2x512xf32>
    %286 = vector.extract_strided_slice %285 {offsets = [0, 0], sizes = [2, 384], strides = [1, 1]} : vector<2x512xf32> to vector<2x384xf32>
    %287 = arith.negf %286 : vector<2x384xf32>
    %288 = math.exp %287 : vector<2x384xf32>
    %cst_78 = arith.constant 1.000000e+00 : f32
    %289 = vector.broadcast %cst_78 : f32 to vector<2x384xf32>
    %290 = arith.addf %289, %288 : vector<2x384xf32>
    %291 = arith.divf %289, %290 : vector<2x384xf32>
    %292 = vector.extract_strided_slice %291 {offsets = [0, 0], sizes = [2, 128], strides = [1, 1]} : vector<2x384xf32> to vector<2x128xf32>
    %293 = vector.extract_strided_slice %291 {offsets = [0, 128], sizes = [2, 128], strides = [1, 1]} : vector<2x384xf32> to vector<2x128xf32>
    %294 = vector.extract_strided_slice %291 {offsets = [0, 256], sizes = [2, 128], strides = [1, 1]} : vector<2x384xf32> to vector<2x128xf32>
    %295 = vector.extract_strided_slice %285 {offsets = [0, 384], sizes = [2, 128], strides = [1, 1]} : vector<2x512xf32> to vector<2x128xf32>
    %296 = math.tanh %295 : vector<2x128xf32>
    %297 = arith.mulf %293, %278 : vector<2x128xf32>
    %298 = arith.mulf %292, %296 : vector<2x128xf32>
    %299 = arith.addf %297, %298 : vector<2x128xf32>
    %300 = math.tanh %299 : vector<2x128xf32>
    %301 = arith.mulf %294, %300 : vector<2x128xf32>
    %c0_79 = arith.constant 0 : index
    %c0_80 = arith.constant 0 : index
    %c0_81 = arith.constant 0 : index
    %302 = vector.load %arg22[%c0_79, %c0_80, %c0_81] : memref<8x2x128xf32, #tpu.memory_space<vmem>>, vector<1x2x128xf32>
    %303 = vector.shape_cast %302 : vector<1x2x128xf32> to vector<2x128xf32>
    %304 = vector.shape_cast %301 : vector<2x128xf32> to vector<1x2x128xf32>
    tpu.vector_store %arg22[%c0_79, %c0_80, %c0_81], %304 {strides = array<i32>} : memref<8x2x128xf32, #tpu.memory_space<vmem>>, vector<1x2x128xf32>,
    %c7 = arith.constant 7 : index
    %c0_82 = arith.constant 0 : index
    %c0_83 = arith.constant 0 : index
    %305 = vector.load %arg23[%c7, %c0_82, %c0_83] : memref<8x2x128xf32, #tpu.memory_space<vmem>>, vector<1x2x128xf32>
    %306 = vector.shape_cast %305 : vector<1x2x128xf32> to vector<2x128xf32>
    %307 = vector.shape_cast %301 : vector<2x128xf32> to vector<1x2x128xf32>
    tpu.vector_store %arg23[%c7, %c0_82, %c0_83], %307 {strides = array<i32>} : memref<8x2x128xf32, #tpu.memory_space<vmem>>, vector<1x2x128xf32>,
    %308 = vector.extract_strided_slice %275 {offsets = [8, 0], sizes = [2, 512], strides = [1, 1]} : vector<64x512xf32> to vector<2x512xf32>
    %309 = vector.extract_strided_slice %275 {offsets = [48, 0], sizes = [2, 512], strides = [1, 1]} : vector<64x512xf32> to vector<2x512xf32>
    %310 = vector.shape_cast %18 : vector<1x512xi1> to vector<1x512xi1>
    %311 = vector.broadcast %310 : vector<1x512xi1> to vector<2x512xi1>
    %312 = arith.select %311, %308, %309 : vector<2x512xi1>, vector<2x512xf32>
    %cst_84 = arith.constant dense<0.000000e+00> : vector<2x512xf32>
    %313 = tpu.matmul %301, %276, %cst_84 {dimension_numbers = #tpu.dot_dimension_numbers<[1], [0], [0], [1], [0, 0, 1, 1], [], []>} : vector<2x128xf32>, vector<128x512xf32>, vector<2x512xf32> -> vector<2x512xf32>
    %314 = arith.addf %312, %313 : vector<2x512xf32>
    %315 = vector.extract_strided_slice %314 {offsets = [0, 0], sizes = [2, 384], strides = [1, 1]} : vector<2x512xf32> to vector<2x384xf32>
    %316 = arith.negf %315 : vector<2x384xf32>
    %317 = math.exp %316 : vector<2x384xf32>
    %cst_85 = arith.constant 1.000000e+00 : f32
    %318 = vector.broadcast %cst_85 : f32 to vector<2x384xf32>
    %319 = arith.addf %318, %317 : vector<2x384xf32>
    %320 = arith.divf %318, %319 : vector<2x384xf32>
    %321 = vector.extract_strided_slice %320 {offsets = [0, 0], sizes = [2, 128], strides = [1, 1]} : vector<2x384xf32> to vector<2x128xf32>
    %322 = vector.extract_strided_slice %320 {offsets = [0, 128], sizes = [2, 128], strides = [1, 1]} : vector<2x384xf32> to vector<2x128xf32>
    %323 = vector.extract_strided_slice %320 {offsets = [0, 256], sizes = [2, 128], strides = [1, 1]} : vector<2x384xf32> to vector<2x128xf32>
    %324 = vector.extract_strided_slice %314 {offsets = [0, 384], sizes = [2, 128], strides = [1, 1]} : vector<2x512xf32> to vector<2x128xf32>
    %325 = math.tanh %324 : vector<2x128xf32>
    %326 = arith.mulf %322, %299 : vector<2x128xf32>
    %327 = arith.mulf %321, %325 : vector<2x128xf32>
    %328 = arith.addf %326, %327 : vector<2x128xf32>
    %329 = math.tanh %328 : vector<2x128xf32>
    %330 = arith.mulf %323, %329 : vector<2x128xf32>
    %c1 = arith.constant 1 : index
    %c0_86 = arith.constant 0 : index
    %c0_87 = arith.constant 0 : index
    %331 = vector.load %arg22[%c1, %c0_86, %c0_87] : memref<8x2x128xf32, #tpu.memory_space<vmem>>, vector<1x2x128xf32>
    %332 = vector.shape_cast %331 : vector<1x2x128xf32> to vector<2x128xf32>
    %333 = vector.shape_cast %330 : vector<2x128xf32> to vector<1x2x128xf32>
    tpu.vector_store %arg22[%c1, %c0_86, %c0_87], %333 {strides = array<i32>} : memref<8x2x128xf32, #tpu.memory_space<vmem>>, vector<1x2x128xf32>,
    %c6 = arith.constant 6 : index
    %c0_88 = arith.constant 0 : index
    %c0_89 = arith.constant 0 : index
    %334 = vector.load %arg23[%c6, %c0_88, %c0_89] : memref<8x2x128xf32, #tpu.memory_space<vmem>>, vector<1x2x128xf32>
    %335 = vector.shape_cast %334 : vector<1x2x128xf32> to vector<2x128xf32>
    %336 = vector.shape_cast %330 : vector<2x128xf32> to vector<1x2x128xf32>
    tpu.vector_store %arg23[%c6, %c0_88, %c0_89], %336 {strides = array<i32>} : memref<8x2x128xf32, #tpu.memory_space<vmem>>, vector<1x2x128xf32>,
    %337 = vector.extract_strided_slice %275 {offsets = [16, 0], sizes = [2, 512], strides = [1, 1]} : vector<64x512xf32> to vector<2x512xf32>
    %338 = vector.extract_strided_slice %275 {offsets = [40, 0], sizes = [2, 512], strides = [1, 1]} : vector<64x512xf32> to vector<2x512xf32>
    %339 = vector.shape_cast %18 : vector<1x512xi1> to vector<1x512xi1>
    %340 = vector.broadcast %339 : vector<1x512xi1> to vector<2x512xi1>
    %341 = arith.select %340, %337, %338 : vector<2x512xi1>, vector<2x512xf32>
    %cst_90 = arith.constant dense<0.000000e+00> : vector<2x512xf32>
    %342 = tpu.matmul %330, %276, %cst_90 {dimension_numbers = #tpu.dot_dimension_numbers<[1], [0], [0], [1], [0, 0, 1, 1], [], []>} : vector<2x128xf32>, vector<128x512xf32>, vector<2x512xf32> -> vector<2x512xf32>
    %343 = arith.addf %341, %342 : vector<2x512xf32>
    %344 = vector.extract_strided_slice %343 {offsets = [0, 0], sizes = [2, 384], strides = [1, 1]} : vector<2x512xf32> to vector<2x384xf32>
    %345 = arith.negf %344 : vector<2x384xf32>
    %346 = math.exp %345 : vector<2x384xf32>
    %cst_91 = arith.constant 1.000000e+00 : f32
    %347 = vector.broadcast %cst_91 : f32 to vector<2x384xf32>
    %348 = arith.addf %347, %346 : vector<2x384xf32>
    %349 = arith.divf %347, %348 : vector<2x384xf32>
    %350 = vector.extract_strided_slice %349 {offsets = [0, 0], sizes = [2, 128], strides = [1, 1]} : vector<2x384xf32> to vector<2x128xf32>
    %351 = vector.extract_strided_slice %349 {offsets = [0, 128], sizes = [2, 128], strides = [1, 1]} : vector<2x384xf32> to vector<2x128xf32>
    %352 = vector.extract_strided_slice %349 {offsets = [0, 256], sizes = [2, 128], strides = [1, 1]} : vector<2x384xf32> to vector<2x128xf32>
    %353 = vector.extract_strided_slice %343 {offsets = [0, 384], sizes = [2, 128], strides = [1, 1]} : vector<2x512xf32> to vector<2x128xf32>
    %354 = math.tanh %353 : vector<2x128xf32>
    %355 = arith.mulf %351, %328 : vector<2x128xf32>
    %356 = arith.mulf %350, %354 : vector<2x128xf32>
    %357 = arith.addf %355, %356 : vector<2x128xf32>
    %358 = math.tanh %357 : vector<2x128xf32>
    %359 = arith.mulf %352, %358 : vector<2x128xf32>
    %c2 = arith.constant 2 : index
    %c0_92 = arith.constant 0 : index
    %c0_93 = arith.constant 0 : index
    %360 = vector.load %arg22[%c2, %c0_92, %c0_93] : memref<8x2x128xf32, #tpu.memory_space<vmem>>, vector<1x2x128xf32>
    %361 = vector.shape_cast %360 : vector<1x2x128xf32> to vector<2x128xf32>
    %362 = vector.shape_cast %359 : vector<2x128xf32> to vector<1x2x128xf32>
    tpu.vector_store %arg22[%c2, %c0_92, %c0_93], %362 {strides = array<i32>} : memref<8x2x128xf32, #tpu.memory_space<vmem>>, vector<1x2x128xf32>,
    %c5 = arith.constant 5 : index
    %c0_94 = arith.constant 0 : index
    %c0_95 = arith.constant 0 : index
    %363 = vector.load %arg23[%c5, %c0_94, %c0_95] : memref<8x2x128xf32, #tpu.memory_space<vmem>>, vector<1x2x128xf32>
    %364 = vector.shape_cast %363 : vector<1x2x128xf32> to vector<2x128xf32>
    %365 = vector.shape_cast %359 : vector<2x128xf32> to vector<1x2x128xf32>
    tpu.vector_store %arg23[%c5, %c0_94, %c0_95], %365 {strides = array<i32>} : memref<8x2x128xf32, #tpu.memory_space<vmem>>, vector<1x2x128xf32>,
    %366 = vector.extract_strided_slice %275 {offsets = [24, 0], sizes = [2, 512], strides = [1, 1]} : vector<64x512xf32> to vector<2x512xf32>
    %367 = vector.extract_strided_slice %275 {offsets = [32, 0], sizes = [2, 512], strides = [1, 1]} : vector<64x512xf32> to vector<2x512xf32>
    %368 = vector.shape_cast %18 : vector<1x512xi1> to vector<1x512xi1>
    %369 = vector.broadcast %368 : vector<1x512xi1> to vector<2x512xi1>
    %370 = arith.select %369, %366, %367 : vector<2x512xi1>, vector<2x512xf32>
    %cst_96 = arith.constant dense<0.000000e+00> : vector<2x512xf32>
    %371 = tpu.matmul %359, %276, %cst_96 {dimension_numbers = #tpu.dot_dimension_numbers<[1], [0], [0], [1], [0, 0, 1, 1], [], []>} : vector<2x128xf32>, vector<128x512xf32>, vector<2x512xf32> -> vector<2x512xf32>
    %372 = arith.addf %370, %371 : vector<2x512xf32>
    %373 = vector.extract_strided_slice %372 {offsets = [0, 0], sizes = [2, 384], strides = [1, 1]} : vector<2x512xf32> to vector<2x384xf32>
    %374 = arith.negf %373 : vector<2x384xf32>
    %375 = math.exp %374 : vector<2x384xf32>
    %cst_97 = arith.constant 1.000000e+00 : f32
    %376 = vector.broadcast %cst_97 : f32 to vector<2x384xf32>
    %377 = arith.addf %376, %375 : vector<2x384xf32>
    %378 = arith.divf %376, %377 : vector<2x384xf32>
    %379 = vector.extract_strided_slice %378 {offsets = [0, 0], sizes = [2, 128], strides = [1, 1]} : vector<2x384xf32> to vector<2x128xf32>
    %380 = vector.extract_strided_slice %378 {offsets = [0, 128], sizes = [2, 128], strides = [1, 1]} : vector<2x384xf32> to vector<2x128xf32>
    %381 = vector.extract_strided_slice %378 {offsets = [0, 256], sizes = [2, 128], strides = [1, 1]} : vector<2x384xf32> to vector<2x128xf32>
    %382 = vector.extract_strided_slice %372 {offsets = [0, 384], sizes = [2, 128], strides = [1, 1]} : vector<2x512xf32> to vector<2x128xf32>
    %383 = math.tanh %382 : vector<2x128xf32>
    %384 = arith.mulf %380, %357 : vector<2x128xf32>
    %385 = arith.mulf %379, %383 : vector<2x128xf32>
    %386 = arith.addf %384, %385 : vector<2x128xf32>
    %387 = math.tanh %386 : vector<2x128xf32>
    %388 = arith.mulf %381, %387 : vector<2x128xf32>
    %c3 = arith.constant 3 : index
    %c0_98 = arith.constant 0 : index
    %c0_99 = arith.constant 0 : index
    %389 = vector.load %arg22[%c3, %c0_98, %c0_99] : memref<8x2x128xf32, #tpu.memory_space<vmem>>, vector<1x2x128xf32>
    %390 = vector.shape_cast %389 : vector<1x2x128xf32> to vector<2x128xf32>
    %391 = vector.shape_cast %388 : vector<2x128xf32> to vector<1x2x128xf32>
    tpu.vector_store %arg22[%c3, %c0_98, %c0_99], %391 {strides = array<i32>} : memref<8x2x128xf32, #tpu.memory_space<vmem>>, vector<1x2x128xf32>,
    %c4 = arith.constant 4 : index
    %c0_100 = arith.constant 0 : index
    %c0_101 = arith.constant 0 : index
    %392 = vector.load %arg23[%c4, %c0_100, %c0_101] : memref<8x2x128xf32, #tpu.memory_space<vmem>>, vector<1x2x128xf32>
    %393 = vector.shape_cast %392 : vector<1x2x128xf32> to vector<2x128xf32>
    %394 = vector.shape_cast %388 : vector<2x128xf32> to vector<1x2x128xf32>
    tpu.vector_store %arg23[%c4, %c0_100, %c0_101], %394 {strides = array<i32>} : memref<8x2x128xf32, #tpu.memory_space<vmem>>, vector<1x2x128xf32>,
    %395 = vector.extract_strided_slice %275 {offsets = [32, 0], sizes = [2, 512], strides = [1, 1]} : vector<64x512xf32> to vector<2x512xf32>
    %396 = vector.extract_strided_slice %275 {offsets = [24, 0], sizes = [2, 512], strides = [1, 1]} : vector<64x512xf32> to vector<2x512xf32>
    %397 = vector.shape_cast %18 : vector<1x512xi1> to vector<1x512xi1>
    %398 = vector.broadcast %397 : vector<1x512xi1> to vector<2x512xi1>
    %399 = arith.select %398, %395, %396 : vector<2x512xi1>, vector<2x512xf32>
    %cst_102 = arith.constant dense<0.000000e+00> : vector<2x512xf32>
    %400 = tpu.matmul %388, %276, %cst_102 {dimension_numbers = #tpu.dot_dimension_numbers<[1], [0], [0], [1], [0, 0, 1, 1], [], []>} : vector<2x128xf32>, vector<128x512xf32>, vector<2x512xf32> -> vector<2x512xf32>
    %401 = arith.addf %399, %400 : vector<2x512xf32>
    %402 = vector.extract_strided_slice %401 {offsets = [0, 0], sizes = [2, 384], strides = [1, 1]} : vector<2x512xf32> to vector<2x384xf32>
    %403 = arith.negf %402 : vector<2x384xf32>
    %404 = math.exp %403 : vector<2x384xf32>
    %cst_103 = arith.constant 1.000000e+00 : f32
    %405 = vector.broadcast %cst_103 : f32 to vector<2x384xf32>
    %406 = arith.addf %405, %404 : vector<2x384xf32>
    %407 = arith.divf %405, %406 : vector<2x384xf32>
    %408 = vector.extract_strided_slice %407 {offsets = [0, 0], sizes = [2, 128], strides = [1, 1]} : vector<2x384xf32> to vector<2x128xf32>
    %409 = vector.extract_strided_slice %407 {offsets = [0, 128], sizes = [2, 128], strides = [1, 1]} : vector<2x384xf32> to vector<2x128xf32>
    %410 = vector.extract_strided_slice %407 {offsets = [0, 256], sizes = [2, 128], strides = [1, 1]} : vector<2x384xf32> to vector<2x128xf32>
    %411 = vector.extract_strided_slice %401 {offsets = [0, 384], sizes = [2, 128], strides = [1, 1]} : vector<2x512xf32> to vector<2x128xf32>
    %412 = math.tanh %411 : vector<2x128xf32>
    %413 = arith.mulf %409, %386 : vector<2x128xf32>
    %414 = arith.mulf %408, %412 : vector<2x128xf32>
    %415 = arith.addf %413, %414 : vector<2x128xf32>
    %416 = math.tanh %415 : vector<2x128xf32>
    %417 = arith.mulf %410, %416 : vector<2x128xf32>
    %c4_104 = arith.constant 4 : index
    %c0_105 = arith.constant 0 : index
    %c0_106 = arith.constant 0 : index
    %418 = vector.load %arg22[%c4_104, %c0_105, %c0_106] : memref<8x2x128xf32, #tpu.memory_space<vmem>>, vector<1x2x128xf32>
    %419 = vector.shape_cast %418 : vector<1x2x128xf32> to vector<2x128xf32>
    %420 = vector.shape_cast %417 : vector<2x128xf32> to vector<1x2x128xf32>
    tpu.vector_store %arg22[%c4_104, %c0_105, %c0_106], %420 {strides = array<i32>} : memref<8x2x128xf32, #tpu.memory_space<vmem>>, vector<1x2x128xf32>,
    %c3_107 = arith.constant 3 : index
    %c0_108 = arith.constant 0 : index
    %c0_109 = arith.constant 0 : index
    %421 = vector.load %arg23[%c3_107, %c0_108, %c0_109] : memref<8x2x128xf32, #tpu.memory_space<vmem>>, vector<1x2x128xf32>
    %422 = vector.shape_cast %421 : vector<1x2x128xf32> to vector<2x128xf32>
    %423 = vector.shape_cast %417 : vector<2x128xf32> to vector<1x2x128xf32>
    tpu.vector_store %arg23[%c3_107, %c0_108, %c0_109], %423 {strides = array<i32>} : memref<8x2x128xf32, #tpu.memory_space<vmem>>, vector<1x2x128xf32>,
    %424 = vector.extract_strided_slice %275 {offsets = [40, 0], sizes = [2, 512], strides = [1, 1]} : vector<64x512xf32> to vector<2x512xf32>
    %425 = vector.extract_strided_slice %275 {offsets = [16, 0], sizes = [2, 512], strides = [1, 1]} : vector<64x512xf32> to vector<2x512xf32>
    %426 = vector.shape_cast %18 : vector<1x512xi1> to vector<1x512xi1>
    %427 = vector.broadcast %426 : vector<1x512xi1> to vector<2x512xi1>
    %428 = arith.select %427, %424, %425 : vector<2x512xi1>, vector<2x512xf32>
    %cst_110 = arith.constant dense<0.000000e+00> : vector<2x512xf32>
    %429 = tpu.matmul %417, %276, %cst_110 {dimension_numbers = #tpu.dot_dimension_numbers<[1], [0], [0], [1], [0, 0, 1, 1], [], []>} : vector<2x128xf32>, vector<128x512xf32>, vector<2x512xf32> -> vector<2x512xf32>
    %430 = arith.addf %428, %429 : vector<2x512xf32>
    %431 = vector.extract_strided_slice %430 {offsets = [0, 0], sizes = [2, 384], strides = [1, 1]} : vector<2x512xf32> to vector<2x384xf32>
    %432 = arith.negf %431 : vector<2x384xf32>
    %433 = math.exp %432 : vector<2x384xf32>
    %cst_111 = arith.constant 1.000000e+00 : f32
    %434 = vector.broadcast %cst_111 : f32 to vector<2x384xf32>
    %435 = arith.addf %434, %433 : vector<2x384xf32>
    %436 = arith.divf %434, %435 : vector<2x384xf32>
    %437 = vector.extract_strided_slice %436 {offsets = [0, 0], sizes = [2, 128], strides = [1, 1]} : vector<2x384xf32> to vector<2x128xf32>
    %438 = vector.extract_strided_slice %436 {offsets = [0, 128], sizes = [2, 128], strides = [1, 1]} : vector<2x384xf32> to vector<2x128xf32>
    %439 = vector.extract_strided_slice %436 {offsets = [0, 256], sizes = [2, 128], strides = [1, 1]} : vector<2x384xf32> to vector<2x128xf32>
    %440 = vector.extract_strided_slice %430 {offsets = [0, 384], sizes = [2, 128], strides = [1, 1]} : vector<2x512xf32> to vector<2x128xf32>
    %441 = math.tanh %440 : vector<2x128xf32>
    %442 = arith.mulf %438, %415 : vector<2x128xf32>
    %443 = arith.mulf %437, %441 : vector<2x128xf32>
    %444 = arith.addf %442, %443 : vector<2x128xf32>
    %445 = math.tanh %444 : vector<2x128xf32>
    %446 = arith.mulf %439, %445 : vector<2x128xf32>
    %c5_112 = arith.constant 5 : index
    %c0_113 = arith.constant 0 : index
    %c0_114 = arith.constant 0 : index
    %447 = vector.load %arg22[%c5_112, %c0_113, %c0_114] : memref<8x2x128xf32, #tpu.memory_space<vmem>>, vector<1x2x128xf32>
    %448 = vector.shape_cast %447 : vector<1x2x128xf32> to vector<2x128xf32>
    %449 = vector.shape_cast %446 : vector<2x128xf32> to vector<1x2x128xf32>
    tpu.vector_store %arg22[%c5_112, %c0_113, %c0_114], %449 {strides = array<i32>} : memref<8x2x128xf32, #tpu.memory_space<vmem>>, vector<1x2x128xf32>,
    %c2_115 = arith.constant 2 : index
    %c0_116 = arith.constant 0 : index
    %c0_117 = arith.constant 0 : index
    %450 = vector.load %arg23[%c2_115, %c0_116, %c0_117] : memref<8x2x128xf32, #tpu.memory_space<vmem>>, vector<1x2x128xf32>
    %451 = vector.shape_cast %450 : vector<1x2x128xf32> to vector<2x128xf32>
    %452 = vector.shape_cast %446 : vector<2x128xf32> to vector<1x2x128xf32>
    tpu.vector_store %arg23[%c2_115, %c0_116, %c0_117], %452 {strides = array<i32>} : memref<8x2x128xf32, #tpu.memory_space<vmem>>, vector<1x2x128xf32>,
    %453 = vector.extract_strided_slice %275 {offsets = [48, 0], sizes = [2, 512], strides = [1, 1]} : vector<64x512xf32> to vector<2x512xf32>
    %454 = vector.extract_strided_slice %275 {offsets = [8, 0], sizes = [2, 512], strides = [1, 1]} : vector<64x512xf32> to vector<2x512xf32>
    %455 = vector.shape_cast %18 : vector<1x512xi1> to vector<1x512xi1>
    %456 = vector.broadcast %455 : vector<1x512xi1> to vector<2x512xi1>
    %457 = arith.select %456, %453, %454 : vector<2x512xi1>, vector<2x512xf32>
    %cst_118 = arith.constant dense<0.000000e+00> : vector<2x512xf32>
    %458 = tpu.matmul %446, %276, %cst_118 {dimension_numbers = #tpu.dot_dimension_numbers<[1], [0], [0], [1], [0, 0, 1, 1], [], []>} : vector<2x128xf32>, vector<128x512xf32>, vector<2x512xf32> -> vector<2x512xf32>
    %459 = arith.addf %457, %458 : vector<2x512xf32>
    %460 = vector.extract_strided_slice %459 {offsets = [0, 0], sizes = [2, 384], strides = [1, 1]} : vector<2x512xf32> to vector<2x384xf32>
    %461 = arith.negf %460 : vector<2x384xf32>
    %462 = math.exp %461 : vector<2x384xf32>
    %cst_119 = arith.constant 1.000000e+00 : f32
    %463 = vector.broadcast %cst_119 : f32 to vector<2x384xf32>
    %464 = arith.addf %463, %462 : vector<2x384xf32>
    %465 = arith.divf %463, %464 : vector<2x384xf32>
    %466 = vector.extract_strided_slice %465 {offsets = [0, 0], sizes = [2, 128], strides = [1, 1]} : vector<2x384xf32> to vector<2x128xf32>
    %467 = vector.extract_strided_slice %465 {offsets = [0, 128], sizes = [2, 128], strides = [1, 1]} : vector<2x384xf32> to vector<2x128xf32>
    %468 = vector.extract_strided_slice %465 {offsets = [0, 256], sizes = [2, 128], strides = [1, 1]} : vector<2x384xf32> to vector<2x128xf32>
    %469 = vector.extract_strided_slice %459 {offsets = [0, 384], sizes = [2, 128], strides = [1, 1]} : vector<2x512xf32> to vector<2x128xf32>
    %470 = math.tanh %469 : vector<2x128xf32>
    %471 = arith.mulf %467, %444 : vector<2x128xf32>
    %472 = arith.mulf %466, %470 : vector<2x128xf32>
    %473 = arith.addf %471, %472 : vector<2x128xf32>
    %474 = math.tanh %473 : vector<2x128xf32>
    %475 = arith.mulf %468, %474 : vector<2x128xf32>
    %c6_120 = arith.constant 6 : index
    %c0_121 = arith.constant 0 : index
    %c0_122 = arith.constant 0 : index
    %476 = vector.load %arg22[%c6_120, %c0_121, %c0_122] : memref<8x2x128xf32, #tpu.memory_space<vmem>>, vector<1x2x128xf32>
    %477 = vector.shape_cast %476 : vector<1x2x128xf32> to vector<2x128xf32>
    %478 = vector.shape_cast %475 : vector<2x128xf32> to vector<1x2x128xf32>
    tpu.vector_store %arg22[%c6_120, %c0_121, %c0_122], %478 {strides = array<i32>} : memref<8x2x128xf32, #tpu.memory_space<vmem>>, vector<1x2x128xf32>,
    %c1_123 = arith.constant 1 : index
    %c0_124 = arith.constant 0 : index
    %c0_125 = arith.constant 0 : index
    %479 = vector.load %arg23[%c1_123, %c0_124, %c0_125] : memref<8x2x128xf32, #tpu.memory_space<vmem>>, vector<1x2x128xf32>
    %480 = vector.shape_cast %479 : vector<1x2x128xf32> to vector<2x128xf32>
    %481 = vector.shape_cast %475 : vector<2x128xf32> to vector<1x2x128xf32>
    tpu.vector_store %arg23[%c1_123, %c0_124, %c0_125], %481 {strides = array<i32>} : memref<8x2x128xf32, #tpu.memory_space<vmem>>, vector<1x2x128xf32>,
    %482 = vector.extract_strided_slice %275 {offsets = [56, 0], sizes = [2, 512], strides = [1, 1]} : vector<64x512xf32> to vector<2x512xf32>
    %483 = vector.extract_strided_slice %275 {offsets = [0, 0], sizes = [2, 512], strides = [1, 1]} : vector<64x512xf32> to vector<2x512xf32>
    %484 = vector.shape_cast %18 : vector<1x512xi1> to vector<1x512xi1>
    %485 = vector.broadcast %484 : vector<1x512xi1> to vector<2x512xi1>
    %486 = arith.select %485, %482, %483 : vector<2x512xi1>, vector<2x512xf32>
    %cst_126 = arith.constant dense<0.000000e+00> : vector<2x512xf32>
    %487 = tpu.matmul %475, %276, %cst_126 {dimension_numbers = #tpu.dot_dimension_numbers<[1], [0], [0], [1], [0, 0, 1, 1], [], []>} : vector<2x128xf32>, vector<128x512xf32>, vector<2x512xf32> -> vector<2x512xf32>
    %488 = arith.addf %486, %487 : vector<2x512xf32>
    %489 = vector.extract_strided_slice %488 {offsets = [0, 0], sizes = [2, 384], strides = [1, 1]} : vector<2x512xf32> to vector<2x384xf32>
    %490 = arith.negf %489 : vector<2x384xf32>
    %491 = math.exp %490 : vector<2x384xf32>
    %cst_127 = arith.constant 1.000000e+00 : f32
    %492 = vector.broadcast %cst_127 : f32 to vector<2x384xf32>
    %493 = arith.addf %492, %491 : vector<2x384xf32>
    %494 = arith.divf %492, %493 : vector<2x384xf32>
    %495 = vector.extract_strided_slice %494 {offsets = [0, 0], sizes = [2, 128], strides = [1, 1]} : vector<2x384xf32> to vector<2x128xf32>
    %496 = vector.extract_strided_slice %494 {offsets = [0, 128], sizes = [2, 128], strides = [1, 1]} : vector<2x384xf32> to vector<2x128xf32>
    %497 = vector.extract_strided_slice %494 {offsets = [0, 256], sizes = [2, 128], strides = [1, 1]} : vector<2x384xf32> to vector<2x128xf32>
    %498 = vector.extract_strided_slice %488 {offsets = [0, 384], sizes = [2, 128], strides = [1, 1]} : vector<2x512xf32> to vector<2x128xf32>
    %499 = math.tanh %498 : vector<2x128xf32>
    %500 = arith.mulf %496, %473 : vector<2x128xf32>
    %501 = arith.mulf %495, %499 : vector<2x128xf32>
    %502 = arith.addf %500, %501 : vector<2x128xf32>
    %503 = math.tanh %502 : vector<2x128xf32>
    %504 = arith.mulf %497, %503 : vector<2x128xf32>
    %c7_128 = arith.constant 7 : index
    %c0_129 = arith.constant 0 : index
    %c0_130 = arith.constant 0 : index
    %505 = vector.load %arg22[%c7_128, %c0_129, %c0_130] : memref<8x2x128xf32, #tpu.memory_space<vmem>>, vector<1x2x128xf32>
    %506 = vector.shape_cast %505 : vector<1x2x128xf32> to vector<2x128xf32>
    %507 = vector.shape_cast %504 : vector<2x128xf32> to vector<1x2x128xf32>
    tpu.vector_store %arg22[%c7_128, %c0_129, %c0_130], %507 {strides = array<i32>} : memref<8x2x128xf32, #tpu.memory_space<vmem>>, vector<1x2x128xf32>,
    %c0_131 = arith.constant 0 : index
    %c0_132 = arith.constant 0 : index
    %c0_133 = arith.constant 0 : index
    %508 = vector.load %arg23[%c0_131, %c0_132, %c0_133] : memref<8x2x128xf32, #tpu.memory_space<vmem>>, vector<1x2x128xf32>
    %509 = vector.shape_cast %508 : vector<1x2x128xf32> to vector<2x128xf32>
    %510 = vector.shape_cast %504 : vector<2x128xf32> to vector<1x2x128xf32>
    tpu.vector_store %arg23[%c0_131, %c0_132, %c0_133], %510 {strides = array<i32>} : memref<8x2x128xf32, #tpu.memory_space<vmem>>, vector<1x2x128xf32>,
    %c0_134 = arith.constant 0 : index
    %c0_135 = arith.constant 0 : index
    %c0_136 = arith.constant 0 : index
    %511 = vector.load %arg22[%c0_134, %c0_135, %c0_136] : memref<8x2x128xf32, #tpu.memory_space<vmem>>, vector<8x2x128xf32>
    %c0_137 = arith.constant 0 : index
    %c0_138 = arith.constant 0 : index
    %c0_139 = arith.constant 0 : index
    %512 = vector.load %arg23[%c0_137, %c0_138, %c0_139] : memref<8x2x128xf32, #tpu.memory_space<vmem>>, vector<8x2x128xf32>
    %513 = vector.shape_cast %24 : vector<1x1x128xi1> to vector<1x1x128xi1>
    %514 = vector.broadcast %513 : vector<1x1x128xi1> to vector<8x2x128xi1>
    %515 = arith.select %514, %511, %512 : vector<8x2x128xi1>, vector<8x2x128xf32>
    %cst_140 = arith.constant dense<0.000000e+00> : vector<8x2xf32>
    %516 = vector.multi_reduction <add>, %515, %cst_140 [2] : vector<8x2x128xf32> to vector<8x2xf32>
    %517 = vector.shape_cast %516 : vector<8x2xf32> to vector<8x2x1xf32>
    %cst_141 = arith.constant 1.280000e+02 : f32
    %518 = vector.broadcast %cst_141 : f32 to vector<8x2x1xf32>
    %519 = arith.divf %517, %518 : vector<8x2x1xf32>
    %520 = vector.broadcast %519 : vector<8x2x1xf32> to vector<8x2x128xf32>
    %521 = arith.subf %515, %520 : vector<8x2x128xf32>
    %522 = arith.mulf %521, %521 : vector<8x2x128xf32>
    %cst_142 = arith.constant dense<0.000000e+00> : vector<8x2xf32>
    %523 = vector.multi_reduction <add>, %522, %cst_142 [2] : vector<8x2x128xf32> to vector<8x2xf32>
    %524 = vector.shape_cast %523 : vector<8x2xf32> to vector<8x2x1xf32>
    %cst_143 = arith.constant 1.280000e+02 : f32
    %525 = vector.broadcast %cst_143 : f32 to vector<8x2x1xf32>
    %526 = arith.divf %524, %525 : vector<8x2x1xf32>
    %527 = vector.broadcast %519 : vector<8x2x1xf32> to vector<8x2x128xf32>
    %528 = arith.subf %515, %527 : vector<8x2x128xf32>
    %cst_144 = arith.constant 9.99999974E-6 : f32
    %529 = vector.broadcast %cst_144 : f32 to vector<8x2x1xf32>
    %530 = arith.addf %526, %529 : vector<8x2x1xf32>
    %531 = math.rsqrt %530 : vector<8x2x1xf32>
    %532 = vector.broadcast %531 : vector<8x2x1xf32> to vector<8x2x128xf32>
    %533 = arith.mulf %528, %532 : vector<8x2x128xf32>
    %c0_145 = arith.constant 0 : index
    %c0_146 = arith.constant 0 : index
    %534 = vector.load %arg9[%c0_145, %c0_146] : memref<1x128xf32, #tpu.memory_space<vmem>>, vector<1x128xf32>
    %535 = vector.shape_cast %534 : vector<1x128xf32> to vector<1x1x128xf32>
    %536 = vector.broadcast %535 : vector<1x1x128xf32> to vector<8x2x128xf32>
    %537 = arith.mulf %533, %536 : vector<8x2x128xf32>
    %c0_147 = arith.constant 0 : index
    %c0_148 = arith.constant 0 : index
    %538 = vector.load %arg10[%c0_147, %c0_148] : memref<1x128xf32, #tpu.memory_space<vmem>>, vector<1x128xf32>
    %539 = vector.shape_cast %538 : vector<1x128xf32> to vector<1x1x128xf32>
    %540 = vector.broadcast %539 : vector<1x1x128xf32> to vector<8x2x128xf32>
    %541 = arith.addf %537, %540 : vector<8x2x128xf32>
    %c0_149 = arith.constant 0 : index
    %c0_150 = arith.constant 0 : index
    %542 = vector.load %arg11[%c0_149, %c0_150] : memref<128x384xf32, #tpu.memory_space<vmem>>, vector<128x384xf32>
    %c0_151 = arith.constant 0 : index
    %c0_152 = arith.constant 0 : index
    %543 = vector.load %arg12[%c0_151, %c0_152] : memref<1x384xf32, #tpu.memory_space<vmem>>, vector<1x384xf32>
    %c0_153 = arith.constant 0 : index
    %c0_154 = arith.constant 0 : index
    %544 = vector.load %arg13[%c0_153, %c0_154] : memref<128x128xf32, #tpu.memory_space<vmem>>, vector<128x128xf32>
    %545 = vector.extract_strided_slice %541 {offsets = [0, 0, 0], sizes = [8, 1, 128], strides = [1, 1, 1]} : vector<8x2x128xf32> to vector<8x1x128xf32>
    %546 = vector.shape_cast %545 : vector<8x1x128xf32> to vector<8x128xf32>
    %cst_155 = arith.constant dense<0.000000e+00> : vector<8x384xf32>
    %547 = tpu.matmul %546, %542, %cst_155 {dimension_numbers = #tpu.dot_dimension_numbers<[1], [0], [0], [1], [0, 0, 1, 1], [], []>} : vector<8x128xf32>, vector<128x384xf32>, vector<8x384xf32> -> vector<8x384xf32>
    %548 = vector.broadcast %543 : vector<1x384xf32> to vector<8x384xf32>
    %549 = arith.addf %547, %548 : vector<8x384xf32>
    %550 = vector.extract_strided_slice %549 {offsets = [0, 0], sizes = [8, 128], strides = [1, 1]} : vector<8x384xf32> to vector<8x128xf32>
    %cst_156 = arith.constant 0.176776692 : f32
    %551 = vector.broadcast %cst_156 : f32 to vector<8x128xf32>
    %552 = arith.mulf %550, %551 : vector<8x128xf32>
    %553 = vector.extract_strided_slice %549 {offsets = [0, 128], sizes = [8, 128], strides = [1, 1]} : vector<8x384xf32> to vector<8x128xf32>
    %554 = vector.extract_strided_slice %549 {offsets = [0, 256], sizes = [8, 128], strides = [1, 1]} : vector<8x384xf32> to vector<8x128xf32>
    %cst_157 = arith.constant 0.000000e+00 : f32
    %555 = vector.broadcast %cst_157 : f32 to vector<1x128xf32>
    %556 = vector.extract_strided_slice %552 {offsets = [0, 0], sizes = [8, 32], strides = [1, 1]} : vector<8x128xf32> to vector<8x32xf32>
    %557 = vector.extract_strided_slice %553 {offsets = [0, 0], sizes = [8, 32], strides = [1, 1]} : vector<8x128xf32> to vector<8x32xf32>
    %558 = vector.extract_strided_slice %554 {offsets = [0, 0], sizes = [8, 32], strides = [1, 1]} : vector<8x128xf32> to vector<8x32xf32>
    %cst_158 = arith.constant dense<0.000000e+00> : vector<8x8xf32>
    %559 = tpu.matmul %556, %557, %cst_158 {dimension_numbers = #tpu.dot_dimension_numbers<[1], [1], [0], [0], [0, 0, 1, 0], [], []>} : vector<8x32xf32>, vector<8x32xf32>, vector<8x8xf32> -> vector<8x8xf32>
    %cst_159 = arith.constant dense<0xFF800000> : vector<8xf32>
    %560 = vector.multi_reduction <maximumf>, %559, %cst_159 [1] : vector<8x8xf32> to vector<8xf32>
    %cst_160 = arith.constant 0xFF800000 : f32
    %561 = vector.broadcast %cst_160 : f32 to vector<8xf32>
    %562 = arith.maximumf %561, %560 : vector<8xf32>
    %563 = vector.shape_cast %562 : vector<8xf32> to vector<8x1xf32>
    %564 = vector.broadcast %563 : vector<8x1xf32> to vector<8x8xf32>
    %565 = arith.subf %559, %564 : vector<8x8xf32>
    %566 = math.exp %565 : vector<8x8xf32>
    %cst_161 = arith.constant dense<0.000000e+00> : vector<8xf32>
    %567 = vector.multi_reduction <add>, %566, %cst_161 [1] : vector<8x8xf32> to vector<8xf32>
    %568 = vector.shape_cast %567 : vector<8xf32> to vector<8x1xf32>
    %569 = vector.broadcast %568 : vector<8x1xf32> to vector<8x8xf32>
    %570 = arith.divf %566, %569 : vector<8x8xf32>
    %cst_162 = arith.constant dense<0.000000e+00> : vector<8x32xf32>
    %571 = tpu.matmul %570, %558, %cst_162 {dimension_numbers = #tpu.dot_dimension_numbers<[1], [0], [0], [1], [0, 0, 1, 1], [], []>} : vector<8x8xf32>, vector<8x32xf32>, vector<8x32xf32> -> vector<8x32xf32>
    %cst_163 = arith.constant dense<0.000000e+00> : vector<32xf32>
    %572 = vector.multi_reduction <add>, %571, %cst_163 [0] : vector<8x32xf32> to vector<32xf32>
    %573 = vector.shape_cast %572 : vector<32xf32> to vector<1x32xf32>
    %cst_164 = arith.constant 8.000000e+00 : f32
    %574 = vector.broadcast %cst_164 : f32 to vector<1x32xf32>
    %575 = arith.divf %573, %574 : vector<1x32xf32>
    %576 = vector.extract_strided_slice %544 {offsets = [0, 0], sizes = [32, 128], strides = [1, 1]} : vector<128x128xf32> to vector<32x128xf32>
    %cst_165 = arith.constant dense<0.000000e+00> : vector<1x128xf32>
    %577 = tpu.matmul %575, %576, %cst_165 {dimension_numbers = #tpu.dot_dimension_numbers<[1], [0], [0], [1], [0, 0, 1, 1], [], []>} : vector<1x32xf32>, vector<32x128xf32>, vector<1x128xf32> -> vector<1x128xf32>
    %578 = arith.addf %555, %577 : vector<1x128xf32>
    %579 = vector.extract_strided_slice %552 {offsets = [0, 32], sizes = [8, 32], strides = [1, 1]} : vector<8x128xf32> to vector<8x32xf32>
    %580 = vector.extract_strided_slice %553 {offsets = [0, 32], sizes = [8, 32], strides = [1, 1]} : vector<8x128xf32> to vector<8x32xf32>
    %581 = vector.extract_strided_slice %554 {offsets = [0, 32], sizes = [8, 32], strides = [1, 1]} : vector<8x128xf32> to vector<8x32xf32>
    %cst_166 = arith.constant dense<0.000000e+00> : vector<8x8xf32>
    %582 = tpu.matmul %579, %580, %cst_166 {dimension_numbers = #tpu.dot_dimension_numbers<[1], [1], [0], [0], [0, 0, 1, 0], [], []>} : vector<8x32xf32>, vector<8x32xf32>, vector<8x8xf32> -> vector<8x8xf32>
    %cst_167 = arith.constant dense<0xFF800000> : vector<8xf32>
    %583 = vector.multi_reduction <maximumf>, %582, %cst_167 [1] : vector<8x8xf32> to vector<8xf32>
    %cst_168 = arith.constant 0xFF800000 : f32
    %584 = vector.broadcast %cst_168 : f32 to vector<8xf32>
    %585 = arith.maximumf %584, %583 : vector<8xf32>
    %586 = vector.shape_cast %585 : vector<8xf32> to vector<8x1xf32>
    %587 = vector.broadcast %586 : vector<8x1xf32> to vector<8x8xf32>
    %588 = arith.subf %582, %587 : vector<8x8xf32>
    %589 = math.exp %588 : vector<8x8xf32>
    %cst_169 = arith.constant dense<0.000000e+00> : vector<8xf32>
    %590 = vector.multi_reduction <add>, %589, %cst_169 [1] : vector<8x8xf32> to vector<8xf32>
    %591 = vector.shape_cast %590 : vector<8xf32> to vector<8x1xf32>
    %592 = vector.broadcast %591 : vector<8x1xf32> to vector<8x8xf32>
    %593 = arith.divf %589, %592 : vector<8x8xf32>
    %cst_170 = arith.constant dense<0.000000e+00> : vector<8x32xf32>
    %594 = tpu.matmul %593, %581, %cst_170 {dimension_numbers = #tpu.dot_dimension_numbers<[1], [0], [0], [1], [0, 0, 1, 1], [], []>} : vector<8x8xf32>, vector<8x32xf32>, vector<8x32xf32> -> vector<8x32xf32>
    %cst_171 = arith.constant dense<0.000000e+00> : vector<32xf32>
    %595 = vector.multi_reduction <add>, %594, %cst_171 [0] : vector<8x32xf32> to vector<32xf32>
    %596 = vector.shape_cast %595 : vector<32xf32> to vector<1x32xf32>
    %cst_172 = arith.constant 8.000000e+00 : f32
    %597 = vector.broadcast %cst_172 : f32 to vector<1x32xf32>
    %598 = arith.divf %596, %597 : vector<1x32xf32>
    %599 = vector.extract_strided_slice %544 {offsets = [32, 0], sizes = [32, 128], strides = [1, 1]} : vector<128x128xf32> to vector<32x128xf32>
    %cst_173 = arith.constant dense<0.000000e+00> : vector<1x128xf32>
    %600 = tpu.matmul %598, %599, %cst_173 {dimension_numbers = #tpu.dot_dimension_numbers<[1], [0], [0], [1], [0, 0, 1, 1], [], []>} : vector<1x32xf32>, vector<32x128xf32>, vector<1x128xf32> -> vector<1x128xf32>
    %601 = arith.addf %578, %600 : vector<1x128xf32>
    %602 = vector.extract_strided_slice %552 {offsets = [0, 64], sizes = [8, 32], strides = [1, 1]} : vector<8x128xf32> to vector<8x32xf32>
    %603 = vector.extract_strided_slice %553 {offsets = [0, 64], sizes = [8, 32], strides = [1, 1]} : vector<8x128xf32> to vector<8x32xf32>
    %604 = vector.extract_strided_slice %554 {offsets = [0, 64], sizes = [8, 32], strides = [1, 1]} : vector<8x128xf32> to vector<8x32xf32>
    %cst_174 = arith.constant dense<0.000000e+00> : vector<8x8xf32>
    %605 = tpu.matmul %602, %603, %cst_174 {dimension_numbers = #tpu.dot_dimension_numbers<[1], [1], [0], [0], [0, 0, 1, 0], [], []>} : vector<8x32xf32>, vector<8x32xf32>, vector<8x8xf32> -> vector<8x8xf32>
    %cst_175 = arith.constant dense<0xFF800000> : vector<8xf32>
    %606 = vector.multi_reduction <maximumf>, %605, %cst_175 [1] : vector<8x8xf32> to vector<8xf32>
    %cst_176 = arith.constant 0xFF800000 : f32
    %607 = vector.broadcast %cst_176 : f32 to vector<8xf32>
    %608 = arith.maximumf %607, %606 : vector<8xf32>
    %609 = vector.shape_cast %608 : vector<8xf32> to vector<8x1xf32>
    %610 = vector.broadcast %609 : vector<8x1xf32> to vector<8x8xf32>
    %611 = arith.subf %605, %610 : vector<8x8xf32>
    %612 = math.exp %611 : vector<8x8xf32>
    %cst_177 = arith.constant dense<0.000000e+00> : vector<8xf32>
    %613 = vector.multi_reduction <add>, %612, %cst_177 [1] : vector<8x8xf32> to vector<8xf32>
    %614 = vector.shape_cast %613 : vector<8xf32> to vector<8x1xf32>
    %615 = vector.broadcast %614 : vector<8x1xf32> to vector<8x8xf32>
    %616 = arith.divf %612, %615 : vector<8x8xf32>
    %cst_178 = arith.constant dense<0.000000e+00> : vector<8x32xf32>
    %617 = tpu.matmul %616, %604, %cst_178 {dimension_numbers = #tpu.dot_dimension_numbers<[1], [0], [0], [1], [0, 0, 1, 1], [], []>} : vector<8x8xf32>, vector<8x32xf32>, vector<8x32xf32> -> vector<8x32xf32>
    %cst_179 = arith.constant dense<0.000000e+00> : vector<32xf32>
    %618 = vector.multi_reduction <add>, %617, %cst_179 [0] : vector<8x32xf32> to vector<32xf32>
    %619 = vector.shape_cast %618 : vector<32xf32> to vector<1x32xf32>
    %cst_180 = arith.constant 8.000000e+00 : f32
    %620 = vector.broadcast %cst_180 : f32 to vector<1x32xf32>
    %621 = arith.divf %619, %620 : vector<1x32xf32>
    %622 = vector.extract_strided_slice %544 {offsets = [64, 0], sizes = [32, 128], strides = [1, 1]} : vector<128x128xf32> to vector<32x128xf32>
    %cst_181 = arith.constant dense<0.000000e+00> : vector<1x128xf32>
    %623 = tpu.matmul %621, %622, %cst_181 {dimension_numbers = #tpu.dot_dimension_numbers<[1], [0], [0], [1], [0, 0, 1, 1], [], []>} : vector<1x32xf32>, vector<32x128xf32>, vector<1x128xf32> -> vector<1x128xf32>
    %624 = arith.addf %601, %623 : vector<1x128xf32>
    %625 = vector.extract_strided_slice %552 {offsets = [0, 96], sizes = [8, 32], strides = [1, 1]} : vector<8x128xf32> to vector<8x32xf32>
    %626 = vector.extract_strided_slice %553 {offsets = [0, 96], sizes = [8, 32], strides = [1, 1]} : vector<8x128xf32> to vector<8x32xf32>
    %627 = vector.extract_strided_slice %554 {offsets = [0, 96], sizes = [8, 32], strides = [1, 1]} : vector<8x128xf32> to vector<8x32xf32>
    %cst_182 = arith.constant dense<0.000000e+00> : vector<8x8xf32>
    %628 = tpu.matmul %625, %626, %cst_182 {dimension_numbers = #tpu.dot_dimension_numbers<[1], [1], [0], [0], [0, 0, 1, 0], [], []>} : vector<8x32xf32>, vector<8x32xf32>, vector<8x8xf32> -> vector<8x8xf32>
    %cst_183 = arith.constant dense<0xFF800000> : vector<8xf32>
    %629 = vector.multi_reduction <maximumf>, %628, %cst_183 [1] : vector<8x8xf32> to vector<8xf32>
    %cst_184 = arith.constant 0xFF800000 : f32
    %630 = vector.broadcast %cst_184 : f32 to vector<8xf32>
    %631 = arith.maximumf %630, %629 : vector<8xf32>
    %632 = vector.shape_cast %631 : vector<8xf32> to vector<8x1xf32>
    %633 = vector.broadcast %632 : vector<8x1xf32> to vector<8x8xf32>
    %634 = arith.subf %628, %633 : vector<8x8xf32>
    %635 = math.exp %634 : vector<8x8xf32>
    %cst_185 = arith.constant dense<0.000000e+00> : vector<8xf32>
    %636 = vector.multi_reduction <add>, %635, %cst_185 [1] : vector<8x8xf32> to vector<8xf32>
    %637 = vector.shape_cast %636 : vector<8xf32> to vector<8x1xf32>
    %638 = vector.broadcast %637 : vector<8x1xf32> to vector<8x8xf32>
    %639 = arith.divf %635, %638 : vector<8x8xf32>
    %cst_186 = arith.constant dense<0.000000e+00> : vector<8x32xf32>
    %640 = tpu.matmul %639, %627, %cst_186 {dimension_numbers = #tpu.dot_dimension_numbers<[1], [0], [0], [1], [0, 0, 1, 1], [], []>} : vector<8x8xf32>, vector<8x32xf32>, vector<8x32xf32> -> vector<8x32xf32>
    %cst_187 = arith.constant dense<0.000000e+00> : vector<32xf32>
    %641 = vector.multi_reduction <add>, %640, %cst_187 [0] : vector<8x32xf32> to vector<32xf32>
    %642 = vector.shape_cast %641 : vector<32xf32> to vector<1x32xf32>
    %cst_188 = arith.constant 8.000000e+00 : f32
    %643 = vector.broadcast %cst_188 : f32 to vector<1x32xf32>
    %644 = arith.divf %642, %643 : vector<1x32xf32>
    %645 = vector.extract_strided_slice %544 {offsets = [96, 0], sizes = [32, 128], strides = [1, 1]} : vector<128x128xf32> to vector<32x128xf32>
    %cst_189 = arith.constant dense<0.000000e+00> : vector<1x128xf32>
    %646 = tpu.matmul %644, %645, %cst_189 {dimension_numbers = #tpu.dot_dimension_numbers<[1], [0], [0], [1], [0, 0, 1, 1], [], []>} : vector<1x32xf32>, vector<32x128xf32>, vector<1x128xf32> -> vector<1x128xf32>
    %647 = arith.addf %624, %646 : vector<1x128xf32>
    %648 = vector.extract_strided_slice %541 {offsets = [0, 1, 0], sizes = [8, 1, 128], strides = [1, 1, 1]} : vector<8x2x128xf32> to vector<8x1x128xf32>
    %649 = vector.shape_cast %648 : vector<8x1x128xf32> to vector<8x128xf32>
    %cst_190 = arith.constant dense<0.000000e+00> : vector<8x384xf32>
    %650 = tpu.matmul %649, %542, %cst_190 {dimension_numbers = #tpu.dot_dimension_numbers<[1], [0], [0], [1], [0, 0, 1, 1], [], []>} : vector<8x128xf32>, vector<128x384xf32>, vector<8x384xf32> -> vector<8x384xf32>
    %651 = vector.broadcast %543 : vector<1x384xf32> to vector<8x384xf32>
    %652 = arith.addf %650, %651 : vector<8x384xf32>
    %653 = vector.extract_strided_slice %652 {offsets = [0, 0], sizes = [8, 128], strides = [1, 1]} : vector<8x384xf32> to vector<8x128xf32>
    %cst_191 = arith.constant 0.176776692 : f32
    %654 = vector.broadcast %cst_191 : f32 to vector<8x128xf32>
    %655 = arith.mulf %653, %654 : vector<8x128xf32>
    %656 = vector.extract_strided_slice %652 {offsets = [0, 128], sizes = [8, 128], strides = [1, 1]} : vector<8x384xf32> to vector<8x128xf32>
    %657 = vector.extract_strided_slice %652 {offsets = [0, 256], sizes = [8, 128], strides = [1, 1]} : vector<8x384xf32> to vector<8x128xf32>
    %cst_192 = arith.constant 0.000000e+00 : f32
    %658 = vector.broadcast %cst_192 : f32 to vector<1x128xf32>
    %659 = vector.extract_strided_slice %655 {offsets = [0, 0], sizes = [8, 32], strides = [1, 1]} : vector<8x128xf32> to vector<8x32xf32>
    %660 = vector.extract_strided_slice %656 {offsets = [0, 0], sizes = [8, 32], strides = [1, 1]} : vector<8x128xf32> to vector<8x32xf32>
    %661 = vector.extract_strided_slice %657 {offsets = [0, 0], sizes = [8, 32], strides = [1, 1]} : vector<8x128xf32> to vector<8x32xf32>
    %cst_193 = arith.constant dense<0.000000e+00> : vector<8x8xf32>
    %662 = tpu.matmul %659, %660, %cst_193 {dimension_numbers = #tpu.dot_dimension_numbers<[1], [1], [0], [0], [0, 0, 1, 0], [], []>} : vector<8x32xf32>, vector<8x32xf32>, vector<8x8xf32> -> vector<8x8xf32>
    %cst_194 = arith.constant dense<0xFF800000> : vector<8xf32>
    %663 = vector.multi_reduction <maximumf>, %662, %cst_194 [1] : vector<8x8xf32> to vector<8xf32>
    %cst_195 = arith.constant 0xFF800000 : f32
    %664 = vector.broadcast %cst_195 : f32 to vector<8xf32>
    %665 = arith.maximumf %664, %663 : vector<8xf32>
    %666 = vector.shape_cast %665 : vector<8xf32> to vector<8x1xf32>
    %667 = vector.broadcast %666 : vector<8x1xf32> to vector<8x8xf32>
    %668 = arith.subf %662, %667 : vector<8x8xf32>
    %669 = math.exp %668 : vector<8x8xf32>
    %cst_196 = arith.constant dense<0.000000e+00> : vector<8xf32>
    %670 = vector.multi_reduction <add>, %669, %cst_196 [1] : vector<8x8xf32> to vector<8xf32>
    %671 = vector.shape_cast %670 : vector<8xf32> to vector<8x1xf32>
    %672 = vector.broadcast %671 : vector<8x1xf32> to vector<8x8xf32>
    %673 = arith.divf %669, %672 : vector<8x8xf32>
    %cst_197 = arith.constant dense<0.000000e+00> : vector<8x32xf32>
    %674 = tpu.matmul %673, %661, %cst_197 {dimension_numbers = #tpu.dot_dimension_numbers<[1], [0], [0], [1], [0, 0, 1, 1], [], []>} : vector<8x8xf32>, vector<8x32xf32>, vector<8x32xf32> -> vector<8x32xf32>
    %cst_198 = arith.constant dense<0.000000e+00> : vector<32xf32>
    %675 = vector.multi_reduction <add>, %674, %cst_198 [0] : vector<8x32xf32> to vector<32xf32>
    %676 = vector.shape_cast %675 : vector<32xf32> to vector<1x32xf32>
    %cst_199 = arith.constant 8.000000e+00 : f32
    %677 = vector.broadcast %cst_199 : f32 to vector<1x32xf32>
    %678 = arith.divf %676, %677 : vector<1x32xf32>
    %679 = vector.extract_strided_slice %544 {offsets = [0, 0], sizes = [32, 128], strides = [1, 1]} : vector<128x128xf32> to vector<32x128xf32>
    %cst_200 = arith.constant dense<0.000000e+00> : vector<1x128xf32>
    %680 = tpu.matmul %678, %679, %cst_200 {dimension_numbers = #tpu.dot_dimension_numbers<[1], [0], [0], [1], [0, 0, 1, 1], [], []>} : vector<1x32xf32>, vector<32x128xf32>, vector<1x128xf32> -> vector<1x128xf32>
    %681 = arith.addf %658, %680 : vector<1x128xf32>
    %682 = vector.extract_strided_slice %655 {offsets = [0, 32], sizes = [8, 32], strides = [1, 1]} : vector<8x128xf32> to vector<8x32xf32>
    %683 = vector.extract_strided_slice %656 {offsets = [0, 32], sizes = [8, 32], strides = [1, 1]} : vector<8x128xf32> to vector<8x32xf32>
    %684 = vector.extract_strided_slice %657 {offsets = [0, 32], sizes = [8, 32], strides = [1, 1]} : vector<8x128xf32> to vector<8x32xf32>
    %cst_201 = arith.constant dense<0.000000e+00> : vector<8x8xf32>
    %685 = tpu.matmul %682, %683, %cst_201 {dimension_numbers = #tpu.dot_dimension_numbers<[1], [1], [0], [0], [0, 0, 1, 0], [], []>} : vector<8x32xf32>, vector<8x32xf32>, vector<8x8xf32> -> vector<8x8xf32>
    %cst_202 = arith.constant dense<0xFF800000> : vector<8xf32>
    %686 = vector.multi_reduction <maximumf>, %685, %cst_202 [1] : vector<8x8xf32> to vector<8xf32>
    %cst_203 = arith.constant 0xFF800000 : f32
    %687 = vector.broadcast %cst_203 : f32 to vector<8xf32>
    %688 = arith.maximumf %687, %686 : vector<8xf32>
    %689 = vector.shape_cast %688 : vector<8xf32> to vector<8x1xf32>
    %690 = vector.broadcast %689 : vector<8x1xf32> to vector<8x8xf32>
    %691 = arith.subf %685, %690 : vector<8x8xf32>
    %692 = math.exp %691 : vector<8x8xf32>
    %cst_204 = arith.constant dense<0.000000e+00> : vector<8xf32>
    %693 = vector.multi_reduction <add>, %692, %cst_204 [1] : vector<8x8xf32> to vector<8xf32>
    %694 = vector.shape_cast %693 : vector<8xf32> to vector<8x1xf32>
    %695 = vector.broadcast %694 : vector<8x1xf32> to vector<8x8xf32>
    %696 = arith.divf %692, %695 : vector<8x8xf32>
    %cst_205 = arith.constant dense<0.000000e+00> : vector<8x32xf32>
    %697 = tpu.matmul %696, %684, %cst_205 {dimension_numbers = #tpu.dot_dimension_numbers<[1], [0], [0], [1], [0, 0, 1, 1], [], []>} : vector<8x8xf32>, vector<8x32xf32>, vector<8x32xf32> -> vector<8x32xf32>
    %cst_206 = arith.constant dense<0.000000e+00> : vector<32xf32>
    %698 = vector.multi_reduction <add>, %697, %cst_206 [0] : vector<8x32xf32> to vector<32xf32>
    %699 = vector.shape_cast %698 : vector<32xf32> to vector<1x32xf32>
    %cst_207 = arith.constant 8.000000e+00 : f32
    %700 = vector.broadcast %cst_207 : f32 to vector<1x32xf32>
    %701 = arith.divf %699, %700 : vector<1x32xf32>
    %702 = vector.extract_strided_slice %544 {offsets = [32, 0], sizes = [32, 128], strides = [1, 1]} : vector<128x128xf32> to vector<32x128xf32>
    %cst_208 = arith.constant dense<0.000000e+00> : vector<1x128xf32>
    %703 = tpu.matmul %701, %702, %cst_208 {dimension_numbers = #tpu.dot_dimension_numbers<[1], [0], [0], [1], [0, 0, 1, 1], [], []>} : vector<1x32xf32>, vector<32x128xf32>, vector<1x128xf32> -> vector<1x128xf32>
    %704 = arith.addf %681, %703 : vector<1x128xf32>
    %705 = vector.extract_strided_slice %655 {offsets = [0, 64], sizes = [8, 32], strides = [1, 1]} : vector<8x128xf32> to vector<8x32xf32>
    %706 = vector.extract_strided_slice %656 {offsets = [0, 64], sizes = [8, 32], strides = [1, 1]} : vector<8x128xf32> to vector<8x32xf32>
    %707 = vector.extract_strided_slice %657 {offsets = [0, 64], sizes = [8, 32], strides = [1, 1]} : vector<8x128xf32> to vector<8x32xf32>
    %cst_209 = arith.constant dense<0.000000e+00> : vector<8x8xf32>
    %708 = tpu.matmul %705, %706, %cst_209 {dimension_numbers = #tpu.dot_dimension_numbers<[1], [1], [0], [0], [0, 0, 1, 0], [], []>} : vector<8x32xf32>, vector<8x32xf32>, vector<8x8xf32> -> vector<8x8xf32>
    %cst_210 = arith.constant dense<0xFF800000> : vector<8xf32>
    %709 = vector.multi_reduction <maximumf>, %708, %cst_210 [1] : vector<8x8xf32> to vector<8xf32>
    %cst_211 = arith.constant 0xFF800000 : f32
    %710 = vector.broadcast %cst_211 : f32 to vector<8xf32>
    %711 = arith.maximumf %710, %709 : vector<8xf32>
    %712 = vector.shape_cast %711 : vector<8xf32> to vector<8x1xf32>
    %713 = vector.broadcast %712 : vector<8x1xf32> to vector<8x8xf32>
    %714 = arith.subf %708, %713 : vector<8x8xf32>
    %715 = math.exp %714 : vector<8x8xf32>
    %cst_212 = arith.constant dense<0.000000e+00> : vector<8xf32>
    %716 = vector.multi_reduction <add>, %715, %cst_212 [1] : vector<8x8xf32> to vector<8xf32>
    %717 = vector.shape_cast %716 : vector<8xf32> to vector<8x1xf32>
    %718 = vector.broadcast %717 : vector<8x1xf32> to vector<8x8xf32>
    %719 = arith.divf %715, %718 : vector<8x8xf32>
    %cst_213 = arith.constant dense<0.000000e+00> : vector<8x32xf32>
    %720 = tpu.matmul %719, %707, %cst_213 {dimension_numbers = #tpu.dot_dimension_numbers<[1], [0], [0], [1], [0, 0, 1, 1], [], []>} : vector<8x8xf32>, vector<8x32xf32>, vector<8x32xf32> -> vector<8x32xf32>
    %cst_214 = arith.constant dense<0.000000e+00> : vector<32xf32>
    %721 = vector.multi_reduction <add>, %720, %cst_214 [0] : vector<8x32xf32> to vector<32xf32>
    %722 = vector.shape_cast %721 : vector<32xf32> to vector<1x32xf32>
    %cst_215 = arith.constant 8.000000e+00 : f32
    %723 = vector.broadcast %cst_215 : f32 to vector<1x32xf32>
    %724 = arith.divf %722, %723 : vector<1x32xf32>
    %725 = vector.extract_strided_slice %544 {offsets = [64, 0], sizes = [32, 128], strides = [1, 1]} : vector<128x128xf32> to vector<32x128xf32>
    %cst_216 = arith.constant dense<0.000000e+00> : vector<1x128xf32>
    %726 = tpu.matmul %724, %725, %cst_216 {dimension_numbers = #tpu.dot_dimension_numbers<[1], [0], [0], [1], [0, 0, 1, 1], [], []>} : vector<1x32xf32>, vector<32x128xf32>, vector<1x128xf32> -> vector<1x128xf32>
    %727 = arith.addf %704, %726 : vector<1x128xf32>
    %728 = vector.extract_strided_slice %655 {offsets = [0, 96], sizes = [8, 32], strides = [1, 1]} : vector<8x128xf32> to vector<8x32xf32>
    %729 = vector.extract_strided_slice %656 {offsets = [0, 96], sizes = [8, 32], strides = [1, 1]} : vector<8x128xf32> to vector<8x32xf32>
    %730 = vector.extract_strided_slice %657 {offsets = [0, 96], sizes = [8, 32], strides = [1, 1]} : vector<8x128xf32> to vector<8x32xf32>
    %cst_217 = arith.constant dense<0.000000e+00> : vector<8x8xf32>
    %731 = tpu.matmul %728, %729, %cst_217 {dimension_numbers = #tpu.dot_dimension_numbers<[1], [1], [0], [0], [0, 0, 1, 0], [], []>} : vector<8x32xf32>, vector<8x32xf32>, vector<8x8xf32> -> vector<8x8xf32>
    %cst_218 = arith.constant dense<0xFF800000> : vector<8xf32>
    %732 = vector.multi_reduction <maximumf>, %731, %cst_218 [1] : vector<8x8xf32> to vector<8xf32>
    %cst_219 = arith.constant 0xFF800000 : f32
    %733 = vector.broadcast %cst_219 : f32 to vector<8xf32>
    %734 = arith.maximumf %733, %732 : vector<8xf32>
    %735 = vector.shape_cast %734 : vector<8xf32> to vector<8x1xf32>
    %736 = vector.broadcast %735 : vector<8x1xf32> to vector<8x8xf32>
    %737 = arith.subf %731, %736 : vector<8x8xf32>
    %738 = math.exp %737 : vector<8x8xf32>
    %cst_220 = arith.constant dense<0.000000e+00> : vector<8xf32>
    %739 = vector.multi_reduction <add>, %738, %cst_220 [1] : vector<8x8xf32> to vector<8xf32>
    %740 = vector.shape_cast %739 : vector<8xf32> to vector<8x1xf32>
    %741 = vector.broadcast %740 : vector<8x1xf32> to vector<8x8xf32>
    %742 = arith.divf %738, %741 : vector<8x8xf32>
    %cst_221 = arith.constant dense<0.000000e+00> : vector<8x32xf32>
    %743 = tpu.matmul %742, %730, %cst_221 {dimension_numbers = #tpu.dot_dimension_numbers<[1], [0], [0], [1], [0, 0, 1, 1], [], []>} : vector<8x8xf32>, vector<8x32xf32>, vector<8x32xf32> -> vector<8x32xf32>
    %cst_222 = arith.constant dense<0.000000e+00> : vector<32xf32>
    %744 = vector.multi_reduction <add>, %743, %cst_222 [0] : vector<8x32xf32> to vector<32xf32>
    %745 = vector.shape_cast %744 : vector<32xf32> to vector<1x32xf32>
    %cst_223 = arith.constant 8.000000e+00 : f32
    %746 = vector.broadcast %cst_223 : f32 to vector<1x32xf32>
    %747 = arith.divf %745, %746 : vector<1x32xf32>
    %748 = vector.extract_strided_slice %544 {offsets = [96, 0], sizes = [32, 128], strides = [1, 1]} : vector<128x128xf32> to vector<32x128xf32>
    %cst_224 = arith.constant dense<0.000000e+00> : vector<1x128xf32>
    %749 = tpu.matmul %747, %748, %cst_224 {dimension_numbers = #tpu.dot_dimension_numbers<[1], [0], [0], [1], [0, 0, 1, 1], [], []>} : vector<1x32xf32>, vector<32x128xf32>, vector<1x128xf32> -> vector<1x128xf32>
    %750 = arith.addf %727, %749 : vector<1x128xf32>
    %751 = tpu.concatenate %647, %750 in 0 : vector<1x128xf32>, vector<1x128xf32> -> vector<2x128xf32>
    %c0_225 = arith.constant 0 : index
    %c0_226 = arith.constant 0 : index
    %752 = vector.load %arg14[%c0_225, %c0_226] : memref<1x128xf32, #tpu.memory_space<vmem>>, vector<1x128xf32>
    %753 = vector.broadcast %752 : vector<1x128xf32> to vector<2x128xf32>
    %754 = arith.addf %751, %753 : vector<2x128xf32>
    %c0_227 = arith.constant 0 : index
    %c0_228 = arith.constant 0 : index
    %755 = vector.load %arg15[%c0_227, %c0_228] : memref<128x64xf32, #tpu.memory_space<vmem>>, vector<128x64xf32>
    %cst_229 = arith.constant dense<0.000000e+00> : vector<2x64xf32>
    %756 = tpu.matmul %754, %755, %cst_229 {dimension_numbers = #tpu.dot_dimension_numbers<[1], [0], [0], [1], [0, 0, 1, 1], [], []>} : vector<2x128xf32>, vector<128x64xf32>, vector<2x64xf32> -> vector<2x64xf32>
    %c0_230 = arith.constant 0 : index
    %c0_231 = arith.constant 0 : index
    %757 = vector.load %arg16[%c0_230, %c0_231] : memref<1x64xf32, #tpu.memory_space<vmem>>, vector<1x64xf32>
    %758 = vector.broadcast %757 : vector<1x64xf32> to vector<2x64xf32>
    %759 = arith.addf %756, %758 : vector<2x64xf32>
    %cst_232 = arith.constant 0.000000e+00 : f32
    %760 = vector.broadcast %cst_232 : f32 to vector<2x64xf32>
    %761 = arith.maximumf %759, %760 : vector<2x64xf32>
    %c0_233 = arith.constant 0 : index
    %c0_234 = arith.constant 0 : index
    %762 = vector.load %arg17[%c0_233, %c0_234] : memref<64x64xf32, #tpu.memory_space<vmem>>, vector<64x64xf32>
    %cst_235 = arith.constant dense<0.000000e+00> : vector<2x64xf32>
    %763 = tpu.matmul %761, %762, %cst_235 {dimension_numbers = #tpu.dot_dimension_numbers<[1], [0], [0], [1], [0, 0, 1, 1], [], []>} : vector<2x64xf32>, vector<64x64xf32>, vector<2x64xf32> -> vector<2x64xf32>
    %c0_236 = arith.constant 0 : index
    %c0_237 = arith.constant 0 : index
    %764 = vector.load %arg18[%c0_236, %c0_237] : memref<1x64xf32, #tpu.memory_space<vmem>>, vector<1x64xf32>
    %765 = vector.broadcast %764 : vector<1x64xf32> to vector<2x64xf32>
    %766 = arith.addf %763, %765 : vector<2x64xf32>
    %c0_238 = arith.constant 0 : index
    %c0_239 = arith.constant 0 : index
    %767 = vector.load %arg19[%c0_238, %c0_239] : memref<2x64xf32, #tpu.memory_space<vmem>>, vector<2x64xf32>
    tpu.vector_store %arg19[%c0_238, %c0_239], %766 {strides = array<i32>} : memref<2x64xf32, #tpu.memory_space<vmem>>, vector<2x64xf32>,
    return
  }
  func.func @transform_0(%arg0: i32) -> (i32, i32, i32) {
    %c0_i32 = arith.constant 0 : i32
    %c0_i32_0 = arith.constant 0 : i32
    %c0_i32_1 = arith.constant 0 : i32
    %c0_i32_2 = arith.constant 0 : i32
    return %c0_i32, %c0_i32_0, %c0_i32_1 : i32, i32, i32
  }
  func.func @transform_1(%arg0: i32) -> (i32, i32, i32) {
    %c0_i32 = arith.constant 0 : i32
    %c0_i32_0 = arith.constant 0 : i32
    %c0_i32_1 = arith.constant 0 : i32
    %c0_i32_2 = arith.constant 0 : i32
    return %c0_i32, %c0_i32_0, %c0_i32_1 : i32, i32, i32
  }
  func.func @transform_2(%arg0: i32) -> (i32, i32) {
    %c0_i32 = arith.constant 0 : i32
    %c0_i32_0 = arith.constant 0 : i32
    %c0_i32_1 = arith.constant 0 : i32
    return %c0_i32, %c0_i32_0 : i32, i32
  }
  func.func @transform_3(%arg0: i32) -> (i32, i32) {
    %c0_i32 = arith.constant 0 : i32
    %c0_i32_0 = arith.constant 0 : i32
    %c0_i32_1 = arith.constant 0 : i32
    return %c0_i32, %c0_i32_0 : i32, i32
  }
  func.func @transform_4(%arg0: i32) -> (i32, i32) {
    %c0_i32 = arith.constant 0 : i32
    %c0_i32_0 = arith.constant 0 : i32
    %c0_i32_1 = arith.constant 0 : i32
    return %c0_i32, %c0_i32_0 : i32, i32
  }
  func.func @transform_5(%arg0: i32) -> (i32, i32) {
    %c0_i32 = arith.constant 0 : i32
    %c0_i32_0 = arith.constant 0 : i32
    %c0_i32_1 = arith.constant 0 : i32
    return %c0_i32, %c0_i32_0 : i32, i32
  }
  func.func @transform_6(%arg0: i32) -> (i32, i32) {
    %c0_i32 = arith.constant 0 : i32
    %c0_i32_0 = arith.constant 0 : i32
    %c0_i32_1 = arith.constant 0 : i32
    return %c0_i32, %c0_i32_0 : i32, i32
  }
  func.func @transform_7(%arg0: i32) -> (i32, i32) {
    %c0_i32 = arith.constant 0 : i32
    %c0_i32_0 = arith.constant 0 : i32
    %c0_i32_1 = arith.constant 0 : i32
    return %c0_i32, %c0_i32_0 : i32, i32
  }
  func.func @transform_8(%arg0: i32) -> (i32, i32) {
    %c0_i32 = arith.constant 0 : i32
    %c0_i32_0 = arith.constant 0 : i32
    %c0_i32_1 = arith.constant 0 : i32
    return %c0_i32, %c0_i32_0 : i32, i32
  }
  func.func @transform_9(%arg0: i32) -> (i32, i32) {
    %c0_i32 = arith.constant 0 : i32
    %c0_i32_0 = arith.constant 0 : i32
    %c0_i32_1 = arith.constant 0 : i32
    return %c0_i32, %c0_i32_0 : i32, i32
  }
  func.func @transform_10(%arg0: i32) -> (i32, i32) {
    %c0_i32 = arith.constant 0 : i32
    %c0_i32_0 = arith.constant 0 : i32
    %c0_i32_1 = arith.constant 0 : i32
    return %c0_i32, %c0_i32_0 : i32, i32
  }
  func.func @transform_11(%arg0: i32) -> (i32, i32) {
    %c0_i32 = arith.constant 0 : i32
    %c0_i32_0 = arith.constant 0 : i32
    %c0_i32_1 = arith.constant 0 : i32
    return %c0_i32, %c0_i32_0 : i32, i32
  }
  func.func @transform_12(%arg0: i32) -> (i32, i32) {
    %c0_i32 = arith.constant 0 : i32
    %c0_i32_0 = arith.constant 0 : i32
    %c0_i32_1 = arith.constant 0 : i32
    return %c0_i32, %c0_i32_0 : i32, i32
  }
  func.func @transform_13(%arg0: i32) -> (i32, i32) {
    %c0_i32 = arith.constant 0 : i32
    %c0_i32_0 = arith.constant 0 : i32
    %c0_i32_1 = arith.constant 0 : i32
    return %c0_i32, %c0_i32_0 : i32, i32
  }
  func.func @transform_14(%arg0: i32) -> (i32, i32) {
    %c0_i32 = arith.constant 0 : i32
    %c0_i32_0 = arith.constant 0 : i32
    %c0_i32_1 = arith.constant 0 : i32
    return %c0_i32, %c0_i32_0 : i32, i32
  }
  func.func @transform_15(%arg0: i32) -> (i32, i32) {
    %c0_i32 = arith.constant 0 : i32
    %c0_i32_0 = arith.constant 0 : i32
    %c0_i32_1 = arith.constant 0 : i32
    return %c0_i32, %c0_i32_0 : i32, i32
  }
  func.func @transform_16(%arg0: i32) -> (i32, i32) {
    %c0_i32 = arith.constant 0 : i32
    %c0_i32_0 = arith.constant 0 : i32
    %c0_i32_1 = arith.constant 0 : i32
    return %c0_i32, %c0_i32_0 : i32, i32
  }
  func.func @transform_17(%arg0: i32) -> (i32, i32) {
    %c0_i32 = arith.constant 0 : i32
    %c0_i32_0 = arith.constant 0 : i32
    %c0_i32_1 = arith.constant 0 : i32
    return %c0_i32, %c0_i32_0 : i32, i32
  }
  func.func @transform_18(%arg0: i32) -> (i32, i32) {
    %c0_i32 = arith.constant 0 : i32
    %c0_i32_0 = arith.constant 0 : i32
    %c0_i32_1 = arith.constant 0 : i32
    return %c0_i32, %c0_i32_0 : i32, i32
  }
}

</mosaic_0001>

<llo_original>
// kernel: model_forward.1
$region0: #{model_forward.1}
  #allocation0 [shape = 'u32[]', space=smem, size = 0x4, offset = 0x4, fixed_abs, tag = 'smem constant byte address 0x4 - core index']
  #allocation1 [shape = 'u32[144,128]{1,0:T(1,128)}', space=vmem, size = 0x12000, scoped, tag = 'internal scratch']
  #allocation2 [shape = 'f32[64,128]{1,0:T(8,128)}', space=vmem, size = 0x8000, scoped, tag = 'scratch operand']
  #allocation3 [shape = 'f32[64,128]{1,0:T(8,128)}', space=vmem, size = 0x8000, scoped, tag = 'scratch operand']
  #allocation4 [shape = 'f32[8,2,128]{2,1,0:T(2,128)}', space=vmem, size = 0x2000, scoped, tag = 'scratch operand']
  #allocation5 [shape = 'f32[8,2,128]{2,1,0:T(2,128)}', space=vmem, size = 0x2000, scoped, tag = 'scratch operand']
  %s0 = inlined_call_operand.vmem [shape: f32[2,8,1], index: 0, kind: input, shape index: {}]
  %s1 = inlined_call_operand.vmem [shape: f32[2,8,1], index: 1, kind: input, shape index: {}]
  %s2 = inlined_call_operand.vmem [shape: f32[2,512], index: 2, kind: input, shape index: {}]
  %s3 = inlined_call_operand.hbm [shape: f32[128,512], index: 3, kind: input, shape index: {}]
  %s4 = inlined_call_operand.vmem [shape: f32[1,512], index: 4, kind: input, shape index: {}]
  %s5 = inlined_call_operand.hbm [shape: f32[128,512], index: 5, kind: input, shape index: {}]
  %s6 = inlined_call_operand.hbm [shape: f32[128,512], index: 6, kind: input, shape index: {}]
  %s7 = inlined_call_operand.vmem [shape: f32[1,512], index: 7, kind: input, shape index: {}]
  %s8 = inlined_call_operand.vmem [shape: f32[1,128], index: 8, kind: input, shape index: {}]
  %s9 = inlined_call_operand.vmem [shape: f32[1,128], index: 9, kind: input, shape index: {}]
  %s10 = inlined_call_operand.hbm [shape: f32[128,384], index: 10, kind: input, shape index: {}]
  %s11 = inlined_call_operand.vmem [shape: f32[1,384], index: 11, kind: input, shape index: {}]
  %s12 = inlined_call_operand.vmem [shape: f32[128,128], index: 12, kind: input, shape index: {}]
  %s13 = inlined_call_operand.vmem [shape: f32[1,128], index: 13, kind: input, shape index: {}]
  %s14 = inlined_call_operand.vmem [shape: f32[128,64], index: 14, kind: input, shape index: {}]
  %s15 = inlined_call_operand.vmem [shape: f32[1,64], index: 15, kind: input, shape index: {}]
  %s16 = inlined_call_operand.vmem [shape: f32[64,64], index: 16, kind: input, shape index: {}]
  %s17 = inlined_call_operand.vmem [shape: f32[1,64], index: 17, kind: input, shape index: {}]
  %s18 = inlined_call_operand.hbm [shape: f32[2,64], index: 18, kind: output, shape index: {}]
  %s19 = sld [smem:[#allocation0]]
  $region98: #{model_forward.1} parent=0
    _
  %s21 = ssub.s32 1, %s19
  %s22 = scalar_select 0, %s21, %s19
  $region1: #{model_forward.1} parent=0
    #allocation6 [shape = 'u8[262144]{0}', space=vmem, size = 0x40000, scoped, tag = 'input window, operand 3, single buffered']
    #allocation7 [shape = 's32[1]{0}', space=sflag, size = 0x4, scoped, tag = 'scoped memory for model_forward.1']
    #allocation8 [shape = 's32[1]{0}', space=sflag, size = 0x4, scoped, tag = 'scoped memory for model_forward.1']
    #allocation9 [shape = 'u8[262144]{0}', space=vmem, size = 0x40000, scoped, tag = 'input window, operand 5, single buffered']
    #allocation10 [shape = 's32[1]{0}', space=sflag, size = 0x4, scoped, tag = 'scoped memory for model_forward.1']
    #allocation11 [shape = 'u8[262144]{0}', space=vmem, size = 0x40000, scoped, tag = 'input window, operand 6, single buffered']
    #allocation12 [shape = 'u8[196608]{0}', space=vmem, size = 0x30000, scoped, tag = 'input window, operand 10, single buffered']
    #allocation13 [shape = 's32[1]{0}', space=sflag, size = 0x4, scoped, tag = 'scoped memory for model_forward.1']
    #allocation14 [shape = 'u8[1024]{0}', space=vmem, size = 0x400, scoped, tag = 'output window, operand 0, single buffered']
    %23 = vsyncpa [#allocation7], 0
    %24 = vsyncpa [#allocation10], 0
    %25 = vsyncpa [#allocation13], 0
    %26 = vsyncpa [#allocation8], 0
    // Predicated region
    $region2: #{model_forward.1} parent=1 // pred_check
      _
    $region3: #{model_forward.1} parent=1 // pred_check_branch
      %28 = sbr.rel (0) target = $region5
    $region4: #{model_forward.1} parent=1 // pred_region
      _
    $region5: #{model_forward.1} parent=1 // pred_fallthru
      _
    // Predicated region
    $region6: #{model_forward.1} parent=1 // pred_check
      _
    $region7: #{model_forward.1} parent=1 // pred_check_branch
      %30 = sbr.rel (0) target = $region9
    $region8: #{model_forward.1} parent=1 // pred_region
      _
    $region9: #{model_forward.1} parent=1 // pred_fallthru
      _
    // Predicated region
    $region10: #{model_forward.1} parent=1 // pred_check
      _
    $region11: #{model_forward.1} parent=1 // pred_check_branch
      %32 = sbr.rel (0) target = $region13
    $region12: #{model_forward.1} parent=1 // pred_region
      _
    $region13: #{model_forward.1} parent=1 // pred_fallthru
      _
    // Predicated region
    $region14: #{model_forward.1} parent=1 // pred_check
      _
    $region15: #{model_forward.1} parent=1 // pred_check_branch
      %34 = sbr.rel (0) target = $region17
    $region16: #{model_forward.1} parent=1 // pred_region
      %s36 = ssub.s32 8192, 8192
      %37 = vsyncadd [#allocation7], %s36
      %s38 = sshll.u32 [#allocation6], 4
      %s39 = int_to_ptr.vmem [resolvable:$true] %s38
      %44 = dma.hbm_to_vmem [thread:$0]  %s3, 8192, %s39, [#allocation7], 512, 512, 32
    $region17: #{model_forward.1} parent=1 // pred_fallthru
      _
    // Predicated region
    $region18: #{model_forward.1} parent=1 // pred_check
      _
    $region19: #{model_forward.1} parent=1 // pred_check_branch
      %46 = sbr.rel (0) target = $region21
    $region20: #{model_forward.1} parent=1 // pred_region
      _
    $region21: #{model_forward.1} parent=1 // pred_fallthru
      _
    // Predicated region
    $region22: #{model_forward.1} parent=1 // pred_check
      _
    $region23: #{model_forward.1} parent=1 // pred_check_branch
      %48 = sbr.rel (0) target = $region25
    $region24: #{model_forward.1} parent=1 // pred_region
      %s50 = ssub.s32 8192, 8192
      %51 = vsyncadd [#allocation10], %s50
      %s52 = sshll.u32 [#allocation9], 4
      %s53 = int_to_ptr.vmem [resolvable:$true] %s52
      %58 = dma.hbm_to_vmem [thread:$0]  %s5, 8192, %s53, [#allocation10], 512, 512, 32
    $region25: #{model_forward.1} parent=1 // pred_fallthru
      _
    // Predicated region
    $region26: #{model_forward.1} parent=1 // pred_check
      _
    $region27: #{model_forward.1} parent=1 // pred_check_branch
      %60 = sbr.rel (0) target = $region29
    $region28: #{model_forward.1} parent=1 // pred_region
      %s62 = ssub.s32 8192, 8192
      %63 = vsyncadd [#allocation10], %s62
      %s64 = sshll.u32 [#allocation11], 4
      %s65 = int_to_ptr.vmem [resolvable:$true] %s64
      %70 = dma.hbm_to_vmem [thread:$0]  %s6, 8192, %s65, [#allocation10], 512, 512, 32
    $region29: #{model_forward.1} parent=1 // pred_fallthru
      _
    // Predicated region
    $region30: #{model_forward.1} parent=1 // pred_check
      _
    $region31: #{model_forward.1} parent=1 // pred_check_branch
      %72 = sbr.rel (0) target = $region33
    $region32: #{model_forward.1} parent=1 // pred_region
      _
    $region33: #{model_forward.1} parent=1 // pred_fallthru
      _
    // Predicated region
    $region34: #{model_forward.1} parent=1 // pred_check
      _
    $region35: #{model_forward.1} parent=1 // pred_check_branch
      %74 = sbr.rel (0) target = $region37
    $region36: #{model_forward.1} parent=1 // pred_region
      _
    $region37: #{model_forward.1} parent=1 // pred_fallthru
      _
    // Predicated region
    $region38: #{model_forward.1} parent=1 // pred_check
      _
    $region39: #{model_forward.1} parent=1 // pred_check_branch
      %76 = sbr.rel (0) target = $region41
    $region40: #{model_forward.1} parent=1 // pred_region
      _
    $region41: #{model_forward.1} parent=1 // pred_fallthru
      _
    // Predicated region
    $region42: #{model_forward.1} parent=1 // pred_check
      _
    $region43: #{model_forward.1} parent=1 // pred_check_branch
      %78 = sbr.rel (0) target = $region45
    $region44: #{model_forward.1} parent=1 // pred_region
      %s80 = ssub.s32 6144, 6144
      %81 = vsyncadd [#allocation13], %s80
      %s82 = sshll.u32 [#allocation12], 4
      %s83 = int_to_ptr.vmem [resolvable:$true] %s82
      %88 = dma.hbm_to_vmem [thread:$0]  %s10, 6144, %s83, [#allocation13], 384, 384, 24
    $region45: #{model_forward.1} parent=1 // pred_fallthru
      _
    // Predicated region
    $region46: #{model_forward.1} parent=1 // pred_check
      _
    $region47: #{model_forward.1} parent=1 // pred_check_branch
      %90 = sbr.rel (0) target = $region49
    $region48: #{model_forward.1} parent=1 // pred_region
      _
    $region49: #{model_forward.1} parent=1 // pred_fallthru
      _
    // Predicated region
    $region50: #{model_forward.1} parent=1 // pred_check
      _
    $region51: #{model_forward.1} parent=1 // pred_check_branch
      %92 = sbr.rel (0) target = $region53
    $region52: #{model_forward.1} parent=1 // pred_region
      _
    $region53: #{model_forward.1} parent=1 // pred_fallthru
      _
    // Predicated region
    $region54: #{model_forward.1} parent=1 // pred_check
      _
    $region55: #{model_forward.1} parent=1 // pred_check_branch
      %94 = sbr.rel (0) target = $region57
    $region56: #{model_forward.1} parent=1 // pred_region
      _
    $region57: #{model_forward.1} parent=1 // pred_fallthru
      _
    // Predicated region
    $region58: #{model_forward.1} parent=1 // pred_check
      _
    $region59: #{model_forward.1} parent=1 // pred_check_branch
      %96 = sbr.rel (0) target = $region61
    $region60: #{model_forward.1} parent=1 // pred_region
      _
    $region61: #{model_forward.1} parent=1 // pred_fallthru
      _
    // Predicated region
    $region62: #{model_forward.1} parent=1 // pred_check
      _
    $region63: #{model_forward.1} parent=1 // pred_check_branch
      %98 = sbr.rel (0) target = $region65
    $region64: #{model_forward.1} parent=1 // pred_region
      _
    $region65: #{model_forward.1} parent=1 // pred_fallthru
      _
    // Predicated region
    $region66: #{model_forward.1} parent=1 // pred_check
      _
    $region67: #{model_forward.1} parent=1 // pred_check_branch
      %100 = sbr.rel (0) target = $region69
    $region68: #{model_forward.1} parent=1 // pred_region
      _
    $region69: #{model_forward.1} parent=1 // pred_fallthru
      _
    // Predicated region
    $region70: #{model_forward.1} parent=1 // pred_check
      _
    $region71: #{model_forward.1} parent=1 // pred_check_branch
      %102 = sbr.rel (0) target = $region73
    $region72: #{model_forward.1} parent=1 // pred_region
      _
    $region73: #{model_forward.1} parent=1 // pred_fallthru
      _
    // Predicated region
    $region74: #{model_forward.1} parent=1 // pred_check
      _
    $region75: #{model_forward.1} parent=1 // pred_check_branch
      %104 = sbr.rel (0) target = $region77
    $region76: #{model_forward.1} parent=1 // pred_region
      %105 = dma.done [#allocation7], 8192
    $region77: #{model_forward.1} parent=1 // pred_fallthru
      _
    // Predicated region
    $region78: #{model_forward.1} parent=1 // pred_check
      _
    $region79: #{model_forward.1} parent=1 // pred_check_branch
      %107 = sbr.rel (0) target = $region81
    $region80: #{model_forward.1} parent=1 // pred_region
      %108 = dma.done [#allocation10], 8192
    $region81: #{model_forward.1} parent=1 // pred_fallthru
      _
    // Predicated region
    $region82: #{model_forward.1} parent=1 // pred_check
      _
    $region83: #{model_forward.1} parent=1 // pred_check_branch
      %110 = sbr.rel (0) target = $region85
    $region84: #{model_forward.1} parent=1 // pred_region
      %111 = dma.done [#allocation10], 8192
    $region85: #{model_forward.1} parent=1 // pred_fallthru
      _
    // Predicated region
    $region86: #{model_forward.1} parent=1 // pred_check
      _
    $region87: #{model_forward.1} parent=1 // pred_check_branch
      %113 = sbr.rel (0) target = $region89
    $region88: #{model_forward.1} parent=1 // pred_region
      %114 = dma.done [#allocation13], 6144
    $region89: #{model_forward.1} parent=1 // pred_fallthru
      _
    %v115 = vlaneseq
    %v116 = vand.u32 %v115, 127
    %v117 = vadd.s32 %v116, 128
    %v118 = vadd.s32 %v116, 256
    %v119 = vadd.s32 %v116, 384
    %vm120 = vcmp.lt.s32.totalorder %v116, 0
    %v121 = vsub.s32 0, %v116
    %v122 = vsel %vm120, %v121, %v116
    %v123 = vshrl.u32 %v122, 7
    %v124 = vand.u32 %v122, 127
    %v125 = vsub.s32 0, %v124
    %v126 = vsel %vm120, %v125, %v124
    %vm127 = vcmp.lt.s32.totalorder %v117, 0
    %v128 = vsub.s32 0, %v117
    %v129 = vsel %vm127, %v128, %v117
    %v130 = vshrl.u32 %v129, 7
    %v131 = vand.u32 %v129, 127
    %v132 = vsub.s32 0, %v131
    %v133 = vsel %vm127, %v132, %v131
    %vm134 = vcmp.lt.s32.totalorder %v118, 0
    %v135 = vsub.s32 0, %v118
    %v136 = vsel %vm134, %v135, %v118
    %v137 = vshrl.u32 %v136, 7
    %v138 = vand.u32 %v136, 127
    %v139 = vsub.s32 0, %v138
    %v140 = vsel %vm134, %v139, %v138
    %vm141 = vcmp.lt.s32.totalorder %v119, 0
    %v142 = vsub.s32 0, %v119
    %v143 = vsel %vm141, %v142, %v119
    %v144 = vshrl.u32 %v143, 7
    %v145 = vand.u32 %v143, 127
    %v146 = vsub.s32 0, %v145
    %v147 = vsel %vm141, %v146, %v145
    %vm148 = vcmp.ne.s32.totalorder %v126, 0
    %vm149 = vcmp.ne.s32.totalorder %v133, 0
    %vm150 = vcmp.ne.s32.totalorder %v140, 0
    %vm151 = vcmp.ne.s32.totalorder %v147, 0
    %vm152 = vcmp.lt.s32.totalorder %v126, 0
    %vm153 = vcmp.lt.s32.totalorder %v133, 0
    %vm154 = vcmp.lt.s32.totalorder %v140, 0
    %vm155 = vcmp.lt.s32.totalorder %v147, 0
    %vm156 = vmand %vm152, %vm148
    %vm157 = vmand %vm153, %vm149
    %vm158 = vmand %vm154, %vm150
    %vm159 = vmand %vm155, %vm151
    %v160 = vadd.s32 %v126, 128
    %v161 = vadd.s32 %v133, 128
    %v162 = vadd.s32 %v140, 128
    %v163 = vadd.s32 %v147, 128
    %v164 = vsel %vm156, %v160, %v126
    %v165 = vsel %vm157, %v161, %v133
    %v166 = vsel %vm158, %v162, %v140
    %v167 = vsel %vm159, %v163, %v147
    %vm168 = vcmp.lt.s32.totalorder %v164, 64
    %vm169 = vcmp.lt.s32.totalorder %v165, 64
    %vm170 = vcmp.lt.s32.totalorder %v166, 64
    %vm171 = vcmp.lt.s32.totalorder %v167, 64
    %vm172 = vcmp.lt.s32.totalorder %v116, 64
    %173 = vst [vmem:[#allocation2] sm:$0xff] 0.0
    %174 = vst [vmem:[#allocation2 + $0x8] sm:$0xff] 0.0
    %175 = vst [vmem:[#allocation2 + $0x10] sm:$0xff] 0.0
    %176 = vst [vmem:[#allocation2 + $0x18] sm:$0xff] 0.0
    %177 = vst [vmem:[#allocation2 + $0x20] sm:$0xff] 0.0
    %178 = vst [vmem:[#allocation2 + $0x28] sm:$0xff] 0.0
    %179 = vst [vmem:[#allocation2 + $0x30] sm:$0xff] 0.0
    %180 = vst [vmem:[#allocation2 + $0x38] sm:$0xff] 0.0
    %181 = vst [vmem:[#allocation3] sm:$0xff] 0.0
    %182 = vst [vmem:[#allocation3 + $0x8] sm:$0xff] 0.0
    %183 = vst [vmem:[#allocation3 + $0x10] sm:$0xff] 0.0
    %184 = vst [vmem:[#allocation3 + $0x18] sm:$0xff] 0.0
    %185 = vst [vmem:[#allocation3 + $0x20] sm:$0xff] 0.0
    %186 = vst [vmem:[#allocation3 + $0x28] sm:$0xff] 0.0
    %187 = vst [vmem:[#allocation3 + $0x30] sm:$0xff] 0.0
    %188 = vst [vmem:[#allocation3 + $0x38] sm:$0xff] 0.0
    %v189 = vld [vmem:[%s2] sm:$0xff]
    %v190 = vld [vmem:[%s0] sm:$0xff]
    %v191 = vld [vmem:[%s0 + $0x8] sm:$0xff]
    %193 = vset.pattern.permute.xlu0 0
    %194 = vperm.xlu0 %193, %v190
    %v195 = vpop.permute.xlu0 %194
    %198 = vset.pattern.permute.xlu0 0
    %199 = vperm.xlu0 %198, %v191
    %v200 = vpop.permute.xlu0 %199
    %v203 = vlaneseq
    %v204 = vshrl.u32 %v203, 7
    %v205 = vsub.s32 0, %v204
    %v206 = vrot.slane %v189, %v205
    %v207 = vlaneseq
    %v208 = vshrl.u32 %v207, 7
    %v209 = vsub.s32 2, %v208
    %v210 = vrot.slane %v189, %v209
    %v211 = vlaneseq
    %v212 = vshrl.u32 %v211, 7
    %v213 = vsub.s32 4, %v212
    %v214 = vrot.slane %v189, %v213
    %v215 = vlaneseq
    %v216 = vshrl.u32 %v215, 7
    %v217 = vsub.s32 6, %v216
    %v218 = vrot.slane %v189, %v217
    %v223 = vlaneseq
    %v224 = vshrl.u32 %v223, 7
    %v225 = vsub.s32 0, %v224
    %v226 = vrot.slane %v206, %v225
    %v227 = vlaneseq
    %v228 = vshrl.u32 %v227, 7
    %v229 = vsub.s32 0, %v228
    %v230 = vrot.slane %v210, %v229
    %v231 = vlaneseq
    %v232 = vshrl.u32 %v231, 7
    %v233 = vsub.s32 0, %v232
    %v234 = vrot.slane %v214, %v233
    %v235 = vlaneseq
    %v236 = vshrl.u32 %v235, 7
    %v237 = vsub.s32 0, %v236
    %v238 = vrot.slane %v218, %v237
    %v239 = vmul.f32 %v195, %v226
    %v240 = vmul.f32 %v195, %v230
    %v241 = vmul.f32 %v195, %v234
    %v242 = vmul.f32 %v195, %v238
    %v243 = vmul.f32 %v200, %v226
    %v244 = vmul.f32 %v200, %v230
    %v245 = vmul.f32 %v200, %v234
    %v246 = vmul.f32 %v200, %v238
    %v247 = vld [vmem:[%s1] sm:$0xff]
    %v248 = vld [vmem:[%s1 + $0x8] sm:$0xff]
    %250 = vset.pattern.permute.xlu0 0
    %251 = vperm.xlu0 %250, %v247
    %v252 = vpop.permute.xlu0 %251
    %255 = vset.pattern.permute.xlu0 0
    %256 = vperm.xlu0 %255, %v248
    %v257 = vpop.permute.xlu0 %256
    %v259 = vlaneseq
    %v260 = vshrl.u32 %v259, 7
    %v261 = vsub.s32 1, %v260
    %v262 = vrot.slane %v189, %v261
    %v263 = vlaneseq
    %v264 = vshrl.u32 %v263, 7
    %v265 = vsub.s32 3, %v264
    %v266 = vrot.slane %v189, %v265
    %v267 = vlaneseq
    %v268 = vshrl.u32 %v267, 7
    %v269 = vsub.s32 5, %v268
    %v270 = vrot.slane %v189, %v269
    %v271 = vlaneseq
    %v272 = vshrl.u32 %v271, 7
    %v273 = vsub.s32 7, %v272
    %v274 = vrot.slane %v189, %v273
    %v279 = vlaneseq
    %v280 = vshrl.u32 %v279, 7
    %v281 = vsub.s32 1, %v280
    %v282 = vrot.slane %v262, %v281
    %v283 = vlaneseq
    %v284 = vshrl.u32 %v283, 7
    %v285 = vsub.s32 1, %v284
    %v286 = vrot.slane %v266, %v285
    %v287 = vlaneseq
    %v288 = vshrl.u32 %v287, 7
    %v289 = vsub.s32 1, %v288
    %v290 = vrot.slane %v270, %v289
    %v291 = vlaneseq
    %v292 = vshrl.u32 %v291, 7
    %v293 = vsub.s32 1, %v292
    %v294 = vrot.slane %v274, %v293
    %v295 = vmul.f32 %v252, %v282
    %v296 = vmul.f32 %v252, %v286
    %v297 = vmul.f32 %v252, %v290
    %v298 = vmul.f32 %v252, %v294
    %v299 = vmul.f32 %v257, %v282
    %v300 = vmul.f32 %v257, %v286
    %v301 = vmul.f32 %v257, %v290
    %v302 = vmul.f32 %v257, %v294
    %v303 = vadd.f32 %v239, %v295
    %v304 = vadd.f32 %v240, %v296
    %v305 = vadd.f32 %v241, %v297
    %v306 = vadd.f32 %v242, %v298
    %v307 = vadd.f32 %v243, %v299
    %v308 = vadd.f32 %v244, %v300
    %v309 = vadd.f32 %v245, %v301
    %v310 = vadd.f32 %v246, %v302
    %v311 = vld [vmem:[%s4] sm:$0xf]
    %v313 = vlaneseq
    %v314 = vshrl.u32 %v313, 7
    %v315 = vsub.s32 0, %v314
    %v316 = vrot.slane %v311, %v315
    %v317 = vlaneseq
    %v318 = vshrl.u32 %v317, 7
    %v319 = vsub.s32 1, %v318
    %v320 = vrot.slane %v311, %v319
    %v321 = vlaneseq
    %v322 = vshrl.u32 %v321, 7
    %v323 = vsub.s32 2, %v322
    %v324 = vrot.slane %v311, %v323
    %v325 = vlaneseq
    %v326 = vshrl.u32 %v325, 7
    %v327 = vsub.s32 3, %v326
    %v328 = vrot.slane %v311, %v327
    %v333 = vadd.f32 %v303, %v316
    %v334 = vadd.f32 %v304, %v320
    %v335 = vadd.f32 %v305, %v324
    %v336 = vadd.f32 %v306, %v328
    %v337 = vadd.f32 %v307, %v316
    %v338 = vadd.f32 %v308, %v320
    %v339 = vadd.f32 %v309, %v324
    %v340 = vadd.f32 %v310, %v328
    %v341 = vld [vmem:[#allocation6] sm:$0xff]
    %v342 = vld [vmem:[#allocation6 + $0x8] sm:$0xff]
    %v343 = vld [vmem:[#allocation6 + $0x10] sm:$0xff]
    %v344 = vld [vmem:[#allocation6 + $0x18] sm:$0xff]
    %v345 = vld [vmem:[#allocation6 + $0x20] sm:$0xff]
    %v346 = vld [vmem:[#allocation6 + $0x28] sm:$0xff]
    %v347 = vld [vmem:[#allocation6 + $0x30] sm:$0xff]
    %v348 = vld [vmem:[#allocation6 + $0x38] sm:$0xff]
    %v349 = vld [vmem:[#allocation6 + $0x40] sm:$0xff]
    %v350 = vld [vmem:[#allocation6 + $0x48] sm:$0xff]
    %v351 = vld [vmem:[#allocation6 + $0x50] sm:$0xff]
    %v352 = vld [vmem:[#allocation6 + $0x58] sm:$0xff]
    %v353 = vld [vmem:[#allocation6 + $0x60] sm:$0xff]
    %v354 = vld [vmem:[#allocation6 + $0x68] sm:$0xff]
    %v355 = vld [vmem:[#allocation6 + $0x70] sm:$0xff]
    %v356 = vld [vmem:[#allocation6 + $0x78] sm:$0xff]
    %v357 = vld [vmem:[#allocation6 + $0x80] sm:$0xff]
    %v358 = vld [vmem:[#allocation6 + $0x88] sm:$0xff]
    %v359 = vld [vmem:[#allocation6 + $0x90] sm:$0xff]
    %v360 = vld [vmem:[#allocation6 + $0x98] sm:$0xff]
    %v361 = vld [vmem:[#allocation6 + $0xa0] sm:$0xff]
    %v362 = vld [vmem:[#allocation6 + $0xa8] sm:$0xff]
    %v363 = vld [vmem:[#allocation6 + $0xb0] sm:$0xff]
    %v364 = vld [vmem:[#allocation6 + $0xb8] sm:$0xff]
    %v365 = vld [vmem:[#allocation6 + $0xc0] sm:$0xff]
    %v366 = vld [vmem:[#allocation6 + $0xc8] sm:$0xff]
    %v367 = vld [vmem:[#allocation6 + $0xd0] sm:$0xff]
    %v368 = vld [vmem:[#allocation6 + $0xd8] sm:$0xff]
    %v369 = vld [vmem:[#allocation6 + $0xe0] sm:$0xff]
    %v370 = vld [vmem:[#allocation6 + $0xe8] sm:$0xff]
    %v371 = vld [vmem:[#allocation6 + $0xf0] sm:$0xff]
    %v372 = vld [vmem:[#allocation6 + $0xf8] sm:$0xff]
    %v373 = vld [vmem:[#allocation6 + $0x100] sm:$0xff]
    %v374 = vld [vmem:[#allocation6 + $0x108] sm:$0xff]
    %v375 = vld [vmem:[#allocation6 + $0x110] sm:$0xff]
    %v376 = vld [vmem:[#allocation6 + $0x118] sm:$0xff]
    %v377 = vld [vmem:[#allocation6 + $0x120] sm:$0xff]
    %v378 = vld [vmem:[#allocation6 + $0x128] sm:$0xff]
    %v379 = vld [vmem:[#allocation6 + $0x130] sm:$0xff]
    %v380 = vld [vmem:[#allocation6 + $0x138] sm:$0xff]
    %v381 = vld [vmem:[#allocation6 + $0x140] sm:$0xff]
    %v382 = vld [vmem:[#allocation6 + $0x148] sm:$0xff]
    %v383 = vld [vmem:[#allocation6 + $0x150] sm:$0xff]
    %v384 = vld [vmem:[#allocation6 + $0x158] sm:$0xff]
    %v385 = vld [vmem:[#allocation6 + $0x160] sm:$0xff]
    %v386 = vld [vmem:[#allocation6 + $0x168] sm:$0xff]
    %v387 = vld [vmem:[#allocation6 + $0x170] sm:$0xff]
    %v388 = vld [vmem:[#allocation6 + $0x178] sm:$0xff]
    %v389 = vld [vmem:[#allocation6 + $0x180] sm:$0xff]
    %v390 = vld [vmem:[#allocation6 + $0x188] sm:$0xff]
    %v391 = vld [vmem:[#allocation6 + $0x190] sm:$0xff]
    %v392 = vld [vmem:[#allocation6 + $0x198] sm:$0xff]
    %v393 = vld [vmem:[#allocation6 + $0x1a0] sm:$0xff]
    %v394 = vld [vmem:[#allocation6 + $0x1a8] sm:$0xff]
    %v395 = vld [vmem:[#allocation6 + $0x1b0] sm:$0xff]
    %v396 = vld [vmem:[#allocation6 + $0x1b8] sm:$0xff]
    %v397 = vld [vmem:[#allocation6 + $0x1c0] sm:$0xff]
    %v398 = vld [vmem:[#allocation6 + $0x1c8] sm:$0xff]
    %v399 = vld [vmem:[#allocation6 + $0x1d0] sm:$0xff]
    %v400 = vld [vmem:[#allocation6 + $0x1d8] sm:$0xff]
    %v401 = vld [vmem:[#allocation6 + $0x1e0] sm:$0xff]
    %v402 = vld [vmem:[#allocation6 + $0x1e8] sm:$0xff]
    %v403 = vld [vmem:[#allocation6 + $0x1f0] sm:$0xff]
    %v404 = vld [vmem:[#allocation6 + $0x1f8] sm:$0xff]
    %v405 = vsel %vm168, 1, 0
    %v406 = vsel %vm169, 1, 0
    %v407 = vsel %vm170, 1, 0
    %v408 = vsel %vm171, 1, 0
    %vm409 = vcmp.eq.s32.totalorder %v405, 1
    %vm410 = vcmp.eq.s32.totalorder %v406, 1
    %vm411 = vcmp.eq.s32.totalorder %v407, 1
    %vm412 = vcmp.eq.s32.totalorder %v408, 1
    %v421 = vrot.slane %v337, 7
    %vm422 = vcmask 1041409
    %v423 = vsel %vm422, %v421, %v333
    %v424 = vrot.slane %v338, 7
    %v425 = vsel %vm422, %v424, %v334
    %v426 = vrot.slane %v339, 7
    %v427 = vsel %vm422, %v426, %v335
    %v428 = vrot.slane %v340, 7
    %v429 = vsel %vm422, %v428, %v336
    %v434 = vrot.slane %v333, 7
    %v435 = vrot.slane %v337, 6
    %v436 = vsel %vm422, %v435, %v434
    %v437 = vrot.slane %v334, 7
    %v438 = vrot.slane %v338, 6
    %v439 = vsel %vm422, %v438, %v437
    %v440 = vrot.slane %v335, 7
    %v441 = vrot.slane %v339, 6
    %v442 = vsel %vm422, %v441, %v440
    %v443 = vrot.slane %v336, 7
    %v444 = vrot.slane %v340, 6
    %v445 = vsel %vm422, %v444, %v443
    %v450 = vsel %vm409, %v423, %v436
    %v451 = vsel %vm410, %v425, %v439
    %v452 = vsel %vm411, %v427, %v442
    %v453 = vsel %vm412, %v429, %v445
    %454 = vmatprep.subr.mxu0 %v342
    %455 = vmatpush1.msra.mxu0 %v341
    %456 = vmatprep.subr.mxu0 %v346
    %457 = vmatpush1.msra.mxu0 %v345
    %458 = vmatprep.subr.mxu0 %v350
    %459 = vmatpush1.msra.mxu0 %v349
    %460 = vmatprep.subr.mxu0 %v354
    %461 = vmatpush1.msra.mxu0 %v353
    %462 = vmatprep.subr.mxu0 %v358
    %463 = vmatpush1.msra.mxu0 %v357
    %464 = vmatprep.subr.mxu0 %v362
    %465 = vmatpush1.msra.mxu0 %v361
    %466 = vmatprep.subr.mxu0 %v366
    %467 = vmatpush1.msra.mxu0 %v365
    %468 = vmatprep.subr.mxu0 %v370
    %469 = vmatpush1.msra.mxu0 %v369
    %470 = vmatprep.subr.mxu0 %v374
    %471 = vmatpush1.msra.mxu0 %v373
    %472 = vmatprep.subr.mxu0 %v378
    %473 = vmatpush1.msra.mxu0 %v377
    %474 = vmatprep.subr.mxu0 %v382
    %475 = vmatpush1.msra.mxu0 %v381
    %476 = vmatprep.subr.mxu0 %v386
    %477 = vmatpush1.msra.mxu0 %v385
    %478 = vmatprep.subr.mxu0 %v390
    %479 = vmatpush1.msra.mxu0 %v389
    %480 = vmatprep.subr.mxu0 %v394
    %481 = vmatpush1.msra.mxu0 %v393
    %482 = vmatprep.subr.mxu0 %v398
    %483 = vmatpush1.msra.mxu0 %v397
    %484 = vmatprep.subr.mxu0 %v402
    %485 = vmatpush1.msra.mxu0 %v401
    %486 = vmatprep.subr.mxu0 0.0
    %487 = vmatpush1.msra.mxu0 0.0
    %488 = vmatprep.subr.mxu0 0.0
    %489 = vmatpush1.msra.mxu0 0.0
    %490 = vmatprep.subr.mxu0 0.0
    %491 = vmatpush1.msra.mxu0 0.0
    %492 = vmatprep.subr.mxu0 0.0
    %493 = vmatpush1.msra.mxu0 0.0
    %494 = vmatprep.subr.mxu0 0.0
    %495 = vmatpush1.msra.mxu0 0.0
    %496 = vmatprep.subr.mxu0 0.0
    %497 = vmatpush1.msra.mxu0 0.0
    %498 = vmatprep.subr.mxu0 0.0
    %499 = vmatpush1.msra.mxu0 0.0
    %500 = vmatprep.subr.mxu0 0.0
    %501 = vmatpush1.msra.mxu0 0.0
    %502 = vmatprep.subr.mxu0 0.0
    %503 = vmatpush1.msra.mxu0 0.0
    %504 = vmatprep.subr.mxu0 0.0
    %505 = vmatpush1.msra.mxu0 0.0
    %506 = vmatprep.subr.mxu0 0.0
    %507 = vmatpush1.msra.mxu0 0.0
    %508 = vmatprep.subr.mxu0 0.0
    %509 = vmatpush1.msra.mxu0 0.0
    %510 = vmatprep.subr.mxu0 0.0
    %511 = vmatpush1.msra.mxu0 0.0
    %512 = vmatprep.subr.mxu0 0.0
    %513 = vmatpush1.msra.mxu0 0.0
    %514 = vmatprep.subr.mxu0 0.0
    %515 = vmatpush1.msra.mxu0 0.0
    %516 = vmatprep.subr.mxu0 0.0
    %517 = vmatpush1.msra.mxu0 0.0
    %518 = vmatprep.mubr.f32.mxu0 0.0
    %519 = vmatmul.mubr.f32.gmra.mrb[0].mxu0 0.0
    %v520 = vpop.f32.mrb[0].mxu0
    %v521 = vadd.f32 0.0, %v520
    %v522 = vpop.f32.mrb[0].mxu0
    %v523 = vadd.f32 0.0, %v522
    %524 = vdwg.mxu0
    %525 = vmatprep.subr.mxu0 %v344
    %526 = vmatpush1.msra.mxu0 %v343
    %527 = vmatprep.subr.mxu0 %v348
    %528 = vmatpush1.msra.mxu0 %v347
    %529 = vmatprep.subr.mxu0 %v352
    %530 = vmatpush1.msra.mxu0 %v351
    %531 = vmatprep.subr.mxu0 %v356
    %532 = vmatpush1.msra.mxu0 %v355
    %533 = vmatprep.subr.mxu0 %v360
    %534 = vmatpush1.msra.mxu0 %v359
    %535 = vmatprep.subr.mxu0 %v364
    %536 = vmatpush1.msra.mxu0 %v363
    %537 = vmatprep.subr.mxu0 %v368
    %538 = vmatpush1.msra.mxu0 %v367
    %539 = vmatprep.subr.mxu0 %v372
    %540 = vmatpush1.msra.mxu0 %v371
    %541 = vmatprep.subr.mxu0 %v376
    %542 = vmatpush1.msra.mxu0 %v375
    %543 = vmatprep.subr.mxu0 %v380
    %544 = vmatpush1.msra.mxu0 %v379
    %545 = vmatprep.subr.mxu0 %v384
    %546 = vmatpush1.msra.mxu0 %v383
    %547 = vmatprep.subr.mxu0 %v388
    %548 = vmatpush1.msra.mxu0 %v387
    %549 = vmatprep.subr.mxu0 %v392
    %550 = vmatpush1.msra.mxu0 %v391
    %551 = vmatprep.subr.mxu0 %v396
    %552 = vmatpush1.msra.mxu0 %v395
    %553 = vmatprep.subr.mxu0 %v400
    %554 = vmatpush1.msra.mxu0 %v399
    %555 = vmatprep.subr.mxu0 %v404
    %556 = vmatpush1.msra.mxu0 %v403
    %557 = vmatprep.subr.mxu0 0.0
    %558 = vmatpush1.msra.mxu0 0.0
    %559 = vmatprep.subr.mxu0 0.0
    %560 = vmatpush1.msra.mxu0 0.0
    %561 = vmatprep.subr.mxu0 0.0
    %562 = vmatpush1.msra.mxu0 0.0
    %563 = vmatprep.subr.mxu0 0.0
    %564 = vmatpush1.msra.mxu0 0.0
    %565 = vmatprep.subr.mxu0 0.0
    %566 = vmatpush1.msra.mxu0 0.0
    %567 = vmatprep.subr.mxu0 0.0
    %568 = vmatpush1.msra.mxu0 0.0
    %569 = vmatprep.subr.mxu0 0.0
    %570 = vmatpush1.msra.mxu0 0.0
    %571 = vmatprep.subr.mxu0 0.0
    %572 = vmatpush1.msra.mxu0 0.0
    %573 = vmatprep.subr.mxu0 0.0
    %574 = vmatpush1.msra.mxu0 0.0
    %575 = vmatprep.subr.mxu0 0.0
    %576 = vmatpush1.msra.mxu0 0.0
    %577 = vmatprep.subr.mxu0 0.0
    %578 = vmatpush1.msra.mxu0 0.0
    %579 = vmatprep.subr.mxu0 0.0
    %580 = vmatpush1.msra.mxu0 0.0
    %581 = vmatprep.subr.mxu0 0.0
    %582 = vmatpush1.msra.mxu0 0.0
    %583 = vmatprep.subr.mxu0 0.0
    %584 = vmatpush1.msra.mxu0 0.0
    %585 = vmatprep.subr.mxu0 0.0
    %586 = vmatpush1.msra.mxu0 0.0
    %587 = vmatprep.subr.mxu0 0.0
    %588 = vmatpush1.msra.mxu0 0.0
    %589 = vmatprep.mubr.f32.mxu0 0.0
    %590 = vmatmul.mubr.f32.gmra.mrb[0].mxu0 0.0
    %v591 = vpop.f32.mrb[0].mxu0
    %v592 = vadd.f32 0.0, %v591
    %v593 = vpop.f32.mrb[0].mxu0
    %v594 = vadd.f32 0.0, %v593
    %595 = vdwg.mxu0
    %v596 = vadd.f32 %v450, %v521
    %v597 = vadd.f32 %v451, %v523
    %v598 = vadd.f32 %v452, %v592
    %v599 = vadd.f32 %v453, %v594
    %v600 = vxor.u32 %v596, 2147483648
    %v601 = vxor.u32 %v597, 2147483648
    %v602 = vxor.u32 %v598, 2147483648
    %v603 = vmul.f32 %v600, 1.442695
    %v604 = vpow.pop %v603
    %v605 = vmul.f32 %v601, 1.442695
    %v606 = vpow.pop %v605
    %v607 = vmul.f32 %v602, 1.442695
    %v608 = vpow.pop %v607
    %v609 = vadd.f32 %v604, 1.0
    %v610 = vadd.f32 %v606, 1.0
    %v611 = vadd.f32 %v608, 1.0
    %v612 = vrcp.pop %v609
    %v613 = vmul.f32 1.0, %v612
    %v614 = vrcp.pop %v610
    %v615 = vmul.f32 1.0, %v614
    %v616 = vrcp.pop %v611
    %v617 = vmul.f32 1.0, %v616
    %v618 = vtanh.pop %v599
    %v619 = vmul.f32 %v615, 0.0
    %v620 = vmul.f32 %v613, %v618
    %v621 = vadd.f32 %v619, %v620
    %v622 = vtanh.pop %v621
    %v623 = vmul.f32 %v617, %v622
    %624 = vst [vmem:[#allocation2] sm:$0x3] %v623
    %625 = vst [vmem:[#allocation3 + $0x38] sm:$0x3] %v623
    %v626 = vrot.slane %v333, 1
    %v627 = vsel %vm422, %v337, %v626
    %v628 = vrot.slane %v334, 1
    %v629 = vsel %vm422, %v338, %v628
    %v630 = vrot.slane %v335, 1
    %v631 = vsel %vm422, %v339, %v630
    %v632 = vrot.slane %v336, 1
    %v633 = vsel %vm422, %v340, %v632
    %v638 = vrot.slane %v333, 6
    %v639 = vrot.slane %v337, 5
    %v640 = vsel %vm422, %v639, %v638
    %v641 = vrot.slane %v334, 6
    %v642 = vrot.slane %v338, 5
    %v643 = vsel %vm422, %v642, %v641
    %v644 = vrot.slane %v335, 6
    %v645 = vrot.slane %v339, 5
    %v646 = vsel %vm422, %v645, %v644
    %v647 = vrot.slane %v336, 6
    %v648 = vrot.slane %v340, 5
    %v649 = vsel %vm422, %v648, %v647
    %v654 = vsel %vm409, %v627, %v640
    %v655 = vsel %vm410, %v629, %v643
    %v656 = vsel %vm411, %v631, %v646
    %v657 = vsel %vm412, %v633, %v649
    %658 = vmatprep.subr.mxu0 %v342
    %659 = vmatpush1.msra.mxu0 %v341
    %660 = vmatprep.subr.mxu0 %v346
    %661 = vmatpush1.msra.mxu0 %v345
    %662 = vmatprep.subr.mxu0 %v350
    %663 = vmatpush1.msra.mxu0 %v349
    %664 = vmatprep.subr.mxu0 %v354
    %665 = vmatpush1.msra.mxu0 %v353
    %666 = vmatprep.subr.mxu0 %v358
    %667 = vmatpush1.msra.mxu0 %v357
    %668 = vmatprep.subr.mxu0 %v362
    %669 = vmatpush1.msra.mxu0 %v361
    %670 = vmatprep.subr.mxu0 %v366
    %671 = vmatpush1.msra.mxu0 %v365
    %672 = vmatprep.subr.mxu0 %v370
    %673 = vmatpush1.msra.mxu0 %v369
    %674 = vmatprep.subr.mxu0 %v374
    %675 = vmatpush1.msra.mxu0 %v373
    %676 = vmatprep.subr.mxu0 %v378
    %677 = vmatpush1.msra.mxu0 %v377
    %678 = vmatprep.subr.mxu0 %v382
    %679 = vmatpush1.msra.mxu0 %v381
    %680 = vmatprep.subr.mxu0 %v386
    %681 = vmatpush1.msra.mxu0 %v385
    %682 = vmatprep.subr.mxu0 %v390
    %683 = vmatpush1.msra.mxu0 %v389
    %684 = vmatprep.subr.mxu0 %v394
    %685 = vmatpush1.msra.mxu0 %v393
    %686 = vmatprep.subr.mxu0 %v398
    %687 = vmatpush1.msra.mxu0 %v397
    %688 = vmatprep.subr.mxu0 %v402
    %689 = vmatpush1.msra.mxu0 %v401
    %690 = vmatprep.subr.mxu0 0.0
    %691 = vmatpush1.msra.mxu0 0.0
    %692 = vmatprep.subr.mxu0 0.0
    %693 = vmatpush1.msra.mxu0 0.0
    %694 = vmatprep.subr.mxu0 0.0
    %695 = vmatpush1.msra.mxu0 0.0
    %696 = vmatprep.subr.mxu0 0.0
    %697 = vmatpush1.msra.mxu0 0.0
    %698 = vmatprep.subr.mxu0 0.0
    %699 = vmatpush1.msra.mxu0 0.0
    %700 = vmatprep.subr.mxu0 0.0
    %701 = vmatpush1.msra.mxu0 0.0
    %702 = vmatprep.subr.mxu0 0.0
    %703 = vmatpush1.msra.mxu0 0.0
    %704 = vmatprep.subr.mxu0 0.0
    %705 = vmatpush1.msra.mxu0 0.0
    %706 = vmatprep.subr.mxu0 0.0
    %707 = vmatpush1.msra.mxu0 0.0
    %708 = vmatprep.subr.mxu0 0.0
    %709 = vmatpush1.msra.mxu0 0.0
    %710 = vmatprep.subr.mxu0 0.0
    %711 = vmatpush1.msra.mxu0 0.0
    %712 = vmatprep.subr.mxu0 0.0
    %713 = vmatpush1.msra.mxu0 0.0
    %714 = vmatprep.subr.mxu0 0.0
    %715 = vmatpush1.msra.mxu0 0.0
    %716 = vmatprep.subr.mxu0 0.0
    %717 = vmatpush1.msra.mxu0 0.0
    %718 = vmatprep.subr.mxu0 0.0
    %719 = vmatpush1.msra.mxu0 0.0
    %720 = vmatprep.subr.mxu0 0.0
    %721 = vmatpush1.msra.mxu0 0.0
    %722 = vmatprep.mubr.f32.mxu0 0.0
    %723 = vmatmul.mubr.f32.gmra.mrb[0].mxu0 %v623
    %v724 = vpop.f32.mrb[0].mxu0
    %v725 = vadd.f32 0.0, %v724
    %v726 = vpop.f32.mrb[0].mxu0
    %v727 = vadd.f32 0.0, %v726
    %728 = vdwg.mxu0
    %729 = vmatprep.subr.mxu0 %v344
    %730 = vmatpush1.msra.mxu0 %v343
    %731 = vmatprep.subr.mxu0 %v348
    %732 = vmatpush1.msra.mxu0 %v347
    %733 = vmatprep.subr.mxu0 %v352
    %734 = vmatpush1.msra.mxu0 %v351
    %735 = vmatprep.subr.mxu0 %v356
    %736 = vmatpush1.msra.mxu0 %v355
    %737 = vmatprep.subr.mxu0 %v360
    %738 = vmatpush1.msra.mxu0 %v359
    %739 = vmatprep.subr.mxu0 %v364
    %740 = vmatpush1.msra.mxu0 %v363
    %741 = vmatprep.subr.mxu0 %v368
    %742 = vmatpush1.msra.mxu0 %v367
    %743 = vmatprep.subr.mxu0 %v372
    %744 = vmatpush1.msra.mxu0 %v371
    %745 = vmatprep.subr.mxu0 %v376
    %746 = vmatpush1.msra.mxu0 %v375
    %747 = vmatprep.subr.mxu0 %v380
    %748 = vmatpush1.msra.mxu0 %v379
    %749 = vmatprep.subr.mxu0 %v384
    %750 = vmatpush1.msra.mxu0 %v383
    %751 = vmatprep.subr.mxu0 %v388
    %752 = vmatpush1.msra.mxu0 %v387
    %753 = vmatprep.subr.mxu0 %v392
    %754 = vmatpush1.msra.mxu0 %v391
    %755 = vmatprep.subr.mxu0 %v396
    %756 = vmatpush1.msra.mxu0 %v395
    %757 = vmatprep.subr.mxu0 %v400
    %758 = vmatpush1.msra.mxu0 %v399
    %759 = vmatprep.subr.mxu0 %v404
    %760 = vmatpush1.msra.mxu0 %v403
    %761 = vmatprep.subr.mxu0 0.0
    %762 = vmatpush1.msra.mxu0 0.0
    %763 = vmatprep.subr.mxu0 0.0
    %764 = vmatpush1.msra.mxu0 0.0
    %765 = vmatprep.subr.mxu0 0.0
    %766 = vmatpush1.msra.mxu0 0.0
    %767 = vmatprep.subr.mxu0 0.0
    %768 = vmatpush1.msra.mxu0 0.0
    %769 = vmatprep.subr.mxu0 0.0
    %770 = vmatpush1.msra.mxu0 0.0
    %771 = vmatprep.subr.mxu0 0.0
    %772 = vmatpush1.msra.mxu0 0.0
    %773 = vmatprep.subr.mxu0 0.0
    %774 = vmatpush1.msra.mxu0 0.0
    %775 = vmatprep.subr.mxu0 0.0
    %776 = vmatpush1.msra.mxu0 0.0
    %777 = vmatprep.subr.mxu0 0.0
    %778 = vmatpush1.msra.mxu0 0.0
    %779 = vmatprep.subr.mxu0 0.0
    %780 = vmatpush1.msra.mxu0 0.0
    %781 = vmatprep.subr.mxu0 0.0
    %782 = vmatpush1.msra.mxu0 0.0
    %783 = vmatprep.subr.mxu0 0.0
    %784 = vmatpush1.msra.mxu0 0.0
    %785 = vmatprep.subr.mxu0 0.0
    %786 = vmatpush1.msra.mxu0 0.0
    %787 = vmatprep.subr.mxu0 0.0
    %788 = vmatpush1.msra.mxu0 0.0
    %789 = vmatprep.subr.mxu0 0.0
    %790 = vmatpush1.msra.mxu0 0.0
    %791 = vmatprep.subr.mxu0 0.0
    %792 = vmatpush1.msra.mxu0 0.0
    %793 = vmatprep.mubr.f32.mxu0 0.0
    %794 = vmatmul.mubr.f32.gmra.mrb[0].mxu0 %v623
    %v795 = vpop.f32.mrb[0].mxu0
    %v796 = vadd.f32 0.0, %v795
    %v797 = vpop.f32.mrb[0].mxu0
    %v798 = vadd.f32 0.0, %v797
    %799 = vdwg.mxu0
    %v800 = vadd.f32 %v654, %v725
    %v801 = vadd.f32 %v655, %v727
    %v802 = vadd.f32 %v656, %v796
    %v803 = vadd.f32 %v657, %v798
    %v804 = vxor.u32 %v800, 2147483648
    %v805 = vxor.u32 %v801, 2147483648
    %v806 = vxor.u32 %v802, 2147483648
    %v807 = vmul.f32 %v804, 1.442695
    %v808 = vpow.pop %v807
    %v809 = vmul.f32 %v805, 1.442695
    %v810 = vpow.pop %v809
    %v811 = vmul.f32 %v806, 1.442695
    %v812 = vpow.pop %v811
    %v813 = vadd.f32 %v808, 1.0
    %v814 = vadd.f32 %v810, 1.0
    %v815 = vadd.f32 %v812, 1.0
    %v816 = vrcp.pop %v813
    %v817 = vmul.f32 1.0, %v816
    %v818 = vrcp.pop %v814
    %v819 = vmul.f32 1.0, %v818
    %v820 = vrcp.pop %v815
    %v821 = vmul.f32 1.0, %v820
    %v822 = vtanh.pop %v803
    %v823 = vmul.f32 %v819, %v621
    %v824 = vmul.f32 %v817, %v822
    %v825 = vadd.f32 %v823, %v824
    %v826 = vtanh.pop %v825
    %v827 = vmul.f32 %v821, %v826
    %828 = vst [vmem:[#allocation2 + $0x8] sm:$0x3] %v827
    %829 = vst [vmem:[#allocation3 + $0x30] sm:$0x3] %v827
    %v830 = vrot.slane %v333, 2
    %v831 = vrot.slane %v337, 1
    %v832 = vsel %vm422, %v831, %v830
    %v833 = vrot.slane %v334, 2
    %v834 = vrot.slane %v338, 1
    %v835 = vsel %vm422, %v834, %v833
    %v836 = vrot.slane %v335, 2
    %v837 = vrot.slane %v339, 1
    %v838 = vsel %vm422, %v837, %v836
    %v839 = vrot.slane %v336, 2
    %v840 = vrot.slane %v340, 1
    %v841 = vsel %vm422, %v840, %v839
    %v846 = vrot.slane %v333, 5
    %v847 = vrot.slane %v337, 4
    %v848 = vsel %vm422, %v847, %v846
    %v849 = vrot.slane %v334, 5
    %v850 = vrot.slane %v338, 4
    %v851 = vsel %vm422, %v850, %v849
    %v852 = vrot.slane %v335, 5
    %v853 = vrot.slane %v339, 4
    %v854 = vsel %vm422, %v853, %v852
    %v855 = vrot.slane %v336, 5
    %v856 = vrot.slane %v340, 4
    %v857 = vsel %vm422, %v856, %v855
    %v862 = vsel %vm409, %v832, %v848
    %v863 = vsel %vm410, %v835, %v851
    %v864 = vsel %vm411, %v838, %v854
    %v865 = vsel %vm412, %v841, %v857
    %866 = vmatprep.subr.mxu0 %v342
    %867 = vmatpush1.msra.mxu0 %v341
    %868 = vmatprep.subr.mxu0 %v346
    %869 = vmatpush1.msra.mxu0 %v345
    %870 = vmatprep.subr.mxu0 %v350
    %871 = vmatpush1.msra.mxu0 %v349
    %872 = vmatprep.subr.mxu0 %v354
    %873 = vmatpush1.msra.mxu0 %v353
    %874 = vmatprep.subr.mxu0 %v358
    %875 = vmatpush1.msra.mxu0 %v357
    %876 = vmatprep.subr.mxu0 %v362
    %877 = vmatpush1.msra.mxu0 %v361
    %878 = vmatprep.subr.mxu0 %v366
    %879 = vmatpush1.msra.mxu0 %v365
    %880 = vmatprep.subr.mxu0 %v370
    %881 = vmatpush1.msra.mxu0 %v369
    %882 = vmatprep.subr.mxu0 %v374
    %883 = vmatpush1.msra.mxu0 %v373
    %884 = vmatprep.subr.mxu0 %v378
    %885 = vmatpush1.msra.mxu0 %v377
    %886 = vmatprep.subr.mxu0 %v382
    %887 = vmatpush1.msra.mxu0 %v381
    %888 = vmatprep.subr.mxu0 %v386
    %889 = vmatpush1.msra.mxu0 %v385
    %890 = vmatprep.subr.mxu0 %v390
    %891 = vmatpush1.msra.mxu0 %v389
    %892 = vmatprep.subr.mxu0 %v394
    %893 = vmatpush1.msra.mxu0 %v393
    %894 = vmatprep.subr.mxu0 %v398
    %895 = vmatpush1.msra.mxu0 %v397
    %896 = vmatprep.subr.mxu0 %v402
    %897 = vmatpush1.msra.mxu0 %v401
    %898 = vmatprep.subr.mxu0 0.0
    %899 = vmatpush1.msra.mxu0 0.0
    %900 = vmatprep.subr.mxu0 0.0
    %901 = vmatpush1.msra.mxu0 0.0
    %902 = vmatprep.subr.mxu0 0.0
    %903 = vmatpush1.msra.mxu0 0.0
    %904 = vmatprep.subr.mxu0 0.0
    %905 = vmatpush1.msra.mxu0 0.0
    %906 = vmatprep.subr.mxu0 0.0
    %907 = vmatpush1.msra.mxu0 0.0
    %908 = vmatprep.subr.mxu0 0.0
    %909 = vmatpush1.msra.mxu0 0.0
    %910 = vmatprep.subr.mxu0 0.0
    %911 = vmatpush1.msra.mxu0 0.0
    %912 = vmatprep.subr.mxu0 0.0
    %913 = vmatpush1.msra.mxu0 0.0
    %914 = vmatprep.subr.mxu0 0.0
    %915 = vmatpush1.msra.mxu0 0.0
    %916 = vmatprep.subr.mxu0 0.0
    %917 = vmatpush1.msra.mxu0 0.0
    %918 = vmatprep.subr.mxu0 0.0
    %919 = vmatpush1.msra.mxu0 0.0
    %920 = vmatprep.subr.mxu0 0.0
    %921 = vmatpush1.msra.mxu0 0.0
    %922 = vmatprep.subr.mxu0 0.0
    %923 = vmatpush1.msra.mxu0 0.0
    %924 = vmatprep.subr.mxu0 0.0
    %925 = vmatpush1.msra.mxu0 0.0
    %926 = vmatprep.subr.mxu0 0.0
    %927 = vmatpush1.msra.mxu0 0.0
    %928 = vmatprep.subr.mxu0 0.0
    %929 = vmatpush1.msra.mxu0 0.0
    %930 = vmatprep.mubr.f32.mxu0 0.0
    %931 = vmatmul.mubr.f32.gmra.mrb[0].mxu0 %v827
    %v932 = vpop.f32.mrb[0].mxu0
    %v933 = vadd.f32 0.0, %v932
    %v934 = vpop.f32.mrb[0].mxu0
    %v935 = vadd.f32 0.0, %v934
    %936 = vdwg.mxu0
    %937 = vmatprep.subr.mxu0 %v344
    %938 = vmatpush1.msra.mxu0 %v343
    %939 = vmatprep.subr.mxu0 %v348
    %940 = vmatpush1.msra.mxu0 %v347
    %941 = vmatprep.subr.mxu0 %v352
    %942 = vmatpush1.msra.mxu0 %v351
    %943 = vmatprep.subr.mxu0 %v356
    %944 = vmatpush1.msra.mxu0 %v355
    %945 = vmatprep.subr.mxu0 %v360
    %946 = vmatpush1.msra.mxu0 %v359
    %947 = vmatprep.subr.mxu0 %v364
    %948 = vmatpush1.msra.mxu0 %v363
    %949 = vmatprep.subr.mxu0 %v368
    %950 = vmatpush1.msra.mxu0 %v367
    %951 = vmatprep.subr.mxu0 %v372
    %952 = vmatpush1.msra.mxu0 %v371
    %953 = vmatprep.subr.mxu0 %v376
    %954 = vmatpush1.msra.mxu0 %v375
    %955 = vmatprep.subr.mxu0 %v380
    %956 = vmatpush1.msra.mxu0 %v379
    %957 = vmatprep.subr.mxu0 %v384
    %958 = vmatpush1.msra.mxu0 %v383
    %959 = vmatprep.subr.mxu0 %v388
    %960 = vmatpush1.msra.mxu0 %v387
    %961 = vmatprep.subr.mxu0 %v392
    %962 = vmatpush1.msra.mxu0 %v391
    %963 = vmatprep.subr.mxu0 %v396
    %964 = vmatpush1.msra.mxu0 %v395
    %965 = vmatprep.subr.mxu0 %v400
    %966 = vmatpush1.msra.mxu0 %v399
    %967 = vmatprep.subr.mxu0 %v404
    %968 = vmatpush1.msra.mxu0 %v403
    %969 = vmatprep.subr.mxu0 0.0
    %970 = vmatpush1.msra.mxu0 0.0
    %971 = vmatprep.subr.mxu0 0.0
    %972 = vmatpush1.msra.mxu0 0.0
    %973 = vmatprep.subr.mxu0 0.0
    %974 = vmatpush1.msra.mxu0 0.0
    %975 = vmatprep.subr.mxu0 0.0
    %976 = vmatpush1.msra.mxu0 0.0
    %977 = vmatprep.subr.mxu0 0.0
    %978 = vmatpush1.msra.mxu0 0.0
    %979 = vmatprep.subr.mxu0 0.0
    %980 = vmatpush1.msra.mxu0 0.0
    %981 = vmatprep.subr.mxu0 0.0
    %982 = vmatpush1.msra.mxu0 0.0
    %983 = vmatprep.subr.mxu0 0.0
    %984 = vmatpush1.msra.mxu0 0.0
    %985 = vmatprep.subr.mxu0 0.0
    %986 = vmatpush1.msra.mxu0 0.0
    %987 = vmatprep.subr.mxu0 0.0
    %988 = vmatpush1.msra.mxu0 0.0
    %989 = vmatprep.subr.mxu0 0.0
    %990 = vmatpush1.msra.mxu0 0.0
    %991 = vmatprep.subr.mxu0 0.0
    %992 = vmatpush1.msra.mxu0 0.0
    %993 = vmatprep.subr.mxu0 0.0
    %994 = vmatpush1.msra.mxu0 0.0
    %995 = vmatprep.subr.mxu0 0.0
    %996 = vmatpush1.msra.mxu0 0.0
    %997 = vmatprep.subr.mxu0 0.0
    %998 = vmatpush1.msra.mxu0 0.0
    %999 = vmatprep.subr.mxu0 0.0
    %1000 = vmatpush1.msra.mxu0 0.0
    %1001 = vmatprep.mubr.f32.mxu0 0.0
    %1002 = vmatmul.mubr.f32.gmra.mrb[0].mxu0 %v827
    %v1003 = vpop.f32.mrb[0].mxu0
    %v1004 = vadd.f32 0.0, %v1003
    %v1005 = vpop.f32.mrb[0].mxu0
    %v1006 = vadd.f32 0.0, %v1005
    %1007 = vdwg.mxu0
    %v1008 = vadd.f32 %v862, %v933
    %v1009 = vadd.f32 %v863, %v935
    %v1010 = vadd.f32 %v864, %v1004
    %v1011 = vadd.f32 %v865, %v1006
    %v1012 = vxor.u32 %v1008, 2147483648
    %v1013 = vxor.u32 %v1009, 2147483648
    %v1014 = vxor.u32 %v1010, 2147483648
    %v1015 = vmul.f32 %v1012, 1.442695
    %v1016 = vpow.pop %v1015
    %v1017 = vmul.f32 %v1013, 1.442695
    %v1018 = vpow.pop %v1017
    %v1019 = vmul.f32 %v1014, 1.442695
    %v1020 = vpow.pop %v1019
    %v1021 = vadd.f32 %v1016, 1.0
    %v1022 = vadd.f32 %v1018, 1.0
    %v1023 = vadd.f32 %v1020, 1.0
    %v1024 = vrcp.pop %v1021
    %v1025 = vmul.f32 1.0, %v1024
    %v1026 = vrcp.pop %v1022
    %v1027 = vmul.f32 1.0, %v1026
    %v1028 = vrcp.pop %v1023
    %v1029 = vmul.f32 1.0, %v1028
    %v1030 = vtanh.pop %v1011
    %v1031 = vmul.f32 %v1027, %v825
    %v1032 = vmul.f32 %v1025, %v1030
    %v1033 = vadd.f32 %v1031, %v1032
    %v1034 = vtanh.pop %v1033
    %v1035 = vmul.f32 %v1029, %v1034
    %1036 = vst [vmem:[#allocation2 + $0x10] sm:$0x3] %v1035
    %1037 = vst [vmem:[#allocation3 + $0x28] sm:$0x3] %v1035
    %v1038 = vrot.slane %v333, 3
    %v1039 = vrot.slane %v337, 2
    %v1040 = vsel %vm422, %v1039, %v1038
    %v1041 = vrot.slane %v334, 3
    %v1042 = vrot.slane %v338, 2
    %v1043 = vsel %vm422, %v1042, %v1041
    %v1044 = vrot.slane %v335, 3
    %v1045 = vrot.slane %v339, 2
    %v1046 = vsel %vm422, %v1045, %v1044
    %v1047 = vrot.slane %v336, 3
    %v1048 = vrot.slane %v340, 2
    %v1049 = vsel %vm422, %v1048, %v1047
    %v1054 = vrot.slane %v333, 4
    %v1055 = vrot.slane %v337, 3
    %v1056 = vsel %vm422, %v1055, %v1054
    %v1057 = vrot.slane %v334, 4
    %v1058 = vrot.slane %v338, 3
    %v1059 = vsel %vm422, %v1058, %v1057
    %v1060 = vrot.slane %v335, 4
    %v1061 = vrot.slane %v339, 3
    %v1062 = vsel %vm422, %v1061, %v1060
    %v1063 = vrot.slane %v336, 4
    %v1064 = vrot.slane %v340, 3
    %v1065 = vsel %vm422, %v1064, %v1063
    %v1070 = vsel %vm409, %v1040, %v1056
    %v1071 = vsel %vm410, %v1043, %v1059
    %v1072 = vsel %vm411, %v1046, %v1062
    %v1073 = vsel %vm412, %v1049, %v1065
    %1074 = vmatprep.subr.mxu0 %v342
    %1075 = vmatpush1.msra.mxu0 %v341
    %1076 = vmatprep.subr.mxu0 %v346
    %1077 = vmatpush1.msra.mxu0 %v345
    %1078 = vmatprep.subr.mxu0 %v350
    %1079 = vmatpush1.msra.mxu0 %v349
    %1080 = vmatprep.subr.mxu0 %v354
    %1081 = vmatpush1.msra.mxu0 %v353
    %1082 = vmatprep.subr.mxu0 %v358
    %1083 = vmatpush1.msra.mxu0 %v357
    %1084 = vmatprep.subr.mxu0 %v362
    %1085 = vmatpush1.msra.mxu0 %v361
    %1086 = vmatprep.subr.mxu0 %v366
    %1087 = vmatpush1.msra.mxu0 %v365
    %1088 = vmatprep.subr.mxu0 %v370
    %1089 = vmatpush1.msra.mxu0 %v369
    %1090 = vmatprep.subr.mxu0 %v374
    %1091 = vmatpush1.msra.mxu0 %v373
    %1092 = vmatprep.subr.mxu0 %v378
    %1093 = vmatpush1.msra.mxu0 %v377
    %1094 = vmatprep.subr.mxu0 %v382
    %1095 = vmatpush1.msra.mxu0 %v381
    %1096 = vmatprep.subr.mxu0 %v386
    %1097 = vmatpush1.msra.mxu0 %v385
    %1098 = vmatprep.subr.mxu0 %v390
    %1099 = vmatpush1.msra.mxu0 %v389
    %1100 = vmatprep.subr.mxu0 %v394
    %1101 = vmatpush1.msra.mxu0 %v393
    %1102 = vmatprep.subr.mxu0 %v398
    %1103 = vmatpush1.msra.mxu0 %v397
    %1104 = vmatprep.subr.mxu0 %v402
    %1105 = vmatpush1.msra.mxu0 %v401
    %1106 = vmatprep.subr.mxu0 0.0
    %1107 = vmatpush1.msra.mxu0 0.0
    %1108 = vmatprep.subr.mxu0 0.0
    %1109 = vmatpush1.msra.mxu0 0.0
    %1110 = vmatprep.subr.mxu0 0.0
    %1111 = vmatpush1.msra.mxu0 0.0
    %1112 = vmatprep.subr.mxu0 0.0
    %1113 = vmatpush1.msra.mxu0 0.0
    %1114 = vmatprep.subr.mxu0 0.0
    %1115 = vmatpush1.msra.mxu0 0.0
    %1116 = vmatprep.subr.mxu0 0.0
    %1117 = vmatpush1.msra.mxu0 0.0
    %1118 = vmatprep.subr.mxu0 0.0
    %1119 = vmatpush1.msra.mxu0 0.0
    %1120 = vmatprep.subr.mxu0 0.0
    %1121 = vmatpush1.msra.mxu0 0.0
    %1122 = vmatprep.subr.mxu0 0.0
    %1123 = vmatpush1.msra.mxu0 0.0
    %1124 = vmatprep.subr.mxu0 0.0
    %1125 = vmatpush1.msra.mxu0 0.0
    %1126 = vmatprep.subr.mxu0 0.0
    %1127 = vmatpush1.msra.mxu0 0.0
    %1128 = vmatprep.subr.mxu0 0.0
    %1129 = vmatpush1.msra.mxu0 0.0
    %1130 = vmatprep.subr.mxu0 0.0
    %1131 = vmatpush1.msra.mxu0 0.0
    %1132 = vmatprep.subr.mxu0 0.0
    %1133 = vmatpush1.msra.mxu0 0.0
    %1134 = vmatprep.subr.mxu0 0.0
    %1135 = vmatpush1.msra.mxu0 0.0
    %1136 = vmatprep.subr.mxu0 0.0
    %1137 = vmatpush1.msra.mxu0 0.0
    %1138 = vmatprep.mubr.f32.mxu0 0.0
    %1139 = vmatmul.mubr.f32.gmra.mrb[0].mxu0 %v1035
    %v1140 = vpop.f32.mrb[0].mxu0
    %v1141 = vadd.f32 0.0, %v1140
    %v1142 = vpop.f32.mrb[0].mxu0
    %v1143 = vadd.f32 0.0, %v1142
    %1144 = vdwg.mxu0
    %1145 = vmatprep.subr.mxu0 %v344
    %1146 = vmatpush1.msra.mxu0 %v343
    %1147 = vmatprep.subr.mxu0 %v348
    %1148 = vmatpush1.msra.mxu0 %v347
    %1149 = vmatprep.subr.mxu0 %v352
    %1150 = vmatpush1.msra.mxu0 %v351
    %1151 = vmatprep.subr.mxu0 %v356
    %1152 = vmatpush1.msra.mxu0 %v355
    %1153 = vmatprep.subr.mxu0 %v360
    %1154 = vmatpush1.msra.mxu0 %v359
    %1155 = vmatprep.subr.mxu0 %v364
    %1156 = vmatpush1.msra.mxu0 %v363
    %1157 = vmatprep.subr.mxu0 %v368
    %1158 = vmatpush1.msra.mxu0 %v367
    %1159 = vmatprep.subr.mxu0 %v372
    %1160 = vmatpush1.msra.mxu0 %v371
    %1161 = vmatprep.subr.mxu0 %v376
    %1162 = vmatpush1.msra.mxu0 %v375
    %1163 = vmatprep.subr.mxu0 %v380
    %1164 = vmatpush1.msra.mxu0 %v379
    %1165 = vmatprep.subr.mxu0 %v384
    %1166 = vmatpush1.msra.mxu0 %v383
    %1167 = vmatprep.subr.mxu0 %v388
    %1168 = vmatpush1.msra.mxu0 %v387
    %1169 = vmatprep.subr.mxu0 %v392
    %1170 = vmatpush1.msra.mxu0 %v391
    %1171 = vmatprep.subr.mxu0 %v396
    %1172 = vmatpush1.msra.mxu0 %v395
    %1173 = vmatprep.subr.mxu0 %v400
    %1174 = vmatpush1.msra.mxu0 %v399
    %1175 = vmatprep.subr.mxu0 %v404
    %1176 = vmatpush1.msra.mxu0 %v403
    %1177 = vmatprep.subr.mxu0 0.0
    %1178 = vmatpush1.msra.mxu0 0.0
    %1179 = vmatprep.subr.mxu0 0.0
    %1180 = vmatpush1.msra.mxu0 0.0
    %1181 = vmatprep.subr.mxu0 0.0
    %1182 = vmatpush1.msra.mxu0 0.0
    %1183 = vmatprep.subr.mxu0 0.0
    %1184 = vmatpush1.msra.mxu0 0.0
    %1185 = vmatprep.subr.mxu0 0.0
    %1186 = vmatpush1.msra.mxu0 0.0
    %1187 = vmatprep.subr.mxu0 0.0
    %1188 = vmatpush1.msra.mxu0 0.0
    %1189 = vmatprep.subr.mxu0 0.0
    %1190 = vmatpush1.msra.mxu0 0.0
    %1191 = vmatprep.subr.mxu0 0.0
    %1192 = vmatpush1.msra.mxu0 0.0
    %1193 = vmatprep.subr.mxu0 0.0
    %1194 = vmatpush1.msra.mxu0 0.0
    %1195 = vmatprep.subr.mxu0 0.0
    %1196 = vmatpush1.msra.mxu0 0.0
    %1197 = vmatprep.subr.mxu0 0.0
    %1198 = vmatpush1.msra.mxu0 0.0
    %1199 = vmatprep.subr.mxu0 0.0
    %1200 = vmatpush1.msra.mxu0 0.0
    %1201 = vmatprep.subr.mxu0 0.0
    %1202 = vmatpush1.msra.mxu0 0.0
    %1203 = vmatprep.subr.mxu0 0.0
    %1204 = vmatpush1.msra.mxu0 0.0
    %1205 = vmatprep.subr.mxu0 0.0
    %1206 = vmatpush1.msra.mxu0 0.0
    %1207 = vmatprep.subr.mxu0 0.0
    %1208 = vmatpush1.msra.mxu0 0.0
    %1209 = vmatprep.mubr.f32.mxu0 0.0
    %1210 = vmatmul.mubr.f32.gmra.mrb[0].mxu0 %v1035
    %v1211 = vpop.f32.mrb[0].mxu0
    %v1212 = vadd.f32 0.0, %v1211
    %v1213 = vpop.f32.mrb[0].mxu0
    %v1214 = vadd.f32 0.0, %v1213
    %1215 = vdwg.mxu0
    %v1216 = vadd.f32 %v1070, %v1141
    %v1217 = vadd.f32 %v1071, %v1143
    %v1218 = vadd.f32 %v1072, %v1212
    %v1219 = vadd.f32 %v1073, %v1214
    %v1220 = vxor.u32 %v1216, 2147483648
    %v1221 = vxor.u32 %v1217, 2147483648
    %v1222 = vxor.u32 %v1218, 2147483648
    %v1223 = vmul.f32 %v1220, 1.442695
    %v1224 = vpow.pop %v1223
    %v1225 = vmul.f32 %v1221, 1.442695
    %v1226 = vpow.pop %v1225
    %v1227 = vmul.f32 %v1222, 1.442695
    %v1228 = vpow.pop %v1227
    %v1229 = vadd.f32 %v1224, 1.0
    %v1230 = vadd.f32 %v1226, 1.0
    %v1231 = vadd.f32 %v1228, 1.0
    %v1232 = vrcp.pop %v1229
    %v1233 = vmul.f32 1.0, %v1232
    %v1234 = vrcp.pop %v1230
    %v1235 = vmul.f32 1.0, %v1234
    %v1236 = vrcp.pop %v1231
    %v1237 = vmul.f32 1.0, %v1236
    %v1238 = vtanh.pop %v1219
    %v1239 = vmul.f32 %v1235, %v1033
    %v1240 = vmul.f32 %v1233, %v1238
    %v1241 = vadd.f32 %v1239, %v1240
    %v1242 = vtanh.pop %v1241
    %v1243 = vmul.f32 %v1237, %v1242
    %1244 = vst [vmem:[#allocation2 + $0x18] sm:$0x3] %v1243
    %1245 = vst [vmem:[#allocation3 + $0x20] sm:$0x3] %v1243
    %v1246 = vsel %vm409, %v1056, %v1040
    %v1247 = vsel %vm410, %v1059, %v1043
    %v1248 = vsel %vm411, %v1062, %v1046
    %v1249 = vsel %vm412, %v1065, %v1049
    %1250 = vmatprep.subr.mxu0 %v342
    %1251 = vmatpush1.msra.mxu0 %v341
    %1252 = vmatprep.subr.mxu0 %v346
    %1253 = vmatpush1.msra.mxu0 %v345
    %1254 = vmatprep.subr.mxu0 %v350
    %1255 = vmatpush1.msra.mxu0 %v349
    %1256 = vmatprep.subr.mxu0 %v354
    %1257 = vmatpush1.msra.mxu0 %v353
    %1258 = vmatprep.subr.mxu0 %v358
    %1259 = vmatpush1.msra.mxu0 %v357
    %1260 = vmatprep.subr.mxu0 %v362
    %1261 = vmatpush1.msra.mxu0 %v361
    %1262 = vmatprep.subr.mxu0 %v366
    %1263 = vmatpush1.msra.mxu0 %v365
    %1264 = vmatprep.subr.mxu0 %v370
    %1265 = vmatpush1.msra.mxu0 %v369
    %1266 = vmatprep.subr.mxu0 %v374
    %1267 = vmatpush1.msra.mxu0 %v373
    %1268 = vmatprep.subr.mxu0 %v378
    %1269 = vmatpush1.msra.mxu0 %v377
    %1270 = vmatprep.subr.mxu0 %v382
    %1271 = vmatpush1.msra.mxu0 %v381
    %1272 = vmatprep.subr.mxu0 %v386
    %1273 = vmatpush1.msra.mxu0 %v385
    %1274 = vmatprep.subr.mxu0 %v390
    %1275 = vmatpush1.msra.mxu0 %v389
    %1276 = vmatprep.subr.mxu0 %v394
    %1277 = vmatpush1.msra.mxu0 %v393
    %1278 = vmatprep.subr.mxu0 %v398
    %1279 = vmatpush1.msra.mxu0 %v397
    %1280 = vmatprep.subr.mxu0 %v402
    %1281 = vmatpush1.msra.mxu0 %v401
    %1282 = vmatprep.subr.mxu0 0.0
    %1283 = vmatpush1.msra.mxu0 0.0
    %1284 = vmatprep.subr.mxu0 0.0
    %1285 = vmatpush1.msra.mxu0 0.0
    %1286 = vmatprep.subr.mxu0 0.0
    %1287 = vmatpush1.msra.mxu0 0.0
    %1288 = vmatprep.subr.mxu0 0.0
    %1289 = vmatpush1.msra.mxu0 0.0
    %1290 = vmatprep.subr.mxu0 0.0
    %1291 = vmatpush1.msra.mxu0 0.0
    %1292 = vmatprep.subr.mxu0 0.0
    %1293 = vmatpush1.msra.mxu0 0.0
    %1294 = vmatprep.subr.mxu0 0.0
    %1295 = vmatpush1.msra.mxu0 0.0
    %1296 = vmatprep.subr.mxu0 0.0
    %1297 = vmatpush1.msra.mxu0 0.0
    %1298 = vmatprep.subr.mxu0 0.0
    %1299 = vmatpush1.msra.mxu0 0.0
    %1300 = vmatprep.subr.mxu0 0.0
    %1301 = vmatpush1.msra.mxu0 0.0
    %1302 = vmatprep.subr.mxu0 0.0
    %1303 = vmatpush1.msra.mxu0 0.0
    %1304 = vmatprep.subr.mxu0 0.0
    %1305 = vmatpush1.msra.mxu0 0.0
    %1306 = vmatprep.subr.mxu0 0.0
    %1307 = vmatpush1.msra.mxu0 0.0
    %1308 = vmatprep.subr.mxu0 0.0
    %1309 = vmatpush1.msra.mxu0 0.0
    %1310 = vmatprep.subr.mxu0 0.0
    %1311 = vmatpush1.msra.mxu0 0.0
    %1312 = vmatprep.subr.mxu0 0.0
    %1313 = vmatpush1.msra.mxu0 0.0
    %1314 = vmatprep.mubr.f32.mxu0 0.0
    %1315 = vmatmul.mubr.f32.gmra.mrb[0].mxu0 %v1243
    %v1316 = vpop.f32.mrb[0].mxu0
    %v1317 = vadd.f32 0.0, %v1316
    %v1318 = vpop.f32.mrb[0].mxu0
    %v1319 = vadd.f32 0.0, %v1318
    %1320 = vdwg.mxu0
    %1321 = vmatprep.subr.mxu0 %v344
    %1322 = vmatpush1.msra.mxu0 %v343
    %1323 = vmatprep.subr.mxu0 %v348
    %1324 = vmatpush1.msra.mxu0 %v347
    %1325 = vmatprep.subr.mxu0 %v352
    %1326 = vmatpush1.msra.mxu0 %v351
    %1327 = vmatprep.subr.mxu0 %v356
    %1328 = vmatpush1.msra.mxu0 %v355
    %1329 = vmatprep.subr.mxu0 %v360
    %1330 = vmatpush1.msra.mxu0 %v359
    %1331 = vmatprep.subr.mxu0 %v364
    %1332 = vmatpush1.msra.mxu0 %v363
    %1333 = vmatprep.subr.mxu0 %v368
    %1334 = vmatpush1.msra.mxu0 %v367
    %1335 = vmatprep.subr.mxu0 %v372
    %1336 = vmatpush1.msra.mxu0 %v371
    %1337 = vmatprep.subr.mxu0 %v376
    %1338 = vmatpush1.msra.mxu0 %v375
    %1339 = vmatprep.subr.mxu0 %v380
    %1340 = vmatpush1.msra.mxu0 %v379
    %1341 = vmatprep.subr.mxu0 %v384
    %1342 = vmatpush1.msra.mxu0 %v383
    %1343 = vmatprep.subr.mxu0 %v388
    %1344 = vmatpush1.msra.mxu0 %v387
    %1345 = vmatprep.subr.mxu0 %v392
    %1346 = vmatpush1.msra.mxu0 %v391
    %1347 = vmatprep.subr.mxu0 %v396
    %1348 = vmatpush1.msra.mxu0 %v395
    %1349 = vmatprep.subr.mxu0 %v400
    %1350 = vmatpush1.msra.mxu0 %v399
    %1351 = vmatprep.subr.mxu0 %v404
    %1352 = vmatpush1.msra.mxu0 %v403
    %1353 = vmatprep.subr.mxu0 0.0
    %1354 = vmatpush1.msra.mxu0 0.0
    %1355 = vmatprep.subr.mxu0 0.0
    %1356 = vmatpush1.msra.mxu0 0.0
    %1357 = vmatprep.subr.mxu0 0.0
    %1358 = vmatpush1.msra.mxu0 0.0
    %1359 = vmatprep.subr.mxu0 0.0
    %1360 = vmatpush1.msra.mxu0 0.0
    %1361 = vmatprep.subr.mxu0 0.0
    %1362 = vmatpush1.msra.mxu0 0.0
    %1363 = vmatprep.subr.mxu0 0.0
    %1364 = vmatpush1.msra.mxu0 0.0
    %1365 = vmatprep.subr.mxu0 0.0
    %1366 = vmatpush1.msra.mxu0 0.0
    %1367 = vmatprep.subr.mxu0 0.0
    %1368 = vmatpush1.msra.mxu0 0.0
    %1369 = vmatprep.subr.mxu0 0.0
    %1370 = vmatpush1.msra.mxu0 0.0
    %1371 = vmatprep.subr.mxu0 0.0
    %1372 = vmatpush1.msra.mxu0 0.0
    %1373 = vmatprep.subr.mxu0 0.0
    %1374 = vmatpush1.msra.mxu0 0.0
    %1375 = vmatprep.subr.mxu0 0.0
    %1376 = vmatpush1.msra.mxu0 0.0
    %1377 = vmatprep.subr.mxu0 0.0
    %1378 = vmatpush1.msra.mxu0 0.0
    %1379 = vmatprep.subr.mxu0 0.0
    %1380 = vmatpush1.msra.mxu0 0.0
    %1381 = vmatprep.subr.mxu0 0.0
    %1382 = vmatpush1.msra.mxu0 0.0
    %1383 = vmatprep.subr.mxu0 0.0
    %1384 = vmatpush1.msra.mxu0 0.0
    %1385 = vmatprep.mubr.f32.mxu0 0.0
    %1386 = vmatmul.mubr.f32.gmra.mrb[0].mxu0 %v1243
    %v1387 = vpop.f32.mrb[0].mxu0
    %v1388 = vadd.f32 0.0, %v1387
    %v1389 = vpop.f32.mrb[0].mxu0
    %v1390 = vadd.f32 0.0, %v1389
    %1391 = vdwg.mxu0
    %v1392 = vadd.f32 %v1246, %v1317
    %v1393 = vadd.f32 %v1247, %v1319
    %v1394 = vadd.f32 %v1248, %v1388
    %v1395 = vadd.f32 %v1249, %v1390
    %v1396 = vxor.u32 %v1392, 2147483648
    %v1397 = vxor.u32 %v1393, 2147483648
    %v1398 = vxor.u32 %v1394, 2147483648
    %v1399 = vmul.f32 %v1396, 1.442695
    %v1400 = vpow.pop %v1399
    %v1401 = vmul.f32 %v1397, 1.442695
    %v1402 = vpow.pop %v1401
    %v1403 = vmul.f32 %v1398, 1.442695
    %v1404 = vpow.pop %v1403
    %v1405 = vadd.f32 %v1400, 1.0
    %v1406 = vadd.f32 %v1402, 1.0
    %v1407 = vadd.f32 %v1404, 1.0
    %v1408 = vrcp.pop %v1405
    %v1409 = vmul.f32 1.0, %v1408
    %v1410 = vrcp.pop %v1406
    %v1411 = vmul.f32 1.0, %v1410
    %v1412 = vrcp.pop %v1407
    %v1413 = vmul.f32 1.0, %v1412
    %v1414 = vtanh.pop %v1395
    %v1415 = vmul.f32 %v1411, %v1241
    %v1416 = vmul.f32 %v1409, %v1414
    %v1417 = vadd.f32 %v1415, %v1416
    %v1418 = vtanh.pop %v1417
    %v1419 = vmul.f32 %v1413, %v1418
    %1420 = vst [vmem:[#allocation2 + $0x20] sm:$0x3] %v1419
    %1421 = vst [vmem:[#allocation3 + $0x18] sm:$0x3] %v1419
    %v1422 = vsel %vm409, %v848, %v832
    %v1423 = vsel %vm410, %v851, %v835
    %v1424 = vsel %vm411, %v854, %v838
    %v1425 = vsel %vm412, %v857, %v841
    %1426 = vmatprep.subr.mxu0 %v342
    %1427 = vmatpush1.msra.mxu0 %v341
    %1428 = vmatprep.subr.mxu0 %v346
    %1429 = vmatpush1.msra.mxu0 %v345
    %1430 = vmatprep.subr.mxu0 %v350
    %1431 = vmatpush1.msra.mxu0 %v349
    %1432 = vmatprep.subr.mxu0 %v354
    %1433 = vmatpush1.msra.mxu0 %v353
    %1434 = vmatprep.subr.mxu0 %v358
    %1435 = vmatpush1.msra.mxu0 %v357
    %1436 = vmatprep.subr.mxu0 %v362
    %1437 = vmatpush1.msra.mxu0 %v361
    %1438 = vmatprep.subr.mxu0 %v366
    %1439 = vmatpush1.msra.mxu0 %v365
    %1440 = vmatprep.subr.mxu0 %v370
    %1441 = vmatpush1.msra.mxu0 %v369
    %1442 = vmatprep.subr.mxu0 %v374
    %1443 = vmatpush1.msra.mxu0 %v373
    %1444 = vmatprep.subr.mxu0 %v378
    %1445 = vmatpush1.msra.mxu0 %v377
    %1446 = vmatprep.subr.mxu0 %v382
    %1447 = vmatpush1.msra.mxu0 %v381
    %1448 = vmatprep.subr.mxu0 %v386
    %1449 = vmatpush1.msra.mxu0 %v385
    %1450 = vmatprep.subr.mxu0 %v390
    %1451 = vmatpush1.msra.mxu0 %v389
    %1452 = vmatprep.subr.mxu0 %v394
    %1453 = vmatpush1.msra.mxu0 %v393
    %1454 = vmatprep.subr.mxu0 %v398
    %1455 = vmatpush1.msra.mxu0 %v397
    %1456 = vmatprep.subr.mxu0 %v402
    %1457 = vmatpush1.msra.mxu0 %v401
    %1458 = vmatprep.subr.mxu0 0.0
    %1459 = vmatpush1.msra.mxu0 0.0
    %1460 = vmatprep.subr.mxu0 0.0
    %1461 = vmatpush1.msra.mxu0 0.0
    %1462 = vmatprep.subr.mxu0 0.0
    %1463 = vmatpush1.msra.mxu0 0.0
    %1464 = vmatprep.subr.mxu0 0.0
    %1465 = vmatpush1.msra.mxu0 0.0
    %1466 = vmatprep.subr.mxu0 0.0
    %1467 = vmatpush1.msra.mxu0 0.0
    %1468 = vmatprep.subr.mxu0 0.0
    %1469 = vmatpush1.msra.mxu0 0.0
    %1470 = vmatprep.subr.mxu0 0.0
    %1471 = vmatpush1.msra.mxu0 0.0
    %1472 = vmatprep.subr.mxu0 0.0
    %1473 = vmatpush1.msra.mxu0 0.0
    %1474 = vmatprep.subr.mxu0 0.0
    %1475 = vmatpush1.msra.mxu0 0.0
    %1476 = vmatprep.subr.mxu0 0.0
    %1477 = vmatpush1.msra.mxu0 0.0
    %1478 = vmatprep.subr.mxu0 0.0
    %1479 = vmatpush1.msra.mxu0 0.0
    %1480 = vmatprep.subr.mxu0 0.0
    %1481 = vmatpush1.msra.mxu0 0.0
    %1482 = vmatprep.subr.mxu0 0.0
    %1483 = vmatpush1.msra.mxu0 0.0
    %1484 = vmatprep.subr.mxu0 0.0
    %1485 = vmatpush1.msra.mxu0 0.0
    %1486 = vmatprep.subr.mxu0 0.0
    %1487 = vmatpush1.msra.mxu0 0.0
    %1488 = vmatprep.subr.mxu0 0.0
    %1489 = vmatpush1.msra.mxu0 0.0
    %1490 = vmatprep.mubr.f32.mxu0 0.0
    %1491 = vmatmul.mubr.f32.gmra.mrb[0].mxu0 %v1419
    %v1492 = vpop.f32.mrb[0].mxu0
    %v1493 = vadd.f32 0.0, %v1492
    %v1494 = vpop.f32.mrb[0].mxu0
    %v1495 = vadd.f32 0.0, %v1494
    %1496 = vdwg.mxu0
    %1497 = vmatprep.subr.mxu0 %v344
    %1498 = vmatpush1.msra.mxu0 %v343
    %1499 = vmatprep.subr.mxu0 %v348
    %1500 = vmatpush1.msra.mxu0 %v347
    %1501 = vmatprep.subr.mxu0 %v352
    %1502 = vmatpush1.msra.mxu0 %v351
    %1503 = vmatprep.subr.mxu0 %v356
    %1504 = vmatpush1.msra.mxu0 %v355
    %1505 = vmatprep.subr.mxu0 %v360
    %1506 = vmatpush1.msra.mxu0 %v359
    %1507 = vmatprep.subr.mxu0 %v364
    %1508 = vmatpush1.msra.mxu0 %v363
    %1509 = vmatprep.subr.mxu0 %v368
    %1510 = vmatpush1.msra.mxu0 %v367
    %1511 = vmatprep.subr.mxu0 %v372
    %1512 = vmatpush1.msra.mxu0 %v371
    %1513 = vmatprep.subr.mxu0 %v376
    %1514 = vmatpush1.msra.mxu0 %v375
    %1515 = vmatprep.subr.mxu0 %v380
    %1516 = vmatpush1.msra.mxu0 %v379
    %1517 = vmatprep.subr.mxu0 %v384
    %1518 = vmatpush1.msra.mxu0 %v383
    %1519 = vmatprep.subr.mxu0 %v388
    %1520 = vmatpush1.msra.mxu0 %v387
    %1521 = vmatprep.subr.mxu0 %v392
    %1522 = vmatpush1.msra.mxu0 %v391
    %1523 = vmatprep.subr.mxu0 %v396
    %1524 = vmatpush1.msra.mxu0 %v395
    %1525 = vmatprep.subr.mxu0 %v400
    %1526 = vmatpush1.msra.mxu0 %v399
    %1527 = vmatprep.subr.mxu0 %v404
    %1528 = vmatpush1.msra.mxu0 %v403
    %1529 = vmatprep.subr.mxu0 0.0
    %1530 = vmatpush1.msra.mxu0 0.0
    %1531 = vmatprep.subr.mxu0 0.0
    %1532 = vmatpush1.msra.mxu0 0.0
    %1533 = vmatprep.subr.mxu0 0.0
    %1534 = vmatpush1.msra.mxu0 0.0
    %1535 = vmatprep.subr.mxu0 0.0
    %1536 = vmatpush1.msra.mxu0 0.0
    %1537 = vmatprep.subr.mxu0 0.0
    %1538 = vmatpush1.msra.mxu0 0.0
    %1539 = vmatprep.subr.mxu0 0.0
    %1540 = vmatpush1.msra.mxu0 0.0
    %1541 = vmatprep.subr.mxu0 0.0
    %1542 = vmatpush1.msra.mxu0 0.0
    %1543 = vmatprep.subr.mxu0 0.0
    %1544 = vmatpush1.msra.mxu0 0.0
    %1545 = vmatprep.subr.mxu0 0.0
    %1546 = vmatpush1.msra.mxu0 0.0
    %1547 = vmatprep.subr.mxu0 0.0
    %1548 = vmatpush1.msra.mxu0 0.0
    %1549 = vmatprep.subr.mxu0 0.0
    %1550 = vmatpush1.msra.mxu0 0.0
    %1551 = vmatprep.subr.mxu0 0.0
    %1552 = vmatpush1.msra.mxu0 0.0
    %1553 = vmatprep.subr.mxu0 0.0
    %1554 = vmatpush1.msra.mxu0 0.0
    %1555 = vmatprep.subr.mxu0 0.0
    %1556 = vmatpush1.msra.mxu0 0.0
    %1557 = vmatprep.subr.mxu0 0.0
    %1558 = vmatpush1.msra.mxu0 0.0
    %1559 = vmatprep.subr.mxu0 0.0
    %1560 = vmatpush1.msra.mxu0 0.0
    %1561 = vmatprep.mubr.f32.mxu0 0.0
    %1562 = vmatmul.mubr.f32.gmra.mrb[0].mxu0 %v1419
    %v1563 = vpop.f32.mrb[0].mxu0
    %v1564 = vadd.f32 0.0, %v1563
    %v1565 = vpop.f32.mrb[0].mxu0
    %v1566 = vadd.f32 0.0, %v1565
    %1567 = vdwg.mxu0
    %v1568 = vadd.f32 %v1422, %v1493
    %v1569 = vadd.f32 %v1423, %v1495
    %v1570 = vadd.f32 %v1424, %v1564
    %v1571 = vadd.f32 %v1425, %v1566
    %v1572 = vxor.u32 %v1568, 2147483648
    %v1573 = vxor.u32 %v1569, 2147483648
    %v1574 = vxor.u32 %v1570, 2147483648
    %v1575 = vmul.f32 %v1572, 1.442695
    %v1576 = vpow.pop %v1575
    %v1577 = vmul.f32 %v1573, 1.442695
    %v1578 = vpow.pop %v1577
    %v1579 = vmul.f32 %v1574, 1.442695
    %v1580 = vpow.pop %v1579
    %v1581 = vadd.f32 %v1576, 1.0
    %v1582 = vadd.f32 %v1578, 1.0
    %v1583 = vadd.f32 %v1580, 1.0
    %v1584 = vrcp.pop %v1581
    %v1585 = vmul.f32 1.0, %v1584
    %v1586 = vrcp.pop %v1582
    %v1587 = vmul.f32 1.0, %v1586
    %v1588 = vrcp.pop %v1583
    %v1589 = vmul.f32 1.0, %v1588
    %v1590 = vtanh.pop %v1571
    %v1591 = vmul.f32 %v1587, %v1417
    %v1592 = vmul.f32 %v1585, %v1590
    %v1593 = vadd.f32 %v1591, %v1592
    %v1594 = vtanh.pop %v1593
    %v1595 = vmul.f32 %v1589, %v1594
    %1596 = vst [vmem:[#allocation2 + $0x28] sm:$0x3] %v1595
    %1597 = vst [vmem:[#allocation3 + $0x10] sm:$0x3] %v1595
    %v1598 = vsel %vm409, %v640, %v627
    %v1599 = vsel %vm410, %v643, %v629
    %v1600 = vsel %vm411, %v646, %v631
    %v1601 = vsel %vm412, %v649, %v633
    %1602 = vmatprep.subr.mxu0 %v342
    %1603 = vmatpush1.msra.mxu0 %v341
    %1604 = vmatprep.subr.mxu0 %v346
    %1605 = vmatpush1.msra.mxu0 %v345
    %1606 = vmatprep.subr.mxu0 %v350
    %1607 = vmatpush1.msra.mxu0 %v349
    %1608 = vmatprep.subr.mxu0 %v354
    %1609 = vmatpush1.msra.mxu0 %v353
    %1610 = vmatprep.subr.mxu0 %v358
    %1611 = vmatpush1.msra.mxu0 %v357
    %1612 = vmatprep.subr.mxu0 %v362
    %1613 = vmatpush1.msra.mxu0 %v361
    %1614 = vmatprep.subr.mxu0 %v366
    %1615 = vmatpush1.msra.mxu0 %v365
    %1616 = vmatprep.subr.mxu0 %v370
    %1617 = vmatpush1.msra.mxu0 %v369
    %1618 = vmatprep.subr.mxu0 %v374
    %1619 = vmatpush1.msra.mxu0 %v373
    %1620 = vmatprep.subr.mxu0 %v378
    %1621 = vmatpush1.msra.mxu0 %v377
    %1622 = vmatprep.subr.mxu0 %v382
    %1623 = vmatpush1.msra.mxu0 %v381
    %1624 = vmatprep.subr.mxu0 %v386
    %1625 = vmatpush1.msra.mxu0 %v385
    %1626 = vmatprep.subr.mxu0 %v390
    %1627 = vmatpush1.msra.mxu0 %v389
    %1628 = vmatprep.subr.mxu0 %v394
    %1629 = vmatpush1.msra.mxu0 %v393
    %1630 = vmatprep.subr.mxu0 %v398
    %1631 = vmatpush1.msra.mxu0 %v397
    %1632 = vmatprep.subr.mxu0 %v402
    %1633 = vmatpush1.msra.mxu0 %v401
    %1634 = vmatprep.subr.mxu0 0.0
    %1635 = vmatpush1.msra.mxu0 0.0
    %1636 = vmatprep.subr.mxu0 0.0
    %1637 = vmatpush1.msra.mxu0 0.0
    %1638 = vmatprep.subr.mxu0 0.0
    %1639 = vmatpush1.msra.mxu0 0.0
    %1640 = vmatprep.subr.mxu0 0.0
    %1641 = vmatpush1.msra.mxu0 0.0
    %1642 = vmatprep.subr.mxu0 0.0
    %1643 = vmatpush1.msra.mxu0 0.0
    %1644 = vmatprep.subr.mxu0 0.0
    %1645 = vmatpush1.msra.mxu0 0.0
    %1646 = vmatprep.subr.mxu0 0.0
    %1647 = vmatpush1.msra.mxu0 0.0
    %1648 = vmatprep.subr.mxu0 0.0
    %1649 = vmatpush1.msra.mxu0 0.0
    %1650 = vmatprep.subr.mxu0 0.0
    %1651 = vmatpush1.msra.mxu0 0.0
    %1652 = vmatprep.subr.mxu0 0.0
    %1653 = vmatpush1.msra.mxu0 0.0
    %1654 = vmatprep.subr.mxu0 0.0
    %1655 = vmatpush1.msra.mxu0 0.0
    %1656 = vmatprep.subr.mxu0 0.0
    %1657 = vmatpush1.msra.mxu0 0.0
    %1658 = vmatprep.subr.mxu0 0.0
    %1659 = vmatpush1.msra.mxu0 0.0
    %1660 = vmatprep.subr.mxu0 0.0
    %1661 = vmatpush1.msra.mxu0 0.0
    %1662 = vmatprep.subr.mxu0 0.0
    %1663 = vmatpush1.msra.mxu0 0.0
    %1664 = vmatprep.subr.mxu0 0.0
    %1665 = vmatpush1.msra.mxu0 0.0
    %1666 = vmatprep.mubr.f32.mxu0 0.0
    %1667 = vmatmul.mubr.f32.gmra.mrb[0].mxu0 %v1595
    %v1668 = vpop.f32.mrb[0].mxu0
    %v1669 = vadd.f32 0.0, %v1668
    %v1670 = vpop.f32.mrb[0].mxu0
    %v1671 = vadd.f32 0.0, %v1670
    %1672 = vdwg.mxu0
    %1673 = vmatprep.subr.mxu0 %v344
    %1674 = vmatpush1.msra.mxu0 %v343
    %1675 = vmatprep.subr.mxu0 %v348
    %1676 = vmatpush1.msra.mxu0 %v347
    %1677 = vmatprep.subr.mxu0 %v352
    %1678 = vmatpush1.msra.mxu0 %v351
    %1679 = vmatprep.subr.mxu0 %v356
    %1680 = vmatpush1.msra.mxu0 %v355
    %1681 = vmatprep.subr.mxu0 %v360
    %1682 = vmatpush1.msra.mxu0 %v359
    %1683 = vmatprep.subr.mxu0 %v364
    %1684 = vmatpush1.msra.mxu0 %v363
    %1685 = vmatprep.subr.mxu0 %v368
    %1686 = vmatpush1.msra.mxu0 %v367
    %1687 = vmatprep.subr.mxu0 %v372
    %1688 = vmatpush1.msra.mxu0 %v371
    %1689 = vmatprep.subr.mxu0 %v376
    %1690 = vmatpush1.msra.mxu0 %v375
    %1691 = vmatprep.subr.mxu0 %v380
    %1692 = vmatpush1.msra.mxu0 %v379
    %1693 = vmatprep.subr.mxu0 %v384
    %1694 = vmatpush1.msra.mxu0 %v383
    %1695 = vmatprep.subr.mxu0 %v388
    %1696 = vmatpush1.msra.mxu0 %v387
    %1697 = vmatprep.subr.mxu0 %v392
    %1698 = vmatpush1.msra.mxu0 %v391
    %1699 = vmatprep.subr.mxu0 %v396
    %1700 = vmatpush1.msra.mxu0 %v395
    %1701 = vmatprep.subr.mxu0 %v400
    %1702 = vmatpush1.msra.mxu0 %v399
    %1703 = vmatprep.subr.mxu0 %v404
    %1704 = vmatpush1.msra.mxu0 %v403
    %1705 = vmatprep.subr.mxu0 0.0
    %1706 = vmatpush1.msra.mxu0 0.0
    %1707 = vmatprep.subr.mxu0 0.0
    %1708 = vmatpush1.msra.mxu0 0.0
    %1709 = vmatprep.subr.mxu0 0.0
    %1710 = vmatpush1.msra.mxu0 0.0
    %1711 = vmatprep.subr.mxu0 0.0
    %1712 = vmatpush1.msra.mxu0 0.0
    %1713 = vmatprep.subr.mxu0 0.0
    %1714 = vmatpush1.msra.mxu0 0.0
    %1715 = vmatprep.subr.mxu0 0.0
    %1716 = vmatpush1.msra.mxu0 0.0
    %1717 = vmatprep.subr.mxu0 0.0
    %1718 = vmatpush1.msra.mxu0 0.0
    %1719 = vmatprep.subr.mxu0 0.0
    %1720 = vmatpush1.msra.mxu0 0.0
    %1721 = vmatprep.subr.mxu0 0.0
    %1722 = vmatpush1.msra.mxu0 0.0
    %1723 = vmatprep.subr.mxu0 0.0
    %1724 = vmatpush1.msra.mxu0 0.0
    %1725 = vmatprep.subr.mxu0 0.0
    %1726 = vmatpush1.msra.mxu0 0.0
    %1727 = vmatprep.subr.mxu0 0.0
    %1728 = vmatpush1.msra.mxu0 0.0
    %1729 = vmatprep.subr.mxu0 0.0
    %1730 = vmatpush1.msra.mxu0 0.0
    %1731 = vmatprep.subr.mxu0 0.0
    %1732 = vmatpush1.msra.mxu0 0.0
    %1733 = vmatprep.subr.mxu0 0.0
    %1734 = vmatpush1.msra.mxu0 0.0
    %1735 = vmatprep.subr.mxu0 0.0
    %1736 = vmatpush1.msra.mxu0 0.0
    %1737 = vmatprep.mubr.f32.mxu0 0.0
    %1738 = vmatmul.mubr.f32.gmra.mrb[0].mxu0 %v1595
    %v1739 = vpop.f32.mrb[0].mxu0
    %v1740 = vadd.f32 0.0, %v1739
    %v1741 = vpop.f32.mrb[0].mxu0
    %v1742 = vadd.f32 0.0, %v1741
    %1743 = vdwg.mxu0
    %v1744 = vadd.f32 %v1598, %v1669
    %v1745 = vadd.f32 %v1599, %v1671
    %v1746 = vadd.f32 %v1600, %v1740
    %v1747 = vadd.f32 %v1601, %v1742
    %v1748 = vxor.u32 %v1744, 2147483648
    %v1749 = vxor.u32 %v1745, 2147483648
    %v1750 = vxor.u32 %v1746, 2147483648
    %v1751 = vmul.f32 %v1748, 1.442695
    %v1752 = vpow.pop %v1751
    %v1753 = vmul.f32 %v1749, 1.442695
    %v1754 = vpow.pop %v1753
    %v1755 = vmul.f32 %v1750, 1.442695
    %v1756 = vpow.pop %v1755
    %v1757 = vadd.f32 %v1752, 1.0
    %v1758 = vadd.f32 %v1754, 1.0
    %v1759 = vadd.f32 %v1756, 1.0
    %v1760 = vrcp.pop %v1757
    %v1761 = vmul.f32 1.0, %v1760
    %v1762 = vrcp.pop %v1758
    %v1763 = vmul.f32 1.0, %v1762
    %v1764 = vrcp.pop %v1759
    %v1765 = vmul.f32 1.0, %v1764
    %v1766 = vtanh.pop %v1747
    %v1767 = vmul.f32 %v1763, %v1593
    %v1768 = vmul.f32 %v1761, %v1766
    %v1769 = vadd.f32 %v1767, %v1768
    %v1770 = vtanh.pop %v1769
    %v1771 = vmul.f32 %v1765, %v1770
    %1772 = vst [vmem:[#allocation2 + $0x30] sm:$0x3] %v1771
    %1773 = vst [vmem:[#allocation3 + $0x8] sm:$0x3] %v1771
    %v1774 = vsel %vm409, %v436, %v423
    %v1775 = vsel %vm410, %v439, %v425
    %v1776 = vsel %vm411, %v442, %v427
    %v1777 = vsel %vm412, %v445, %v429
    %1778 = vmatprep.subr.mxu0 %v342
    %1779 = vmatpush1.msra.mxu0 %v341
    %1780 = vmatprep.subr.mxu0 %v346
    %1781 = vmatpush1.msra.mxu0 %v345
    %1782 = vmatprep.subr.mxu0 %v350
    %1783 = vmatpush1.msra.mxu0 %v349
    %1784 = vmatprep.subr.mxu0 %v354
    %1785 = vmatpush1.msra.mxu0 %v353
    %1786 = vmatprep.subr.mxu0 %v358
    %1787 = vmatpush1.msra.mxu0 %v357
    %1788 = vmatprep.subr.mxu0 %v362
    %1789 = vmatpush1.msra.mxu0 %v361
    %1790 = vmatprep.subr.mxu0 %v366
    %1791 = vmatpush1.msra.mxu0 %v365
    %1792 = vmatprep.subr.mxu0 %v370
    %1793 = vmatpush1.msra.mxu0 %v369
    %1794 = vmatprep.subr.mxu0 %v374
    %1795 = vmatpush1.msra.mxu0 %v373
    %1796 = vmatprep.subr.mxu0 %v378
    %1797 = vmatpush1.msra.mxu0 %v377
    %1798 = vmatprep.subr.mxu0 %v382
    %1799 = vmatpush1.msra.mxu0 %v381
    %1800 = vmatprep.subr.mxu0 %v386
    %1801 = vmatpush1.msra.mxu0 %v385
    %1802 = vmatprep.subr.mxu0 %v390
    %1803 = vmatpush1.msra.mxu0 %v389
    %1804 = vmatprep.subr.mxu0 %v394
    %1805 = vmatpush1.msra.mxu0 %v393
    %1806 = vmatprep.subr.mxu0 %v398
    %1807 = vmatpush1.msra.mxu0 %v397
    %1808 = vmatprep.subr.mxu0 %v402
    %1809 = vmatpush1.msra.mxu0 %v401
    %1810 = vmatprep.subr.mxu0 0.0
    %1811 = vmatpush1.msra.mxu0 0.0
    %1812 = vmatprep.subr.mxu0 0.0
    %1813 = vmatpush1.msra.mxu0 0.0
    %1814 = vmatprep.subr.mxu0 0.0
    %1815 = vmatpush1.msra.mxu0 0.0
    %1816 = vmatprep.subr.mxu0 0.0
    %1817 = vmatpush1.msra.mxu0 0.0
    %1818 = vmatprep.subr.mxu0 0.0
    %1819 = vmatpush1.msra.mxu0 0.0
    %1820 = vmatprep.subr.mxu0 0.0
    %1821 = vmatpush1.msra.mxu0 0.0
    %1822 = vmatprep.subr.mxu0 0.0
    %1823 = vmatpush1.msra.mxu0 0.0
    %1824 = vmatprep.subr.mxu0 0.0
    %1825 = vmatpush1.msra.mxu0 0.0
    %1826 = vmatprep.subr.mxu0 0.0
    %1827 = vmatpush1.msra.mxu0 0.0
    %1828 = vmatprep.subr.mxu0 0.0
    %1829 = vmatpush1.msra.mxu0 0.0
    %1830 = vmatprep.subr.mxu0 0.0
    %1831 = vmatpush1.msra.mxu0 0.0
    %1832 = vmatprep.subr.mxu0 0.0
    %1833 = vmatpush1.msra.mxu0 0.0
    %1834 = vmatprep.subr.mxu0 0.0
    %1835 = vmatpush1.msra.mxu0 0.0
    %1836 = vmatprep.subr.mxu0 0.0
    %1837 = vmatpush1.msra.mxu0 0.0
    %1838 = vmatprep.subr.mxu0 0.0
    %1839 = vmatpush1.msra.mxu0 0.0
    %1840 = vmatprep.subr.mxu0 0.0
    %1841 = vmatpush1.msra.mxu0 0.0
    %1842 = vmatprep.mubr.f32.mxu0 0.0
    %1843 = vmatmul.mubr.f32.gmra.mrb[0].mxu0 %v1771
    %v1844 = vpop.f32.mrb[0].mxu0
    %v1845 = vadd.f32 0.0, %v1844
    %v1846 = vpop.f32.mrb[0].mxu0
    %v1847 = vadd.f32 0.0, %v1846
    %1848 = vdwg.mxu0
    %1849 = vmatprep.subr.mxu0 %v344
    %1850 = vmatpush1.msra.mxu0 %v343
    %1851 = vmatprep.subr.mxu0 %v348
    %1852 = vmatpush1.msra.mxu0 %v347
    %1853 = vmatprep.subr.mxu0 %v352
    %1854 = vmatpush1.msra.mxu0 %v351
    %1855 = vmatprep.subr.mxu0 %v356
    %1856 = vmatpush1.msra.mxu0 %v355
    %1857 = vmatprep.subr.mxu0 %v360
    %1858 = vmatpush1.msra.mxu0 %v359
    %1859 = vmatprep.subr.mxu0 %v364
    %1860 = vmatpush1.msra.mxu0 %v363
    %1861 = vmatprep.subr.mxu0 %v368
    %1862 = vmatpush1.msra.mxu0 %v367
    %1863 = vmatprep.subr.mxu0 %v372
    %1864 = vmatpush1.msra.mxu0 %v371
    %1865 = vmatprep.subr.mxu0 %v376
    %1866 = vmatpush1.msra.mxu0 %v375
    %1867 = vmatprep.subr.mxu0 %v380
    %1868 = vmatpush1.msra.mxu0 %v379
    %1869 = vmatprep.subr.mxu0 %v384
    %1870 = vmatpush1.msra.mxu0 %v383
    %1871 = vmatprep.subr.mxu0 %v388
    %1872 = vmatpush1.msra.mxu0 %v387
    %1873 = vmatprep.subr.mxu0 %v392
    %1874 = vmatpush1.msra.mxu0 %v391
    %1875 = vmatprep.subr.mxu0 %v396
    %1876 = vmatpush1.msra.mxu0 %v395
    %1877 = vmatprep.subr.mxu0 %v400
    %1878 = vmatpush1.msra.mxu0 %v399
    %1879 = vmatprep.subr.mxu0 %v404
    %1880 = vmatpush1.msra.mxu0 %v403
    %1881 = vmatprep.subr.mxu0 0.0
    %1882 = vmatpush1.msra.mxu0 0.0
    %1883 = vmatprep.subr.mxu0 0.0
    %1884 = vmatpush1.msra.mxu0 0.0
    %1885 = vmatprep.subr.mxu0 0.0
    %1886 = vmatpush1.msra.mxu0 0.0
    %1887 = vmatprep.subr.mxu0 0.0
    %1888 = vmatpush1.msra.mxu0 0.0
    %1889 = vmatprep.subr.mxu0 0.0
    %1890 = vmatpush1.msra.mxu0 0.0
    %1891 = vmatprep.subr.mxu0 0.0
    %1892 = vmatpush1.msra.mxu0 0.0
    %1893 = vmatprep.subr.mxu0 0.0
    %1894 = vmatpush1.msra.mxu0 0.0
    %1895 = vmatprep.subr.mxu0 0.0
    %1896 = vmatpush1.msra.mxu0 0.0
    %1897 = vmatprep.subr.mxu0 0.0
    %1898 = vmatpush1.msra.mxu0 0.0
    %1899 = vmatprep.subr.mxu0 0.0
    %1900 = vmatpush1.msra.mxu0 0.0
    %1901 = vmatprep.subr.mxu0 0.0
    %1902 = vmatpush1.msra.mxu0 0.0
    %1903 = vmatprep.subr.mxu0 0.0
    %1904 = vmatpush1.msra.mxu0 0.0
    %1905 = vmatprep.subr.mxu0 0.0
    %1906 = vmatpush1.msra.mxu0 0.0
    %1907 = vmatprep.subr.mxu0 0.0
    %1908 = vmatpush1.msra.mxu0 0.0
    %1909 = vmatprep.subr.mxu0 0.0
    %1910 = vmatpush1.msra.mxu0 0.0
    %1911 = vmatprep.subr.mxu0 0.0
    %1912 = vmatpush1.msra.mxu0 0.0
    %1913 = vmatprep.mubr.f32.mxu0 0.0
    %1914 = vmatmul.mubr.f32.gmra.mrb[0].mxu0 %v1771
    %v1915 = vpop.f32.mrb[0].mxu0
    %v1916 = vadd.f32 0.0, %v1915
    %v1917 = vpop.f32.mrb[0].mxu0
    %v1918 = vadd.f32 0.0, %v1917
    %1919 = vdwg.mxu0
    %v1920 = vadd.f32 %v1774, %v1845
    %v1921 = vadd.f32 %v1775, %v1847
    %v1922 = vadd.f32 %v1776, %v1916
    %v1923 = vadd.f32 %v1777, %v1918
    %v1924 = vxor.u32 %v1920, 2147483648
    %v1925 = vxor.u32 %v1921, 2147483648
    %v1926 = vxor.u32 %v1922, 2147483648
    %v1927 = vmul.f32 %v1924, 1.442695
    %v1928 = vpow.pop %v1927
    %v1929 = vmul.f32 %v1925, 1.442695
    %v1930 = vpow.pop %v1929
    %v1931 = vmul.f32 %v1926, 1.442695
    %v1932 = vpow.pop %v1931
    %v1933 = vadd.f32 %v1928, 1.0
    %v1934 = vadd.f32 %v1930, 1.0
    %v1935 = vadd.f32 %v1932, 1.0
    %v1936 = vrcp.pop %v1933
    %v1937 = vmul.f32 1.0, %v1936
    %v1938 = vrcp.pop %v1934
    %v1939 = vmul.f32 1.0, %v1938
    %v1940 = vrcp.pop %v1935
    %v1941 = vmul.f32 1.0, %v1940
    %v1942 = vtanh.pop %v1923
    %v1943 = vmul.f32 %v1939, %v1769
    %v1944 = vmul.f32 %v1937, %v1942
    %v1945 = vadd.f32 %v1943, %v1944
    %v1946 = vtanh.pop %v1945
    %v1947 = vmul.f32 %v1941, %v1946
    %1948 = vst [vmem:[#allocation2 + $0x38] sm:$0x3] %v1947
    %1949 = vst [vmem:[#allocation3] sm:$0x3] %v1947
    %v1950 = vld [vmem:[#allocation2] sm:$0xff]
    %v1951 = vld [vmem:[#allocation2 + $0x8] sm:$0xff]
    %v1952 = vld [vmem:[#allocation2 + $0x10] sm:$0xff]
    %v1953 = vld [vmem:[#allocation2 + $0x18] sm:$0xff]
    %v1954 = vld [vmem:[#allocation2 + $0x20] sm:$0xff]
    %v1955 = vld [vmem:[#allocation2 + $0x28] sm:$0xff]
    %v1956 = vld [vmem:[#allocation2 + $0x30] sm:$0xff]
    %v1957 = vld [vmem:[#allocation2 + $0x38] sm:$0xff]
    %v1958 = vld [vmem:[#allocation3] sm:$0xff]
    %v1959 = vld [vmem:[#allocation3 + $0x8] sm:$0xff]
    %v1960 = vld [vmem:[#allocation3 + $0x10] sm:$0xff]
    %v1961 = vld [vmem:[#allocation3 + $0x18] sm:$0xff]
    %v1962 = vld [vmem:[#allocation3 + $0x20] sm:$0xff]
    %v1963 = vld [vmem:[#allocation3 + $0x28] sm:$0xff]
    %v1964 = vld [vmem:[#allocation3 + $0x30] sm:$0xff]
    %v1965 = vld [vmem:[#allocation3 + $0x38] sm:$0xff]
    %v1966 = vsel %vm172, 1, 0
    %vm1967 = vcmp.eq.s32.totalorder %v1966, 1
    %v1968 = vsel %vm1967, %v1950, %v1958
    %v1969 = vsel %vm1967, %v1951, %v1959
    %v1970 = vsel %vm1967, %v1952, %v1960
    %v1971 = vsel %vm1967, %v1953, %v1961
    %v1972 = vsel %vm1967, %v1954, %v1962
    %v1973 = vsel %vm1967, %v1955, %v1963
    %v1974 = vsel %vm1967, %v1956, %v1964
    %v1975 = vsel %vm1967, %v1957, %v1965
    %v1976 = vld [vmem:[#allocation9] sm:$0xff]
    %v1977 = vld [vmem:[#allocation9 + $0x8] sm:$0xff]
    %v1978 = vld [vmem:[#allocation9 + $0x10] sm:$0xff]
    %v1979 = vld [vmem:[#allocation9 + $0x18] sm:$0xff]
    %v1980 = vld [vmem:[#allocation9 + $0x20] sm:$0xff]
    %v1981 = vld [vmem:[#allocation9 + $0x28] sm:$0xff]
    %v1982 = vld [vmem:[#allocation9 + $0x30] sm:$0xff]
    %v1983 = vld [vmem:[#allocation9 + $0x38] sm:$0xff]
    %v1984 = vld [vmem:[#allocation9 + $0x40] sm:$0xff]
    %v1985 = vld [vmem:[#allocation9 + $0x48] sm:$0xff]
    %v1986 = vld [vmem:[#allocation9 + $0x50] sm:$0xff]
    %v1987 = vld [vmem:[#allocation9 + $0x58] sm:$0xff]
    %v1988 = vld [vmem:[#allocation9 + $0x60] sm:$0xff]
    %v1989 = vld [vmem:[#allocation9 + $0x68] sm:$0xff]
    %v1990 = vld [vmem:[#allocation9 + $0x70] sm:$0xff]
    %v1991 = vld [vmem:[#allocation9 + $0x78] sm:$0xff]
    %v1992 = vld [vmem:[#allocation9 + $0x80] sm:$0xff]
    %v1993 = vld [vmem:[#allocation9 + $0x88] sm:$0xff]
    %v1994 = vld [vmem:[#allocation9 + $0x90] sm:$0xff]
    %v1995 = vld [vmem:[#allocation9 + $0x98] sm:$0xff]
    %v1996 = vld [vmem:[#allocation9 + $0xa0] sm:$0xff]
    %v1997 = vld [vmem:[#allocation9 + $0xa8] sm:$0xff]
    %v1998 = vld [vmem:[#allocation9 + $0xb0] sm:$0xff]
    %v1999 = vld [vmem:[#allocation9 + $0xb8] sm:$0xff]
    %v2000 = vld [vmem:[#allocation9 + $0xc0] sm:$0xff]
    %v2001 = vld [vmem:[#allocation9 + $0xc8] sm:$0xff]
    %v2002 = vld [vmem:[#allocation9 + $0xd0] sm:$0xff]
    %v2003 = vld [vmem:[#allocation9 + $0xd8] sm:$0xff]
    %v2004 = vld [vmem:[#allocation9 + $0xe0] sm:$0xff]
    %v2005 = vld [vmem:[#allocation9 + $0xe8] sm:$0xff]
    %v2006 = vld [vmem:[#allocation9 + $0xf0] sm:$0xff]
    %v2007 = vld [vmem:[#allocation9 + $0xf8] sm:$0xff]
    %v2008 = vld [vmem:[#allocation9 + $0x100] sm:$0xff]
    %v2009 = vld [vmem:[#allocation9 + $0x108] sm:$0xff]
    %v2010 = vld [vmem:[#allocation9 + $0x110] sm:$0xff]
    %v2011 = vld [vmem:[#allocation9 + $0x118] sm:$0xff]
    %v2012 = vld [vmem:[#allocation9 + $0x120] sm:$0xff]
    %v2013 = vld [vmem:[#allocation9 + $0x128] sm:$0xff]
    %v2014 = vld [vmem:[#allocation9 + $0x130] sm:$0xff]
    %v2015 = vld [vmem:[#allocation9 + $0x138] sm:$0xff]
    %v2016 = vld [vmem:[#allocation9 + $0x140] sm:$0xff]
    %v2017 = vld [vmem:[#allocation9 + $0x148] sm:$0xff]
    %v2018 = vld [vmem:[#allocation9 + $0x150] sm:$0xff]
    %v2019 = vld [vmem:[#allocation9 + $0x158] sm:$0xff]
    %v2020 = vld [vmem:[#allocation9 + $0x160] sm:$0xff]
    %v2021 = vld [vmem:[#allocation9 + $0x168] sm:$0xff]
    %v2022 = vld [vmem:[#allocation9 + $0x170] sm:$0xff]
    %v2023 = vld [vmem:[#allocation9 + $0x178] sm:$0xff]
    %v2024 = vld [vmem:[#allocation9 + $0x180] sm:$0xff]
    %v2025 = vld [vmem:[#allocation9 + $0x188] sm:$0xff]
    %v2026 = vld [vmem:[#allocation9 + $0x190] sm:$0xff]
    %v2027 = vld [vmem:[#allocation9 + $0x198] sm:$0xff]
    %v2028 = vld [vmem:[#allocation9 + $0x1a0] sm:$0xff]
    %v2029 = vld [vmem:[#allocation9 + $0x1a8] sm:$0xff]
    %v2030 = vld [vmem:[#allocation9 + $0x1b0] sm:$0xff]
    %v2031 = vld [vmem:[#allocation9 + $0x1b8] sm:$0xff]
    %v2032 = vld [vmem:[#allocation9 + $0x1c0] sm:$0xff]
    %v2033 = vld [vmem:[#allocation9 + $0x1c8] sm:$0xff]
    %v2034 = vld [vmem:[#allocation9 + $0x1d0] sm:$0xff]
    %v2035 = vld [vmem:[#allocation9 + $0x1d8] sm:$0xff]
    %v2036 = vld [vmem:[#allocation9 + $0x1e0] sm:$0xff]
    %v2037 = vld [vmem:[#allocation9 + $0x1e8] sm:$0xff]
    %v2038 = vld [vmem:[#allocation9 + $0x1f0] sm:$0xff]
    %v2039 = vld [vmem:[#allocation9 + $0x1f8] sm:$0xff]
    %v2040 = vld [vmem:[%s7] sm:$0xf]
    %v2042 = vlaneseq
    %v2043 = vshrl.u32 %v2042, 7
    %v2044 = vsub.s32 0, %v2043
    %v2045 = vrot.slane %v2040, %v2044
    %v2046 = vlaneseq
    %v2047 = vshrl.u32 %v2046, 7
    %v2048 = vsub.s32 1, %v2047
    %v2049 = vrot.slane %v2040, %v2048
    %v2050 = vlaneseq
    %v2051 = vshrl.u32 %v2050, 7
    %v2052 = vsub.s32 2, %v2051
    %v2053 = vrot.slane %v2040, %v2052
    %v2054 = vlaneseq
    %v2055 = vshrl.u32 %v2054, 7
    %v2056 = vsub.s32 3, %v2055
    %v2057 = vrot.slane %v2040, %v2056
    %2062 = vmatprep.subr.mxu0 %v1977
    %2063 = vmatpush1.msra.mxu0 %v1976
    %2064 = vmatprep.subr.mxu0 %v1981
    %2065 = vmatpush1.msra.mxu0 %v1980
    %2066 = vmatprep.subr.mxu0 %v1985
    %2067 = vmatpush1.msra.mxu0 %v1984
    %2068 = vmatprep.subr.mxu0 %v1989
    %2069 = vmatpush1.msra.mxu0 %v1988
    %2070 = vmatprep.subr.mxu0 %v1993
    %2071 = vmatpush1.msra.mxu0 %v1992
    %2072 = vmatprep.subr.mxu0 %v1997
    %2073 = vmatpush1.msra.mxu0 %v1996
    %2074 = vmatprep.subr.mxu0 %v2001
    %2075 = vmatpush1.msra.mxu0 %v2000
    %2076 = vmatprep.subr.mxu0 %v2005
    %2077 = vmatpush1.msra.mxu0 %v2004
    %2078 = vmatprep.subr.mxu0 %v2009
    %2079 = vmatpush1.msra.mxu0 %v2008
    %2080 = vmatprep.subr.mxu0 %v2013
    %2081 = vmatpush1.msra.mxu0 %v2012
    %2082 = vmatprep.subr.mxu0 %v2017
    %2083 = vmatpush1.msra.mxu0 %v2016
    %2084 = vmatprep.subr.mxu0 %v2021
    %2085 = vmatpush1.msra.mxu0 %v2020
    %2086 = vmatprep.subr.mxu0 %v2025
    %2087 = vmatpush1.msra.mxu0 %v2024
    %2088 = vmatprep.subr.mxu0 %v2029
    %2089 = vmatpush1.msra.mxu0 %v2028
    %2090 = vmatprep.subr.mxu0 %v2033
    %2091 = vmatpush1.msra.mxu0 %v2032
    %2092 = vmatprep.subr.mxu0 %v2037
    %2093 = vmatpush1.msra.mxu0 %v2036
    %2094 = vmatprep.subr.mxu0 0.0
    %2095 = vmatpush1.msra.mxu0 0.0
    %2096 = vmatprep.subr.mxu0 0.0
    %2097 = vmatpush1.msra.mxu0 0.0
    %2098 = vmatprep.subr.mxu0 0.0
    %2099 = vmatpush1.msra.mxu0 0.0
    %2100 = vmatprep.subr.mxu0 0.0
    %2101 = vmatpush1.msra.mxu0 0.0
    %2102 = vmatprep.subr.mxu0 0.0
    %2103 = vmatpush1.msra.mxu0 0.0
    %2104 = vmatprep.subr.mxu0 0.0
    %2105 = vmatpush1.msra.mxu0 0.0
    %2106 = vmatprep.subr.mxu0 0.0
    %2107 = vmatpush1.msra.mxu0 0.0
    %2108 = vmatprep.subr.mxu0 0.0
    %2109 = vmatpush1.msra.mxu0 0.0
    %2110 = vmatprep.subr.mxu0 0.0
    %2111 = vmatpush1.msra.mxu0 0.0
    %2112 = vmatprep.subr.mxu0 0.0
    %2113 = vmatpush1.msra.mxu0 0.0
    %2114 = vmatprep.subr.mxu0 0.0
    %2115 = vmatpush1.msra.mxu0 0.0
    %2116 = vmatprep.subr.mxu0 0.0
    %2117 = vmatpush1.msra.mxu0 0.0
    %2118 = vmatprep.subr.mxu0 0.0
    %2119 = vmatpush1.msra.mxu0 0.0
    %2120 = vmatprep.subr.mxu0 0.0
    %2121 = vmatpush1.msra.mxu0 0.0
    %2122 = vmatprep.subr.mxu0 0.0
    %2123 = vmatpush1.msra.mxu0 0.0
    %2124 = vmatprep.subr.mxu0 0.0
    %2125 = vmatpush1.msra.mxu0 0.0
    %2126 = vmatprep.mubr.f32.mxu0 0.0
    %2127 = vmatmul.mubr.f32.gmra.mrb[0].mxu0 %v1968
    %v2128 = vpop.f32.mrb[0].mxu0
    %v2129 = vadd.f32 %v2045, %v2128
    %v2130 = vpop.f32.mrb[0].mxu0
    %v2131 = vadd.f32 %v2049, %v2130
    %2132 = vmatprep.mubr.f32.mxu0 0.0
    %2133 = vmatmul.mubr.f32.gmra.mrb[0].mxu0 %v1969
    %v2134 = vpop.f32.mrb[0].mxu0
    %v2135 = vadd.f32 %v2045, %v2134
    %v2136 = vpop.f32.mrb[0].mxu0
    %v2137 = vadd.f32 %v2049, %v2136
    %2138 = vmatprep.mubr.f32.mxu0 0.0
    %2139 = vmatmul.mubr.f32.gmra.mrb[0].mxu0 %v1970
    %v2140 = vpop.f32.mrb[0].mxu0
    %v2141 = vadd.f32 %v2045, %v2140
    %v2142 = vpop.f32.mrb[0].mxu0
    %v2143 = vadd.f32 %v2049, %v2142
    %2144 = vmatprep.mubr.f32.mxu0 0.0
    %2145 = vmatmul.mubr.f32.gmra.mrb[0].mxu0 %v1971
    %v2146 = vpop.f32.mrb[0].mxu0
    %v2147 = vadd.f32 %v2045, %v2146
    %v2148 = vpop.f32.mrb[0].mxu0
    %v2149 = vadd.f32 %v2049, %v2148
    %2150 = vmatprep.mubr.f32.mxu0 0.0
    %2151 = vmatmul.mubr.f32.gmra.mrb[0].mxu0 %v1972
    %v2152 = vpop.f32.mrb[0].mxu0
    %v2153 = vadd.f32 %v2045, %v2152
    %v2154 = vpop.f32.mrb[0].mxu0
    %v2155 = vadd.f32 %v2049, %v2154
    %2156 = vmatprep.mubr.f32.mxu0 0.0
    %2157 = vmatmul.mubr.f32.gmra.mrb[0].mxu0 %v1973
    %v2158 = vpop.f32.mrb[0].mxu0
    %v2159 = vadd.f32 %v2045, %v2158
    %v2160 = vpop.f32.mrb[0].mxu0
    %v2161 = vadd.f32 %v2049, %v2160
    %2162 = vmatprep.mubr.f32.mxu0 0.0
    %2163 = vmatmul.mubr.f32.gmra.mrb[0].mxu0 %v1974
    %v2164 = vpop.f32.mrb[0].mxu0
    %v2165 = vadd.f32 %v2045, %v2164
    %v2166 = vpop.f32.mrb[0].mxu0
    %v2167 = vadd.f32 %v2049, %v2166
    %2168 = vmatprep.mubr.f32.mxu0 0.0
    %2169 = vmatmul.mubr.f32.gmra.mrb[0].mxu0 %v1975
    %v2170 = vpop.f32.mrb[0].mxu0
    %v2171 = vadd.f32 %v2045, %v2170
    %v2172 = vpop.f32.mrb[0].mxu0
    %v2173 = vadd.f32 %v2049, %v2172
    %2174 = vdwg.mxu0
    %2175 = vmatprep.subr.mxu0 %v1979
    %2176 = vmatpush1.msra.mxu0 %v1978
    %2177 = vmatprep.subr.mxu0 %v1983
    %2178 = vmatpush1.msra.mxu0 %v1982
    %2179 = vmatprep.subr.mxu0 %v1987
    %2180 = vmatpush1.msra.mxu0 %v1986
    %2181 = vmatprep.subr.mxu0 %v1991
    %2182 = vmatpush1.msra.mxu0 %v1990
    %2183 = vmatprep.subr.mxu0 %v1995
    %2184 = vmatpush1.msra.mxu0 %v1994
    %2185 = vmatprep.subr.mxu0 %v1999
    %2186 = vmatpush1.msra.mxu0 %v1998
    %2187 = vmatprep.subr.mxu0 %v2003
    %2188 = vmatpush1.msra.mxu0 %v2002
    %2189 = vmatprep.subr.mxu0 %v2007
    %2190 = vmatpush1.msra.mxu0 %v2006
    %2191 = vmatprep.subr.mxu0 %v2011
    %2192 = vmatpush1.msra.mxu0 %v2010
    %2193 = vmatprep.subr.mxu0 %v2015
    %2194 = vmatpush1.msra.mxu0 %v2014
    %2195 = vmatprep.subr.mxu0 %v2019
    %2196 = vmatpush1.msra.mxu0 %v2018
    %2197 = vmatprep.subr.mxu0 %v2023
    %2198 = vmatpush1.msra.mxu0 %v2022
    %2199 = vmatprep.subr.mxu0 %v2027
    %2200 = vmatpush1.msra.mxu0 %v2026
    %2201 = vmatprep.subr.mxu0 %v2031
    %2202 = vmatpush1.msra.mxu0 %v2030
    %2203 = vmatprep.subr.mxu0 %v2035
    %2204 = vmatpush1.msra.mxu0 %v2034
    %2205 = vmatprep.subr.mxu0 %v2039
    %2206 = vmatpush1.msra.mxu0 %v2038
    %2207 = vmatprep.subr.mxu0 0.0
    %2208 = vmatpush1.msra.mxu0 0.0
    %2209 = vmatprep.subr.mxu0 0.0
    %2210 = vmatpush1.msra.mxu0 0.0
    %2211 = vmatprep.subr.mxu0 0.0
    %2212 = vmatpush1.msra.mxu0 0.0
    %2213 = vmatprep.subr.mxu0 0.0
    %2214 = vmatpush1.msra.mxu0 0.0
    %2215 = vmatprep.subr.mxu0 0.0
    %2216 = vmatpush1.msra.mxu0 0.0
    %2217 = vmatprep.subr.mxu0 0.0
    %2218 = vmatpush1.msra.mxu0 0.0
    %2219 = vmatprep.subr.mxu0 0.0
    %2220 = vmatpush1.msra.mxu0 0.0
    %2221 = vmatprep.subr.mxu0 0.0
    %2222 = vmatpush1.msra.mxu0 0.0
    %2223 = vmatprep.subr.mxu0 0.0
    %2224 = vmatpush1.msra.mxu0 0.0
    %2225 = vmatprep.subr.mxu0 0.0
    %2226 = vmatpush1.msra.mxu0 0.0
    %2227 = vmatprep.subr.mxu0 0.0
    %2228 = vmatpush1.msra.mxu0 0.0
    %2229 = vmatprep.subr.mxu0 0.0
    %2230 = vmatpush1.msra.mxu0 0.0
    %2231 = vmatprep.subr.mxu0 0.0
    %2232 = vmatpush1.msra.mxu0 0.0
    %2233 = vmatprep.subr.mxu0 0.0
    %2234 = vmatpush1.msra.mxu0 0.0
    %2235 = vmatprep.subr.mxu0 0.0
    %2236 = vmatpush1.msra.mxu0 0.0
    %2237 = vmatprep.subr.mxu0 0.0
    %2238 = vmatpush1.msra.mxu0 0.0
    %2239 = vmatprep.mubr.f32.mxu0 0.0
    %2240 = vmatmul.mubr.f32.gmra.mrb[0].mxu0 %v1968
    %v2241 = vpop.f32.mrb[0].mxu0
    %v2242 = vadd.f32 %v2053, %v2241
    %v2243 = vpop.f32.mrb[0].mxu0
    %v2244 = vadd.f32 %v2057, %v2243
    %2245 = vmatprep.mubr.f32.mxu0 0.0
    %2246 = vmatmul.mubr.f32.gmra.mrb[0].mxu0 %v1969
    %v2247 = vpop.f32.mrb[0].mxu0
    %v2248 = vadd.f32 %v2053, %v2247
    %v2249 = vpop.f32.mrb[0].mxu0
    %v2250 = vadd.f32 %v2057, %v2249
    %2251 = vmatprep.mubr.f32.mxu0 0.0
    %2252 = vmatmul.mubr.f32.gmra.mrb[0].mxu0 %v1970
    %v2253 = vpop.f32.mrb[0].mxu0
    %v2254 = vadd.f32 %v2053, %v2253
    %v2255 = vpop.f32.mrb[0].mxu0
    %v2256 = vadd.f32 %v2057, %v2255
    %2257 = vmatprep.mubr.f32.mxu0 0.0
    %2258 = vmatmul.mubr.f32.gmra.mrb[0].mxu0 %v1971
    %v2259 = vpop.f32.mrb[0].mxu0
    %v2260 = vadd.f32 %v2053, %v2259
    %v2261 = vpop.f32.mrb[0].mxu0
    %v2262 = vadd.f32 %v2057, %v2261
    %2263 = vmatprep.mubr.f32.mxu0 0.0
    %2264 = vmatmul.mubr.f32.gmra.mrb[0].mxu0 %v1972
    %v2265 = vpop.f32.mrb[0].mxu0
    %v2266 = vadd.f32 %v2053, %v2265
    %v2267 = vpop.f32.mrb[0].mxu0
    %v2268 = vadd.f32 %v2057, %v2267
    %2269 = vmatprep.mubr.f32.mxu0 0.0
    %2270 = vmatmul.mubr.f32.gmra.mrb[0].mxu0 %v1973
    %v2271 = vpop.f32.mrb[0].mxu0
    %v2272 = vadd.f32 %v2053, %v2271
    %v2273 = vpop.f32.mrb[0].mxu0
    %v2274 = vadd.f32 %v2057, %v2273
    %2275 = vmatprep.mubr.f32.mxu0 0.0
    %2276 = vmatmul.mubr.f32.gmra.mrb[0].mxu0 %v1974
    %v2277 = vpop.f32.mrb[0].mxu0
    %v2278 = vadd.f32 %v2053, %v2277
    %v2279 = vpop.f32.mrb[0].mxu0
    %v2280 = vadd.f32 %v2057, %v2279
    %2281 = vmatprep.mubr.f32.mxu0 0.0
    %2282 = vmatmul.mubr.f32.gmra.mrb[0].mxu0 %v1975
    %v2283 = vpop.f32.mrb[0].mxu0
    %v2284 = vadd.f32 %v2053, %v2283
    %v2285 = vpop.f32.mrb[0].mxu0
    %v2286 = vadd.f32 %v2057, %v2285
    %2287 = vdwg.mxu0
    %v2288 = vld [vmem:[#allocation11] sm:$0xff]
    %v2289 = vld [vmem:[#allocation11 + $0x8] sm:$0xff]
    %v2290 = vld [vmem:[#allocation11 + $0x10] sm:$0xff]
    %v2291 = vld [vmem:[#allocation11 + $0x18] sm:$0xff]
    %v2292 = vld [vmem:[#allocation11 + $0x20] sm:$0xff]
    %v2293 = vld [vmem:[#allocation11 + $0x28] sm:$0xff]
    %v2294 = vld [vmem:[#allocation11 + $0x30] sm:$0xff]
    %v2295 = vld [vmem:[#allocation11 + $0x38] sm:$0xff]
    %v2296 = vld [vmem:[#allocation11 + $0x40] sm:$0xff]
    %v2297 = vld [vmem:[#allocation11 + $0x48] sm:$0xff]
    %v2298 = vld [vmem:[#allocation11 + $0x50] sm:$0xff]
    %v2299 = vld [vmem:[#allocation11 + $0x58] sm:$0xff]
    %v2300 = vld [vmem:[#allocation11 + $0x60] sm:$0xff]
    %v2301 = vld [vmem:[#allocation11 + $0x68] sm:$0xff]
    %v2302 = vld [vmem:[#allocation11 + $0x70] sm:$0xff]
    %v2303 = vld [vmem:[#allocation11 + $0x78] sm:$0xff]
    %v2304 = vld [vmem:[#allocation11 + $0x80] sm:$0xff]
    %v2305 = vld [vmem:[#allocation11 + $0x88] sm:$0xff]
    %v2306 = vld [vmem:[#allocation11 + $0x90] sm:$0xff]
    %v2307 = vld [vmem:[#allocation11 + $0x98] sm:$0xff]
    %v2308 = vld [vmem:[#allocation11 + $0xa0] sm:$0xff]
    %v2309 = vld [vmem:[#allocation11 + $0xa8] sm:$0xff]
    %v2310 = vld [vmem:[#allocation11 + $0xb0] sm:$0xff]
    %v2311 = vld [vmem:[#allocation11 + $0xb8] sm:$0xff]
    %v2312 = vld [vmem:[#allocation11 + $0xc0] sm:$0xff]
    %v2313 = vld [vmem:[#allocation11 + $0xc8] sm:$0xff]
    %v2314 = vld [vmem:[#allocation11 + $0xd0] sm:$0xff]
    %v2315 = vld [vmem:[#allocation11 + $0xd8] sm:$0xff]
    %v2316 = vld [vmem:[#allocation11 + $0xe0] sm:$0xff]
    %v2317 = vld [vmem:[#allocation11 + $0xe8] sm:$0xff]
    %v2318 = vld [vmem:[#allocation11 + $0xf0] sm:$0xff]
    %v2319 = vld [vmem:[#allocation11 + $0xf8] sm:$0xff]
    %v2320 = vld [vmem:[#allocation11 + $0x100] sm:$0xff]
    %v2321 = vld [vmem:[#allocation11 + $0x108] sm:$0xff]
    %v2322 = vld [vmem:[#allocation11 + $0x110] sm:$0xff]
    %v2323 = vld [vmem:[#allocation11 + $0x118] sm:$0xff]
    %v2324 = vld [vmem:[#allocation11 + $0x120] sm:$0xff]
    %v2325 = vld [vmem:[#allocation11 + $0x128] sm:$0xff]
    %v2326 = vld [vmem:[#allocation11 + $0x130] sm:$0xff]
    %v2327 = vld [vmem:[#allocation11 + $0x138] sm:$0xff]
    %v2328 = vld [vmem:[#allocation11 + $0x140] sm:$0xff]
    %v2329 = vld [vmem:[#allocation11 + $0x148] sm:$0xff]
    %v2330 = vld [vmem:[#allocation11 + $0x150] sm:$0xff]
    %v2331 = vld [vmem:[#allocation11 + $0x158] sm:$0xff]
    %v2332 = vld [vmem:[#allocation11 + $0x160] sm:$0xff]
    %v2333 = vld [vmem:[#allocation11 + $0x168] sm:$0xff]
    %v2334 = vld [vmem:[#allocation11 + $0x170] sm:$0xff]
    %v2335 = vld [vmem:[#allocation11 + $0x178] sm:$0xff]
    %v2336 = vld [vmem:[#allocation11 + $0x180] sm:$0xff]
    %v2337 = vld [vmem:[#allocation11 + $0x188] sm:$0xff]
    %v2338 = vld [vmem:[#allocation11 + $0x190] sm:$0xff]
    %v2339 = vld [vmem:[#allocation11 + $0x198] sm:$0xff]
    %v2340 = vld [vmem:[#allocation11 + $0x1a0] sm:$0xff]
    %v2341 = vld [vmem:[#allocation11 + $0x1a8] sm:$0xff]
    %v2342 = vld [vmem:[#allocation11 + $0x1b0] sm:$0xff]
    %v2343 = vld [vmem:[#allocation11 + $0x1b8] sm:$0xff]
    %v2344 = vld [vmem:[#allocation11 + $0x1c0] sm:$0xff]
    %v2345 = vld [vmem:[#allocation11 + $0x1c8] sm:$0xff]
    %v2346 = vld [vmem:[#allocation11 + $0x1d0] sm:$0xff]
    %v2347 = vld [vmem:[#allocation11 + $0x1d8] sm:$0xff]
    %v2348 = vld [vmem:[#allocation11 + $0x1e0] sm:$0xff]
    %v2349 = vld [vmem:[#allocation11 + $0x1e8] sm:$0xff]
    %v2350 = vld [vmem:[#allocation11 + $0x1f0] sm:$0xff]
    %v2351 = vld [vmem:[#allocation11 + $0x1f8] sm:$0xff]
    %v2352 = vsel %vm409, %v2129, %v2171
    %v2353 = vsel %vm410, %v2131, %v2173
    %v2354 = vsel %vm411, %v2242, %v2284
    %v2355 = vsel %vm412, %v2244, %v2286
    %2356 = vmatprep.subr.mxu0 %v2289
    %2357 = vmatpush1.msra.mxu0 %v2288
    %2358 = vmatprep.subr.mxu0 %v2293
    %2359 = vmatpush1.msra.mxu0 %v2292
    %2360 = vmatprep.subr.mxu0 %v2297
    %2361 = vmatpush1.msra.mxu0 %v2296
    %2362 = vmatprep.subr.mxu0 %v2301
    %2363 = vmatpush1.msra.mxu0 %v2300
    %2364 = vmatprep.subr.mxu0 %v2305
    %2365 = vmatpush1.msra.mxu0 %v2304
    %2366 = vmatprep.subr.mxu0 %v2309
    %2367 = vmatpush1.msra.mxu0 %v2308
    %2368 = vmatprep.subr.mxu0 %v2313
    %2369 = vmatpush1.msra.mxu0 %v2312
    %2370 = vmatprep.subr.mxu0 %v2317
    %2371 = vmatpush1.msra.mxu0 %v2316
    %2372 = vmatprep.subr.mxu0 %v2321
    %2373 = vmatpush1.msra.mxu0 %v2320
    %2374 = vmatprep.subr.mxu0 %v2325
    %2375 = vmatpush1.msra.mxu0 %v2324
    %2376 = vmatprep.subr.mxu0 %v2329
    %2377 = vmatpush1.msra.mxu0 %v2328
    %2378 = vmatprep.subr.mxu0 %v2333
    %2379 = vmatpush1.msra.mxu0 %v2332
    %2380 = vmatprep.subr.mxu0 %v2337
    %2381 = vmatpush1.msra.mxu0 %v2336
    %2382 = vmatprep.subr.mxu0 %v2341
    %2383 = vmatpush1.msra.mxu0 %v2340
    %2384 = vmatprep.subr.mxu0 %v2345
    %2385 = vmatpush1.msra.mxu0 %v2344
    %2386 = vmatprep.subr.mxu0 %v2349
    %2387 = vmatpush1.msra.mxu0 %v2348
    %2388 = vmatprep.subr.mxu0 0.0
    %2389 = vmatpush1.msra.mxu0 0.0
    %2390 = vmatprep.subr.mxu0 0.0
    %2391 = vmatpush1.msra.mxu0 0.0
    %2392 = vmatprep.subr.mxu0 0.0
    %2393 = vmatpush1.msra.mxu0 0.0
    %2394 = vmatprep.subr.mxu0 0.0
    %2395 = vmatpush1.msra.mxu0 0.0
    %2396 = vmatprep.subr.mxu0 0.0
    %2397 = vmatpush1.msra.mxu0 0.0
    %2398 = vmatprep.subr.mxu0 0.0
    %2399 = vmatpush1.msra.mxu0 0.0
    %2400 = vmatprep.subr.mxu0 0.0
    %2401 = vmatpush1.msra.mxu0 0.0
    %2402 = vmatprep.subr.mxu0 0.0
    %2403 = vmatpush1.msra.mxu0 0.0
    %2404 = vmatprep.subr.mxu0 0.0
    %2405 = vmatpush1.msra.mxu0 0.0
    %2406 = vmatprep.subr.mxu0 0.0
    %2407 = vmatpush1.msra.mxu0 0.0
    %2408 = vmatprep.subr.mxu0 0.0
    %2409 = vmatpush1.msra.mxu0 0.0
    %2410 = vmatprep.subr.mxu0 0.0
    %2411 = vmatpush1.msra.mxu0 0.0
    %2412 = vmatprep.subr.mxu0 0.0
    %2413 = vmatpush1.msra.mxu0 0.0
    %2414 = vmatprep.subr.mxu0 0.0
    %2415 = vmatpush1.msra.mxu0 0.0
    %2416 = vmatprep.subr.mxu0 0.0
    %2417 = vmatpush1.msra.mxu0 0.0
    %2418 = vmatprep.subr.mxu0 0.0
    %2419 = vmatpush1.msra.mxu0 0.0
    %2420 = vmatprep.mubr.f32.mxu0 0.0
    %2421 = vmatmul.mubr.f32.gmra.mrb[0].mxu0 0.0
    %v2422 = vpop.f32.mrb[0].mxu0
    %v2423 = vadd.f32 0.0, %v2422
    %v2424 = vpop.f32.mrb[0].mxu0
    %v2425 = vadd.f32 0.0, %v2424
    %2426 = vdwg.mxu0
    %2427 = vmatprep.subr.mxu0 %v2291
    %2428 = vmatpush1.msra.mxu0 %v2290
    %2429 = vmatprep.subr.mxu0 %v2295
    %2430 = vmatpush1.msra.mxu0 %v2294
    %2431 = vmatprep.subr.mxu0 %v2299
    %2432 = vmatpush1.msra.mxu0 %v2298
    %2433 = vmatprep.subr.mxu0 %v2303
    %2434 = vmatpush1.msra.mxu0 %v2302
    %2435 = vmatprep.subr.mxu0 %v2307
    %2436 = vmatpush1.msra.mxu0 %v2306
    %2437 = vmatprep.subr.mxu0 %v2311
    %2438 = vmatpush1.msra.mxu0 %v2310
    %2439 = vmatprep.subr.mxu0 %v2315
    %2440 = vmatpush1.msra.mxu0 %v2314
    %2441 = vmatprep.subr.mxu0 %v2319
    %2442 = vmatpush1.msra.mxu0 %v2318
    %2443 = vmatprep.subr.mxu0 %v2323
    %2444 = vmatpush1.msra.mxu0 %v2322
    %2445 = vmatprep.subr.mxu0 %v2327
    %2446 = vmatpush1.msra.mxu0 %v2326
    %2447 = vmatprep.subr.mxu0 %v2331
    %2448 = vmatpush1.msra.mxu0 %v2330
    %2449 = vmatprep.subr.mxu0 %v2335
    %2450 = vmatpush1.msra.mxu0 %v2334
    %2451 = vmatprep.subr.mxu0 %v2339
    %2452 = vmatpush1.msra.mxu0 %v2338
    %2453 = vmatprep.subr.mxu0 %v2343
    %2454 = vmatpush1.msra.mxu0 %v2342
    %2455 = vmatprep.subr.mxu0 %v2347
    %2456 = vmatpush1.msra.mxu0 %v2346
    %2457 = vmatprep.subr.mxu0 %v2351
    %2458 = vmatpush1.msra.mxu0 %v2350
    %2459 = vmatprep.subr.mxu0 0.0
    %2460 = vmatpush1.msra.mxu0 0.0
    %2461 = vmatprep.subr.mxu0 0.0
    %2462 = vmatpush1.msra.mxu0 0.0
    %2463 = vmatprep.subr.mxu0 0.0
    %2464 = vmatpush1.msra.mxu0 0.0
    %2465 = vmatprep.subr.mxu0 0.0
    %2466 = vmatpush1.msra.mxu0 0.0
    %2467 = vmatprep.subr.mxu0 0.0
    %2468 = vmatpush1.msra.mxu0 0.0
    %2469 = vmatprep.subr.mxu0 0.0
    %2470 = vmatpush1.msra.mxu0 0.0
    %2471 = vmatprep.subr.mxu0 0.0
    %2472 = vmatpush1.msra.mxu0 0.0
    %2473 = vmatprep.subr.mxu0 0.0
    %2474 = vmatpush1.msra.mxu0 0.0
    %2475 = vmatprep.subr.mxu0 0.0
    %2476 = vmatpush1.msra.mxu0 0.0
    %2477 = vmatprep.subr.mxu0 0.0
    %2478 = vmatpush1.msra.mxu0 0.0
    %2479 = vmatprep.subr.mxu0 0.0
    %2480 = vmatpush1.msra.mxu0 0.0
    %2481 = vmatprep.subr.mxu0 0.0
    %2482 = vmatpush1.msra.mxu0 0.0
    %2483 = vmatprep.subr.mxu0 0.0
    %2484 = vmatpush1.msra.mxu0 0.0
    %2485 = vmatprep.subr.mxu0 0.0
    %2486 = vmatpush1.msra.mxu0 0.0
    %2487 = vmatprep.subr.mxu0 0.0
    %2488 = vmatpush1.msra.mxu0 0.0
    %2489 = vmatprep.subr.mxu0 0.0
    %2490 = vmatpush1.msra.mxu0 0.0
    %2491 = vmatprep.mubr.f32.mxu0 0.0
    %2492 = vmatmul.mubr.f32.gmra.mrb[0].mxu0 0.0
    %v2493 = vpop.f32.mrb[0].mxu0
    %v2494 = vadd.f32 0.0, %v2493
    %v2495 = vpop.f32.mrb[0].mxu0
    %v2496 = vadd.f32 0.0, %v2495
    %2497 = vdwg.mxu0
    %v2498 = vadd.f32 %v2352, %v2423
    %v2499 = vadd.f32 %v2353, %v2425
    %v2500 = vadd.f32 %v2354, %v2494
    %v2501 = vadd.f32 %v2355, %v2496
    %v2502 = vxor.u32 %v2498, 2147483648
    %v2503 = vxor.u32 %v2499, 2147483648
    %v2504 = vxor.u32 %v2500, 2147483648
    %v2505 = vmul.f32 %v2502, 1.442695
    %v2506 = vpow.pop %v2505
    %v2507 = vmul.f32 %v2503, 1.442695
    %v2508 = vpow.pop %v2507
    %v2509 = vmul.f32 %v2504, 1.442695
    %v2510 = vpow.pop %v2509
    %v2511 = vadd.f32 %v2506, 1.0
    %v2512 = vadd.f32 %v2508, 1.0
    %v2513 = vadd.f32 %v2510, 1.0
    %v2514 = vrcp.pop %v2511
    %v2515 = vmul.f32 1.0, %v2514
    %v2516 = vrcp.pop %v2512
    %v2517 = vmul.f32 1.0, %v2516
    %v2518 = vrcp.pop %v2513
    %v2519 = vmul.f32 1.0, %v2518
    %v2520 = vtanh.pop %v2501
    %v2521 = vmul.f32 %v2517, 0.0
    %v2522 = vmul.f32 %v2515, %v2520
    %v2523 = vadd.f32 %v2521, %v2522
    %v2524 = vtanh.pop %v2523
    %v2525 = vmul.f32 %v2519, %v2524
    %2526 = vst [vmem:[#allocation4] sm:$0x3] %v2525
    %s2527 = scalar_lea.vmem [#allocation5], 14
    %2528 = vst [vmem:[%s2527] sm:$0x3] %v2525
    %v2529 = vsel %vm409, %v2135, %v2165
    %v2530 = vsel %vm410, %v2137, %v2167
    %v2531 = vsel %vm411, %v2248, %v2278
    %v2532 = vsel %vm412, %v2250, %v2280
    %2533 = vmatprep.subr.mxu0 %v2289
    %2534 = vmatpush1.msra.mxu0 %v2288
    %2535 = vmatprep.subr.mxu0 %v2293
    %2536 = vmatpush1.msra.mxu0 %v2292
    %2537 = vmatprep.subr.mxu0 %v2297
    %2538 = vmatpush1.msra.mxu0 %v2296
    %2539 = vmatprep.subr.mxu0 %v2301
    %2540 = vmatpush1.msra.mxu0 %v2300
    %2541 = vmatprep.subr.mxu0 %v2305
    %2542 = vmatpush1.msra.mxu0 %v2304
    %2543 = vmatprep.subr.mxu0 %v2309
    %2544 = vmatpush1.msra.mxu0 %v2308
    %2545 = vmatprep.subr.mxu0 %v2313
    %2546 = vmatpush1.msra.mxu0 %v2312
    %2547 = vmatprep.subr.mxu0 %v2317
    %2548 = vmatpush1.msra.mxu0 %v2316
    %2549 = vmatprep.subr.mxu0 %v2321
    %2550 = vmatpush1.msra.mxu0 %v2320
    %2551 = vmatprep.subr.mxu0 %v2325
    %2552 = vmatpush1.msra.mxu0 %v2324
    %2553 = vmatprep.subr.mxu0 %v2329
    %2554 = vmatpush1.msra.mxu0 %v2328
    %2555 = vmatprep.subr.mxu0 %v2333
    %2556 = vmatpush1.msra.mxu0 %v2332
    %2557 = vmatprep.subr.mxu0 %v2337
    %2558 = vmatpush1.msra.mxu0 %v2336
    %2559 = vmatprep.subr.mxu0 %v2341
    %2560 = vmatpush1.msra.mxu0 %v2340
    %2561 = vmatprep.subr.mxu0 %v2345
    %2562 = vmatpush1.msra.mxu0 %v2344
    %2563 = vmatprep.subr.mxu0 %v2349
    %2564 = vmatpush1.msra.mxu0 %v2348
    %2565 = vmatprep.subr.mxu0 0.0
    %2566 = vmatpush1.msra.mxu0 0.0
    %2567 = vmatprep.subr.mxu0 0.0
    %2568 = vmatpush1.msra.mxu0 0.0
    %2569 = vmatprep.subr.mxu0 0.0
    %2570 = vmatpush1.msra.mxu0 0.0
    %2571 = vmatprep.subr.mxu0 0.0
    %2572 = vmatpush1.msra.mxu0 0.0
    %2573 = vmatprep.subr.mxu0 0.0
    %2574 = vmatpush1.msra.mxu0 0.0
    %2575 = vmatprep.subr.mxu0 0.0
    %2576 = vmatpush1.msra.mxu0 0.0
    %2577 = vmatprep.subr.mxu0 0.0
    %2578 = vmatpush1.msra.mxu0 0.0
    %2579 = vmatprep.subr.mxu0 0.0
    %2580 = vmatpush1.msra.mxu0 0.0
    %2581 = vmatprep.subr.mxu0 0.0
    %2582 = vmatpush1.msra.mxu0 0.0
    %2583 = vmatprep.subr.mxu0 0.0
    %2584 = vmatpush1.msra.mxu0 0.0
    %2585 = vmatprep.subr.mxu0 0.0
    %2586 = vmatpush1.msra.mxu0 0.0
    %2587 = vmatprep.subr.mxu0 0.0
    %2588 = vmatpush1.msra.mxu0 0.0
    %2589 = vmatprep.subr.mxu0 0.0
    %2590 = vmatpush1.msra.mxu0 0.0
    %2591 = vmatprep.subr.mxu0 0.0
    %2592 = vmatpush1.msra.mxu0 0.0
    %2593 = vmatprep.subr.mxu0 0.0
    %2594 = vmatpush1.msra.mxu0 0.0
    %2595 = vmatprep.subr.mxu0 0.0
    %2596 = vmatpush1.msra.mxu0 0.0
    %2597 = vmatprep.mubr.f32.mxu0 0.0
    %2598 = vmatmul.mubr.f32.gmra.mrb[0].mxu0 %v2525
    %v2599 = vpop.f32.mrb[0].mxu0
    %v2600 = vadd.f32 0.0, %v2599
    %v2601 = vpop.f32.mrb[0].mxu0
    %v2602 = vadd.f32 0.0, %v2601
    %2603 = vdwg.mxu0
    %2604 = vmatprep.subr.mxu0 %v2291
    %2605 = vmatpush1.msra.mxu0 %v2290
    %2606 = vmatprep.subr.mxu0 %v2295
    %2607 = vmatpush1.msra.mxu0 %v2294
    %2608 = vmatprep.subr.mxu0 %v2299
    %2609 = vmatpush1.msra.mxu0 %v2298
    %2610 = vmatprep.subr.mxu0 %v2303
    %2611 = vmatpush1.msra.mxu0 %v2302
    %2612 = vmatprep.subr.mxu0 %v2307
    %2613 = vmatpush1.msra.mxu0 %v2306
    %2614 = vmatprep.subr.mxu0 %v2311
    %2615 = vmatpush1.msra.mxu0 %v2310
    %2616 = vmatprep.subr.mxu0 %v2315
    %2617 = vmatpush1.msra.mxu0 %v2314
    %2618 = vmatprep.subr.mxu0 %v2319
    %2619 = vmatpush1.msra.mxu0 %v2318
    %2620 = vmatprep.subr.mxu0 %v2323
    %2621 = vmatpush1.msra.mxu0 %v2322
    %2622 = vmatprep.subr.mxu0 %v2327
    %2623 = vmatpush1.msra.mxu0 %v2326
    %2624 = vmatprep.subr.mxu0 %v2331
    %2625 = vmatpush1.msra.mxu0 %v2330
    %2626 = vmatprep.subr.mxu0 %v2335
    %2627 = vmatpush1.msra.mxu0 %v2334
    %2628 = vmatprep.subr.mxu0 %v2339
    %2629 = vmatpush1.msra.mxu0 %v2338
    %2630 = vmatprep.subr.mxu0 %v2343
    %2631 = vmatpush1.msra.mxu0 %v2342
    %2632 = vmatprep.subr.mxu0 %v2347
    %2633 = vmatpush1.msra.mxu0 %v2346
    %2634 = vmatprep.subr.mxu0 %v2351
    %2635 = vmatpush1.msra.mxu0 %v2350
    %2636 = vmatprep.subr.mxu0 0.0
    %2637 = vmatpush1.msra.mxu0 0.0
    %2638 = vmatprep.subr.mxu0 0.0
    %2639 = vmatpush1.msra.mxu0 0.0
    %2640 = vmatprep.subr.mxu0 0.0
    %2641 = vmatpush1.msra.mxu0 0.0
    %2642 = vmatprep.subr.mxu0 0.0
    %2643 = vmatpush1.msra.mxu0 0.0
    %2644 = vmatprep.subr.mxu0 0.0
    %2645 = vmatpush1.msra.mxu0 0.0
    %2646 = vmatprep.subr.mxu0 0.0
    %2647 = vmatpush1.msra.mxu0 0.0
    %2648 = vmatprep.subr.mxu0 0.0
    %2649 = vmatpush1.msra.mxu0 0.0
    %2650 = vmatprep.subr.mxu0 0.0
    %2651 = vmatpush1.msra.mxu0 0.0
    %2652 = vmatprep.subr.mxu0 0.0
    %2653 = vmatpush1.msra.mxu0 0.0
    %2654 = vmatprep.subr.mxu0 0.0
    %2655 = vmatpush1.msra.mxu0 0.0
    %2656 = vmatprep.subr.mxu0 0.0
    %2657 = vmatpush1.msra.mxu0 0.0
    %2658 = vmatprep.subr.mxu0 0.0
    %2659 = vmatpush1.msra.mxu0 0.0
    %2660 = vmatprep.subr.mxu0 0.0
    %2661 = vmatpush1.msra.mxu0 0.0
    %2662 = vmatprep.subr.mxu0 0.0
    %2663 = vmatpush1.msra.mxu0 0.0
    %2664 = vmatprep.subr.mxu0 0.0
    %2665 = vmatpush1.msra.mxu0 0.0
    %2666 = vmatprep.subr.mxu0 0.0
    %2667 = vmatpush1.msra.mxu0 0.0
    %2668 = vmatprep.mubr.f32.mxu0 0.0
    %2669 = vmatmul.mubr.f32.gmra.mrb[0].mxu0 %v2525
    %v2670 = vpop.f32.mrb[0].mxu0
    %v2671 = vadd.f32 0.0, %v2670
    %v2672 = vpop.f32.mrb[0].mxu0
    %v2673 = vadd.f32 0.0, %v2672
    %2674 = vdwg.mxu0
    %v2675 = vadd.f32 %v2529, %v2600
    %v2676 = vadd.f32 %v2530, %v2602
    %v2677 = vadd.f32 %v2531, %v2671
    %v2678 = vadd.f32 %v2532, %v2673
    %v2679 = vxor.u32 %v2675, 2147483648
    %v2680 = vxor.u32 %v2676, 2147483648
    %v2681 = vxor.u32 %v2677, 2147483648
    %v2682 = vmul.f32 %v2679, 1.442695
    %v2683 = vpow.pop %v2682
    %v2684 = vmul.f32 %v2680, 1.442695
    %v2685 = vpow.pop %v2684
    %v2686 = vmul.f32 %v2681, 1.442695
    %v2687 = vpow.pop %v2686
    %v2688 = vadd.f32 %v2683, 1.0
    %v2689 = vadd.f32 %v2685, 1.0
    %v2690 = vadd.f32 %v2687, 1.0
    %v2691 = vrcp.pop %v2688
    %v2692 = vmul.f32 1.0, %v2691
    %v2693 = vrcp.pop %v2689
    %v2694 = vmul.f32 1.0, %v2693
    %v2695 = vrcp.pop %v2690
    %v2696 = vmul.f32 1.0, %v2695
    %v2697 = vtanh.pop %v2678
    %v2698 = vmul.f32 %v2694, %v2523
    %v2699 = vmul.f32 %v2692, %v2697
    %v2700 = vadd.f32 %v2698, %v2699
    %v2701 = vtanh.pop %v2700
    %v2702 = vmul.f32 %v2696, %v2701
    %s2703 = scalar_lea.vmem [#allocation4], 2
    %2704 = vst [vmem:[%s2703] sm:$0x3] %v2702
    %s2705 = scalar_lea.vmem [#allocation5], 12
    %2706 = vst [vmem:[%s2705] sm:$0x3] %v2702
    %v2707 = vsel %vm409, %v2141, %v2159
    %v2708 = vsel %vm410, %v2143, %v2161
    %v2709 = vsel %vm411, %v2254, %v2272
    %v2710 = vsel %vm412, %v2256, %v2274
    %2711 = vmatprep.subr.mxu0 %v2289
    %2712 = vmatpush1.msra.mxu0 %v2288
    %2713 = vmatprep.subr.mxu0 %v2293
    %2714 = vmatpush1.msra.mxu0 %v2292
    %2715 = vmatprep.subr.mxu0 %v2297
    %2716 = vmatpush1.msra.mxu0 %v2296
    %2717 = vmatprep.subr.mxu0 %v2301
    %2718 = vmatpush1.msra.mxu0 %v2300
    %2719 = vmatprep.subr.mxu0 %v2305
    %2720 = vmatpush1.msra.mxu0 %v2304
    %2721 = vmatprep.subr.mxu0 %v2309
    %2722 = vmatpush1.msra.mxu0 %v2308
    %2723 = vmatprep.subr.mxu0 %v2313
    %2724 = vmatpush1.msra.mxu0 %v2312
    %2725 = vmatprep.subr.mxu0 %v2317
    %2726 = vmatpush1.msra.mxu0 %v2316
    %2727 = vmatprep.subr.mxu0 %v2321
    %2728 = vmatpush1.msra.mxu0 %v2320
    %2729 = vmatprep.subr.mxu0 %v2325
    %2730 = vmatpush1.msra.mxu0 %v2324
    %2731 = vmatprep.subr.mxu0 %v2329
    %2732 = vmatpush1.msra.mxu0 %v2328
    %2733 = vmatprep.subr.mxu0 %v2333
    %2734 = vmatpush1.msra.mxu0 %v2332
    %2735 = vmatprep.subr.mxu0 %v2337
    %2736 = vmatpush1.msra.mxu0 %v2336
    %2737 = vmatprep.subr.mxu0 %v2341
    %2738 = vmatpush1.msra.mxu0 %v2340
    %2739 = vmatprep.subr.mxu0 %v2345
    %2740 = vmatpush1.msra.mxu0 %v2344
    %2741 = vmatprep.subr.mxu0 %v2349
    %2742 = vmatpush1.msra.mxu0 %v2348
    %2743 = vmatprep.subr.mxu0 0.0
    %2744 = vmatpush1.msra.mxu0 0.0
    %2745 = vmatprep.subr.mxu0 0.0
    %2746 = vmatpush1.msra.mxu0 0.0
    %2747 = vmatprep.subr.mxu0 0.0
    %2748 = vmatpush1.msra.mxu0 0.0
    %2749 = vmatprep.subr.mxu0 0.0
    %2750 = vmatpush1.msra.mxu0 0.0
    %2751 = vmatprep.subr.mxu0 0.0
    %2752 = vmatpush1.msra.mxu0 0.0
    %2753 = vmatprep.subr.mxu0 0.0
    %2754 = vmatpush1.msra.mxu0 0.0
    %2755 = vmatprep.subr.mxu0 0.0
    %2756 = vmatpush1.msra.mxu0 0.0
    %2757 = vmatprep.subr.mxu0 0.0
    %2758 = vmatpush1.msra.mxu0 0.0
    %2759 = vmatprep.subr.mxu0 0.0
    %2760 = vmatpush1.msra.mxu0 0.0
    %2761 = vmatprep.subr.mxu0 0.0
    %2762 = vmatpush1.msra.mxu0 0.0
    %2763 = vmatprep.subr.mxu0 0.0
    %2764 = vmatpush1.msra.mxu0 0.0
    %2765 = vmatprep.subr.mxu0 0.0
    %2766 = vmatpush1.msra.mxu0 0.0
    %2767 = vmatprep.subr.mxu0 0.0
    %2768 = vmatpush1.msra.mxu0 0.0
    %2769 = vmatprep.subr.mxu0 0.0
    %2770 = vmatpush1.msra.mxu0 0.0
    %2771 = vmatprep.subr.mxu0 0.0
    %2772 = vmatpush1.msra.mxu0 0.0
    %2773 = vmatprep.subr.mxu0 0.0
    %2774 = vmatpush1.msra.mxu0 0.0
    %2775 = vmatprep.mubr.f32.mxu0 0.0
    %2776 = vmatmul.mubr.f32.gmra.mrb[0].mxu0 %v2702
    %v2777 = vpop.f32.mrb[0].mxu0
    %v2778 = vadd.f32 0.0, %v2777
    %v2779 = vpop.f32.mrb[0].mxu0
    %v2780 = vadd.f32 0.0, %v2779
    %2781 = vdwg.mxu0
    %2782 = vmatprep.subr.mxu0 %v2291
    %2783 = vmatpush1.msra.mxu0 %v2290
    %2784 = vmatprep.subr.mxu0 %v2295
    %2785 = vmatpush1.msra.mxu0 %v2294
    %2786 = vmatprep.subr.mxu0 %v2299
    %2787 = vmatpush1.msra.mxu0 %v2298
    %2788 = vmatprep.subr.mxu0 %v2303
    %2789 = vmatpush1.msra.mxu0 %v2302
    %2790 = vmatprep.subr.mxu0 %v2307
    %2791 = vmatpush1.msra.mxu0 %v2306
    %2792 = vmatprep.subr.mxu0 %v2311
    %2793 = vmatpush1.msra.mxu0 %v2310
    %2794 = vmatprep.subr.mxu0 %v2315
    %2795 = vmatpush1.msra.mxu0 %v2314
    %2796 = vmatprep.subr.mxu0 %v2319
    %2797 = vmatpush1.msra.mxu0 %v2318
    %2798 = vmatprep.subr.mxu0 %v2323
    %2799 = vmatpush1.msra.mxu0 %v2322
    %2800 = vmatprep.subr.mxu0 %v2327
    %2801 = vmatpush1.msra.mxu0 %v2326
    %2802 = vmatprep.subr.mxu0 %v2331
    %2803 = vmatpush1.msra.mxu0 %v2330
    %2804 = vmatprep.subr.mxu0 %v2335
    %2805 = vmatpush1.msra.mxu0 %v2334
    %2806 = vmatprep.subr.mxu0 %v2339
    %2807 = vmatpush1.msra.mxu0 %v2338
    %2808 = vmatprep.subr.mxu0 %v2343
    %2809 = vmatpush1.msra.mxu0 %v2342
    %2810 = vmatprep.subr.mxu0 %v2347
    %2811 = vmatpush1.msra.mxu0 %v2346
    %2812 = vmatprep.subr.mxu0 %v2351
    %2813 = vmatpush1.msra.mxu0 %v2350
    %2814 = vmatprep.subr.mxu0 0.0
    %2815 = vmatpush1.msra.mxu0 0.0
    %2816 = vmatprep.subr.mxu0 0.0
    %2817 = vmatpush1.msra.mxu0 0.0
    %2818 = vmatprep.subr.mxu0 0.0
    %2819 = vmatpush1.msra.mxu0 0.0
    %2820 = vmatprep.subr.mxu0 0.0
    %2821 = vmatpush1.msra.mxu0 0.0
    %2822 = vmatprep.subr.mxu0 0.0
    %2823 = vmatpush1.msra.mxu0 0.0
    %2824 = vmatprep.subr.mxu0 0.0
    %2825 = vmatpush1.msra.mxu0 0.0
    %2826 = vmatprep.subr.mxu0 0.0
    %2827 = vmatpush1.msra.mxu0 0.0
    %2828 = vmatprep.subr.mxu0 0.0
    %2829 = vmatpush1.msra.mxu0 0.0
    %2830 = vmatprep.subr.mxu0 0.0
    %2831 = vmatpush1.msra.mxu0 0.0
    %2832 = vmatprep.subr.mxu0 0.0
    %2833 = vmatpush1.msra.mxu0 0.0
    %2834 = vmatprep.subr.mxu0 0.0
    %2835 = vmatpush1.msra.mxu0 0.0
    %2836 = vmatprep.subr.mxu0 0.0
    %2837 = vmatpush1.msra.mxu0 0.0
    %2838 = vmatprep.subr.mxu0 0.0
    %2839 = vmatpush1.msra.mxu0 0.0
    %2840 = vmatprep.subr.mxu0 0.0
    %2841 = vmatpush1.msra.mxu0 0.0
    %2842 = vmatprep.subr.mxu0 0.0
    %2843 = vmatpush1.msra.mxu0 0.0
    %2844 = vmatprep.subr.mxu0 0.0
    %2845 = vmatpush1.msra.mxu0 0.0
    %2846 = vmatprep.mubr.f32.mxu0 0.0
    %2847 = vmatmul.mubr.f32.gmra.mrb[0].mxu0 %v2702
    %v2848 = vpop.f32.mrb[0].mxu0
    %v2849 = vadd.f32 0.0, %v2848
    %v2850 = vpop.f32.mrb[0].mxu0
    %v2851 = vadd.f32 0.0, %v2850
    %2852 = vdwg.mxu0
    %v2853 = vadd.f32 %v2707, %v2778
    %v2854 = vadd.f32 %v2708, %v2780
    %v2855 = vadd.f32 %v2709, %v2849
    %v2856 = vadd.f32 %v2710, %v2851
    %v2857 = vxor.u32 %v2853, 2147483648
    %v2858 = vxor.u32 %v2854, 2147483648
    %v2859 = vxor.u32 %v2855, 2147483648
    %v2860 = vmul.f32 %v2857, 1.442695
    %v2861 = vpow.pop %v2860
    %v2862 = vmul.f32 %v2858, 1.442695
    %v2863 = vpow.pop %v2862
    %v2864 = vmul.f32 %v2859, 1.442695
    %v2865 = vpow.pop %v2864
    %v2866 = vadd.f32 %v2861, 1.0
    %v2867 = vadd.f32 %v2863, 1.0
    %v2868 = vadd.f32 %v2865, 1.0
    %v2869 = vrcp.pop %v2866
    %v2870 = vmul.f32 1.0, %v2869
    %v2871 = vrcp.pop %v2867
    %v2872 = vmul.f32 1.0, %v2871
    %v2873 = vrcp.pop %v2868
    %v2874 = vmul.f32 1.0, %v2873
    %v2875 = vtanh.pop %v2856
    %v2876 = vmul.f32 %v2872, %v2700
    %v2877 = vmul.f32 %v2870, %v2875
    %v2878 = vadd.f32 %v2876, %v2877
    %v2879 = vtanh.pop %v2878
    %v2880 = vmul.f32 %v2874, %v2879
    %s2881 = scalar_lea.vmem [#allocation4], 4
    %2882 = vst [vmem:[%s2881] sm:$0x3] %v2880
    %s2883 = scalar_lea.vmem [#allocation5], 10
    %2884 = vst [vmem:[%s2883] sm:$0x3] %v2880
    %v2885 = vsel %vm409, %v2147, %v2153
    %v2886 = vsel %vm410, %v2149, %v2155
    %v2887 = vsel %vm411, %v2260, %v2266
    %v2888 = vsel %vm412, %v2262, %v2268
    %2889 = vmatprep.subr.mxu0 %v2289
    %2890 = vmatpush1.msra.mxu0 %v2288
    %2891 = vmatprep.subr.mxu0 %v2293
    %2892 = vmatpush1.msra.mxu0 %v2292
    %2893 = vmatprep.subr.mxu0 %v2297
    %2894 = vmatpush1.msra.mxu0 %v2296
    %2895 = vmatprep.subr.mxu0 %v2301
    %2896 = vmatpush1.msra.mxu0 %v2300
    %2897 = vmatprep.subr.mxu0 %v2305
    %2898 = vmatpush1.msra.mxu0 %v2304
    %2899 = vmatprep.subr.mxu0 %v2309
    %2900 = vmatpush1.msra.mxu0 %v2308
    %2901 = vmatprep.subr.mxu0 %v2313
    %2902 = vmatpush1.msra.mxu0 %v2312
    %2903 = vmatprep.subr.mxu0 %v2317
    %2904 = vmatpush1.msra.mxu0 %v2316
    %2905 = vmatprep.subr.mxu0 %v2321
    %2906 = vmatpush1.msra.mxu0 %v2320
    %2907 = vmatprep.subr.mxu0 %v2325
    %2908 = vmatpush1.msra.mxu0 %v2324
    %2909 = vmatprep.subr.mxu0 %v2329
    %2910 = vmatpush1.msra.mxu0 %v2328
    %2911 = vmatprep.subr.mxu0 %v2333
    %2912 = vmatpush1.msra.mxu0 %v2332
    %2913 = vmatprep.subr.mxu0 %v2337
    %2914 = vmatpush1.msra.mxu0 %v2336
    %2915 = vmatprep.subr.mxu0 %v2341
    %2916 = vmatpush1.msra.mxu0 %v2340
    %2917 = vmatprep.subr.mxu0 %v2345
    %2918 = vmatpush1.msra.mxu0 %v2344
    %2919 = vmatprep.subr.mxu0 %v2349
    %2920 = vmatpush1.msra.mxu0 %v2348
    %2921 = vmatprep.subr.mxu0 0.0
    %2922 = vmatpush1.msra.mxu0 0.0
    %2923 = vmatprep.subr.mxu0 0.0
    %2924 = vmatpush1.msra.mxu0 0.0
    %2925 = vmatprep.subr.mxu0 0.0
    %2926 = vmatpush1.msra.mxu0 0.0
    %2927 = vmatprep.subr.mxu0 0.0
    %2928 = vmatpush1.msra.mxu0 0.0
    %2929 = vmatprep.subr.mxu0 0.0
    %2930 = vmatpush1.msra.mxu0 0.0
    %2931 = vmatprep.subr.mxu0 0.0
    %2932 = vmatpush1.msra.mxu0 0.0
    %2933 = vmatprep.subr.mxu0 0.0
    %2934 = vmatpush1.msra.mxu0 0.0
    %2935 = vmatprep.subr.mxu0 0.0
    %2936 = vmatpush1.msra.mxu0 0.0
    %2937 = vmatprep.subr.mxu0 0.0
    %2938 = vmatpush1.msra.mxu0 0.0
    %2939 = vmatprep.subr.mxu0 0.0
    %2940 = vmatpush1.msra.mxu0 0.0
    %2941 = vmatprep.subr.mxu0 0.0
    %2942 = vmatpush1.msra.mxu0 0.0
    %2943 = vmatprep.subr.mxu0 0.0
    %2944 = vmatpush1.msra.mxu0 0.0
    %2945 = vmatprep.subr.mxu0 0.0
    %2946 = vmatpush1.msra.mxu0 0.0
    %2947 = vmatprep.subr.mxu0 0.0
    %2948 = vmatpush1.msra.mxu0 0.0
    %2949 = vmatprep.subr.mxu0 0.0
    %2950 = vmatpush1.msra.mxu0 0.0
    %2951 = vmatprep.subr.mxu0 0.0
    %2952 = vmatpush1.msra.mxu0 0.0
    %2953 = vmatprep.mubr.f32.mxu0 0.0
    %2954 = vmatmul.mubr.f32.gmra.mrb[0].mxu0 %v2880
    %v2955 = vpop.f32.mrb[0].mxu0
    %v2956 = vadd.f32 0.0, %v2955
    %v2957 = vpop.f32.mrb[0].mxu0
    %v2958 = vadd.f32 0.0, %v2957
    %2959 = vdwg.mxu0
    %2960 = vmatprep.subr.mxu0 %v2291
    %2961 = vmatpush1.msra.mxu0 %v2290
    %2962 = vmatprep.subr.mxu0 %v2295
    %2963 = vmatpush1.msra.mxu0 %v2294
    %2964 = vmatprep.subr.mxu0 %v2299
    %2965 = vmatpush1.msra.mxu0 %v2298
    %2966 = vmatprep.subr.mxu0 %v2303
    %2967 = vmatpush1.msra.mxu0 %v2302
    %2968 = vmatprep.subr.mxu0 %v2307
    %2969 = vmatpush1.msra.mxu0 %v2306
    %2970 = vmatprep.subr.mxu0 %v2311
    %2971 = vmatpush1.msra.mxu0 %v2310
    %2972 = vmatprep.subr.mxu0 %v2315
    %2973 = vmatpush1.msra.mxu0 %v2314
    %2974 = vmatprep.subr.mxu0 %v2319
    %2975 = vmatpush1.msra.mxu0 %v2318
    %2976 = vmatprep.subr.mxu0 %v2323
    %2977 = vmatpush1.msra.mxu0 %v2322
    %2978 = vmatprep.subr.mxu0 %v2327
    %2979 = vmatpush1.msra.mxu0 %v2326
    %2980 = vmatprep.subr.mxu0 %v2331
    %2981 = vmatpush1.msra.mxu0 %v2330
    %2982 = vmatprep.subr.mxu0 %v2335
    %2983 = vmatpush1.msra.mxu0 %v2334
    %2984 = vmatprep.subr.mxu0 %v2339
    %2985 = vmatpush1.msra.mxu0 %v2338
    %2986 = vmatprep.subr.mxu0 %v2343
    %2987 = vmatpush1.msra.mxu0 %v2342
    %2988 = vmatprep.subr.mxu0 %v2347
    %2989 = vmatpush1.msra.mxu0 %v2346
    %2990 = vmatprep.subr.mxu0 %v2351
    %2991 = vmatpush1.msra.mxu0 %v2350
    %2992 = vmatprep.subr.mxu0 0.0
    %2993 = vmatpush1.msra.mxu0 0.0
    %2994 = vmatprep.subr.mxu0 0.0
    %2995 = vmatpush1.msra.mxu0 0.0
    %2996 = vmatprep.subr.mxu0 0.0
    %2997 = vmatpush1.msra.mxu0 0.0
    %2998 = vmatprep.subr.mxu0 0.0
    %2999 = vmatpush1.msra.mxu0 0.0
    %3000 = vmatprep.subr.mxu0 0.0
    %3001 = vmatpush1.msra.mxu0 0.0
    %3002 = vmatprep.subr.mxu0 0.0
    %3003 = vmatpush1.msra.mxu0 0.0
    %3004 = vmatprep.subr.mxu0 0.0
    %3005 = vmatpush1.msra.mxu0 0.0
    %3006 = vmatprep.subr.mxu0 0.0
    %3007 = vmatpush1.msra.mxu0 0.0
    %3008 = vmatprep.subr.mxu0 0.0
    %3009 = vmatpush1.msra.mxu0 0.0
    %3010 = vmatprep.subr.mxu0 0.0
    %3011 = vmatpush1.msra.mxu0 0.0
    %3012 = vmatprep.subr.mxu0 0.0
    %3013 = vmatpush1.msra.mxu0 0.0
    %3014 = vmatprep.subr.mxu0 0.0
    %3015 = vmatpush1.msra.mxu0 0.0
    %3016 = vmatprep.subr.mxu0 0.0
    %3017 = vmatpush1.msra.mxu0 0.0
    %3018 = vmatprep.subr.mxu0 0.0
    %3019 = vmatpush1.msra.mxu0 0.0
    %3020 = vmatprep.subr.mxu0 0.0
    %3021 = vmatpush1.msra.mxu0 0.0
    %3022 = vmatprep.subr.mxu0 0.0
    %3023 = vmatpush1.msra.mxu0 0.0
    %3024 = vmatprep.mubr.f32.mxu0 0.0
    %3025 = vmatmul.mubr.f32.gmra.mrb[0].mxu0 %v2880
    %v3026 = vpop.f32.mrb[0].mxu0
    %v3027 = vadd.f32 0.0, %v3026
    %v3028 = vpop.f32.mrb[0].mxu0
    %v3029 = vadd.f32 0.0, %v3028
    %3030 = vdwg.mxu0
    %v3031 = vadd.f32 %v2885, %v2956
    %v3032 = vadd.f32 %v2886, %v2958
    %v3033 = vadd.f32 %v2887, %v3027
    %v3034 = vadd.f32 %v2888, %v3029
    %v3035 = vxor.u32 %v3031, 2147483648
    %v3036 = vxor.u32 %v3032, 2147483648
    %v3037 = vxor.u32 %v3033, 2147483648
    %v3038 = vmul.f32 %v3035, 1.442695
    %v3039 = vpow.pop %v3038
    %v3040 = vmul.f32 %v3036, 1.442695
    %v3041 = vpow.pop %v3040
    %v3042 = vmul.f32 %v3037, 1.442695
    %v3043 = vpow.pop %v3042
    %v3044 = vadd.f32 %v3039, 1.0
    %v3045 = vadd.f32 %v3041, 1.0
    %v3046 = vadd.f32 %v3043, 1.0
    %v3047 = vrcp.pop %v3044
    %v3048 = vmul.f32 1.0, %v3047
    %v3049 = vrcp.pop %v3045
    %v3050 = vmul.f32 1.0, %v3049
    %v3051 = vrcp.pop %v3046
    %v3052 = vmul.f32 1.0, %v3051
    %v3053 = vtanh.pop %v3034
    %v3054 = vmul.f32 %v3050, %v2878
    %v3055 = vmul.f32 %v3048, %v3053
    %v3056 = vadd.f32 %v3054, %v3055
    %v3057 = vtanh.pop %v3056
    %v3058 = vmul.f32 %v3052, %v3057
    %s3059 = scalar_lea.vmem [#allocation4], 6
    %3060 = vst [vmem:[%s3059] sm:$0x3] %v3058
    %s3061 = scalar_lea.vmem [#allocation5], 8
    %3062 = vst [vmem:[%s3061] sm:$0x3] %v3058
    %v3063 = vsel %vm409, %v2153, %v2147
    %v3064 = vsel %vm410, %v2155, %v2149
    %v3065 = vsel %vm411, %v2266, %v2260
    %v3066 = vsel %vm412, %v2268, %v2262
    %3067 = vmatprep.subr.mxu0 %v2289
    %3068 = vmatpush1.msra.mxu0 %v2288
    %3069 = vmatprep.subr.mxu0 %v2293
    %3070 = vmatpush1.msra.mxu0 %v2292
    %3071 = vmatprep.subr.mxu0 %v2297
    %3072 = vmatpush1.msra.mxu0 %v2296
    %3073 = vmatprep.subr.mxu0 %v2301
    %3074 = vmatpush1.msra.mxu0 %v2300
    %3075 = vmatprep.subr.mxu0 %v2305
    %3076 = vmatpush1.msra.mxu0 %v2304
    %3077 = vmatprep.subr.mxu0 %v2309
    %3078 = vmatpush1.msra.mxu0 %v2308
    %3079 = vmatprep.subr.mxu0 %v2313
    %3080 = vmatpush1.msra.mxu0 %v2312
    %3081 = vmatprep.subr.mxu0 %v2317
    %3082 = vmatpush1.msra.mxu0 %v2316
    %3083 = vmatprep.subr.mxu0 %v2321
    %3084 = vmatpush1.msra.mxu0 %v2320
    %3085 = vmatprep.subr.mxu0 %v2325
    %3086 = vmatpush1.msra.mxu0 %v2324
    %3087 = vmatprep.subr.mxu0 %v2329
    %3088 = vmatpush1.msra.mxu0 %v2328
    %3089 = vmatprep.subr.mxu0 %v2333
    %3090 = vmatpush1.msra.mxu0 %v2332
    %3091 = vmatprep.subr.mxu0 %v2337
    %3092 = vmatpush1.msra.mxu0 %v2336
    %3093 = vmatprep.subr.mxu0 %v2341
    %3094 = vmatpush1.msra.mxu0 %v2340
    %3095 = vmatprep.subr.mxu0 %v2345
    %3096 = vmatpush1.msra.mxu0 %v2344
    %3097 = vmatprep.subr.mxu0 %v2349
    %3098 = vmatpush1.msra.mxu0 %v2348
    %3099 = vmatprep.subr.mxu0 0.0
    %3100 = vmatpush1.msra.mxu0 0.0
    %3101 = vmatprep.subr.mxu0 0.0
    %3102 = vmatpush1.msra.mxu0 0.0
    %3103 = vmatprep.subr.mxu0 0.0
    %3104 = vmatpush1.msra.mxu0 0.0
    %3105 = vmatprep.subr.mxu0 0.0
    %3106 = vmatpush1.msra.mxu0 0.0
    %3107 = vmatprep.subr.mxu0 0.0
    %3108 = vmatpush1.msra.mxu0 0.0
    %3109 = vmatprep.subr.mxu0 0.0
    %3110 = vmatpush1.msra.mxu0 0.0
    %3111 = vmatprep.subr.mxu0 0.0
    %3112 = vmatpush1.msra.mxu0 0.0
    %3113 = vmatprep.subr.mxu0 0.0
    %3114 = vmatpush1.msra.mxu0 0.0
    %3115 = vmatprep.subr.mxu0 0.0
    %3116 = vmatpush1.msra.mxu0 0.0
    %3117 = vmatprep.subr.mxu0 0.0
    %3118 = vmatpush1.msra.mxu0 0.0
    %3119 = vmatprep.subr.mxu0 0.0
    %3120 = vmatpush1.msra.mxu0 0.0
    %3121 = vmatprep.subr.mxu0 0.0
    %3122 = vmatpush1.msra.mxu0 0.0
    %3123 = vmatprep.subr.mxu0 0.0
    %3124 = vmatpush1.msra.mxu0 0.0
    %3125 = vmatprep.subr.mxu0 0.0
    %3126 = vmatpush1.msra.mxu0 0.0
    %3127 = vmatprep.subr.mxu0 0.0
    %3128 = vmatpush1.msra.mxu0 0.0
    %3129 = vmatprep.subr.mxu0 0.0
    %3130 = vmatpush1.msra.mxu0 0.0
    %3131 = vmatprep.mubr.f32.mxu0 0.0
    %3132 = vmatmul.mubr.f32.gmra.mrb[0].mxu0 %v3058
    %v3133 = vpop.f32.mrb[0].mxu0
    %v3134 = vadd.f32 0.0, %v3133
    %v3135 = vpop.f32.mrb[0].mxu0
    %v3136 = vadd.f32 0.0, %v3135
    %3137 = vdwg.mxu0
    %3138 = vmatprep.subr.mxu0 %v2291
    %3139 = vmatpush1.msra.mxu0 %v2290
    %3140 = vmatprep.subr.mxu0 %v2295
    %3141 = vmatpush1.msra.mxu0 %v2294
    %3142 = vmatprep.subr.mxu0 %v2299
    %3143 = vmatpush1.msra.mxu0 %v2298
    %3144 = vmatprep.subr.mxu0 %v2303
    %3145 = vmatpush1.msra.mxu0 %v2302
    %3146 = vmatprep.subr.mxu0 %v2307
    %3147 = vmatpush1.msra.mxu0 %v2306
    %3148 = vmatprep.subr.mxu0 %v2311
    %3149 = vmatpush1.msra.mxu0 %v2310
    %3150 = vmatprep.subr.mxu0 %v2315
    %3151 = vmatpush1.msra.mxu0 %v2314
    %3152 = vmatprep.subr.mxu0 %v2319
    %3153 = vmatpush1.msra.mxu0 %v2318
    %3154 = vmatprep.subr.mxu0 %v2323
    %3155 = vmatpush1.msra.mxu0 %v2322
    %3156 = vmatprep.subr.mxu0 %v2327
    %3157 = vmatpush1.msra.mxu0 %v2326
    %3158 = vmatprep.subr.mxu0 %v2331
    %3159 = vmatpush1.msra.mxu0 %v2330
    %3160 = vmatprep.subr.mxu0 %v2335
    %3161 = vmatpush1.msra.mxu0 %v2334
    %3162 = vmatprep.subr.mxu0 %v2339
    %3163 = vmatpush1.msra.mxu0 %v2338
    %3164 = vmatprep.subr.mxu0 %v2343
    %3165 = vmatpush1.msra.mxu0 %v2342
    %3166 = vmatprep.subr.mxu0 %v2347
    %3167 = vmatpush1.msra.mxu0 %v2346
    %3168 = vmatprep.subr.mxu0 %v2351
    %3169 = vmatpush1.msra.mxu0 %v2350
    %3170 = vmatprep.subr.mxu0 0.0
    %3171 = vmatpush1.msra.mxu0 0.0
    %3172 = vmatprep.subr.mxu0 0.0
    %3173 = vmatpush1.msra.mxu0 0.0
    %3174 = vmatprep.subr.mxu0 0.0
    %3175 = vmatpush1.msra.mxu0 0.0
    %3176 = vmatprep.subr.mxu0 0.0
    %3177 = vmatpush1.msra.mxu0 0.0
    %3178 = vmatprep.subr.mxu0 0.0
    %3179 = vmatpush1.msra.mxu0 0.0
    %3180 = vmatprep.subr.mxu0 0.0
    %3181 = vmatpush1.msra.mxu0 0.0
    %3182 = vmatprep.subr.mxu0 0.0
    %3183 = vmatpush1.msra.mxu0 0.0
    %3184 = vmatprep.subr.mxu0 0.0
    %3185 = vmatpush1.msra.mxu0 0.0
    %3186 = vmatprep.subr.mxu0 0.0
    %3187 = vmatpush1.msra.mxu0 0.0
    %3188 = vmatprep.subr.mxu0 0.0
    %3189 = vmatpush1.msra.mxu0 0.0
    %3190 = vmatprep.subr.mxu0 0.0
    %3191 = vmatpush1.msra.mxu0 0.0
    %3192 = vmatprep.subr.mxu0 0.0
    %3193 = vmatpush1.msra.mxu0 0.0
    %3194 = vmatprep.subr.mxu0 0.0
    %3195 = vmatpush1.msra.mxu0 0.0
    %3196 = vmatprep.subr.mxu0 0.0
    %3197 = vmatpush1.msra.mxu0 0.0
    %3198 = vmatprep.subr.mxu0 0.0
    %3199 = vmatpush1.msra.mxu0 0.0
    %3200 = vmatprep.subr.mxu0 0.0
    %3201 = vmatpush1.msra.mxu0 0.0
    %3202 = vmatprep.mubr.f32.mxu0 0.0
    %3203 = vmatmul.mubr.f32.gmra.mrb[0].mxu0 %v3058
    %v3204 = vpop.f32.mrb[0].mxu0
    %v3205 = vadd.f32 0.0, %v3204
    %v3206 = vpop.f32.mrb[0].mxu0
    %v3207 = vadd.f32 0.0, %v3206
    %3208 = vdwg.mxu0
    %v3209 = vadd.f32 %v3063, %v3134
    %v3210 = vadd.f32 %v3064, %v3136
    %v3211 = vadd.f32 %v3065, %v3205
    %v3212 = vadd.f32 %v3066, %v3207
    %v3213 = vxor.u32 %v3209, 2147483648
    %v3214 = vxor.u32 %v3210, 2147483648
    %v3215 = vxor.u32 %v3211, 2147483648
    %v3216 = vmul.f32 %v3213, 1.442695
    %v3217 = vpow.pop %v3216
    %v3218 = vmul.f32 %v3214, 1.442695
    %v3219 = vpow.pop %v3218
    %v3220 = vmul.f32 %v3215, 1.442695
    %v3221 = vpow.pop %v3220
    %v3222 = vadd.f32 %v3217, 1.0
    %v3223 = vadd.f32 %v3219, 1.0
    %v3224 = vadd.f32 %v3221, 1.0
    %v3225 = vrcp.pop %v3222
    %v3226 = vmul.f32 1.0, %v3225
    %v3227 = vrcp.pop %v3223
    %v3228 = vmul.f32 1.0, %v3227
    %v3229 = vrcp.pop %v3224
    %v3230 = vmul.f32 1.0, %v3229
    %v3231 = vtanh.pop %v3212
    %v3232 = vmul.f32 %v3228, %v3056
    %v3233 = vmul.f32 %v3226, %v3231
    %v3234 = vadd.f32 %v3232, %v3233
    %v3235 = vtanh.pop %v3234
    %v3236 = vmul.f32 %v3230, %v3235
    %s3237 = scalar_lea.vmem [#allocation4], 8
    %3238 = vst [vmem:[%s3237] sm:$0x3] %v3236
    %s3239 = scalar_lea.vmem [#allocation5], 6
    %3240 = vst [vmem:[%s3239] sm:$0x3] %v3236
    %v3241 = vsel %vm409, %v2159, %v2141
    %v3242 = vsel %vm410, %v2161, %v2143
    %v3243 = vsel %vm411, %v2272, %v2254
    %v3244 = vsel %vm412, %v2274, %v2256
    %3245 = vmatprep.subr.mxu0 %v2289
    %3246 = vmatpush1.msra.mxu0 %v2288
    %3247 = vmatprep.subr.mxu0 %v2293
    %3248 = vmatpush1.msra.mxu0 %v2292
    %3249 = vmatprep.subr.mxu0 %v2297
    %3250 = vmatpush1.msra.mxu0 %v2296
    %3251 = vmatprep.subr.mxu0 %v2301
    %3252 = vmatpush1.msra.mxu0 %v2300
    %3253 = vmatprep.subr.mxu0 %v2305
    %3254 = vmatpush1.msra.mxu0 %v2304
    %3255 = vmatprep.subr.mxu0 %v2309
    %3256 = vmatpush1.msra.mxu0 %v2308
    %3257 = vmatprep.subr.mxu0 %v2313
    %3258 = vmatpush1.msra.mxu0 %v2312
    %3259 = vmatprep.subr.mxu0 %v2317
    %3260 = vmatpush1.msra.mxu0 %v2316
    %3261 = vmatprep.subr.mxu0 %v2321
    %3262 = vmatpush1.msra.mxu0 %v2320
    %3263 = vmatprep.subr.mxu0 %v2325
    %3264 = vmatpush1.msra.mxu0 %v2324
    %3265 = vmatprep.subr.mxu0 %v2329
    %3266 = vmatpush1.msra.mxu0 %v2328
    %3267 = vmatprep.subr.mxu0 %v2333
    %3268 = vmatpush1.msra.mxu0 %v2332
    %3269 = vmatprep.subr.mxu0 %v2337
    %3270 = vmatpush1.msra.mxu0 %v2336
    %3271 = vmatprep.subr.mxu0 %v2341
    %3272 = vmatpush1.msra.mxu0 %v2340
    %3273 = vmatprep.subr.mxu0 %v2345
    %3274 = vmatpush1.msra.mxu0 %v2344
    %3275 = vmatprep.subr.mxu0 %v2349
    %3276 = vmatpush1.msra.mxu0 %v2348
    %3277 = vmatprep.subr.mxu0 0.0
    %3278 = vmatpush1.msra.mxu0 0.0
    %3279 = vmatprep.subr.mxu0 0.0
    %3280 = vmatpush1.msra.mxu0 0.0
    %3281 = vmatprep.subr.mxu0 0.0
    %3282 = vmatpush1.msra.mxu0 0.0
    %3283 = vmatprep.subr.mxu0 0.0
    %3284 = vmatpush1.msra.mxu0 0.0
    %3285 = vmatprep.subr.mxu0 0.0
    %3286 = vmatpush1.msra.mxu0 0.0
    %3287 = vmatprep.subr.mxu0 0.0
    %3288 = vmatpush1.msra.mxu0 0.0
    %3289 = vmatprep.subr.mxu0 0.0
    %3290 = vmatpush1.msra.mxu0 0.0
    %3291 = vmatprep.subr.mxu0 0.0
    %3292 = vmatpush1.msra.mxu0 0.0
    %3293 = vmatprep.subr.mxu0 0.0
    %3294 = vmatpush1.msra.mxu0 0.0
    %3295 = vmatprep.subr.mxu0 0.0
    %3296 = vmatpush1.msra.mxu0 0.0
    %3297 = vmatprep.subr.mxu0 0.0
    %3298 = vmatpush1.msra.mxu0 0.0
    %3299 = vmatprep.subr.mxu0 0.0
    %3300 = vmatpush1.msra.mxu0 0.0
    %3301 = vmatprep.subr.mxu0 0.0
    %3302 = vmatpush1.msra.mxu0 0.0
    %3303 = vmatprep.subr.mxu0 0.0
    %3304 = vmatpush1.msra.mxu0 0.0
    %3305 = vmatprep.subr.mxu0 0.0
    %3306 = vmatpush1.msra.mxu0 0.0
    %3307 = vmatprep.subr.mxu0 0.0
    %3308 = vmatpush1.msra.mxu0 0.0
    %3309 = vmatprep.mubr.f32.mxu0 0.0
    %3310 = vmatmul.mubr.f32.gmra.mrb[0].mxu0 %v3236
    %v3311 = vpop.f32.mrb[0].mxu0
    %v3312 = vadd.f32 0.0, %v3311
    %v3313 = vpop.f32.mrb[0].mxu0
    %v3314 = vadd.f32 0.0, %v3313
    %3315 = vdwg.mxu0
    %3316 = vmatprep.subr.mxu0 %v2291
    %3317 = vmatpush1.msra.mxu0 %v2290
    %3318 = vmatprep.subr.mxu0 %v2295
    %3319 = vmatpush1.msra.mxu0 %v2294
    %3320 = vmatprep.subr.mxu0 %v2299
    %3321 = vmatpush1.msra.mxu0 %v2298
    %3322 = vmatprep.subr.mxu0 %v2303
    %3323 = vmatpush1.msra.mxu0 %v2302
    %3324 = vmatprep.subr.mxu0 %v2307
    %3325 = vmatpush1.msra.mxu0 %v2306
    %3326 = vmatprep.subr.mxu0 %v2311
    %3327 = vmatpush1.msra.mxu0 %v2310
    %3328 = vmatprep.subr.mxu0 %v2315
    %3329 = vmatpush1.msra.mxu0 %v2314
    %3330 = vmatprep.subr.mxu0 %v2319
    %3331 = vmatpush1.msra.mxu0 %v2318
    %3332 = vmatprep.subr.mxu0 %v2323
    %3333 = vmatpush1.msra.mxu0 %v2322
    %3334 = vmatprep.subr.mxu0 %v2327
    %3335 = vmatpush1.msra.mxu0 %v2326
    %3336 = vmatprep.subr.mxu0 %v2331
    %3337 = vmatpush1.msra.mxu0 %v2330
    %3338 = vmatprep.subr.mxu0 %v2335
    %3339 = vmatpush1.msra.mxu0 %v2334
    %3340 = vmatprep.subr.mxu0 %v2339
    %3341 = vmatpush1.msra.mxu0 %v2338
    %3342 = vmatprep.subr.mxu0 %v2343
    %3343 = vmatpush1.msra.mxu0 %v2342
    %3344 = vmatprep.subr.mxu0 %v2347
    %3345 = vmatpush1.msra.mxu0 %v2346
    %3346 = vmatprep.subr.mxu0 %v2351
    %3347 = vmatpush1.msra.mxu0 %v2350
    %3348 = vmatprep.subr.mxu0 0.0
    %3349 = vmatpush1.msra.mxu0 0.0
    %3350 = vmatprep.subr.mxu0 0.0
    %3351 = vmatpush1.msra.mxu0 0.0
    %3352 = vmatprep.subr.mxu0 0.0
    %3353 = vmatpush1.msra.mxu0 0.0
    %3354 = vmatprep.subr.mxu0 0.0
    %3355 = vmatpush1.msra.mxu0 0.0
    %3356 = vmatprep.subr.mxu0 0.0
    %3357 = vmatpush1.msra.mxu0 0.0
    %3358 = vmatprep.subr.mxu0 0.0
    %3359 = vmatpush1.msra.mxu0 0.0
    %3360 = vmatprep.subr.mxu0 0.0
    %3361 = vmatpush1.msra.mxu0 0.0
    %3362 = vmatprep.subr.mxu0 0.0
    %3363 = vmatpush1.msra.mxu0 0.0
    %3364 = vmatprep.subr.mxu0 0.0
    %3365 = vmatpush1.msra.mxu0 0.0
    %3366 = vmatprep.subr.mxu0 0.0
    %3367 = vmatpush1.msra.mxu0 0.0
    %3368 = vmatprep.subr.mxu0 0.0
    %3369 = vmatpush1.msra.mxu0 0.0
    %3370 = vmatprep.subr.mxu0 0.0
    %3371 = vmatpush1.msra.mxu0 0.0
    %3372 = vmatprep.subr.mxu0 0.0
    %3373 = vmatpush1.msra.mxu0 0.0
    %3374 = vmatprep.subr.mxu0 0.0
    %3375 = vmatpush1.msra.mxu0 0.0
    %3376 = vmatprep.subr.mxu0 0.0
    %3377 = vmatpush1.msra.mxu0 0.0
    %3378 = vmatprep.subr.mxu0 0.0
    %3379 = vmatpush1.msra.mxu0 0.0
    %3380 = vmatprep.mubr.f32.mxu0 0.0
    %3381 = vmatmul.mubr.f32.gmra.mrb[0].mxu0 %v3236
    %v3382 = vpop.f32.mrb[0].mxu0
    %v3383 = vadd.f32 0.0, %v3382
    %v3384 = vpop.f32.mrb[0].mxu0
    %v3385 = vadd.f32 0.0, %v3384
    %3386 = vdwg.mxu0
    %v3387 = vadd.f32 %v3241, %v3312
    %v3388 = vadd.f32 %v3242, %v3314
    %v3389 = vadd.f32 %v3243, %v3383
    %v3390 = vadd.f32 %v3244, %v3385
    %v3391 = vxor.u32 %v3387, 2147483648
    %v3392 = vxor.u32 %v3388, 2147483648
    %v3393 = vxor.u32 %v3389, 2147483648
    %v3394 = vmul.f32 %v3391, 1.442695
    %v3395 = vpow.pop %v3394
    %v3396 = vmul.f32 %v3392, 1.442695
    %v3397 = vpow.pop %v3396
    %v3398 = vmul.f32 %v3393, 1.442695
    %v3399 = vpow.pop %v3398
    %v3400 = vadd.f32 %v3395, 1.0
    %v3401 = vadd.f32 %v3397, 1.0
    %v3402 = vadd.f32 %v3399, 1.0
    %v3403 = vrcp.pop %v3400
    %v3404 = vmul.f32 1.0, %v3403
    %v3405 = vrcp.pop %v3401
    %v3406 = vmul.f32 1.0, %v3405
    %v3407 = vrcp.pop %v3402
    %v3408 = vmul.f32 1.0, %v3407
    %v3409 = vtanh.pop %v3390
    %v3410 = vmul.f32 %v3406, %v3234
    %v3411 = vmul.f32 %v3404, %v3409
    %v3412 = vadd.f32 %v3410, %v3411
    %v3413 = vtanh.pop %v3412
    %v3414 = vmul.f32 %v3408, %v3413
    %s3415 = scalar_lea.vmem [#allocation4], 10
    %3416 = vst [vmem:[%s3415] sm:$0x3] %v3414
    %s3417 = scalar_lea.vmem [#allocation5], 4
    %3418 = vst [vmem:[%s3417] sm:$0x3] %v3414
    %v3419 = vsel %vm409, %v2165, %v2135
    %v3420 = vsel %vm410, %v2167, %v2137
    %v3421 = vsel %vm411, %v2278, %v2248
    %v3422 = vsel %vm412, %v2280, %v2250
    %3423 = vmatprep.subr.mxu0 %v2289
    %3424 = vmatpush1.msra.mxu0 %v2288
    %3425 = vmatprep.subr.mxu0 %v2293
    %3426 = vmatpush1.msra.mxu0 %v2292
    %3427 = vmatprep.subr.mxu0 %v2297
    %3428 = vmatpush1.msra.mxu0 %v2296
    %3429 = vmatprep.subr.mxu0 %v2301
    %3430 = vmatpush1.msra.mxu0 %v2300
    %3431 = vmatprep.subr.mxu0 %v2305
    %3432 = vmatpush1.msra.mxu0 %v2304
    %3433 = vmatprep.subr.mxu0 %v2309
    %3434 = vmatpush1.msra.mxu0 %v2308
    %3435 = vmatprep.subr.mxu0 %v2313
    %3436 = vmatpush1.msra.mxu0 %v2312
    %3437 = vmatprep.subr.mxu0 %v2317
    %3438 = vmatpush1.msra.mxu0 %v2316
    %3439 = vmatprep.subr.mxu0 %v2321
    %3440 = vmatpush1.msra.mxu0 %v2320
    %3441 = vmatprep.subr.mxu0 %v2325
    %3442 = vmatpush1.msra.mxu0 %v2324
    %3443 = vmatprep.subr.mxu0 %v2329
    %3444 = vmatpush1.msra.mxu0 %v2328
    %3445 = vmatprep.subr.mxu0 %v2333
    %3446 = vmatpush1.msra.mxu0 %v2332
    %3447 = vmatprep.subr.mxu0 %v2337
    %3448 = vmatpush1.msra.mxu0 %v2336
    %3449 = vmatprep.subr.mxu0 %v2341
    %3450 = vmatpush1.msra.mxu0 %v2340
    %3451 = vmatprep.subr.mxu0 %v2345
    %3452 = vmatpush1.msra.mxu0 %v2344
    %3453 = vmatprep.subr.mxu0 %v2349
    %3454 = vmatpush1.msra.mxu0 %v2348
    %3455 = vmatprep.subr.mxu0 0.0
    %3456 = vmatpush1.msra.mxu0 0.0
    %3457 = vmatprep.subr.mxu0 0.0
    %3458 = vmatpush1.msra.mxu0 0.0
    %3459 = vmatprep.subr.mxu0 0.0
    %3460 = vmatpush1.msra.mxu0 0.0
    %3461 = vmatprep.subr.mxu0 0.0
    %3462 = vmatpush1.msra.mxu0 0.0
    %3463 = vmatprep.subr.mxu0 0.0
    %3464 = vmatpush1.msra.mxu0 0.0
    %3465 = vmatprep.subr.mxu0 0.0
    %3466 = vmatpush1.msra.mxu0 0.0
    %3467 = vmatprep.subr.mxu0 0.0
    %3468 = vmatpush1.msra.mxu0 0.0
    %3469 = vmatprep.subr.mxu0 0.0
    %3470 = vmatpush1.msra.mxu0 0.0
    %3471 = vmatprep.subr.mxu0 0.0
    %3472 = vmatpush1.msra.mxu0 0.0
    %3473 = vmatprep.subr.mxu0 0.0
    %3474 = vmatpush1.msra.mxu0 0.0
    %3475 = vmatprep.subr.mxu0 0.0
    %3476 = vmatpush1.msra.mxu0 0.0
    %3477 = vmatprep.subr.mxu0 0.0
    %3478 = vmatpush1.msra.mxu0 0.0
    %3479 = vmatprep.subr.mxu0 0.0
    %3480 = vmatpush1.msra.mxu0 0.0
    %3481 = vmatprep.subr.mxu0 0.0
    %3482 = vmatpush1.msra.mxu0 0.0
    %3483 = vmatprep.subr.mxu0 0.0
    %3484 = vmatpush1.msra.mxu0 0.0
    %3485 = vmatprep.subr.mxu0 0.0
    %3486 = vmatpush1.msra.mxu0 0.0
    %3487 = vmatprep.mubr.f32.mxu0 0.0
    %3488 = vmatmul.mubr.f32.gmra.mrb[0].mxu0 %v3414
    %v3489 = vpop.f32.mrb[0].mxu0
    %v3490 = vadd.f32 0.0, %v3489
    %v3491 = vpop.f32.mrb[0].mxu0
    %v3492 = vadd.f32 0.0, %v3491
    %3493 = vdwg.mxu0
    %3494 = vmatprep.subr.mxu0 %v2291
    %3495 = vmatpush1.msra.mxu0 %v2290
    %3496 = vmatprep.subr.mxu0 %v2295
    %3497 = vmatpush1.msra.mxu0 %v2294
    %3498 = vmatprep.subr.mxu0 %v2299
    %3499 = vmatpush1.msra.mxu0 %v2298
    %3500 = vmatprep.subr.mxu0 %v2303
    %3501 = vmatpush1.msra.mxu0 %v2302
    %3502 = vmatprep.subr.mxu0 %v2307
    %3503 = vmatpush1.msra.mxu0 %v2306
    %3504 = vmatprep.subr.mxu0 %v2311
    %3505 = vmatpush1.msra.mxu0 %v2310
    %3506 = vmatprep.subr.mxu0 %v2315
    %3507 = vmatpush1.msra.mxu0 %v2314
    %3508 = vmatprep.subr.mxu0 %v2319
    %3509 = vmatpush1.msra.mxu0 %v2318
    %3510 = vmatprep.subr.mxu0 %v2323
    %3511 = vmatpush1.msra.mxu0 %v2322
    %3512 = vmatprep.subr.mxu0 %v2327
    %3513 = vmatpush1.msra.mxu0 %v2326
    %3514 = vmatprep.subr.mxu0 %v2331
    %3515 = vmatpush1.msra.mxu0 %v2330
    %3516 = vmatprep.subr.mxu0 %v2335
    %3517 = vmatpush1.msra.mxu0 %v2334
    %3518 = vmatprep.subr.mxu0 %v2339
    %3519 = vmatpush1.msra.mxu0 %v2338
    %3520 = vmatprep.subr.mxu0 %v2343
    %3521 = vmatpush1.msra.mxu0 %v2342
    %3522 = vmatprep.subr.mxu0 %v2347
    %3523 = vmatpush1.msra.mxu0 %v2346
    %3524 = vmatprep.subr.mxu0 %v2351
    %3525 = vmatpush1.msra.mxu0 %v2350
    %3526 = vmatprep.subr.mxu0 0.0
    %3527 = vmatpush1.msra.mxu0 0.0
    %3528 = vmatprep.subr.mxu0 0.0
    %3529 = vmatpush1.msra.mxu0 0.0
    %3530 = vmatprep.subr.mxu0 0.0
    %3531 = vmatpush1.msra.mxu0 0.0
    %3532 = vmatprep.subr.mxu0 0.0
    %3533 = vmatpush1.msra.mxu0 0.0
    %3534 = vmatprep.subr.mxu0 0.0
    %3535 = vmatpush1.msra.mxu0 0.0
    %3536 = vmatprep.subr.mxu0 0.0
    %3537 = vmatpush1.msra.mxu0 0.0
    %3538 = vmatprep.subr.mxu0 0.0
    %3539 = vmatpush1.msra.mxu0 0.0
    %3540 = vmatprep.subr.mxu0 0.0
    %3541 = vmatpush1.msra.mxu0 0.0
    %3542 = vmatprep.subr.mxu0 0.0
    %3543 = vmatpush1.msra.mxu0 0.0
    %3544 = vmatprep.subr.mxu0 0.0
    %3545 = vmatpush1.msra.mxu0 0.0
    %3546 = vmatprep.subr.mxu0 0.0
    %3547 = vmatpush1.msra.mxu0 0.0
    %3548 = vmatprep.subr.mxu0 0.0
    %3549 = vmatpush1.msra.mxu0 0.0
    %3550 = vmatprep.subr.mxu0 0.0
    %3551 = vmatpush1.msra.mxu0 0.0
    %3552 = vmatprep.subr.mxu0 0.0
    %3553 = vmatpush1.msra.mxu0 0.0
    %3554 = vmatprep.subr.mxu0 0.0
    %3555 = vmatpush1.msra.mxu0 0.0
    %3556 = vmatprep.subr.mxu0 0.0
    %3557 = vmatpush1.msra.mxu0 0.0
    %3558 = vmatprep.mubr.f32.mxu0 0.0
    %3559 = vmatmul.mubr.f32.gmra.mrb[0].mxu0 %v3414
    %v3560 = vpop.f32.mrb[0].mxu0
    %v3561 = vadd.f32 0.0, %v3560
    %v3562 = vpop.f32.mrb[0].mxu0
    %v3563 = vadd.f32 0.0, %v3562
    %3564 = vdwg.mxu0
    %v3565 = vadd.f32 %v3419, %v3490
    %v3566 = vadd.f32 %v3420, %v3492
    %v3567 = vadd.f32 %v3421, %v3561
    %v3568 = vadd.f32 %v3422, %v3563
    %v3569 = vxor.u32 %v3565, 2147483648
    %v3570 = vxor.u32 %v3566, 2147483648
    %v3571 = vxor.u32 %v3567, 2147483648
    %v3572 = vmul.f32 %v3569, 1.442695
    %v3573 = vpow.pop %v3572
    %v3574 = vmul.f32 %v3570, 1.442695
    %v3575 = vpow.pop %v3574
    %v3576 = vmul.f32 %v3571, 1.442695
    %v3577 = vpow.pop %v3576
    %v3578 = vadd.f32 %v3573, 1.0
    %v3579 = vadd.f32 %v3575, 1.0
    %v3580 = vadd.f32 %v3577, 1.0
    %v3581 = vrcp.pop %v3578
    %v3582 = vmul.f32 1.0, %v3581
    %v3583 = vrcp.pop %v3579
    %v3584 = vmul.f32 1.0, %v3583
    %v3585 = vrcp.pop %v3580
    %v3586 = vmul.f32 1.0, %v3585
    %v3587 = vtanh.pop %v3568
    %v3588 = vmul.f32 %v3584, %v3412
    %v3589 = vmul.f32 %v3582, %v3587
    %v3590 = vadd.f32 %v3588, %v3589
    %v3591 = vtanh.pop %v3590
    %v3592 = vmul.f32 %v3586, %v3591
    %s3593 = scalar_lea.vmem [#allocation4], 12
    %3594 = vst [vmem:[%s3593] sm:$0x3] %v3592
    %s3595 = scalar_lea.vmem [#allocation5], 2
    %3596 = vst [vmem:[%s3595] sm:$0x3] %v3592
    %v3597 = vsel %vm409, %v2171, %v2129
    %v3598 = vsel %vm410, %v2173, %v2131
    %v3599 = vsel %vm411, %v2284, %v2242
    %v3600 = vsel %vm412, %v2286, %v2244
    %3601 = vmatprep.subr.mxu0 %v2289
    %3602 = vmatpush1.msra.mxu0 %v2288
    %3603 = vmatprep.subr.mxu0 %v2293
    %3604 = vmatpush1.msra.mxu0 %v2292
    %3605 = vmatprep.subr.mxu0 %v2297
    %3606 = vmatpush1.msra.mxu0 %v2296
    %3607 = vmatprep.subr.mxu0 %v2301
    %3608 = vmatpush1.msra.mxu0 %v2300
    %3609 = vmatprep.subr.mxu0 %v2305
    %3610 = vmatpush1.msra.mxu0 %v2304
    %3611 = vmatprep.subr.mxu0 %v2309
    %3612 = vmatpush1.msra.mxu0 %v2308
    %3613 = vmatprep.subr.mxu0 %v2313
    %3614 = vmatpush1.msra.mxu0 %v2312
    %3615 = vmatprep.subr.mxu0 %v2317
    %3616 = vmatpush1.msra.mxu0 %v2316
    %3617 = vmatprep.subr.mxu0 %v2321
    %3618 = vmatpush1.msra.mxu0 %v2320
    %3619 = vmatprep.subr.mxu0 %v2325
    %3620 = vmatpush1.msra.mxu0 %v2324
    %3621 = vmatprep.subr.mxu0 %v2329
    %3622 = vmatpush1.msra.mxu0 %v2328
    %3623 = vmatprep.subr.mxu0 %v2333
    %3624 = vmatpush1.msra.mxu0 %v2332
    %3625 = vmatprep.subr.mxu0 %v2337
    %3626 = vmatpush1.msra.mxu0 %v2336
    %3627 = vmatprep.subr.mxu0 %v2341
    %3628 = vmatpush1.msra.mxu0 %v2340
    %3629 = vmatprep.subr.mxu0 %v2345
    %3630 = vmatpush1.msra.mxu0 %v2344
    %3631 = vmatprep.subr.mxu0 %v2349
    %3632 = vmatpush1.msra.mxu0 %v2348
    %3633 = vmatprep.subr.mxu0 0.0
    %3634 = vmatpush1.msra.mxu0 0.0
    %3635 = vmatprep.subr.mxu0 0.0
    %3636 = vmatpush1.msra.mxu0 0.0
    %3637 = vmatprep.subr.mxu0 0.0
    %3638 = vmatpush1.msra.mxu0 0.0
    %3639 = vmatprep.subr.mxu0 0.0
    %3640 = vmatpush1.msra.mxu0 0.0
    %3641 = vmatprep.subr.mxu0 0.0
    %3642 = vmatpush1.msra.mxu0 0.0
    %3643 = vmatprep.subr.mxu0 0.0
    %3644 = vmatpush1.msra.mxu0 0.0
    %3645 = vmatprep.subr.mxu0 0.0
    %3646 = vmatpush1.msra.mxu0 0.0
    %3647 = vmatprep.subr.mxu0 0.0
    %3648 = vmatpush1.msra.mxu0 0.0
    %3649 = vmatprep.subr.mxu0 0.0
    %3650 = vmatpush1.msra.mxu0 0.0
    %3651 = vmatprep.subr.mxu0 0.0
    %3652 = vmatpush1.msra.mxu0 0.0
    %3653 = vmatprep.subr.mxu0 0.0
    %3654 = vmatpush1.msra.mxu0 0.0
    %3655 = vmatprep.subr.mxu0 0.0
    %3656 = vmatpush1.msra.mxu0 0.0
    %3657 = vmatprep.subr.mxu0 0.0
    %3658 = vmatpush1.msra.mxu0 0.0
    %3659 = vmatprep.subr.mxu0 0.0
    %3660 = vmatpush1.msra.mxu0 0.0
    %3661 = vmatprep.subr.mxu0 0.0
    %3662 = vmatpush1.msra.mxu0 0.0
    %3663 = vmatprep.subr.mxu0 0.0
    %3664 = vmatpush1.msra.mxu0 0.0
    %3665 = vmatprep.mubr.f32.mxu0 0.0
    %3666 = vmatmul.mubr.f32.gmra.mrb[0].mxu0 %v3592
    %v3667 = vpop.f32.mrb[0].mxu0
    %v3668 = vadd.f32 0.0, %v3667
    %v3669 = vpop.f32.mrb[0].mxu0
    %v3670 = vadd.f32 0.0, %v3669
    %3671 = vdwg.mxu0
    %3672 = vmatprep.subr.mxu0 %v2291
    %3673 = vmatpush1.msra.mxu0 %v2290
    %3674 = vmatprep.subr.mxu0 %v2295
    %3675 = vmatpush1.msra.mxu0 %v2294
    %3676 = vmatprep.subr.mxu0 %v2299
    %3677 = vmatpush1.msra.mxu0 %v2298
    %3678 = vmatprep.subr.mxu0 %v2303
    %3679 = vmatpush1.msra.mxu0 %v2302
    %3680 = vmatprep.subr.mxu0 %v2307
    %3681 = vmatpush1.msra.mxu0 %v2306
    %3682 = vmatprep.subr.mxu0 %v2311
    %3683 = vmatpush1.msra.mxu0 %v2310
    %3684 = vmatprep.subr.mxu0 %v2315
    %3685 = vmatpush1.msra.mxu0 %v2314
    %3686 = vmatprep.subr.mxu0 %v2319
    %3687 = vmatpush1.msra.mxu0 %v2318
    %3688 = vmatprep.subr.mxu0 %v2323
    %3689 = vmatpush1.msra.mxu0 %v2322
    %3690 = vmatprep.subr.mxu0 %v2327
    %3691 = vmatpush1.msra.mxu0 %v2326
    %3692 = vmatprep.subr.mxu0 %v2331
    %3693 = vmatpush1.msra.mxu0 %v2330
    %3694 = vmatprep.subr.mxu0 %v2335
    %3695 = vmatpush1.msra.mxu0 %v2334
    %3696 = vmatprep.subr.mxu0 %v2339
    %3697 = vmatpush1.msra.mxu0 %v2338
    %3698 = vmatprep.subr.mxu0 %v2343
    %3699 = vmatpush1.msra.mxu0 %v2342
    %3700 = vmatprep.subr.mxu0 %v2347
    %3701 = vmatpush1.msra.mxu0 %v2346
    %3702 = vmatprep.subr.mxu0 %v2351
    %3703 = vmatpush1.msra.mxu0 %v2350
    %3704 = vmatprep.subr.mxu0 0.0
    %3705 = vmatpush1.msra.mxu0 0.0
    %3706 = vmatprep.subr.mxu0 0.0
    %3707 = vmatpush1.msra.mxu0 0.0
    %3708 = vmatprep.subr.mxu0 0.0
    %3709 = vmatpush1.msra.mxu0 0.0
    %3710 = vmatprep.subr.mxu0 0.0
    %3711 = vmatpush1.msra.mxu0 0.0
    %3712 = vmatprep.subr.mxu0 0.0
    %3713 = vmatpush1.msra.mxu0 0.0
    %3714 = vmatprep.subr.mxu0 0.0
    %3715 = vmatpush1.msra.mxu0 0.0
    %3716 = vmatprep.subr.mxu0 0.0
    %3717 = vmatpush1.msra.mxu0 0.0
    %3718 = vmatprep.subr.mxu0 0.0
    %3719 = vmatpush1.msra.mxu0 0.0
    %3720 = vmatprep.subr.mxu0 0.0
    %3721 = vmatpush1.msra.mxu0 0.0
    %3722 = vmatprep.subr.mxu0 0.0
    %3723 = vmatpush1.msra.mxu0 0.0
    %3724 = vmatprep.subr.mxu0 0.0
    %3725 = vmatpush1.msra.mxu0 0.0
    %3726 = vmatprep.subr.mxu0 0.0
    %3727 = vmatpush1.msra.mxu0 0.0
    %3728 = vmatprep.subr.mxu0 0.0
    %3729 = vmatpush1.msra.mxu0 0.0
    %3730 = vmatprep.subr.mxu0 0.0
    %3731 = vmatpush1.msra.mxu0 0.0
    %3732 = vmatprep.subr.mxu0 0.0
    %3733 = vmatpush1.msra.mxu0 0.0
    %3734 = vmatprep.subr.mxu0 0.0
    %3735 = vmatpush1.msra.mxu0 0.0
    %3736 = vmatprep.mubr.f32.mxu0 0.0
    %3737 = vmatmul.mubr.f32.gmra.mrb[0].mxu0 %v3592
    %v3738 = vpop.f32.mrb[0].mxu0
    %v3739 = vadd.f32 0.0, %v3738
    %v3740 = vpop.f32.mrb[0].mxu0
    %v3741 = vadd.f32 0.0, %v3740
    %3742 = vdwg.mxu0
    %v3743 = vadd.f32 %v3597, %v3668
    %v3744 = vadd.f32 %v3598, %v3670
    %v3745 = vadd.f32 %v3599, %v3739
    %v3746 = vadd.f32 %v3600, %v3741
    %v3747 = vxor.u32 %v3743, 2147483648
    %v3748 = vxor.u32 %v3744, 2147483648
    %v3749 = vxor.u32 %v3745, 2147483648
    %v3750 = vmul.f32 %v3747, 1.442695
    %v3751 = vpow.pop %v3750
    %v3752 = vmul.f32 %v3748, 1.442695
    %v3753 = vpow.pop %v3752
    %v3754 = vmul.f32 %v3749, 1.442695
    %v3755 = vpow.pop %v3754
    %v3756 = vadd.f32 %v3751, 1.0
    %v3757 = vadd.f32 %v3753, 1.0
    %v3758 = vadd.f32 %v3755, 1.0
    %v3759 = vrcp.pop %v3756
    %v3760 = vmul.f32 1.0, %v3759
    %v3761 = vrcp.pop %v3757
    %v3762 = vmul.f32 1.0, %v3761
    %v3763 = vrcp.pop %v3758
    %v3764 = vmul.f32 1.0, %v3763
    %v3765 = vtanh.pop %v3746
    %v3766 = vmul.f32 %v3762, %v3590
    %v3767 = vmul.f32 %v3760, %v3765
    %v3768 = vadd.f32 %v3766, %v3767
    %v3769 = vtanh.pop %v3768
    %v3770 = vmul.f32 %v3764, %v3769
    %s3771 = scalar_lea.vmem [#allocation4], 14
    %3772 = vst [vmem:[%s3771] sm:$0x3] %v3770
    %3773 = vst [vmem:[#allocation5] sm:$0x3] %v3770
    %v3774 = vld [vmem:[#allocation4] sm:$0x3]
    %v3775 = vld [vmem:[#allocation4 + $0x2] sm:$0x3]
    %v3776 = vld [vmem:[#allocation4 + $0x4] sm:$0x3]
    %v3777 = vld [vmem:[#allocation4 + $0x6] sm:$0x3]
    %v3778 = vld [vmem:[#allocation4 + $0x8] sm:$0x3]
    %v3779 = vld [vmem:[#allocation4 + $0xa] sm:$0x3]
    %v3780 = vld [vmem:[#allocation4 + $0xc] sm:$0x3]
    %v3781 = vld [vmem:[#allocation4 + $0xe] sm:$0x3]
    %v3782 = vld [vmem:[#allocation5] sm:$0x3]
    %v3783 = vld [vmem:[#allocation5 + $0x2] sm:$0x3]
    %v3784 = vld [vmem:[#allocation5 + $0x4] sm:$0x3]
    %v3785 = vld [vmem:[#allocation5 + $0x6] sm:$0x3]
    %v3786 = vld [vmem:[#allocation5 + $0x8] sm:$0x3]
    %v3787 = vld [vmem:[#allocation5 + $0xa] sm:$0x3]
    %v3788 = vld [vmem:[#allocation5 + $0xc] sm:$0x3]
    %v3789 = vld [vmem:[#allocation5 + $0xe] sm:$0x3]
    %v3790 = vsel %vm1967, %v3774, %v3782
    %v3791 = vsel %vm1967, %v3775, %v3783
    %v3792 = vsel %vm1967, %v3776, %v3784
    %v3793 = vsel %vm1967, %v3777, %v3785
    %v3794 = vsel %vm1967, %v3778, %v3786
    %v3795 = vsel %vm1967, %v3779, %v3787
    %v3796 = vsel %vm1967, %v3780, %v3788
    %v3797 = vsel %vm1967, %v3781, %v3789
    %vm3798 = vcmask 1041408
    %v3799 = vsel %vm3798, %v3790, 0.0
    %3800 = vadd.xlane.f32.xlu0 %v3799
    %v3801 = vpop.xlane.xlu0 %3800
    %v3802 = vsel %vm3798, %v3791, 0.0
    %3803 = vadd.xlane.f32.xlu0 %v3802
    %v3804 = vpop.xlane.xlu0 %3803
    %v3805 = vsel %vm3798, %v3792, 0.0
    %3806 = vadd.xlane.f32.xlu0 %v3805
    %v3807 = vpop.xlane.xlu0 %3806
    %v3808 = vsel %vm3798, %v3793, 0.0
    %3809 = vadd.xlane.f32.xlu0 %v3808
    %v3810 = vpop.xlane.xlu0 %3809
    %v3811 = vsel %vm3798, %v3794, 0.0
    %3812 = vadd.xlane.f32.xlu0 %v3811
    %v3813 = vpop.xlane.xlu0 %3812
    %v3814 = vsel %vm3798, %v3795, 0.0
    %3815 = vadd.xlane.f32.xlu0 %v3814
    %v3816 = vpop.xlane.xlu0 %3815
    %v3817 = vsel %vm3798, %v3796, 0.0
    %3818 = vadd.xlane.f32.xlu0 %v3817
    %v3819 = vpop.xlane.xlu0 %3818
    %v3820 = vsel %vm3798, %v3797, 0.0
    %3821 = vadd.xlane.f32.xlu0 %v3820
    %v3822 = vpop.xlane.xlu0 %3821
    %v3823 = vrcp.pop 128.0
    %v3824 = vmul.f32 %v3801, %v3823
    %v3825 = vmul.f32 %v3804, %v3823
    %v3826 = vmul.f32 %v3807, %v3823
    %v3827 = vmul.f32 %v3810, %v3823
    %v3828 = vmul.f32 %v3813, %v3823
    %v3829 = vmul.f32 %v3816, %v3823
    %v3830 = vmul.f32 %v3819, %v3823
    %v3831 = vmul.f32 %v3822, %v3823
    %v3832 = vsub.f32 %v3790, %v3824
    %v3833 = vsub.f32 %v3791, %v3825
    %v3834 = vsub.f32 %v3792, %v3826
    %v3835 = vsub.f32 %v3793, %v3827
    %v3836 = vsub.f32 %v3794, %v3828
    %v3837 = vsub.f32 %v3795, %v3829
    %v3838 = vsub.f32 %v3796, %v3830
    %v3839 = vsub.f32 %v3797, %v3831
    %v3840 = vmul.f32 %v3832, %v3832
    %v3841 = vmul.f32 %v3833, %v3833
    %v3842 = vmul.f32 %v3834, %v3834
    %v3843 = vmul.f32 %v3835, %v3835
    %v3844 = vmul.f32 %v3836, %v3836
    %v3845 = vmul.f32 %v3837, %v3837
    %v3846 = vmul.f32 %v3838, %v3838
    %v3847 = vmul.f32 %v3839, %v3839
    %v3848 = vsel %vm3798, %v3840, 0.0
    %3849 = vadd.xlane.f32.xlu0 %v3848
    %v3850 = vpop.xlane.xlu0 %3849
    %v3851 = vsel %vm3798, %v3841, 0.0
    %3852 = vadd.xlane.f32.xlu0 %v3851
    %v3853 = vpop.xlane.xlu0 %3852
    %v3854 = vsel %vm3798, %v3842, 0.0
    %3855 = vadd.xlane.f32.xlu0 %v3854
    %v3856 = vpop.xlane.xlu0 %3855
    %v3857 = vsel %vm3798, %v3843, 0.0
    %3858 = vadd.xlane.f32.xlu0 %v3857
    %v3859 = vpop.xlane.xlu0 %3858
    %v3860 = vsel %vm3798, %v3844, 0.0
    %3861 = vadd.xlane.f32.xlu0 %v3860
    %v3862 = vpop.xlane.xlu0 %3861
    %v3863 = vsel %vm3798, %v3845, 0.0
    %3864 = vadd.xlane.f32.xlu0 %v3863
    %v3865 = vpop.xlane.xlu0 %3864
    %v3866 = vsel %vm3798, %v3846, 0.0
    %3867 = vadd.xlane.f32.xlu0 %v3866
    %v3868 = vpop.xlane.xlu0 %3867
    %v3869 = vsel %vm3798, %v3847, 0.0
    %3870 = vadd.xlane.f32.xlu0 %v3869
    %v3871 = vpop.xlane.xlu0 %3870
    %v3872 = vmul.f32 %v3850, %v3823
    %v3873 = vmul.f32 %v3853, %v3823
    %v3874 = vmul.f32 %v3856, %v3823
    %v3875 = vmul.f32 %v3859, %v3823
    %v3876 = vmul.f32 %v3862, %v3823
    %v3877 = vmul.f32 %v3865, %v3823
    %v3878 = vmul.f32 %v3868, %v3823
    %v3879 = vmul.f32 %v3871, %v3823
    %v3880 = vadd.f32 %v3872, 1e-05
    %v3881 = vadd.f32 %v3873, 1e-05
    %v3882 = vadd.f32 %v3874, 1e-05
    %v3883 = vadd.f32 %v3875, 1e-05
    %v3884 = vadd.f32 %v3876, 1e-05
    %v3885 = vadd.f32 %v3877, 1e-05
    %v3886 = vadd.f32 %v3878, 1e-05
    %v3887 = vadd.f32 %v3879, 1e-05
    %v3888 = vrsqrt.pop %v3880
    %v3889 = vrsqrt.pop %v3881
    %v3890 = vrsqrt.pop %v3882
    %v3891 = vrsqrt.pop %v3883
    %v3892 = vrsqrt.pop %v3884
    %v3893 = vrsqrt.pop %v3885
    %v3894 = vrsqrt.pop %v3886
    %v3895 = vrsqrt.pop %v3887
    %v3896 = vmul.f32 %v3832, %v3888
    %v3897 = vmul.f32 %v3833, %v3889
    %v3898 = vmul.f32 %v3834, %v3890
    %v3899 = vmul.f32 %v3835, %v3891
    %v3900 = vmul.f32 %v3836, %v3892
    %v3901 = vmul.f32 %v3837, %v3893
    %v3902 = vmul.f32 %v3838, %v3894
    %v3903 = vmul.f32 %v3839, %v3895
    %v3904 = vld [vmem:[%s8] sm:$0x1]
    %v3906 = vlaneseq
    %v3907 = vshrl.u32 %v3906, 7
    %v3908 = vsub.s32 0, %v3907
    %v3909 = vrot.slane %v3904, %v3908
    %v3911 = vmul.f32 %v3896, %v3909
    %v3912 = vmul.f32 %v3897, %v3909
    %v3913 = vmul.f32 %v3898, %v3909
    %v3914 = vmul.f32 %v3899, %v3909
    %v3915 = vmul.f32 %v3900, %v3909
    %v3916 = vmul.f32 %v3901, %v3909
    %v3917 = vmul.f32 %v3902, %v3909
    %v3918 = vmul.f32 %v3903, %v3909
    %v3919 = vld [vmem:[%s9] sm:$0x1]
    %v3921 = vlaneseq
    %v3922 = vshrl.u32 %v3921, 7
    %v3923 = vsub.s32 0, %v3922
    %v3924 = vrot.slane %v3919, %v3923
    %v3926 = vadd.f32 %v3911, %v3924
    %v3927 = vadd.f32 %v3912, %v3924
    %v3928 = vadd.f32 %v3913, %v3924
    %v3929 = vadd.f32 %v3914, %v3924
    %v3930 = vadd.f32 %v3915, %v3924
    %v3931 = vadd.f32 %v3916, %v3924
    %v3932 = vadd.f32 %v3917, %v3924
    %v3933 = vadd.f32 %v3918, %v3924
    %v3934 = vld [vmem:[#allocation12] sm:$0xff]
    %v3935 = vld [vmem:[#allocation12 + $0x8] sm:$0xff]
    %v3936 = vld [vmem:[#allocation12 + $0x10] sm:$0xff]
    %v3937 = vld [vmem:[#allocation12 + $0x18] sm:$0xff]
    %v3938 = vld [vmem:[#allocation12 + $0x20] sm:$0xff]
    %v3939 = vld [vmem:[#allocation12 + $0x28] sm:$0xff]
    %v3940 = vld [vmem:[#allocation12 + $0x30] sm:$0xff]
    %v3941 = vld [vmem:[#allocation12 + $0x38] sm:$0xff]
    %v3942 = vld [vmem:[#allocation12 + $0x40] sm:$0xff]
    %v3943 = vld [vmem:[#allocation12 + $0x48] sm:$0xff]
    %v3944 = vld [vmem:[#allocation12 + $0x50] sm:$0xff]
    %v3945 = vld [vmem:[#allocation12 + $0x58] sm:$0xff]
    %v3946 = vld [vmem:[#allocation12 + $0x60] sm:$0xff]
    %v3947 = vld [vmem:[#allocation12 + $0x68] sm:$0xff]
    %v3948 = vld [vmem:[#allocation12 + $0x70] sm:$0xff]
    %v3949 = vld [vmem:[#allocation12 + $0x78] sm:$0xff]
    %v3950 = vld [vmem:[#allocation12 + $0x80] sm:$0xff]
    %v3951 = vld [vmem:[#allocation12 + $0x88] sm:$0xff]
    %v3952 = vld [vmem:[#allocation12 + $0x90] sm:$0xff]
    %v3953 = vld [vmem:[#allocation12 + $0x98] sm:$0xff]
    %v3954 = vld [vmem:[#allocation12 + $0xa0] sm:$0xff]
    %v3955 = vld [vmem:[#allocation12 + $0xa8] sm:$0xff]
    %v3956 = vld [vmem:[#allocation12 + $0xb0] sm:$0xff]
    %v3957 = vld [vmem:[#allocation12 + $0xb8] sm:$0xff]
    %v3958 = vld [vmem:[#allocation12 + $0xc0] sm:$0xff]
    %v3959 = vld [vmem:[#allocation12 + $0xc8] sm:$0xff]
    %v3960 = vld [vmem:[#allocation12 + $0xd0] sm:$0xff]
    %v3961 = vld [vmem:[#allocation12 + $0xd8] sm:$0xff]
    %v3962 = vld [vmem:[#allocation12 + $0xe0] sm:$0xff]
    %v3963 = vld [vmem:[#allocation12 + $0xe8] sm:$0xff]
    %v3964 = vld [vmem:[#allocation12 + $0xf0] sm:$0xff]
    %v3965 = vld [vmem:[#allocation12 + $0xf8] sm:$0xff]
    %v3966 = vld [vmem:[#allocation12 + $0x100] sm:$0xff]
    %v3967 = vld [vmem:[#allocation12 + $0x108] sm:$0xff]
    %v3968 = vld [vmem:[#allocation12 + $0x110] sm:$0xff]
    %v3969 = vld [vmem:[#allocation12 + $0x118] sm:$0xff]
    %v3970 = vld [vmem:[#allocation12 + $0x120] sm:$0xff]
    %v3971 = vld [vmem:[#allocation12 + $0x128] sm:$0xff]
    %v3972 = vld [vmem:[#allocation12 + $0x130] sm:$0xff]
    %v3973 = vld [vmem:[#allocation12 + $0x138] sm:$0xff]
    %v3974 = vld [vmem:[#allocation12 + $0x140] sm:$0xff]
    %v3975 = vld [vmem:[#allocation12 + $0x148] sm:$0xff]
    %v3976 = vld [vmem:[#allocation12 + $0x150] sm:$0xff]
    %v3977 = vld [vmem:[#allocation12 + $0x158] sm:$0xff]
    %v3978 = vld [vmem:[#allocation12 + $0x160] sm:$0xff]
    %v3979 = vld [vmem:[#allocation12 + $0x168] sm:$0xff]
    %v3980 = vld [vmem:[#allocation12 + $0x170] sm:$0xff]
    %v3981 = vld [vmem:[#allocation12 + $0x178] sm:$0xff]
    %v3982 = vld [vmem:[%s11] sm:$0x7]
    %v3983 = vld [vmem:[%s12] sm:$0xff]
    %v3984 = vld [vmem:[%s12 + $0x8] sm:$0xff]
    %v3985 = vld [vmem:[%s12 + $0x10] sm:$0xff]
    %v3986 = vld [vmem:[%s12 + $0x18] sm:$0xff]
    %v3987 = vld [vmem:[%s12 + $0x20] sm:$0xff]
    %v3988 = vld [vmem:[%s12 + $0x28] sm:$0xff]
    %v3989 = vld [vmem:[%s12 + $0x30] sm:$0xff]
    %v3990 = vld [vmem:[%s12 + $0x38] sm:$0xff]
    %v3991 = vld [vmem:[%s12 + $0x40] sm:$0xff]
    %v3992 = vld [vmem:[%s12 + $0x48] sm:$0xff]
    %v3993 = vld [vmem:[%s12 + $0x50] sm:$0xff]
    %v3994 = vld [vmem:[%s12 + $0x58] sm:$0xff]
    %v3995 = vld [vmem:[%s12 + $0x60] sm:$0xff]
    %v3996 = vld [vmem:[%s12 + $0x68] sm:$0xff]
    %v3997 = vld [vmem:[%s12 + $0x70] sm:$0xff]
    %v3998 = vld [vmem:[%s12 + $0x78] sm:$0xff]
    %v4000 = vlaneseq
    %v4001 = vshrl.u32 %v4000, 7
    %v4002 = vsub.s32 0, %v4001
    %v4003 = vrot.slane %v3982, %v4002
    %v4004 = vlaneseq
    %v4005 = vshrl.u32 %v4004, 7
    %v4006 = vsub.s32 1, %v4005
    %v4007 = vrot.slane %v3982, %v4006
    %v4008 = vlaneseq
    %v4009 = vshrl.u32 %v4008, 7
    %v4010 = vsub.s32 2, %v4009
    %v4011 = vrot.slane %v3982, %v4010
    %v4023 = vrot.slane %v3927, 7
    %v4024 = vsel %vm422, %v4023, %v3926
    %v4025 = vrot.slane %v3928, 6
    %vm4026 = vcmask 1042434
    %v4027 = vsel %vm4026, %v4025, %v4024
    %v4028 = vrot.slane %v3929, 5
    %vm4029 = vcmask 1043459
    %v4030 = vsel %vm4029, %v4028, %v4027
    %v4031 = vrot.slane %v3930, 4
    %vm4032 = vcmask 1044484
    %v4033 = vsel %vm4032, %v4031, %v4030
    %v4034 = vrot.slane %v3931, 3
    %vm4035 = vcmask 1045509
    %v4036 = vsel %vm4035, %v4034, %v4033
    %v4037 = vrot.slane %v3932, 2
    %vm4038 = vcmask 1046534
    %v4039 = vsel %vm4038, %v4037, %v4036
    %v4040 = vrot.slane %v3933, 1
    %vm4041 = vcmask 1047559
    %v4042 = vsel %vm4041, %v4040, %v4039
    %4044 = vmatprep.subr.mxu0 %v3935
    %4045 = vmatpush1.msra.mxu0 %v3934
    %4046 = vmatprep.subr.mxu0 %v3938
    %4047 = vmatpush1.msra.mxu0 %v3937
    %4048 = vmatprep.subr.mxu0 %v3941
    %4049 = vmatpush1.msra.mxu0 %v3940
    %4050 = vmatprep.subr.mxu0 %v3944
    %4051 = vmatpush1.msra.mxu0 %v3943
    %4052 = vmatprep.subr.mxu0 %v3947
    %4053 = vmatpush1.msra.mxu0 %v3946
    %4054 = vmatprep.subr.mxu0 %v3950
    %4055 = vmatpush1.msra.mxu0 %v3949
    %4056 = vmatprep.subr.mxu0 %v3953
    %4057 = vmatpush1.msra.mxu0 %v3952
    %4058 = vmatprep.subr.mxu0 %v3956
    %4059 = vmatpush1.msra.mxu0 %v3955
    %4060 = vmatprep.subr.mxu0 %v3959
    %4061 = vmatpush1.msra.mxu0 %v3958
    %4062 = vmatprep.subr.mxu0 %v3962
    %4063 = vmatpush1.msra.mxu0 %v3961
    %4064 = vmatprep.subr.mxu0 %v3965
    %4065 = vmatpush1.msra.mxu0 %v3964
    %4066 = vmatprep.subr.mxu0 %v3968
    %4067 = vmatpush1.msra.mxu0 %v3967
    %4068 = vmatprep.subr.mxu0 %v3971
    %4069 = vmatpush1.msra.mxu0 %v3970
    %4070 = vmatprep.subr.mxu0 %v3974
    %4071 = vmatpush1.msra.mxu0 %v3973
    %4072 = vmatprep.subr.mxu0 %v3977
    %4073 = vmatpush1.msra.mxu0 %v3976
    %4074 = vmatprep.subr.mxu0 %v3980
    %4075 = vmatpush1.msra.mxu0 %v3979
    %4076 = vmatprep.subr.mxu0 0.0
    %4077 = vmatpush1.msra.mxu0 0.0
    %4078 = vmatprep.subr.mxu0 0.0
    %4079 = vmatpush1.msra.mxu0 0.0
    %4080 = vmatprep.subr.mxu0 0.0
    %4081 = vmatpush1.msra.mxu0 0.0
    %4082 = vmatprep.subr.mxu0 0.0
    %4083 = vmatpush1.msra.mxu0 0.0
    %4084 = vmatprep.subr.mxu0 0.0
    %4085 = vmatpush1.msra.mxu0 0.0
    %4086 = vmatprep.subr.mxu0 0.0
    %4087 = vmatpush1.msra.mxu0 0.0
    %4088 = vmatprep.subr.mxu0 0.0
    %4089 = vmatpush1.msra.mxu0 0.0
    %4090 = vmatprep.subr.mxu0 0.0
    %4091 = vmatpush1.msra.mxu0 0.0
    %4092 = vmatprep.subr.mxu0 0.0
    %4093 = vmatpush1.msra.mxu0 0.0
    %4094 = vmatprep.subr.mxu0 0.0
    %4095 = vmatpush1.msra.mxu0 0.0
    %4096 = vmatprep.subr.mxu0 0.0
    %4097 = vmatpush1.msra.mxu0 0.0
    %4098 = vmatprep.subr.mxu0 0.0
    %4099 = vmatpush1.msra.mxu0 0.0
    %4100 = vmatprep.subr.mxu0 0.0
    %4101 = vmatpush1.msra.mxu0 0.0
    %4102 = vmatprep.subr.mxu0 0.0
    %4103 = vmatpush1.msra.mxu0 0.0
    %4104 = vmatprep.subr.mxu0 0.0
    %4105 = vmatpush1.msra.mxu0 0.0
    %4106 = vmatprep.subr.mxu0 0.0
    %4107 = vmatpush1.msra.mxu0 0.0
    %4108 = vmatprep.mubr.f32.mxu0 0.0
    %4109 = vmatmul.mubr.f32.gmra.mrb[0].mxu0 %v4042
    %v4110 = vpop.f32.mrb[0].mxu0
    %v4111 = vadd.f32 %v4003, %v4110
    %v4112 = vpop.f32.mrb[0].mxu0
    %v4113 = vadd.f32 %v4007, %v4112
    %4114 = vdwg.mxu0
    %4115 = vmatprep.subr.mxu0 0.0
    %4116 = vmatpush1.msra.mxu0 %v3936
    %4117 = vmatprep.subr.mxu0 0.0
    %4118 = vmatpush1.msra.mxu0 %v3939
    %4119 = vmatprep.subr.mxu0 0.0
    %4120 = vmatpush1.msra.mxu0 %v3942
    %4121 = vmatprep.subr.mxu0 0.0
    %4122 = vmatpush1.msra.mxu0 %v3945
    %4123 = vmatprep.subr.mxu0 0.0
    %4124 = vmatpush1.msra.mxu0 %v3948
    %4125 = vmatprep.subr.mxu0 0.0
    %4126 = vmatpush1.msra.mxu0 %v3951
    %4127 = vmatprep.subr.mxu0 0.0
    %4128 = vmatpush1.msra.mxu0 %v3954
    %4129 = vmatprep.subr.mxu0 0.0
    %4130 = vmatpush1.msra.mxu0 %v3957
    %4131 = vmatprep.subr.mxu0 0.0
    %4132 = vmatpush1.msra.mxu0 %v3960
    %4133 = vmatprep.subr.mxu0 0.0
    %4134 = vmatpush1.msra.mxu0 %v3963
    %4135 = vmatprep.subr.mxu0 0.0
    %4136 = vmatpush1.msra.mxu0 %v3966
    %4137 = vmatprep.subr.mxu0 0.0
    %4138 = vmatpush1.msra.mxu0 %v3969
    %4139 = vmatprep.subr.mxu0 0.0
    %4140 = vmatpush1.msra.mxu0 %v3972
    %4141 = vmatprep.subr.mxu0 0.0
    %4142 = vmatpush1.msra.mxu0 %v3975
    %4143 = vmatprep.subr.mxu0 0.0
    %4144 = vmatpush1.msra.mxu0 %v3978
    %4145 = vmatprep.subr.mxu0 0.0
    %4146 = vmatpush1.msra.mxu0 %v3981
    %4147 = vmatprep.subr.mxu0 0.0
    %4148 = vmatpush1.msra.mxu0 0.0
    %4149 = vmatprep.subr.mxu0 0.0
    %4150 = vmatpush1.msra.mxu0 0.0
    %4151 = vmatprep.subr.mxu0 0.0
    %4152 = vmatpush1.msra.mxu0 0.0
    %4153 = vmatprep.subr.mxu0 0.0
    %4154 = vmatpush1.msra.mxu0 0.0
    %4155 = vmatprep.subr.mxu0 0.0
    %4156 = vmatpush1.msra.mxu0 0.0
    %4157 = vmatprep.subr.mxu0 0.0
    %4158 = vmatpush1.msra.mxu0 0.0
    %4159 = vmatprep.subr.mxu0 0.0
    %4160 = vmatpush1.msra.mxu0 0.0
    %4161 = vmatprep.subr.mxu0 0.0
    %4162 = vmatpush1.msra.mxu0 0.0
    %4163 = vmatprep.subr.mxu0 0.0
    %4164 = vmatpush1.msra.mxu0 0.0
    %4165 = vmatprep.subr.mxu0 0.0
    %4166 = vmatpush1.msra.mxu0 0.0
    %4167 = vmatprep.subr.mxu0 0.0
    %4168 = vmatpush1.msra.mxu0 0.0
    %4169 = vmatprep.subr.mxu0 0.0
    %4170 = vmatpush1.msra.mxu0 0.0
    %4171 = vmatprep.subr.mxu0 0.0
    %4172 = vmatpush1.msra.mxu0 0.0
    %4173 = vmatprep.subr.mxu0 0.0
    %4174 = vmatpush1.msra.mxu0 0.0
    %4175 = vmatprep.subr.mxu0 0.0
    %4176 = vmatpush1.msra.mxu0 0.0
    %4177 = vmatprep.subr.mxu0 0.0
    %4178 = vmatpush1.msra.mxu0 0.0
    %4179 = vmatprep.mubr.f32.mxu0 0.0
    %4180 = vmatmul.mubr.f32.gmra.mrb[0].mxu0 %v4042
    %v4181 = vpop.f32.mrb[0].mxu0
    %v4182 = vadd.f32 %v4011, %v4181
    %v4183 = vpop.f32.mrb[0].mxu0
    %4184 = vdwg.mxu0
    %v4185 = vmul.f32 %v4111, 0.17677669
    %vm4186 = vcmask 261120
    %v4188 = vsel %vm4186, %v4185, 0
    %v4191 = vsel %vm4186, %v4113, 0
    %4193 = vmatprep.subr.mxu0 0.0
    %4194 = vmatpush1.xpose.msra.mxu0 %v4191
    %4195 = vmatprep.subr.mxu0 0.0
    %4196 = vmatpush1.xpose.msra.mxu0 0.0
    %4197 = vmatprep.subr.mxu0 0.0
    %4198 = vmatpush1.xpose.msra.mxu0 0.0
    %4199 = vmatprep.subr.mxu0 0.0
    %4200 = vmatpush1.xpose.msra.mxu0 0.0
    %4201 = vmatprep.subr.mxu0 0.0
    %4202 = vmatpush1.xpose.msra.mxu0 0.0
    %4203 = vmatprep.subr.mxu0 0.0
    %4204 = vmatpush1.xpose.msra.mxu0 0.0
    %4205 = vmatprep.subr.mxu0 0.0
    %4206 = vmatpush1.xpose.msra.mxu0 0.0
    %4207 = vmatprep.subr.mxu0 0.0
    %4208 = vmatpush1.xpose.msra.mxu0 0.0
    %4209 = vmatprep.subr.mxu0 0.0
    %4210 = vmatpush1.xpose.msra.mxu0 0.0
    %4211 = vmatprep.subr.mxu0 0.0
    %4212 = vmatpush1.xpose.msra.mxu0 0.0
    %4213 = vmatprep.subr.mxu0 0.0
    %4214 = vmatpush1.xpose.msra.mxu0 0.0
    %4215 = vmatprep.subr.mxu0 0.0
    %4216 = vmatpush1.xpose.msra.mxu0 0.0
    %4217 = vmatprep.subr.mxu0 0.0
    %4218 = vmatpush1.xpose.msra.mxu0 0.0
    %4219 = vmatprep.subr.mxu0 0.0
    %4220 = vmatpush1.xpose.msra.mxu0 0.0
    %4221 = vmatprep.subr.mxu0 0.0
    %4222 = vmatpush1.xpose.msra.mxu0 0.0
    %4223 = vmatprep.subr.mxu0 0.0
    %4224 = vmatpush1.xpose.msra.mxu0 0.0
    %4225 = vmatprep.subr.mxu0 0.0
    %4226 = vmatpush1.xpose.msra.mxu0 0.0
    %4227 = vmatprep.subr.mxu0 0.0
    %4228 = vmatpush1.xpose.msra.mxu0 0.0
    %4229 = vmatprep.subr.mxu0 0.0
    %4230 = vmatpush1.xpose.msra.mxu0 0.0
    %4231 = vmatprep.subr.mxu0 0.0
    %4232 = vmatpush1.xpose.msra.mxu0 0.0
    %4233 = vmatprep.subr.mxu0 0.0
    %4234 = vmatpush1.xpose.msra.mxu0 0.0
    %4235 = vmatprep.subr.mxu0 0.0
    %4236 = vmatpush1.xpose.msra.mxu0 0.0
    %4237 = vmatprep.subr.mxu0 0.0
    %4238 = vmatpush1.xpose.msra.mxu0 0.0
    %4239 = vmatprep.subr.mxu0 0.0
    %4240 = vmatpush1.xpose.msra.mxu0 0.0
    %4241 = vmatprep.subr.mxu0 0.0
    %4242 = vmatpush1.xpose.msra.mxu0 0.0
    %4243 = vmatprep.subr.mxu0 0.0
    %4244 = vmatpush1.xpose.msra.mxu0 0.0
    %4245 = vmatprep.subr.mxu0 0.0
    %4246 = vmatpush1.xpose.msra.mxu0 0.0
    %4247 = vmatprep.subr.mxu0 0.0
    %4248 = vmatpush1.xpose.msra.mxu0 0.0
    %4249 = vmatprep.subr.mxu0 0.0
    %4250 = vmatpush1.xpose.msra.mxu0 0.0
    %4251 = vmatprep.subr.mxu0 0.0
    %4252 = vmatpush1.xpose.msra.mxu0 0.0
    %4253 = vmatprep.subr.mxu0 0.0
    %4254 = vmatpush1.xpose.msra.mxu0 0.0
    %4255 = vmatprep.subr.mxu0 0.0
    %4256 = vmatpush1.xpose.msra.mxu0 0.0
    %4257 = vmatprep.mubr.f32.mxu0 0.0
    %4258 = vmatmul.mubr.f32.gmra.mrb[0].mxu0 %v4188
    %v4259 = vpop.f32.mrb[0].mxu0
    %v4260 = vadd.f32 0.0, %v4259
    %v4261 = vpop.f32.mrb[0].mxu0
    %4262 = vdwg.mxu0
    %vm4263 = vcmask 64512
    %v4264 = vsel %vm4263, %v4260, -inf
    %4265 = vmax.xlane.f32.xlu0 %v4264
    %v4266 = vpop.xlane.xlu0 %4265
    %v4267 = vsub.f32 %v4260, %v4266
    %v4268 = vmul.f32 %v4267, 1.442695
    %v4269 = vpow.pop %v4268
    %v4270 = vsel %vm4263, %v4269, 0.0
    %4271 = vadd.xlane.f32.xlu0 %v4270
    %v4272 = vpop.xlane.xlu0 %4271
    %v4273 = vrcp.pop %v4272
    %v4274 = vmul.f32 %v4269, %v4273
    %v4276 = vsel %vm4263, %v4274, 0
    %4278 = vmatprep.subr.mxu0 0.0
    %4279 = vmatpush1.msra.mxu0 %v4182
    %4280 = vmatprep.subr.mxu0 0.0
    %4281 = vmatpush1.msra.mxu0 0.0
    %4282 = vmatprep.subr.mxu0 0.0
    %4283 = vmatpush1.msra.mxu0 0.0
    %4284 = vmatprep.subr.mxu0 0.0
    %4285 = vmatpush1.msra.mxu0 0.0
    %4286 = vmatprep.subr.mxu0 0.0
    %4287 = vmatpush1.msra.mxu0 0.0
    %4288 = vmatprep.subr.mxu0 0.0
    %4289 = vmatpush1.msra.mxu0 0.0
    %4290 = vmatprep.subr.mxu0 0.0
    %4291 = vmatpush1.msra.mxu0 0.0
    %4292 = vmatprep.subr.mxu0 0.0
    %4293 = vmatpush1.msra.mxu0 0.0
    %4294 = vmatprep.subr.mxu0 0.0
    %4295 = vmatpush1.msra.mxu0 0.0
    %4296 = vmatprep.subr.mxu0 0.0
    %4297 = vmatpush1.msra.mxu0 0.0
    %4298 = vmatprep.subr.mxu0 0.0
    %4299 = vmatpush1.msra.mxu0 0.0
    %4300 = vmatprep.subr.mxu0 0.0
    %4301 = vmatpush1.msra.mxu0 0.0
    %4302 = vmatprep.subr.mxu0 0.0
    %4303 = vmatpush1.msra.mxu0 0.0
    %4304 = vmatprep.subr.mxu0 0.0
    %4305 = vmatpush1.msra.mxu0 0.0
    %4306 = vmatprep.subr.mxu0 0.0
    %4307 = vmatpush1.msra.mxu0 0.0
    %4308 = vmatprep.subr.mxu0 0.0
    %4309 = vmatpush1.msra.mxu0 0.0
    %4310 = vmatprep.subr.mxu0 0.0
    %4311 = vmatpush1.msra.mxu0 0.0
    %4312 = vmatprep.subr.mxu0 0.0
    %4313 = vmatpush1.msra.mxu0 0.0
    %4314 = vmatprep.subr.mxu0 0.0
    %4315 = vmatpush1.msra.mxu0 0.0
    %4316 = vmatprep.subr.mxu0 0.0
    %4317 = vmatpush1.msra.mxu0 0.0
    %4318 = vmatprep.subr.mxu0 0.0
    %4319 = vmatpush1.msra.mxu0 0.0
    %4320 = vmatprep.subr.mxu0 0.0
    %4321 = vmatpush1.msra.mxu0 0.0
    %4322 = vmatprep.subr.mxu0 0.0
    %4323 = vmatpush1.msra.mxu0 0.0
    %4324 = vmatprep.subr.mxu0 0.0
    %4325 = vmatpush1.msra.mxu0 0.0
    %4326 = vmatprep.subr.mxu0 0.0
    %4327 = vmatpush1.msra.mxu0 0.0
    %4328 = vmatprep.subr.mxu0 0.0
    %4329 = vmatpush1.msra.mxu0 0.0
    %4330 = vmatprep.subr.mxu0 0.0
    %4331 = vmatpush1.msra.mxu0 0.0
    %4332 = vmatprep.subr.mxu0 0.0
    %4333 = vmatpush1.msra.mxu0 0.0
    %4334 = vmatprep.subr.mxu0 0.0
    %4335 = vmatpush1.msra.mxu0 0.0
    %4336 = vmatprep.subr.mxu0 0.0
    %4337 = vmatpush1.msra.mxu0 0.0
    %4338 = vmatprep.subr.mxu0 0.0
    %4339 = vmatpush1.msra.mxu0 0.0
    %4340 = vmatprep.subr.mxu0 0.0
    %4341 = vmatpush1.msra.mxu0 0.0
    %4342 = vmatprep.mubr.f32.mxu0 0.0
    %4343 = vmatmul.mubr.f32.gmra.mrb[0].mxu0 %v4276
    %v4344 = vpop.f32.mrb[0].mxu0
    %v4345 = vadd.f32 0.0, %v4344
    %v4346 = vpop.f32.mrb[0].mxu0
    %4347 = vdwg.mxu0
    %v4348 = vsel %vm4186, %v4345, 0.0
    %v4349 = vrot.slane %v4348, 4
    %v4350 = vadd.f32 %v4348, %v4349
    %v4351 = vrot.slane %v4350, 2
    %v4352 = vadd.f32 %v4350, %v4351
    %v4353 = vrot.slane %v4352, 1
    %v4354 = vadd.f32 %v4352, %v4353
    %v4355 = vrcp.pop 8.0
    %v4356 = vmul.f32 %v4354, %v4355
    %4357 = vrot.lane.b32.xlu0 %v4185, 96
    %v4358 = vpop.permute.xlu0 %4357
    %4359 = vrot.lane.b32.xlu0 %v4113, 96
    %v4360 = vpop.permute.xlu0 %4359
    %v4361 = vsel %vm4186, %v4358, 0
    %v4363 = vsel %vm4186, %v4360, 0
    %4365 = vmatprep.subr.mxu0 0.0
    %4366 = vmatpush1.xpose.msra.mxu0 %v4363
    %4367 = vmatprep.subr.mxu0 0.0
    %4368 = vmatpush1.xpose.msra.mxu0 0.0
    %4369 = vmatprep.subr.mxu0 0.0
    %4370 = vmatpush1.xpose.msra.mxu0 0.0
    %4371 = vmatprep.subr.mxu0 0.0
    %4372 = vmatpush1.xpose.msra.mxu0 0.0
    %4373 = vmatprep.subr.mxu0 0.0
    %4374 = vmatpush1.xpose.msra.mxu0 0.0
    %4375 = vmatprep.subr.mxu0 0.0
    %4376 = vmatpush1.xpose.msra.mxu0 0.0
    %4377 = vmatprep.subr.mxu0 0.0
    %4378 = vmatpush1.xpose.msra.mxu0 0.0
    %4379 = vmatprep.subr.mxu0 0.0
    %4380 = vmatpush1.xpose.msra.mxu0 0.0
    %4381 = vmatprep.subr.mxu0 0.0
    %4382 = vmatpush1.xpose.msra.mxu0 0.0
    %4383 = vmatprep.subr.mxu0 0.0
    %4384 = vmatpush1.xpose.msra.mxu0 0.0
    %4385 = vmatprep.subr.mxu0 0.0
    %4386 = vmatpush1.xpose.msra.mxu0 0.0
    %4387 = vmatprep.subr.mxu0 0.0
    %4388 = vmatpush1.xpose.msra.mxu0 0.0
    %4389 = vmatprep.subr.mxu0 0.0
    %4390 = vmatpush1.xpose.msra.mxu0 0.0
    %4391 = vmatprep.subr.mxu0 0.0
    %4392 = vmatpush1.xpose.msra.mxu0 0.0
    %4393 = vmatprep.subr.mxu0 0.0
    %4394 = vmatpush1.xpose.msra.mxu0 0.0
    %4395 = vmatprep.subr.mxu0 0.0
    %4396 = vmatpush1.xpose.msra.mxu0 0.0
    %4397 = vmatprep.subr.mxu0 0.0
    %4398 = vmatpush1.xpose.msra.mxu0 0.0
    %4399 = vmatprep.subr.mxu0 0.0
    %4400 = vmatpush1.xpose.msra.mxu0 0.0
    %4401 = vmatprep.subr.mxu0 0.0
    %4402 = vmatpush1.xpose.msra.mxu0 0.0
    %4403 = vmatprep.subr.mxu0 0.0
    %4404 = vmatpush1.xpose.msra.mxu0 0.0
    %4405 = vmatprep.subr.mxu0 0.0
    %4406 = vmatpush1.xpose.msra.mxu0 0.0
    %4407 = vmatprep.subr.mxu0 0.0
    %4408 = vmatpush1.xpose.msra.mxu0 0.0
    %4409 = vmatprep.subr.mxu0 0.0
    %4410 = vmatpush1.xpose.msra.mxu0 0.0
    %4411 = vmatprep.subr.mxu0 0.0
    %4412 = vmatpush1.xpose.msra.mxu0 0.0
    %4413 = vmatprep.subr.mxu0 0.0
    %4414 = vmatpush1.xpose.msra.mxu0 0.0
    %4415 = vmatprep.subr.mxu0 0.0
    %4416 = vmatpush1.xpose.msra.mxu0 0.0
    %4417 = vmatprep.subr.mxu0 0.0
    %4418 = vmatpush1.xpose.msra.mxu0 0.0
    %4419 = vmatprep.subr.mxu0 0.0
    %4420 = vmatpush1.xpose.msra.mxu0 0.0
    %4421 = vmatprep.subr.mxu0 0.0
    %4422 = vmatpush1.xpose.msra.mxu0 0.0
    %4423 = vmatprep.subr.mxu0 0.0
    %4424 = vmatpush1.xpose.msra.mxu0 0.0
    %4425 = vmatprep.subr.mxu0 0.0
    %4426 = vmatpush1.xpose.msra.mxu0 0.0
    %4427 = vmatprep.subr.mxu0 0.0
    %4428 = vmatpush1.xpose.msra.mxu0 0.0
    %4429 = vmatprep.mubr.f32.mxu0 0.0
    %4430 = vmatmul.mubr.f32.gmra.mrb[0].mxu0 %v4361
    %v4431 = vpop.f32.mrb[0].mxu0
    %v4432 = vadd.f32 0.0, %v4431
    %v4433 = vpop.f32.mrb[0].mxu0
    %4434 = vdwg.mxu0
    %v4435 = vsel %vm4263, %v4432, -inf
    %4436 = vmax.xlane.f32.xlu0 %v4435
    %v4437 = vpop.xlane.xlu0 %4436
    %v4438 = vsub.f32 %v4432, %v4437
    %v4439 = vmul.f32 %v4438, 1.442695
    %v4440 = vpow.pop %v4439
    %v4441 = vsel %vm4263, %v4440, 0.0
    %4442 = vadd.xlane.f32.xlu0 %v4441
    %v4443 = vpop.xlane.xlu0 %4442
    %v4444 = vrcp.pop %v4443
    %v4445 = vmul.f32 %v4440, %v4444
    %4447 = vrot.lane.b32.xlu0 %v4182, 96
    %v4448 = vpop.permute.xlu0 %4447
    %v4451 = vsel %vm4263, %v4445, 0
    %4453 = vmatprep.subr.mxu0 0.0
    %4454 = vmatpush1.msra.mxu0 %v4448
    %4455 = vmatprep.subr.mxu0 0.0
    %4456 = vmatpush1.msra.mxu0 0.0
    %4457 = vmatprep.subr.mxu0 0.0
    %4458 = vmatpush1.msra.mxu0 0.0
    %4459 = vmatprep.subr.mxu0 0.0
    %4460 = vmatpush1.msra.mxu0 0.0
    %4461 = vmatprep.subr.mxu0 0.0
    %4462 = vmatpush1.msra.mxu0 0.0
    %4463 = vmatprep.subr.mxu0 0.0
    %4464 = vmatpush1.msra.mxu0 0.0
    %4465 = vmatprep.subr.mxu0 0.0
    %4466 = vmatpush1.msra.mxu0 0.0
    %4467 = vmatprep.subr.mxu0 0.0
    %4468 = vmatpush1.msra.mxu0 0.0
    %4469 = vmatprep.subr.mxu0 0.0
    %4470 = vmatpush1.msra.mxu0 0.0
    %4471 = vmatprep.subr.mxu0 0.0
    %4472 = vmatpush1.msra.mxu0 0.0
    %4473 = vmatprep.subr.mxu0 0.0
    %4474 = vmatpush1.msra.mxu0 0.0
    %4475 = vmatprep.subr.mxu0 0.0
    %4476 = vmatpush1.msra.mxu0 0.0
    %4477 = vmatprep.subr.mxu0 0.0
    %4478 = vmatpush1.msra.mxu0 0.0
    %4479 = vmatprep.subr.mxu0 0.0
    %4480 = vmatpush1.msra.mxu0 0.0
    %4481 = vmatprep.subr.mxu0 0.0
    %4482 = vmatpush1.msra.mxu0 0.0
    %4483 = vmatprep.subr.mxu0 0.0
    %4484 = vmatpush1.msra.mxu0 0.0
    %4485 = vmatprep.subr.mxu0 0.0
    %4486 = vmatpush1.msra.mxu0 0.0
    %4487 = vmatprep.subr.mxu0 0.0
    %4488 = vmatpush1.msra.mxu0 0.0
    %4489 = vmatprep.subr.mxu0 0.0
    %4490 = vmatpush1.msra.mxu0 0.0
    %4491 = vmatprep.subr.mxu0 0.0
    %4492 = vmatpush1.msra.mxu0 0.0
    %4493 = vmatprep.subr.mxu0 0.0
    %4494 = vmatpush1.msra.mxu0 0.0
    %4495 = vmatprep.subr.mxu0 0.0
    %4496 = vmatpush1.msra.mxu0 0.0
    %4497 = vmatprep.subr.mxu0 0.0
    %4498 = vmatpush1.msra.mxu0 0.0
    %4499 = vmatprep.subr.mxu0 0.0
    %4500 = vmatpush1.msra.mxu0 0.0
    %4501 = vmatprep.subr.mxu0 0.0
    %4502 = vmatpush1.msra.mxu0 0.0
    %4503 = vmatprep.subr.mxu0 0.0
    %4504 = vmatpush1.msra.mxu0 0.0
    %4505 = vmatprep.subr.mxu0 0.0
    %4506 = vmatpush1.msra.mxu0 0.0
    %4507 = vmatprep.subr.mxu0 0.0
    %4508 = vmatpush1.msra.mxu0 0.0
    %4509 = vmatprep.subr.mxu0 0.0
    %4510 = vmatpush1.msra.mxu0 0.0
    %4511 = vmatprep.subr.mxu0 0.0
    %4512 = vmatpush1.msra.mxu0 0.0
    %4513 = vmatprep.subr.mxu0 0.0
    %4514 = vmatpush1.msra.mxu0 0.0
    %4515 = vmatprep.subr.mxu0 0.0
    %4516 = vmatpush1.msra.mxu0 0.0
    %4517 = vmatprep.mubr.f32.mxu0 0.0
    %4518 = vmatmul.mubr.f32.gmra.mrb[0].mxu0 %v4451
    %v4519 = vpop.f32.mrb[0].mxu0
    %v4520 = vadd.f32 0.0, %v4519
    %v4521 = vpop.f32.mrb[0].mxu0
    %4522 = vdwg.mxu0
    %v4523 = vsel %vm4186, %v4520, 0.0
    %v4524 = vrot.slane %v4523, 4
    %v4525 = vadd.f32 %v4523, %v4524
    %v4526 = vrot.slane %v4525, 2
    %v4527 = vadd.f32 %v4525, %v4526
    %v4528 = vrot.slane %v4527, 1
    %v4529 = vadd.f32 %v4527, %v4528
    %v4530 = vmul.f32 %v4529, %v4355
    %v4532 = vsel %vm4186, %v4530, 0
    %4534 = vmatprep.subr.mxu0 0.0
    %4535 = vmatpush1.msra.mxu0 %v3987
    %4536 = vmatprep.subr.mxu0 0.0
    %4537 = vmatpush1.msra.mxu0 %v3988
    %4538 = vmatprep.subr.mxu0 0.0
    %4539 = vmatpush1.msra.mxu0 %v3989
    %4540 = vmatprep.subr.mxu0 0.0
    %4541 = vmatpush1.msra.mxu0 %v3990
    %4542 = vmatprep.subr.mxu0 0.0
    %4543 = vmatpush1.msra.mxu0 0.0
    %4544 = vmatprep.subr.mxu0 0.0
    %4545 = vmatpush1.msra.mxu0 0.0
    %4546 = vmatprep.subr.mxu0 0.0
    %4547 = vmatpush1.msra.mxu0 0.0
    %4548 = vmatprep.subr.mxu0 0.0
    %4549 = vmatpush1.msra.mxu0 0.0
    %4550 = vmatprep.subr.mxu0 0.0
    %4551 = vmatpush1.msra.mxu0 0.0
    %4552 = vmatprep.subr.mxu0 0.0
    %4553 = vmatpush1.msra.mxu0 0.0
    %4554 = vmatprep.subr.mxu0 0.0
    %4555 = vmatpush1.msra.mxu0 0.0
    %4556 = vmatprep.subr.mxu0 0.0
    %4557 = vmatpush1.msra.mxu0 0.0
    %4558 = vmatprep.subr.mxu0 0.0
    %4559 = vmatpush1.msra.mxu0 0.0
    %4560 = vmatprep.subr.mxu0 0.0
    %4561 = vmatpush1.msra.mxu0 0.0
    %4562 = vmatprep.subr.mxu0 0.0
    %4563 = vmatpush1.msra.mxu0 0.0
    %4564 = vmatprep.subr.mxu0 0.0
    %4565 = vmatpush1.msra.mxu0 0.0
    %4566 = vmatprep.subr.mxu0 0.0
    %4567 = vmatpush1.msra.mxu0 0.0
    %4568 = vmatprep.subr.mxu0 0.0
    %4569 = vmatpush1.msra.mxu0 0.0
    %4570 = vmatprep.subr.mxu0 0.0
    %4571 = vmatpush1.msra.mxu0 0.0
    %4572 = vmatprep.subr.mxu0 0.0
    %4573 = vmatpush1.msra.mxu0 0.0
    %4574 = vmatprep.subr.mxu0 0.0
    %4575 = vmatpush1.msra.mxu0 0.0
    %4576 = vmatprep.subr.mxu0 0.0
    %4577 = vmatpush1.msra.mxu0 0.0
    %4578 = vmatprep.subr.mxu0 0.0
    %4579 = vmatpush1.msra.mxu0 0.0
    %4580 = vmatprep.subr.mxu0 0.0
    %4581 = vmatpush1.msra.mxu0 0.0
    %4582 = vmatprep.subr.mxu0 0.0
    %4583 = vmatpush1.msra.mxu0 0.0
    %4584 = vmatprep.subr.mxu0 0.0
    %4585 = vmatpush1.msra.mxu0 0.0
    %4586 = vmatprep.subr.mxu0 0.0
    %4587 = vmatpush1.msra.mxu0 0.0
    %4588 = vmatprep.subr.mxu0 0.0
    %4589 = vmatpush1.msra.mxu0 0.0
    %4590 = vmatprep.subr.mxu0 0.0
    %4591 = vmatpush1.msra.mxu0 0.0
    %4592 = vmatprep.subr.mxu0 0.0
    %4593 = vmatpush1.msra.mxu0 0.0
    %4594 = vmatprep.subr.mxu0 0.0
    %4595 = vmatpush1.msra.mxu0 0.0
    %4596 = vmatprep.subr.mxu0 0.0
    %4597 = vmatpush1.msra.mxu0 0.0
    %4598 = vmatprep.mubr.f32.mxu0 0.0
    %4599 = vmatmul.mubr.f32.gmra.mrb[0].mxu0 %v4532
    %v4600 = vpop.f32.mrb[0].mxu0
    %v4601 = vadd.f32 0.0, %v4600
    %v4602 = vpop.f32.mrb[0].mxu0
    %4603 = vdwg.mxu0
    %v4605 = vsel %vm4186, %v4356, 0
    %4607 = vmatprep.subr.mxu0 0.0
    %4608 = vmatpush1.msra.mxu0 %v3983
    %4609 = vmatprep.subr.mxu0 0.0
    %4610 = vmatpush1.msra.mxu0 %v3984
    %4611 = vmatprep.subr.mxu0 0.0
    %4612 = vmatpush1.msra.mxu0 %v3985
    %4613 = vmatprep.subr.mxu0 0.0
    %4614 = vmatpush1.msra.mxu0 %v3986
    %4615 = vmatprep.subr.mxu0 0.0
    %4616 = vmatpush1.msra.mxu0 0.0
    %4617 = vmatprep.subr.mxu0 0.0
    %4618 = vmatpush1.msra.mxu0 0.0
    %4619 = vmatprep.subr.mxu0 0.0
    %4620 = vmatpush1.msra.mxu0 0.0
    %4621 = vmatprep.subr.mxu0 0.0
    %4622 = vmatpush1.msra.mxu0 0.0
    %4623 = vmatprep.subr.mxu0 0.0
    %4624 = vmatpush1.msra.mxu0 0.0
    %4625 = vmatprep.subr.mxu0 0.0
    %4626 = vmatpush1.msra.mxu0 0.0
    %4627 = vmatprep.subr.mxu0 0.0
    %4628 = vmatpush1.msra.mxu0 0.0
    %4629 = vmatprep.subr.mxu0 0.0
    %4630 = vmatpush1.msra.mxu0 0.0
    %4631 = vmatprep.subr.mxu0 0.0
    %4632 = vmatpush1.msra.mxu0 0.0
    %4633 = vmatprep.subr.mxu0 0.0
    %4634 = vmatpush1.msra.mxu0 0.0
    %4635 = vmatprep.subr.mxu0 0.0
    %4636 = vmatpush1.msra.mxu0 0.0
    %4637 = vmatprep.subr.mxu0 0.0
    %4638 = vmatpush1.msra.mxu0 0.0
    %4639 = vmatprep.subr.mxu0 0.0
    %4640 = vmatpush1.msra.mxu0 0.0
    %4641 = vmatprep.subr.mxu0 0.0
    %4642 = vmatpush1.msra.mxu0 0.0
    %4643 = vmatprep.subr.mxu0 0.0
    %4644 = vmatpush1.msra.mxu0 0.0
    %4645 = vmatprep.subr.mxu0 0.0
    %4646 = vmatpush1.msra.mxu0 0.0
    %4647 = vmatprep.subr.mxu0 0.0
    %4648 = vmatpush1.msra.mxu0 0.0
    %4649 = vmatprep.subr.mxu0 0.0
    %4650 = vmatpush1.msra.mxu0 0.0
    %4651 = vmatprep.subr.mxu0 0.0
    %4652 = vmatpush1.msra.mxu0 0.0
    %4653 = vmatprep.subr.mxu0 0.0
    %4654 = vmatpush1.msra.mxu0 0.0
    %4655 = vmatprep.subr.mxu0 0.0
    %4656 = vmatpush1.msra.mxu0 0.0
    %4657 = vmatprep.subr.mxu0 0.0
    %4658 = vmatpush1.msra.mxu0 0.0
    %4659 = vmatprep.subr.mxu0 0.0
    %4660 = vmatpush1.msra.mxu0 0.0
    %4661 = vmatprep.subr.mxu0 0.0
    %4662 = vmatpush1.msra.mxu0 0.0
    %4663 = vmatprep.subr.mxu0 0.0
    %4664 = vmatpush1.msra.mxu0 0.0
    %4665 = vmatprep.subr.mxu0 0.0
    %4666 = vmatpush1.msra.mxu0 0.0
    %4667 = vmatprep.subr.mxu0 0.0
    %4668 = vmatpush1.msra.mxu0 0.0
    %4669 = vmatprep.subr.mxu0 0.0
    %4670 = vmatpush1.msra.mxu0 0.0
    %4671 = vmatprep.mubr.f32.mxu0 0.0
    %4672 = vmatmul.mubr.f32.gmra.mrb[0].mxu0 %v4605
    %v4673 = vpop.f32.mrb[0].mxu0
    %v4674 = vadd.f32 %v4601, %v4673
    %v4675 = vpop.f32.mrb[0].mxu0
    %4676 = vdwg.mxu0
    %4677 = vrot.lane.b32.xlu0 %v4185, 64
    %v4678 = vpop.permute.xlu0 %4677
    %4679 = vrot.lane.b32.xlu0 %v4113, 64
    %v4680 = vpop.permute.xlu0 %4679
    %v4681 = vsel %vm4186, %v4678, 0
    %v4683 = vsel %vm4186, %v4680, 0
    %4685 = vmatprep.subr.mxu0 0.0
    %4686 = vmatpush1.xpose.msra.mxu0 %v4683
    %4687 = vmatprep.subr.mxu0 0.0
    %4688 = vmatpush1.xpose.msra.mxu0 0.0
    %4689 = vmatprep.subr.mxu0 0.0
    %4690 = vmatpush1.xpose.msra.mxu0 0.0
    %4691 = vmatprep.subr.mxu0 0.0
    %4692 = vmatpush1.xpose.msra.mxu0 0.0
    %4693 = vmatprep.subr.mxu0 0.0
    %4694 = vmatpush1.xpose.msra.mxu0 0.0
    %4695 = vmatprep.subr.mxu0 0.0
    %4696 = vmatpush1.xpose.msra.mxu0 0.0
    %4697 = vmatprep.subr.mxu0 0.0
    %4698 = vmatpush1.xpose.msra.mxu0 0.0
    %4699 = vmatprep.subr.mxu0 0.0
    %4700 = vmatpush1.xpose.msra.mxu0 0.0
    %4701 = vmatprep.subr.mxu0 0.0
    %4702 = vmatpush1.xpose.msra.mxu0 0.0
    %4703 = vmatprep.subr.mxu0 0.0
    %4704 = vmatpush1.xpose.msra.mxu0 0.0
    %4705 = vmatprep.subr.mxu0 0.0
    %4706 = vmatpush1.xpose.msra.mxu0 0.0
    %4707 = vmatprep.subr.mxu0 0.0
    %4708 = vmatpush1.xpose.msra.mxu0 0.0
    %4709 = vmatprep.subr.mxu0 0.0
    %4710 = vmatpush1.xpose.msra.mxu0 0.0
    %4711 = vmatprep.subr.mxu0 0.0
    %4712 = vmatpush1.xpose.msra.mxu0 0.0
    %4713 = vmatprep.subr.mxu0 0.0
    %4714 = vmatpush1.xpose.msra.mxu0 0.0
    %4715 = vmatprep.subr.mxu0 0.0
    %4716 = vmatpush1.xpose.msra.mxu0 0.0
    %4717 = vmatprep.subr.mxu0 0.0
    %4718 = vmatpush1.xpose.msra.mxu0 0.0
    %4719 = vmatprep.subr.mxu0 0.0
    %4720 = vmatpush1.xpose.msra.mxu0 0.0
    %4721 = vmatprep.subr.mxu0 0.0
    %4722 = vmatpush1.xpose.msra.mxu0 0.0
    %4723 = vmatprep.subr.mxu0 0.0
    %4724 = vmatpush1.xpose.msra.mxu0 0.0
    %4725 = vmatprep.subr.mxu0 0.0
    %4726 = vmatpush1.xpose.msra.mxu0 0.0
    %4727 = vmatprep.subr.mxu0 0.0
    %4728 = vmatpush1.xpose.msra.mxu0 0.0
    %4729 = vmatprep.subr.mxu0 0.0
    %4730 = vmatpush1.xpose.msra.mxu0 0.0
    %4731 = vmatprep.subr.mxu0 0.0
    %4732 = vmatpush1.xpose.msra.mxu0 0.0
    %4733 = vmatprep.subr.mxu0 0.0
    %4734 = vmatpush1.xpose.msra.mxu0 0.0
    %4735 = vmatprep.subr.mxu0 0.0
    %4736 = vmatpush1.xpose.msra.mxu0 0.0
    %4737 = vmatprep.subr.mxu0 0.0
    %4738 = vmatpush1.xpose.msra.mxu0 0.0
    %4739 = vmatprep.subr.mxu0 0.0
    %4740 = vmatpush1.xpose.msra.mxu0 0.0
    %4741 = vmatprep.subr.mxu0 0.0
    %4742 = vmatpush1.xpose.msra.mxu0 0.0
    %4743 = vmatprep.subr.mxu0 0.0
    %4744 = vmatpush1.xpose.msra.mxu0 0.0
    %4745 = vmatprep.subr.mxu0 0.0
    %4746 = vmatpush1.xpose.msra.mxu0 0.0
    %4747 = vmatprep.subr.mxu0 0.0
    %4748 = vmatpush1.xpose.msra.mxu0 0.0
    %4749 = vmatprep.mubr.f32.mxu0 0.0
    %4750 = vmatmul.mubr.f32.gmra.mrb[0].mxu0 %v4681
    %v4751 = vpop.f32.mrb[0].mxu0
    %v4752 = vadd.f32 0.0, %v4751
    %v4753 = vpop.f32.mrb[0].mxu0
    %4754 = vdwg.mxu0
    %v4755 = vsel %vm4263, %v4752, -inf
    %4756 = vmax.xlane.f32.xlu0 %v4755
    %v4757 = vpop.xlane.xlu0 %4756
    %v4758 = vsub.f32 %v4752, %v4757
    %v4759 = vmul.f32 %v4758, 1.442695
    %v4760 = vpow.pop %v4759
    %v4761 = vsel %vm4263, %v4760, 0.0
    %4762 = vadd.xlane.f32.xlu0 %v4761
    %v4763 = vpop.xlane.xlu0 %4762
    %v4764 = vrcp.pop %v4763
    %v4765 = vmul.f32 %v4760, %v4764
    %4766 = vrot.lane.b32.xlu0 %v4182, 64
    %v4767 = vpop.permute.xlu0 %4766
    %v4770 = vsel %vm4263, %v4765, 0
    %4772 = vmatprep.subr.mxu0 0.0
    %4773 = vmatpush1.msra.mxu0 %v4767
    %4774 = vmatprep.subr.mxu0 0.0
    %4775 = vmatpush1.msra.mxu0 0.0
    %4776 = vmatprep.subr.mxu0 0.0
    %4777 = vmatpush1.msra.mxu0 0.0
    %4778 = vmatprep.subr.mxu0 0.0
    %4779 = vmatpush1.msra.mxu0 0.0
    %4780 = vmatprep.subr.mxu0 0.0
    %4781 = vmatpush1.msra.mxu0 0.0
    %4782 = vmatprep.subr.mxu0 0.0
    %4783 = vmatpush1.msra.mxu0 0.0
    %4784 = vmatprep.subr.mxu0 0.0
    %4785 = vmatpush1.msra.mxu0 0.0
    %4786 = vmatprep.subr.mxu0 0.0
    %4787 = vmatpush1.msra.mxu0 0.0
    %4788 = vmatprep.subr.mxu0 0.0
    %4789 = vmatpush1.msra.mxu0 0.0
    %4790 = vmatprep.subr.mxu0 0.0
    %4791 = vmatpush1.msra.mxu0 0.0
    %4792 = vmatprep.subr.mxu0 0.0
    %4793 = vmatpush1.msra.mxu0 0.0
    %4794 = vmatprep.subr.mxu0 0.0
    %4795 = vmatpush1.msra.mxu0 0.0
    %4796 = vmatprep.subr.mxu0 0.0
    %4797 = vmatpush1.msra.mxu0 0.0
    %4798 = vmatprep.subr.mxu0 0.0
    %4799 = vmatpush1.msra.mxu0 0.0
    %4800 = vmatprep.subr.mxu0 0.0
    %4801 = vmatpush1.msra.mxu0 0.0
    %4802 = vmatprep.subr.mxu0 0.0
    %4803 = vmatpush1.msra.mxu0 0.0
    %4804 = vmatprep.subr.mxu0 0.0
    %4805 = vmatpush1.msra.mxu0 0.0
    %4806 = vmatprep.subr.mxu0 0.0
    %4807 = vmatpush1.msra.mxu0 0.0
    %4808 = vmatprep.subr.mxu0 0.0
    %4809 = vmatpush1.msra.mxu0 0.0
    %4810 = vmatprep.subr.mxu0 0.0
    %4811 = vmatpush1.msra.mxu0 0.0
    %4812 = vmatprep.subr.mxu0 0.0
    %4813 = vmatpush1.msra.mxu0 0.0
    %4814 = vmatprep.subr.mxu0 0.0
    %4815 = vmatpush1.msra.mxu0 0.0
    %4816 = vmatprep.subr.mxu0 0.0
    %4817 = vmatpush1.msra.mxu0 0.0
    %4818 = vmatprep.subr.mxu0 0.0
    %4819 = vmatpush1.msra.mxu0 0.0
    %4820 = vmatprep.subr.mxu0 0.0
    %4821 = vmatpush1.msra.mxu0 0.0
    %4822 = vmatprep.subr.mxu0 0.0
    %4823 = vmatpush1.msra.mxu0 0.0
    %4824 = vmatprep.subr.mxu0 0.0
    %4825 = vmatpush1.msra.mxu0 0.0
    %4826 = vmatprep.subr.mxu0 0.0
    %4827 = vmatpush1.msra.mxu0 0.0
    %4828 = vmatprep.subr.mxu0 0.0
    %4829 = vmatpush1.msra.mxu0 0.0
    %4830 = vmatprep.subr.mxu0 0.0
    %4831 = vmatpush1.msra.mxu0 0.0
    %4832 = vmatprep.subr.mxu0 0.0
    %4833 = vmatpush1.msra.mxu0 0.0
    %4834 = vmatprep.subr.mxu0 0.0
    %4835 = vmatpush1.msra.mxu0 0.0
    %4836 = vmatprep.mubr.f32.mxu0 0.0
    %4837 = vmatmul.mubr.f32.gmra.mrb[0].mxu0 %v4770
    %v4838 = vpop.f32.mrb[0].mxu0
    %v4839 = vadd.f32 0.0, %v4838
    %v4840 = vpop.f32.mrb[0].mxu0
    %4841 = vdwg.mxu0
    %v4842 = vsel %vm4186, %v4839, 0.0
    %v4843 = vrot.slane %v4842, 4
    %v4844 = vadd.f32 %v4842, %v4843
    %v4845 = vrot.slane %v4844, 2
    %v4846 = vadd.f32 %v4844, %v4845
    %v4847 = vrot.slane %v4846, 1
    %v4848 = vadd.f32 %v4846, %v4847
    %v4849 = vmul.f32 %v4848, %v4355
    %v4851 = vsel %vm4186, %v4849, 0
    %4853 = vmatprep.subr.mxu0 0.0
    %4854 = vmatpush1.msra.mxu0 %v3991
    %4855 = vmatprep.subr.mxu0 0.0
    %4856 = vmatpush1.msra.mxu0 %v3992
    %4857 = vmatprep.subr.mxu0 0.0
    %4858 = vmatpush1.msra.mxu0 %v3993
    %4859 = vmatprep.subr.mxu0 0.0
    %4860 = vmatpush1.msra.mxu0 %v3994
    %4861 = vmatprep.subr.mxu0 0.0
    %4862 = vmatpush1.msra.mxu0 0.0
    %4863 = vmatprep.subr.mxu0 0.0
    %4864 = vmatpush1.msra.mxu0 0.0
    %4865 = vmatprep.subr.mxu0 0.0
    %4866 = vmatpush1.msra.mxu0 0.0
    %4867 = vmatprep.subr.mxu0 0.0
    %4868 = vmatpush1.msra.mxu0 0.0
    %4869 = vmatprep.subr.mxu0 0.0
    %4870 = vmatpush1.msra.mxu0 0.0
    %4871 = vmatprep.subr.mxu0 0.0
    %4872 = vmatpush1.msra.mxu0 0.0
    %4873 = vmatprep.subr.mxu0 0.0
    %4874 = vmatpush1.msra.mxu0 0.0
    %4875 = vmatprep.subr.mxu0 0.0
    %4876 = vmatpush1.msra.mxu0 0.0
    %4877 = vmatprep.subr.mxu0 0.0
    %4878 = vmatpush1.msra.mxu0 0.0
    %4879 = vmatprep.subr.mxu0 0.0
    %4880 = vmatpush1.msra.mxu0 0.0
    %4881 = vmatprep.subr.mxu0 0.0
    %4882 = vmatpush1.msra.mxu0 0.0
    %4883 = vmatprep.subr.mxu0 0.0
    %4884 = vmatpush1.msra.mxu0 0.0
    %4885 = vmatprep.subr.mxu0 0.0
    %4886 = vmatpush1.msra.mxu0 0.0
    %4887 = vmatprep.subr.mxu0 0.0
    %4888 = vmatpush1.msra.mxu0 0.0
    %4889 = vmatprep.subr.mxu0 0.0
    %4890 = vmatpush1.msra.mxu0 0.0
    %4891 = vmatprep.subr.mxu0 0.0
    %4892 = vmatpush1.msra.mxu0 0.0
    %4893 = vmatprep.subr.mxu0 0.0
    %4894 = vmatpush1.msra.mxu0 0.0
    %4895 = vmatprep.subr.mxu0 0.0
    %4896 = vmatpush1.msra.mxu0 0.0
    %4897 = vmatprep.subr.mxu0 0.0
    %4898 = vmatpush1.msra.mxu0 0.0
    %4899 = vmatprep.subr.mxu0 0.0
    %4900 = vmatpush1.msra.mxu0 0.0
    %4901 = vmatprep.subr.mxu0 0.0
    %4902 = vmatpush1.msra.mxu0 0.0
    %4903 = vmatprep.subr.mxu0 0.0
    %4904 = vmatpush1.msra.mxu0 0.0
    %4905 = vmatprep.subr.mxu0 0.0
    %4906 = vmatpush1.msra.mxu0 0.0
    %4907 = vmatprep.subr.mxu0 0.0
    %4908 = vmatpush1.msra.mxu0 0.0
    %4909 = vmatprep.subr.mxu0 0.0
    %4910 = vmatpush1.msra.mxu0 0.0
    %4911 = vmatprep.subr.mxu0 0.0
    %4912 = vmatpush1.msra.mxu0 0.0
    %4913 = vmatprep.subr.mxu0 0.0
    %4914 = vmatpush1.msra.mxu0 0.0
    %4915 = vmatprep.subr.mxu0 0.0
    %4916 = vmatpush1.msra.mxu0 0.0
    %4917 = vmatprep.mubr.f32.mxu0 0.0
    %4918 = vmatmul.mubr.f32.gmra.mrb[0].mxu0 %v4851
    %v4919 = vpop.f32.mrb[0].mxu0
    %v4920 = vadd.f32 0.0, %v4919
    %v4921 = vpop.f32.mrb[0].mxu0
    %4922 = vdwg.mxu0
    %v4923 = vadd.f32 %v4674, %v4920
    %4924 = vrot.lane.b32.xlu0 %v4185, 32
    %v4925 = vpop.permute.xlu0 %4924
    %4926 = vrot.lane.b32.xlu0 %v4113, 32
    %v4927 = vpop.permute.xlu0 %4926
    %v4928 = vsel %vm4186, %v4925, 0
    %v4930 = vsel %vm4186, %v4927, 0
    %4932 = vmatprep.subr.mxu0 0.0
    %4933 = vmatpush1.xpose.msra.mxu0 %v4930
    %4934 = vmatprep.subr.mxu0 0.0
    %4935 = vmatpush1.xpose.msra.mxu0 0.0
    %4936 = vmatprep.subr.mxu0 0.0
    %4937 = vmatpush1.xpose.msra.mxu0 0.0
    %4938 = vmatprep.subr.mxu0 0.0
    %4939 = vmatpush1.xpose.msra.mxu0 0.0
    %4940 = vmatprep.subr.mxu0 0.0
    %4941 = vmatpush1.xpose.msra.mxu0 0.0
    %4942 = vmatprep.subr.mxu0 0.0
    %4943 = vmatpush1.xpose.msra.mxu0 0.0
    %4944 = vmatprep.subr.mxu0 0.0
    %4945 = vmatpush1.xpose.msra.mxu0 0.0
    %4946 = vmatprep.subr.mxu0 0.0
    %4947 = vmatpush1.xpose.msra.mxu0 0.0
    %4948 = vmatprep.subr.mxu0 0.0
    %4949 = vmatpush1.xpose.msra.mxu0 0.0
    %4950 = vmatprep.subr.mxu0 0.0
    %4951 = vmatpush1.xpose.msra.mxu0 0.0
    %4952 = vmatprep.subr.mxu0 0.0
    %4953 = vmatpush1.xpose.msra.mxu0 0.0
    %4954 = vmatprep.subr.mxu0 0.0
    %4955 = vmatpush1.xpose.msra.mxu0 0.0
    %4956 = vmatprep.subr.mxu0 0.0
    %4957 = vmatpush1.xpose.msra.mxu0 0.0
    %4958 = vmatprep.subr.mxu0 0.0
    %4959 = vmatpush1.xpose.msra.mxu0 0.0
    %4960 = vmatprep.subr.mxu0 0.0
    %4961 = vmatpush1.xpose.msra.mxu0 0.0
    %4962 = vmatprep.subr.mxu0 0.0
    %4963 = vmatpush1.xpose.msra.mxu0 0.0
    %4964 = vmatprep.subr.mxu0 0.0
    %4965 = vmatpush1.xpose.msra.mxu0 0.0
    %4966 = vmatprep.subr.mxu0 0.0
    %4967 = vmatpush1.xpose.msra.mxu0 0.0
    %4968 = vmatprep.subr.mxu0 0.0
    %4969 = vmatpush1.xpose.msra.mxu0 0.0
    %4970 = vmatprep.subr.mxu0 0.0
    %4971 = vmatpush1.xpose.msra.mxu0 0.0
    %4972 = vmatprep.subr.mxu0 0.0
    %4973 = vmatpush1.xpose.msra.mxu0 0.0
    %4974 = vmatprep.subr.mxu0 0.0
    %4975 = vmatpush1.xpose.msra.mxu0 0.0
    %4976 = vmatprep.subr.mxu0 0.0
    %4977 = vmatpush1.xpose.msra.mxu0 0.0
    %4978 = vmatprep.subr.mxu0 0.0
    %4979 = vmatpush1.xpose.msra.mxu0 0.0
    %4980 = vmatprep.subr.mxu0 0.0
    %4981 = vmatpush1.xpose.msra.mxu0 0.0
    %4982 = vmatprep.subr.mxu0 0.0
    %4983 = vmatpush1.xpose.msra.mxu0 0.0
    %4984 = vmatprep.subr.mxu0 0.0
    %4985 = vmatpush1.xpose.msra.mxu0 0.0
    %4986 = vmatprep.subr.mxu0 0.0
    %4987 = vmatpush1.xpose.msra.mxu0 0.0
    %4988 = vmatprep.subr.mxu0 0.0
    %4989 = vmatpush1.xpose.msra.mxu0 0.0
    %4990 = vmatprep.subr.mxu0 0.0
    %4991 = vmatpush1.xpose.msra.mxu0 0.0
    %4992 = vmatprep.subr.mxu0 0.0
    %4993 = vmatpush1.xpose.msra.mxu0 0.0
    %4994 = vmatprep.subr.mxu0 0.0
    %4995 = vmatpush1.xpose.msra.mxu0 0.0
    %4996 = vmatprep.mubr.f32.mxu0 0.0
    %4997 = vmatmul.mubr.f32.gmra.mrb[0].mxu0 %v4928
    %v4998 = vpop.f32.mrb[0].mxu0
    %v4999 = vadd.f32 0.0, %v4998
    %v5000 = vpop.f32.mrb[0].mxu0
    %5001 = vdwg.mxu0
    %v5002 = vsel %vm4263, %v4999, -inf
    %5003 = vmax.xlane.f32.xlu0 %v5002
    %v5004 = vpop.xlane.xlu0 %5003
    %v5005 = vsub.f32 %v4999, %v5004
    %v5006 = vmul.f32 %v5005, 1.442695
    %v5007 = vpow.pop %v5006
    %v5008 = vsel %vm4263, %v5007, 0.0
    %5009 = vadd.xlane.f32.xlu0 %v5008
    %v5010 = vpop.xlane.xlu0 %5009
    %v5011 = vrcp.pop %v5010
    %v5012 = vmul.f32 %v5007, %v5011
    %5013 = vrot.lane.b32.xlu0 %v4182, 32
    %v5014 = vpop.permute.xlu0 %5013
    %v5017 = vsel %vm4263, %v5012, 0
    %5019 = vmatprep.subr.mxu0 0.0
    %5020 = vmatpush1.msra.mxu0 %v5014
    %5021 = vmatprep.subr.mxu0 0.0
    %5022 = vmatpush1.msra.mxu0 0.0
    %5023 = vmatprep.subr.mxu0 0.0
    %5024 = vmatpush1.msra.mxu0 0.0
    %5025 = vmatprep.subr.mxu0 0.0
    %5026 = vmatpush1.msra.mxu0 0.0
    %5027 = vmatprep.subr.mxu0 0.0
    %5028 = vmatpush1.msra.mxu0 0.0
    %5029 = vmatprep.subr.mxu0 0.0
    %5030 = vmatpush1.msra.mxu0 0.0
    %5031 = vmatprep.subr.mxu0 0.0
    %5032 = vmatpush1.msra.mxu0 0.0
    %5033 = vmatprep.subr.mxu0 0.0
    %5034 = vmatpush1.msra.mxu0 0.0
    %5035 = vmatprep.subr.mxu0 0.0
    %5036 = vmatpush1.msra.mxu0 0.0
    %5037 = vmatprep.subr.mxu0 0.0
    %5038 = vmatpush1.msra.mxu0 0.0
    %5039 = vmatprep.subr.mxu0 0.0
    %5040 = vmatpush1.msra.mxu0 0.0
    %5041 = vmatprep.subr.mxu0 0.0
    %5042 = vmatpush1.msra.mxu0 0.0
    %5043 = vmatprep.subr.mxu0 0.0
    %5044 = vmatpush1.msra.mxu0 0.0
    %5045 = vmatprep.subr.mxu0 0.0
    %5046 = vmatpush1.msra.mxu0 0.0
    %5047 = vmatprep.subr.mxu0 0.0
    %5048 = vmatpush1.msra.mxu0 0.0
    %5049 = vmatprep.subr.mxu0 0.0
    %5050 = vmatpush1.msra.mxu0 0.0
    %5051 = vmatprep.subr.mxu0 0.0
    %5052 = vmatpush1.msra.mxu0 0.0
    %5053 = vmatprep.subr.mxu0 0.0
    %5054 = vmatpush1.msra.mxu0 0.0
    %5055 = vmatprep.subr.mxu0 0.0
    %5056 = vmatpush1.msra.mxu0 0.0
    %5057 = vmatprep.subr.mxu0 0.0
    %5058 = vmatpush1.msra.mxu0 0.0
    %5059 = vmatprep.subr.mxu0 0.0
    %5060 = vmatpush1.msra.mxu0 0.0
    %5061 = vmatprep.subr.mxu0 0.0
    %5062 = vmatpush1.msra.mxu0 0.0
    %5063 = vmatprep.subr.mxu0 0.0
    %5064 = vmatpush1.msra.mxu0 0.0
    %5065 = vmatprep.subr.mxu0 0.0
    %5066 = vmatpush1.msra.mxu0 0.0
    %5067 = vmatprep.subr.mxu0 0.0
    %5068 = vmatpush1.msra.mxu0 0.0
    %5069 = vmatprep.subr.mxu0 0.0
    %5070 = vmatpush1.msra.mxu0 0.0
    %5071 = vmatprep.subr.mxu0 0.0
    %5072 = vmatpush1.msra.mxu0 0.0
    %5073 = vmatprep.subr.mxu0 0.0
    %5074 = vmatpush1.msra.mxu0 0.0
    %5075 = vmatprep.subr.mxu0 0.0
    %5076 = vmatpush1.msra.mxu0 0.0
    %5077 = vmatprep.subr.mxu0 0.0
    %5078 = vmatpush1.msra.mxu0 0.0
    %5079 = vmatprep.subr.mxu0 0.0
    %5080 = vmatpush1.msra.mxu0 0.0
    %5081 = vmatprep.subr.mxu0 0.0
    %5082 = vmatpush1.msra.mxu0 0.0
    %5083 = vmatprep.mubr.f32.mxu0 0.0
    %5084 = vmatmul.mubr.f32.gmra.mrb[0].mxu0 %v5017
    %v5085 = vpop.f32.mrb[0].mxu0
    %v5086 = vadd.f32 0.0, %v5085
    %v5087 = vpop.f32.mrb[0].mxu0
    %5088 = vdwg.mxu0
    %v5089 = vsel %vm4186, %v5086, 0.0
    %v5090 = vrot.slane %v5089, 4
    %v5091 = vadd.f32 %v5089, %v5090
    %v5092 = vrot.slane %v5091, 2
    %v5093 = vadd.f32 %v5091, %v5092
    %v5094 = vrot.slane %v5093, 1
    %v5095 = vadd.f32 %v5093, %v5094
    %v5096 = vmul.f32 %v5095, %v4355
    %v5098 = vsel %vm4186, %v5096, 0
    %5100 = vmatprep.subr.mxu0 0.0
    %5101 = vmatpush1.msra.mxu0 %v3995
    %5102 = vmatprep.subr.mxu0 0.0
    %5103 = vmatpush1.msra.mxu0 %v3996
    %5104 = vmatprep.subr.mxu0 0.0
    %5105 = vmatpush1.msra.mxu0 %v3997
    %5106 = vmatprep.subr.mxu0 0.0
    %5107 = vmatpush1.msra.mxu0 %v3998
    %5108 = vmatprep.subr.mxu0 0.0
    %5109 = vmatpush1.msra.mxu0 0.0
    %5110 = vmatprep.subr.mxu0 0.0
    %5111 = vmatpush1.msra.mxu0 0.0
    %5112 = vmatprep.subr.mxu0 0.0
    %5113 = vmatpush1.msra.mxu0 0.0
    %5114 = vmatprep.subr.mxu0 0.0
    %5115 = vmatpush1.msra.mxu0 0.0
    %5116 = vmatprep.subr.mxu0 0.0
    %5117 = vmatpush1.msra.mxu0 0.0
    %5118 = vmatprep.subr.mxu0 0.0
    %5119 = vmatpush1.msra.mxu0 0.0
    %5120 = vmatprep.subr.mxu0 0.0
    %5121 = vmatpush1.msra.mxu0 0.0
    %5122 = vmatprep.subr.mxu0 0.0
    %5123 = vmatpush1.msra.mxu0 0.0
    %5124 = vmatprep.subr.mxu0 0.0
    %5125 = vmatpush1.msra.mxu0 0.0
    %5126 = vmatprep.subr.mxu0 0.0
    %5127 = vmatpush1.msra.mxu0 0.0
    %5128 = vmatprep.subr.mxu0 0.0
    %5129 = vmatpush1.msra.mxu0 0.0
    %5130 = vmatprep.subr.mxu0 0.0
    %5131 = vmatpush1.msra.mxu0 0.0
    %5132 = vmatprep.subr.mxu0 0.0
    %5133 = vmatpush1.msra.mxu0 0.0
    %5134 = vmatprep.subr.mxu0 0.0
    %5135 = vmatpush1.msra.mxu0 0.0
    %5136 = vmatprep.subr.mxu0 0.0
    %5137 = vmatpush1.msra.mxu0 0.0
    %5138 = vmatprep.subr.mxu0 0.0
    %5139 = vmatpush1.msra.mxu0 0.0
    %5140 = vmatprep.subr.mxu0 0.0
    %5141 = vmatpush1.msra.mxu0 0.0
    %5142 = vmatprep.subr.mxu0 0.0
    %5143 = vmatpush1.msra.mxu0 0.0
    %5144 = vmatprep.subr.mxu0 0.0
    %5145 = vmatpush1.msra.mxu0 0.0
    %5146 = vmatprep.subr.mxu0 0.0
    %5147 = vmatpush1.msra.mxu0 0.0
    %5148 = vmatprep.subr.mxu0 0.0
    %5149 = vmatpush1.msra.mxu0 0.0
    %5150 = vmatprep.subr.mxu0 0.0
    %5151 = vmatpush1.msra.mxu0 0.0
    %5152 = vmatprep.subr.mxu0 0.0
    %5153 = vmatpush1.msra.mxu0 0.0
    %5154 = vmatprep.subr.mxu0 0.0
    %5155 = vmatpush1.msra.mxu0 0.0
    %5156 = vmatprep.subr.mxu0 0.0
    %5157 = vmatpush1.msra.mxu0 0.0
    %5158 = vmatprep.subr.mxu0 0.0
    %5159 = vmatpush1.msra.mxu0 0.0
    %5160 = vmatprep.subr.mxu0 0.0
    %5161 = vmatpush1.msra.mxu0 0.0
    %5162 = vmatprep.subr.mxu0 0.0
    %5163 = vmatpush1.msra.mxu0 0.0
    %5164 = vmatprep.mubr.f32.mxu0 0.0
    %5165 = vmatmul.mubr.f32.gmra.mrb[0].mxu0 %v5098
    %v5166 = vpop.f32.mrb[0].mxu0
    %v5167 = vadd.f32 0.0, %v5166
    %v5168 = vpop.f32.mrb[0].mxu0
    %5169 = vdwg.mxu0
    %v5170 = vadd.f32 %v4923, %v5167
    %v5171 = vrot.slane %v3926, 1
    %v5172 = vsel %vm422, %v3927, %v5171
    %v5173 = vrot.slane %v3928, 7
    %v5174 = vsel %vm4026, %v5173, %v5172
    %v5175 = vrot.slane %v3929, 6
    %v5176 = vsel %vm4029, %v5175, %v5174
    %v5177 = vrot.slane %v3930, 5
    %v5178 = vsel %vm4032, %v5177, %v5176
    %v5179 = vrot.slane %v3931, 4
    %v5180 = vsel %vm4035, %v5179, %v5178
    %v5181 = vrot.slane %v3932, 3
    %v5182 = vsel %vm4038, %v5181, %v5180
    %v5183 = vrot.slane %v3933, 2
    %v5184 = vsel %vm4041, %v5183, %v5182
    %5186 = vmatprep.subr.mxu0 %v3935
    %5187 = vmatpush1.msra.mxu0 %v3934
    %5188 = vmatprep.subr.mxu0 %v3938
    %5189 = vmatpush1.msra.mxu0 %v3937
    %5190 = vmatprep.subr.mxu0 %v3941
    %5191 = vmatpush1.msra.mxu0 %v3940
    %5192 = vmatprep.subr.mxu0 %v3944
    %5193 = vmatpush1.msra.mxu0 %v3943
    %5194 = vmatprep.subr.mxu0 %v3947
    %5195 = vmatpush1.msra.mxu0 %v3946
    %5196 = vmatprep.subr.mxu0 %v3950
    %5197 = vmatpush1.msra.mxu0 %v3949
    %5198 = vmatprep.subr.mxu0 %v3953
    %5199 = vmatpush1.msra.mxu0 %v3952
    %5200 = vmatprep.subr.mxu0 %v3956
    %5201 = vmatpush1.msra.mxu0 %v3955
    %5202 = vmatprep.subr.mxu0 %v3959
    %5203 = vmatpush1.msra.mxu0 %v3958
    %5204 = vmatprep.subr.mxu0 %v3962
    %5205 = vmatpush1.msra.mxu0 %v3961
    %5206 = vmatprep.subr.mxu0 %v3965
    %5207 = vmatpush1.msra.mxu0 %v3964
    %5208 = vmatprep.subr.mxu0 %v3968
    %5209 = vmatpush1.msra.mxu0 %v3967
    %5210 = vmatprep.subr.mxu0 %v3971
    %5211 = vmatpush1.msra.mxu0 %v3970
    %5212 = vmatprep.subr.mxu0 %v3974
    %5213 = vmatpush1.msra.mxu0 %v3973
    %5214 = vmatprep.subr.mxu0 %v3977
    %5215 = vmatpush1.msra.mxu0 %v3976
    %5216 = vmatprep.subr.mxu0 %v3980
    %5217 = vmatpush1.msra.mxu0 %v3979
    %5218 = vmatprep.subr.mxu0 0.0
    %5219 = vmatpush1.msra.mxu0 0.0
    %5220 = vmatprep.subr.mxu0 0.0
    %5221 = vmatpush1.msra.mxu0 0.0
    %5222 = vmatprep.subr.mxu0 0.0
    %5223 = vmatpush1.msra.mxu0 0.0
    %5224 = vmatprep.subr.mxu0 0.0
    %5225 = vmatpush1.msra.mxu0 0.0
    %5226 = vmatprep.subr.mxu0 0.0
    %5227 = vmatpush1.msra.mxu0 0.0
    %5228 = vmatprep.subr.mxu0 0.0
    %5229 = vmatpush1.msra.mxu0 0.0
    %5230 = vmatprep.subr.mxu0 0.0
    %5231 = vmatpush1.msra.mxu0 0.0
    %5232 = vmatprep.subr.mxu0 0.0
    %5233 = vmatpush1.msra.mxu0 0.0
    %5234 = vmatprep.subr.mxu0 0.0
    %5235 = vmatpush1.msra.mxu0 0.0
    %5236 = vmatprep.subr.mxu0 0.0
    %5237 = vmatpush1.msra.mxu0 0.0
    %5238 = vmatprep.subr.mxu0 0.0
    %5239 = vmatpush1.msra.mxu0 0.0
    %5240 = vmatprep.subr.mxu0 0.0
    %5241 = vmatpush1.msra.mxu0 0.0
    %5242 = vmatprep.subr.mxu0 0.0
    %5243 = vmatpush1.msra.mxu0 0.0
    %5244 = vmatprep.subr.mxu0 0.0
    %5245 = vmatpush1.msra.mxu0 0.0
    %5246 = vmatprep.subr.mxu0 0.0
    %5247 = vmatpush1.msra.mxu0 0.0
    %5248 = vmatprep.subr.mxu0 0.0
    %5249 = vmatpush1.msra.mxu0 0.0
    %5250 = vmatprep.mubr.f32.mxu0 0.0
    %5251 = vmatmul.mubr.f32.gmra.mrb[0].mxu0 %v5184
    %v5252 = vpop.f32.mrb[0].mxu0
    %v5253 = vadd.f32 %v4003, %v5252
    %v5254 = vpop.f32.mrb[0].mxu0
    %v5255 = vadd.f32 %v4007, %v5254
    %5256 = vdwg.mxu0
    %5257 = vmatprep.subr.mxu0 0.0
    %5258 = vmatpush1.msra.mxu0 %v3936
    %5259 = vmatprep.subr.mxu0 0.0
    %5260 = vmatpush1.msra.mxu0 %v3939
    %5261 = vmatprep.subr.mxu0 0.0
    %5262 = vmatpush1.msra.mxu0 %v3942
    %5263 = vmatprep.subr.mxu0 0.0
    %5264 = vmatpush1.msra.mxu0 %v3945
    %5265 = vmatprep.subr.mxu0 0.0
    %5266 = vmatpush1.msra.mxu0 %v3948
    %5267 = vmatprep.subr.mxu0 0.0
    %5268 = vmatpush1.msra.mxu0 %v3951
    %5269 = vmatprep.subr.mxu0 0.0
    %5270 = vmatpush1.msra.mxu0 %v3954
    %5271 = vmatprep.subr.mxu0 0.0
    %5272 = vmatpush1.msra.mxu0 %v3957
    %5273 = vmatprep.subr.mxu0 0.0
    %5274 = vmatpush1.msra.mxu0 %v3960
    %5275 = vmatprep.subr.mxu0 0.0
    %5276 = vmatpush1.msra.mxu0 %v3963
    %5277 = vmatprep.subr.mxu0 0.0
    %5278 = vmatpush1.msra.mxu0 %v3966
    %5279 = vmatprep.subr.mxu0 0.0
    %5280 = vmatpush1.msra.mxu0 %v3969
    %5281 = vmatprep.subr.mxu0 0.0
    %5282 = vmatpush1.msra.mxu0 %v3972
    %5283 = vmatprep.subr.mxu0 0.0
    %5284 = vmatpush1.msra.mxu0 %v3975
    %5285 = vmatprep.subr.mxu0 0.0
    %5286 = vmatpush1.msra.mxu0 %v3978
    %5287 = vmatprep.subr.mxu0 0.0
    %5288 = vmatpush1.msra.mxu0 %v3981
    %5289 = vmatprep.subr.mxu0 0.0
    %5290 = vmatpush1.msra.mxu0 0.0
    %5291 = vmatprep.subr.mxu0 0.0
    %5292 = vmatpush1.msra.mxu0 0.0
    %5293 = vmatprep.subr.mxu0 0.0
    %5294 = vmatpush1.msra.mxu0 0.0
    %5295 = vmatprep.subr.mxu0 0.0
    %5296 = vmatpush1.msra.mxu0 0.0
    %5297 = vmatprep.subr.mxu0 0.0
    %5298 = vmatpush1.msra.mxu0 0.0
    %5299 = vmatprep.subr.mxu0 0.0
    %5300 = vmatpush1.msra.mxu0 0.0
    %5301 = vmatprep.subr.mxu0 0.0
    %5302 = vmatpush1.msra.mxu0 0.0
    %5303 = vmatprep.subr.mxu0 0.0
    %5304 = vmatpush1.msra.mxu0 0.0
    %5305 = vmatprep.subr.mxu0 0.0
    %5306 = vmatpush1.msra.mxu0 0.0
    %5307 = vmatprep.subr.mxu0 0.0
    %5308 = vmatpush1.msra.mxu0 0.0
    %5309 = vmatprep.subr.mxu0 0.0
    %5310 = vmatpush1.msra.mxu0 0.0
    %5311 = vmatprep.subr.mxu0 0.0
    %5312 = vmatpush1.msra.mxu0 0.0
    %5313 = vmatprep.subr.mxu0 0.0
    %5314 = vmatpush1.msra.mxu0 0.0
    %5315 = vmatprep.subr.mxu0 0.0
    %5316 = vmatpush1.msra.mxu0 0.0
    %5317 = vmatprep.subr.mxu0 0.0
    %5318 = vmatpush1.msra.mxu0 0.0
    %5319 = vmatprep.subr.mxu0 0.0
    %5320 = vmatpush1.msra.mxu0 0.0
    %5321 = vmatprep.mubr.f32.mxu0 0.0
    %5322 = vmatmul.mubr.f32.gmra.mrb[0].mxu0 %v5184
    %v5323 = vpop.f32.mrb[0].mxu0
    %v5324 = vadd.f32 %v4011, %v5323
    %v5325 = vpop.f32.mrb[0].mxu0
    %5326 = vdwg.mxu0
    %v5327 = vmul.f32 %v5253, 0.17677669
    %v5329 = vsel %vm4186, %v5327, 0
    %v5332 = vsel %vm4186, %v5255, 0
    %5334 = vmatprep.subr.mxu0 0.0
    %5335 = vmatpush1.xpose.msra.mxu0 %v5332
    %5336 = vmatprep.subr.mxu0 0.0
    %5337 = vmatpush1.xpose.msra.mxu0 0.0
    %5338 = vmatprep.subr.mxu0 0.0
    %5339 = vmatpush1.xpose.msra.mxu0 0.0
    %5340 = vmatprep.subr.mxu0 0.0
    %5341 = vmatpush1.xpose.msra.mxu0 0.0
    %5342 = vmatprep.subr.mxu0 0.0
    %5343 = vmatpush1.xpose.msra.mxu0 0.0
    %5344 = vmatprep.subr.mxu0 0.0
    %5345 = vmatpush1.xpose.msra.mxu0 0.0
    %5346 = vmatprep.subr.mxu0 0.0
    %5347 = vmatpush1.xpose.msra.mxu0 0.0
    %5348 = vmatprep.subr.mxu0 0.0
    %5349 = vmatpush1.xpose.msra.mxu0 0.0
    %5350 = vmatprep.subr.mxu0 0.0
    %5351 = vmatpush1.xpose.msra.mxu0 0.0
    %5352 = vmatprep.subr.mxu0 0.0
    %5353 = vmatpush1.xpose.msra.mxu0 0.0
    %5354 = vmatprep.subr.mxu0 0.0
    %5355 = vmatpush1.xpose.msra.mxu0 0.0
    %5356 = vmatprep.subr.mxu0 0.0
    %5357 = vmatpush1.xpose.msra.mxu0 0.0
    %5358 = vmatprep.subr.mxu0 0.0
    %5359 = vmatpush1.xpose.msra.mxu0 0.0
    %5360 = vmatprep.subr.mxu0 0.0
    %5361 = vmatpush1.xpose.msra.mxu0 0.0
    %5362 = vmatprep.subr.mxu0 0.0
    %5363 = vmatpush1.xpose.msra.mxu0 0.0
    %5364 = vmatprep.subr.mxu0 0.0
    %5365 = vmatpush1.xpose.msra.mxu0 0.0
    %5366 = vmatprep.subr.mxu0 0.0
    %5367 = vmatpush1.xpose.msra.mxu0 0.0
    %5368 = vmatprep.subr.mxu0 0.0
    %5369 = vmatpush1.xpose.msra.mxu0 0.0
    %5370 = vmatprep.subr.mxu0 0.0
    %5371 = vmatpush1.xpose.msra.mxu0 0.0
    %5372 = vmatprep.subr.mxu0 0.0
    %5373 = vmatpush1.xpose.msra.mxu0 0.0
    %5374 = vmatprep.subr.mxu0 0.0
    %5375 = vmatpush1.xpose.msra.mxu0 0.0
    %5376 = vmatprep.subr.mxu0 0.0
    %5377 = vmatpush1.xpose.msra.mxu0 0.0
    %5378 = vmatprep.subr.mxu0 0.0
    %5379 = vmatpush1.xpose.msra.mxu0 0.0
    %5380 = vmatprep.subr.mxu0 0.0
    %5381 = vmatpush1.xpose.msra.mxu0 0.0
    %5382 = vmatprep.subr.mxu0 0.0
    %5383 = vmatpush1.xpose.msra.mxu0 0.0
    %5384 = vmatprep.subr.mxu0 0.0
    %5385 = vmatpush1.xpose.msra.mxu0 0.0
    %5386 = vmatprep.subr.mxu0 0.0
    %5387 = vmatpush1.xpose.msra.mxu0 0.0
    %5388 = vmatprep.subr.mxu0 0.0
    %5389 = vmatpush1.xpose.msra.mxu0 0.0
    %5390 = vmatprep.subr.mxu0 0.0
    %5391 = vmatpush1.xpose.msra.mxu0 0.0
    %5392 = vmatprep.subr.mxu0 0.0
    %5393 = vmatpush1.xpose.msra.mxu0 0.0
    %5394 = vmatprep.subr.mxu0 0.0
    %5395 = vmatpush1.xpose.msra.mxu0 0.0
    %5396 = vmatprep.subr.mxu0 0.0
    %5397 = vmatpush1.xpose.msra.mxu0 0.0
    %5398 = vmatprep.mubr.f32.mxu0 0.0
    %5399 = vmatmul.mubr.f32.gmra.mrb[0].mxu0 %v5329
    %v5400 = vpop.f32.mrb[0].mxu0
    %v5401 = vadd.f32 0.0, %v5400
    %v5402 = vpop.f32.mrb[0].mxu0
    %5403 = vdwg.mxu0
    %v5404 = vsel %vm4263, %v5401, -inf
    %5405 = vmax.xlane.f32.xlu0 %v5404
    %v5406 = vpop.xlane.xlu0 %5405
    %v5407 = vsub.f32 %v5401, %v5406
    %v5408 = vmul.f32 %v5407, 1.442695
    %v5409 = vpow.pop %v5408
    %v5410 = vsel %vm4263, %v5409, 0.0
    %5411 = vadd.xlane.f32.xlu0 %v5410
    %v5412 = vpop.xlane.xlu0 %5411
    %v5413 = vrcp.pop %v5412
    %v5414 = vmul.f32 %v5409, %v5413
    %v5416 = vsel %vm4263, %v5414, 0
    %5418 = vmatprep.subr.mxu0 0.0
    %5419 = vmatpush1.msra.mxu0 %v5324
    %5420 = vmatprep.subr.mxu0 0.0
    %5421 = vmatpush1.msra.mxu0 0.0
    %5422 = vmatprep.subr.mxu0 0.0
    %5423 = vmatpush1.msra.mxu0 0.0
    %5424 = vmatprep.subr.mxu0 0.0
    %5425 = vmatpush1.msra.mxu0 0.0
    %5426 = vmatprep.subr.mxu0 0.0
    %5427 = vmatpush1.msra.mxu0 0.0
    %5428 = vmatprep.subr.mxu0 0.0
    %5429 = vmatpush1.msra.mxu0 0.0
    %5430 = vmatprep.subr.mxu0 0.0
    %5431 = vmatpush1.msra.mxu0 0.0
    %5432 = vmatprep.subr.mxu0 0.0
    %5433 = vmatpush1.msra.mxu0 0.0
    %5434 = vmatprep.subr.mxu0 0.0
    %5435 = vmatpush1.msra.mxu0 0.0
    %5436 = vmatprep.subr.mxu0 0.0
    %5437 = vmatpush1.msra.mxu0 0.0
    %5438 = vmatprep.subr.mxu0 0.0
    %5439 = vmatpush1.msra.mxu0 0.0
    %5440 = vmatprep.subr.mxu0 0.0
    %5441 = vmatpush1.msra.mxu0 0.0
    %5442 = vmatprep.subr.mxu0 0.0
    %5443 = vmatpush1.msra.mxu0 0.0
    %5444 = vmatprep.subr.mxu0 0.0
    %5445 = vmatpush1.msra.mxu0 0.0
    %5446 = vmatprep.subr.mxu0 0.0
    %5447 = vmatpush1.msra.mxu0 0.0
    %5448 = vmatprep.subr.mxu0 0.0
    %5449 = vmatpush1.msra.mxu0 0.0
    %5450 = vmatprep.subr.mxu0 0.0
    %5451 = vmatpush1.msra.mxu0 0.0
    %5452 = vmatprep.subr.mxu0 0.0
    %5453 = vmatpush1.msra.mxu0 0.0
    %5454 = vmatprep.subr.mxu0 0.0
    %5455 = vmatpush1.msra.mxu0 0.0
    %5456 = vmatprep.subr.mxu0 0.0
    %5457 = vmatpush1.msra.mxu0 0.0
    %5458 = vmatprep.subr.mxu0 0.0
    %5459 = vmatpush1.msra.mxu0 0.0
    %5460 = vmatprep.subr.mxu0 0.0
    %5461 = vmatpush1.msra.mxu0 0.0
    %5462 = vmatprep.subr.mxu0 0.0
    %5463 = vmatpush1.msra.mxu0 0.0
    %5464 = vmatprep.subr.mxu0 0.0
    %5465 = vmatpush1.msra.mxu0 0.0
    %5466 = vmatprep.subr.mxu0 0.0
    %5467 = vmatpush1.msra.mxu0 0.0
    %5468 = vmatprep.subr.mxu0 0.0
    %5469 = vmatpush1.msra.mxu0 0.0
    %5470 = vmatprep.subr.mxu0 0.0
    %5471 = vmatpush1.msra.mxu0 0.0
    %5472 = vmatprep.subr.mxu0 0.0
    %5473 = vmatpush1.msra.mxu0 0.0
    %5474 = vmatprep.subr.mxu0 0.0
    %5475 = vmatpush1.msra.mxu0 0.0
    %5476 = vmatprep.subr.mxu0 0.0
    %5477 = vmatpush1.msra.mxu0 0.0
    %5478 = vmatprep.subr.mxu0 0.0
    %5479 = vmatpush1.msra.mxu0 0.0
    %5480 = vmatprep.subr.mxu0 0.0
    %5481 = vmatpush1.msra.mxu0 0.0
    %5482 = vmatprep.mubr.f32.mxu0 0.0
    %5483 = vmatmul.mubr.f32.gmra.mrb[0].mxu0 %v5416
    %v5484 = vpop.f32.mrb[0].mxu0
    %v5485 = vadd.f32 0.0, %v5484
    %v5486 = vpop.f32.mrb[0].mxu0
    %5487 = vdwg.mxu0
    %v5488 = vsel %vm4186, %v5485, 0.0
    %v5489 = vrot.slane %v5488, 4
    %v5490 = vadd.f32 %v5488, %v5489
    %v5491 = vrot.slane %v5490, 2
    %v5492 = vadd.f32 %v5490, %v5491
    %v5493 = vrot.slane %v5492, 1
    %v5494 = vadd.f32 %v5492, %v5493
    %v5495 = vmul.f32 %v5494, %v4355
    %5496 = vrot.lane.b32.xlu0 %v5327, 96
    %v5497 = vpop.permute.xlu0 %5496
    %5498 = vrot.lane.b32.xlu0 %v5255, 96
    %v5499 = vpop.permute.xlu0 %5498
    %v5500 = vsel %vm4186, %v5497, 0
    %v5502 = vsel %vm4186, %v5499, 0
    %5504 = vmatprep.subr.mxu0 0.0
    %5505 = vmatpush1.xpose.msra.mxu0 %v5502
    %5506 = vmatprep.subr.mxu0 0.0
    %5507 = vmatpush1.xpose.msra.mxu0 0.0
    %5508 = vmatprep.subr.mxu0 0.0
    %5509 = vmatpush1.xpose.msra.mxu0 0.0
    %5510 = vmatprep.subr.mxu0 0.0
    %5511 = vmatpush1.xpose.msra.mxu0 0.0
    %5512 = vmatprep.subr.mxu0 0.0
    %5513 = vmatpush1.xpose.msra.mxu0 0.0
    %5514 = vmatprep.subr.mxu0 0.0
    %5515 = vmatpush1.xpose.msra.mxu0 0.0
    %5516 = vmatprep.subr.mxu0 0.0
    %5517 = vmatpush1.xpose.msra.mxu0 0.0
    %5518 = vmatprep.subr.mxu0 0.0
    %5519 = vmatpush1.xpose.msra.mxu0 0.0
    %5520 = vmatprep.subr.mxu0 0.0
    %5521 = vmatpush1.xpose.msra.mxu0 0.0
    %5522 = vmatprep.subr.mxu0 0.0
    %5523 = vmatpush1.xpose.msra.mxu0 0.0
    %5524 = vmatprep.subr.mxu0 0.0
    %5525 = vmatpush1.xpose.msra.mxu0 0.0
    %5526 = vmatprep.subr.mxu0 0.0
    %5527 = vmatpush1.xpose.msra.mxu0 0.0
    %5528 = vmatprep.subr.mxu0 0.0
    %5529 = vmatpush1.xpose.msra.mxu0 0.0
    %5530 = vmatprep.subr.mxu0 0.0
    %5531 = vmatpush1.xpose.msra.mxu0 0.0
    %5532 = vmatprep.subr.mxu0 0.0
    %5533 = vmatpush1.xpose.msra.mxu0 0.0
    %5534 = vmatprep.subr.mxu0 0.0
    %5535 = vmatpush1.xpose.msra.mxu0 0.0
    %5536 = vmatprep.subr.mxu0 0.0
    %5537 = vmatpush1.xpose.msra.mxu0 0.0
    %5538 = vmatprep.subr.mxu0 0.0
    %5539 = vmatpush1.xpose.msra.mxu0 0.0
    %5540 = vmatprep.subr.mxu0 0.0
    %5541 = vmatpush1.xpose.msra.mxu0 0.0
    %5542 = vmatprep.subr.mxu0 0.0
    %5543 = vmatpush1.xpose.msra.mxu0 0.0
    %5544 = vmatprep.subr.mxu0 0.0
    %5545 = vmatpush1.xpose.msra.mxu0 0.0
    %5546 = vmatprep.subr.mxu0 0.0
    %5547 = vmatpush1.xpose.msra.mxu0 0.0
    %5548 = vmatprep.subr.mxu0 0.0
    %5549 = vmatpush1.xpose.msra.mxu0 0.0
    %5550 = vmatprep.subr.mxu0 0.0
    %5551 = vmatpush1.xpose.msra.mxu0 0.0
    %5552 = vmatprep.subr.mxu0 0.0
    %5553 = vmatpush1.xpose.msra.mxu0 0.0
    %5554 = vmatprep.subr.mxu0 0.0
    %5555 = vmatpush1.xpose.msra.mxu0 0.0
    %5556 = vmatprep.subr.mxu0 0.0
    %5557 = vmatpush1.xpose.msra.mxu0 0.0
    %5558 = vmatprep.subr.mxu0 0.0
    %5559 = vmatpush1.xpose.msra.mxu0 0.0
    %5560 = vmatprep.subr.mxu0 0.0
    %5561 = vmatpush1.xpose.msra.mxu0 0.0
    %5562 = vmatprep.subr.mxu0 0.0
    %5563 = vmatpush1.xpose.msra.mxu0 0.0
    %5564 = vmatprep.subr.mxu0 0.0
    %5565 = vmatpush1.xpose.msra.mxu0 0.0
    %5566 = vmatprep.subr.mxu0 0.0
    %5567 = vmatpush1.xpose.msra.mxu0 0.0
    %5568 = vmatprep.mubr.f32.mxu0 0.0
    %5569 = vmatmul.mubr.f32.gmra.mrb[0].mxu0 %v5500
    %v5570 = vpop.f32.mrb[0].mxu0
    %v5571 = vadd.f32 0.0, %v5570
    %v5572 = vpop.f32.mrb[0].mxu0
    %5573 = vdwg.mxu0
    %v5574 = vsel %vm4263, %v5571, -inf
    %5575 = vmax.xlane.f32.xlu0 %v5574
    %v5576 = vpop.xlane.xlu0 %5575
    %v5577 = vsub.f32 %v5571, %v5576
    %v5578 = vmul.f32 %v5577, 1.442695
    %v5579 = vpow.pop %v5578
    %v5580 = vsel %vm4263, %v5579, 0.0
    %5581 = vadd.xlane.f32.xlu0 %v5580
    %v5582 = vpop.xlane.xlu0 %5581
    %v5583 = vrcp.pop %v5582
    %v5584 = vmul.f32 %v5579, %v5583
    %5586 = vrot.lane.b32.xlu0 %v5324, 96
    %v5587 = vpop.permute.xlu0 %5586
    %v5590 = vsel %vm4263, %v5584, 0
    %5592 = vmatprep.subr.mxu0 0.0
    %5593 = vmatpush1.msra.mxu0 %v5587
    %5594 = vmatprep.subr.mxu0 0.0
    %5595 = vmatpush1.msra.mxu0 0.0
    %5596 = vmatprep.subr.mxu0 0.0
    %5597 = vmatpush1.msra.mxu0 0.0
    %5598 = vmatprep.subr.mxu0 0.0
    %5599 = vmatpush1.msra.mxu0 0.0
    %5600 = vmatprep.subr.mxu0 0.0
    %5601 = vmatpush1.msra.mxu0 0.0
    %5602 = vmatprep.subr.mxu0 0.0
    %5603 = vmatpush1.msra.mxu0 0.0
    %5604 = vmatprep.subr.mxu0 0.0
    %5605 = vmatpush1.msra.mxu0 0.0
    %5606 = vmatprep.subr.mxu0 0.0
    %5607 = vmatpush1.msra.mxu0 0.0
    %5608 = vmatprep.subr.mxu0 0.0
    %5609 = vmatpush1.msra.mxu0 0.0
    %5610 = vmatprep.subr.mxu0 0.0
    %5611 = vmatpush1.msra.mxu0 0.0
    %5612 = vmatprep.subr.mxu0 0.0
    %5613 = vmatpush1.msra.mxu0 0.0
    %5614 = vmatprep.subr.mxu0 0.0
    %5615 = vmatpush1.msra.mxu0 0.0
    %5616 = vmatprep.subr.mxu0 0.0
    %5617 = vmatpush1.msra.mxu0 0.0
    %5618 = vmatprep.subr.mxu0 0.0
    %5619 = vmatpush1.msra.mxu0 0.0
    %5620 = vmatprep.subr.mxu0 0.0
    %5621 = vmatpush1.msra.mxu0 0.0
    %5622 = vmatprep.subr.mxu0 0.0
    %5623 = vmatpush1.msra.mxu0 0.0
    %5624 = vmatprep.subr.mxu0 0.0
    %5625 = vmatpush1.msra.mxu0 0.0
    %5626 = vmatprep.subr.mxu0 0.0
    %5627 = vmatpush1.msra.mxu0 0.0
    %5628 = vmatprep.subr.mxu0 0.0
    %5629 = vmatpush1.msra.mxu0 0.0
    %5630 = vmatprep.subr.mxu0 0.0
    %5631 = vmatpush1.msra.mxu0 0.0
    %5632 = vmatprep.subr.mxu0 0.0
    %5633 = vmatpush1.msra.mxu0 0.0
    %5634 = vmatprep.subr.mxu0 0.0
    %5635 = vmatpush1.msra.mxu0 0.0
    %5636 = vmatprep.subr.mxu0 0.0
    %5637 = vmatpush1.msra.mxu0 0.0
    %5638 = vmatprep.subr.mxu0 0.0
    %5639 = vmatpush1.msra.mxu0 0.0
    %5640 = vmatprep.subr.mxu0 0.0
    %5641 = vmatpush1.msra.mxu0 0.0
    %5642 = vmatprep.subr.mxu0 0.0
    %5643 = vmatpush1.msra.mxu0 0.0
    %5644 = vmatprep.subr.mxu0 0.0
    %5645 = vmatpush1.msra.mxu0 0.0
    %5646 = vmatprep.subr.mxu0 0.0
    %5647 = vmatpush1.msra.mxu0 0.0
    %5648 = vmatprep.subr.mxu0 0.0
    %5649 = vmatpush1.msra.mxu0 0.0
    %5650 = vmatprep.subr.mxu0 0.0
    %5651 = vmatpush1.msra.mxu0 0.0
    %5652 = vmatprep.subr.mxu0 0.0
    %5653 = vmatpush1.msra.mxu0 0.0
    %5654 = vmatprep.subr.mxu0 0.0
    %5655 = vmatpush1.msra.mxu0 0.0
    %5656 = vmatprep.mubr.f32.mxu0 0.0
    %5657 = vmatmul.mubr.f32.gmra.mrb[0].mxu0 %v5590
    %v5658 = vpop.f32.mrb[0].mxu0
    %v5659 = vadd.f32 0.0, %v5658
    %v5660 = vpop.f32.mrb[0].mxu0
    %5661 = vdwg.mxu0
    %v5662 = vsel %vm4186, %v5659, 0.0
    %v5663 = vrot.slane %v5662, 4
    %v5664 = vadd.f32 %v5662, %v5663
    %v5665 = vrot.slane %v5664, 2
    %v5666 = vadd.f32 %v5664, %v5665
    %v5667 = vrot.slane %v5666, 1
    %v5668 = vadd.f32 %v5666, %v5667
    %v5669 = vmul.f32 %v5668, %v4355
    %v5671 = vsel %vm4186, %v5669, 0
    %5673 = vmatprep.subr.mxu0 0.0
    %5674 = vmatpush1.msra.mxu0 %v3987
    %5675 = vmatprep.subr.mxu0 0.0
    %5676 = vmatpush1.msra.mxu0 %v3988
    %5677 = vmatprep.subr.mxu0 0.0
    %5678 = vmatpush1.msra.mxu0 %v3989
    %5679 = vmatprep.subr.mxu0 0.0
    %5680 = vmatpush1.msra.mxu0 %v3990
    %5681 = vmatprep.subr.mxu0 0.0
    %5682 = vmatpush1.msra.mxu0 0.0
    %5683 = vmatprep.subr.mxu0 0.0
    %5684 = vmatpush1.msra.mxu0 0.0
    %5685 = vmatprep.subr.mxu0 0.0
    %5686 = vmatpush1.msra.mxu0 0.0
    %5687 = vmatprep.subr.mxu0 0.0
    %5688 = vmatpush1.msra.mxu0 0.0
    %5689 = vmatprep.subr.mxu0 0.0
    %5690 = vmatpush1.msra.mxu0 0.0
    %5691 = vmatprep.subr.mxu0 0.0
    %5692 = vmatpush1.msra.mxu0 0.0
    %5693 = vmatprep.subr.mxu0 0.0
    %5694 = vmatpush1.msra.mxu0 0.0
    %5695 = vmatprep.subr.mxu0 0.0
    %5696 = vmatpush1.msra.mxu0 0.0
    %5697 = vmatprep.subr.mxu0 0.0
    %5698 = vmatpush1.msra.mxu0 0.0
    %5699 = vmatprep.subr.mxu0 0.0
    %5700 = vmatpush1.msra.mxu0 0.0
    %5701 = vmatprep.subr.mxu0 0.0
    %5702 = vmatpush1.msra.mxu0 0.0
    %5703 = vmatprep.subr.mxu0 0.0
    %5704 = vmatpush1.msra.mxu0 0.0
    %5705 = vmatprep.subr.mxu0 0.0
    %5706 = vmatpush1.msra.mxu0 0.0
    %5707 = vmatprep.subr.mxu0 0.0
    %5708 = vmatpush1.msra.mxu0 0.0
    %5709 = vmatprep.subr.mxu0 0.0
    %5710 = vmatpush1.msra.mxu0 0.0
    %5711 = vmatprep.subr.mxu0 0.0
    %5712 = vmatpush1.msra.mxu0 0.0
    %5713 = vmatprep.subr.mxu0 0.0
    %5714 = vmatpush1.msra.mxu0 0.0
    %5715 = vmatprep.subr.mxu0 0.0
    %5716 = vmatpush1.msra.mxu0 0.0
    %5717 = vmatprep.subr.mxu0 0.0
    %5718 = vmatpush1.msra.mxu0 0.0
    %5719 = vmatprep.subr.mxu0 0.0
    %5720 = vmatpush1.msra.mxu0 0.0
    %5721 = vmatprep.subr.mxu0 0.0
    %5722 = vmatpush1.msra.mxu0 0.0
    %5723 = vmatprep.subr.mxu0 0.0
    %5724 = vmatpush1.msra.mxu0 0.0
    %5725 = vmatprep.subr.mxu0 0.0
    %5726 = vmatpush1.msra.mxu0 0.0
    %5727 = vmatprep.subr.mxu0 0.0
    %5728 = vmatpush1.msra.mxu0 0.0
    %5729 = vmatprep.subr.mxu0 0.0
    %5730 = vmatpush1.msra.mxu0 0.0
    %5731 = vmatprep.subr.mxu0 0.0
    %5732 = vmatpush1.msra.mxu0 0.0
    %5733 = vmatprep.subr.mxu0 0.0
    %5734 = vmatpush1.msra.mxu0 0.0
    %5735 = vmatprep.subr.mxu0 0.0
    %5736 = vmatpush1.msra.mxu0 0.0
    %5737 = vmatprep.mubr.f32.mxu0 0.0
    %5738 = vmatmul.mubr.f32.gmra.mrb[0].mxu0 %v5671
    %v5739 = vpop.f32.mrb[0].mxu0
    %v5740 = vadd.f32 0.0, %v5739
    %v5741 = vpop.f32.mrb[0].mxu0
    %5742 = vdwg.mxu0
    %v5744 = vsel %vm4186, %v5495, 0
    %5746 = vmatprep.subr.mxu0 0.0
    %5747 = vmatpush1.msra.mxu0 %v3983
    %5748 = vmatprep.subr.mxu0 0.0
    %5749 = vmatpush1.msra.mxu0 %v3984
    %5750 = vmatprep.subr.mxu0 0.0
    %5751 = vmatpush1.msra.mxu0 %v3985
    %5752 = vmatprep.subr.mxu0 0.0
    %5753 = vmatpush1.msra.mxu0 %v3986
    %5754 = vmatprep.subr.mxu0 0.0
    %5755 = vmatpush1.msra.mxu0 0.0
    %5756 = vmatprep.subr.mxu0 0.0
    %5757 = vmatpush1.msra.mxu0 0.0
    %5758 = vmatprep.subr.mxu0 0.0
    %5759 = vmatpush1.msra.mxu0 0.0
    %5760 = vmatprep.subr.mxu0 0.0
    %5761 = vmatpush1.msra.mxu0 0.0
    %5762 = vmatprep.subr.mxu0 0.0
    %5763 = vmatpush1.msra.mxu0 0.0
    %5764 = vmatprep.subr.mxu0 0.0
    %5765 = vmatpush1.msra.mxu0 0.0
    %5766 = vmatprep.subr.mxu0 0.0
    %5767 = vmatpush1.msra.mxu0 0.0
    %5768 = vmatprep.subr.mxu0 0.0
    %5769 = vmatpush1.msra.mxu0 0.0
    %5770 = vmatprep.subr.mxu0 0.0
    %5771 = vmatpush1.msra.mxu0 0.0
    %5772 = vmatprep.subr.mxu0 0.0
    %5773 = vmatpush1.msra.mxu0 0.0
    %5774 = vmatprep.subr.mxu0 0.0
    %5775 = vmatpush1.msra.mxu0 0.0
    %5776 = vmatprep.subr.mxu0 0.0
    %5777 = vmatpush1.msra.mxu0 0.0
    %5778 = vmatprep.subr.mxu0 0.0
    %5779 = vmatpush1.msra.mxu0 0.0
    %5780 = vmatprep.subr.mxu0 0.0
    %5781 = vmatpush1.msra.mxu0 0.0
    %5782 = vmatprep.subr.mxu0 0.0
    %5783 = vmatpush1.msra.mxu0 0.0
    %5784 = vmatprep.subr.mxu0 0.0
    %5785 = vmatpush1.msra.mxu0 0.0
    %5786 = vmatprep.subr.mxu0 0.0
    %5787 = vmatpush1.msra.mxu0 0.0
    %5788 = vmatprep.subr.mxu0 0.0
    %5789 = vmatpush1.msra.mxu0 0.0
    %5790 = vmatprep.subr.mxu0 0.0
    %5791 = vmatpush1.msra.mxu0 0.0
    %5792 = vmatprep.subr.mxu0 0.0
    %5793 = vmatpush1.msra.mxu0 0.0
    %5794 = vmatprep.subr.mxu0 0.0
    %5795 = vmatpush1.msra.mxu0 0.0
    %5796 = vmatprep.subr.mxu0 0.0
    %5797 = vmatpush1.msra.mxu0 0.0
    %5798 = vmatprep.subr.mxu0 0.0
    %5799 = vmatpush1.msra.mxu0 0.0
    %5800 = vmatprep.subr.mxu0 0.0
    %5801 = vmatpush1.msra.mxu0 0.0
    %5802 = vmatprep.subr.mxu0 0.0
    %5803 = vmatpush1.msra.mxu0 0.0
    %5804 = vmatprep.subr.mxu0 0.0
    %5805 = vmatpush1.msra.mxu0 0.0
    %5806 = vmatprep.subr.mxu0 0.0
    %5807 = vmatpush1.msra.mxu0 0.0
    %5808 = vmatprep.subr.mxu0 0.0
    %5809 = vmatpush1.msra.mxu0 0.0
    %5810 = vmatprep.mubr.f32.mxu0 0.0
    %5811 = vmatmul.mubr.f32.gmra.mrb[0].mxu0 %v5744
    %v5812 = vpop.f32.mrb[0].mxu0
    %v5813 = vadd.f32 %v5740, %v5812
    %v5814 = vpop.f32.mrb[0].mxu0
    %5815 = vdwg.mxu0
    %5816 = vrot.lane.b32.xlu0 %v5327, 64
    %v5817 = vpop.permute.xlu0 %5816
    %5818 = vrot.lane.b32.xlu0 %v5255, 64
    %v5819 = vpop.permute.xlu0 %5818
    %v5820 = vsel %vm4186, %v5817, 0
    %v5822 = vsel %vm4186, %v5819, 0
    %5824 = vmatprep.subr.mxu0 0.0
    %5825 = vmatpush1.xpose.msra.mxu0 %v5822
    %5826 = vmatprep.subr.mxu0 0.0
    %5827 = vmatpush1.xpose.msra.mxu0 0.0
    %5828 = vmatprep.subr.mxu0 0.0
    %5829 = vmatpush1.xpose.msra.mxu0 0.0
    %5830 = vmatprep.subr.mxu0 0.0
    %5831 = vmatpush1.xpose.msra.mxu0 0.0
    %5832 = vmatprep.subr.mxu0 0.0
    %5833 = vmatpush1.xpose.msra.mxu0 0.0
    %5834 = vmatprep.subr.mxu0 0.0
    %5835 = vmatpush1.xpose.msra.mxu0 0.0
    %5836 = vmatprep.subr.mxu0 0.0
    %5837 = vmatpush1.xpose.msra.mxu0 0.0
    %5838 = vmatprep.subr.mxu0 0.0
    %5839 = vmatpush1.xpose.msra.mxu0 0.0
    %5840 = vmatprep.subr.mxu0 0.0
    %5841 = vmatpush1.xpose.msra.mxu0 0.0
    %5842 = vmatprep.subr.mxu0 0.0
    %5843 = vmatpush1.xpose.msra.mxu0 0.0
    %5844 = vmatprep.subr.mxu0 0.0
    %5845 = vmatpush1.xpose.msra.mxu0 0.0
    %5846 = vmatprep.subr.mxu0 0.0
    %5847 = vmatpush1.xpose.msra.mxu0 0.0
    %5848 = vmatprep.subr.mxu0 0.0
    %5849 = vmatpush1.xpose.msra.mxu0 0.0
    %5850 = vmatprep.subr.mxu0 0.0
    %5851 = vmatpush1.xpose.msra.mxu0 0.0
    %5852 = vmatprep.subr.mxu0 0.0
    %5853 = vmatpush1.xpose.msra.mxu0 0.0
    %5854 = vmatprep.subr.mxu0 0.0
    %5855 = vmatpush1.xpose.msra.mxu0 0.0
    %5856 = vmatprep.subr.mxu0 0.0
    %5857 = vmatpush1.xpose.msra.mxu0 0.0
    %5858 = vmatprep.subr.mxu0 0.0
    %5859 = vmatpush1.xpose.msra.mxu0 0.0
    %5860 = vmatprep.subr.mxu0 0.0
    %5861 = vmatpush1.xpose.msra.mxu0 0.0
    %5862 = vmatprep.subr.mxu0 0.0
    %5863 = vmatpush1.xpose.msra.mxu0 0.0
    %5864 = vmatprep.subr.mxu0 0.0
    %5865 = vmatpush1.xpose.msra.mxu0 0.0
    %5866 = vmatprep.subr.mxu0 0.0
    %5867 = vmatpush1.xpose.msra.mxu0 0.0
    %5868 = vmatprep.subr.mxu0 0.0
    %5869 = vmatpush1.xpose.msra.mxu0 0.0
    %5870 = vmatprep.subr.mxu0 0.0
    %5871 = vmatpush1.xpose.msra.mxu0 0.0
    %5872 = vmatprep.subr.mxu0 0.0
    %5873 = vmatpush1.xpose.msra.mxu0 0.0
    %5874 = vmatprep.subr.mxu0 0.0
    %5875 = vmatpush1.xpose.msra.mxu0 0.0
    %5876 = vmatprep.subr.mxu0 0.0
    %5877 = vmatpush1.xpose.msra.mxu0 0.0
    %5878 = vmatprep.subr.mxu0 0.0
    %5879 = vmatpush1.xpose.msra.mxu0 0.0
    %5880 = vmatprep.subr.mxu0 0.0
    %5881 = vmatpush1.xpose.msra.mxu0 0.0
    %5882 = vmatprep.subr.mxu0 0.0
    %5883 = vmatpush1.xpose.msra.mxu0 0.0
    %5884 = vmatprep.subr.mxu0 0.0
    %5885 = vmatpush1.xpose.msra.mxu0 0.0
    %5886 = vmatprep.subr.mxu0 0.0
    %5887 = vmatpush1.xpose.msra.mxu0 0.0
    %5888 = vmatprep.mubr.f32.mxu0 0.0
    %5889 = vmatmul.mubr.f32.gmra.mrb[0].mxu0 %v5820
    %v5890 = vpop.f32.mrb[0].mxu0
    %v5891 = vadd.f32 0.0, %v5890
    %v5892 = vpop.f32.mrb[0].mxu0
    %5893 = vdwg.mxu0
    %v5894 = vsel %vm4263, %v5891, -inf
    %5895 = vmax.xlane.f32.xlu0 %v5894
    %v5896 = vpop.xlane.xlu0 %5895
    %v5897 = vsub.f32 %v5891, %v5896
    %v5898 = vmul.f32 %v5897, 1.442695
    %v5899 = vpow.pop %v5898
    %v5900 = vsel %vm4263, %v5899, 0.0
    %5901 = vadd.xlane.f32.xlu0 %v5900
    %v5902 = vpop.xlane.xlu0 %5901
    %v5903 = vrcp.pop %v5902
    %v5904 = vmul.f32 %v5899, %v5903
    %5905 = vrot.lane.b32.xlu0 %v5324, 64
    %v5906 = vpop.permute.xlu0 %5905
    %v5909 = vsel %vm4263, %v5904, 0
    %5911 = vmatprep.subr.mxu0 0.0
    %5912 = vmatpush1.msra.mxu0 %v5906
    %5913 = vmatprep.subr.mxu0 0.0
    %5914 = vmatpush1.msra.mxu0 0.0
    %5915 = vmatprep.subr.mxu0 0.0
    %5916 = vmatpush1.msra.mxu0 0.0
    %5917 = vmatprep.subr.mxu0 0.0
    %5918 = vmatpush1.msra.mxu0 0.0
    %5919 = vmatprep.subr.mxu0 0.0
    %5920 = vmatpush1.msra.mxu0 0.0
    %5921 = vmatprep.subr.mxu0 0.0
    %5922 = vmatpush1.msra.mxu0 0.0
    %5923 = vmatprep.subr.mxu0 0.0
    %5924 = vmatpush1.msra.mxu0 0.0
    %5925 = vmatprep.subr.mxu0 0.0
    %5926 = vmatpush1.msra.mxu0 0.0
    %5927 = vmatprep.subr.mxu0 0.0
    %5928 = vmatpush1.msra.mxu0 0.0
    %5929 = vmatprep.subr.mxu0 0.0
    %5930 = vmatpush1.msra.mxu0 0.0
    %5931 = vmatprep.subr.mxu0 0.0
    %5932 = vmatpush1.msra.mxu0 0.0
    %5933 = vmatprep.subr.mxu0 0.0
    %5934 = vmatpush1.msra.mxu0 0.0
    %5935 = vmatprep.subr.mxu0 0.0
    %5936 = vmatpush1.msra.mxu0 0.0
    %5937 = vmatprep.subr.mxu0 0.0
    %5938 = vmatpush1.msra.mxu0 0.0
    %5939 = vmatprep.subr.mxu0 0.0
    %5940 = vmatpush1.msra.mxu0 0.0
    %5941 = vmatprep.subr.mxu0 0.0
    %5942 = vmatpush1.msra.mxu0 0.0
    %5943 = vmatprep.subr.mxu0 0.0
    %5944 = vmatpush1.msra.mxu0 0.0
    %5945 = vmatprep.subr.mxu0 0.0
    %5946 = vmatpush1.msra.mxu0 0.0
    %5947 = vmatprep.subr.mxu0 0.0
    %5948 = vmatpush1.msra.mxu0 0.0
    %5949 = vmatprep.subr.mxu0 0.0
    %5950 = vmatpush1.msra.mxu0 0.0
    %5951 = vmatprep.subr.mxu0 0.0
    %5952 = vmatpush1.msra.mxu0 0.0
    %5953 = vmatprep.subr.mxu0 0.0
    %5954 = vmatpush1.msra.mxu0 0.0
    %5955 = vmatprep.subr.mxu0 0.0
    %5956 = vmatpush1.msra.mxu0 0.0
    %5957 = vmatprep.subr.mxu0 0.0
    %5958 = vmatpush1.msra.mxu0 0.0
    %5959 = vmatprep.subr.mxu0 0.0
    %5960 = vmatpush1.msra.mxu0 0.0
    %5961 = vmatprep.subr.mxu0 0.0
    %5962 = vmatpush1.msra.mxu0 0.0
    %5963 = vmatprep.subr.mxu0 0.0
    %5964 = vmatpush1.msra.mxu0 0.0
    %5965 = vmatprep.subr.mxu0 0.0
    %5966 = vmatpush1.msra.mxu0 0.0
    %5967 = vmatprep.subr.mxu0 0.0
    %5968 = vmatpush1.msra.mxu0 0.0
    %5969 = vmatprep.subr.mxu0 0.0
    %5970 = vmatpush1.msra.mxu0 0.0
    %5971 = vmatprep.subr.mxu0 0.0
    %5972 = vmatpush1.msra.mxu0 0.0
    %5973 = vmatprep.subr.mxu0 0.0
    %5974 = vmatpush1.msra.mxu0 0.0
    %5975 = vmatprep.mubr.f32.mxu0 0.0
    %5976 = vmatmul.mubr.f32.gmra.mrb[0].mxu0 %v5909
    %v5977 = vpop.f32.mrb[0].mxu0
    %v5978 = vadd.f32 0.0, %v5977
    %v5979 = vpop.f32.mrb[0].mxu0
    %5980 = vdwg.mxu0
    %v5981 = vsel %vm4186, %v5978, 0.0
    %v5982 = vrot.slane %v5981, 4
    %v5983 = vadd.f32 %v5981, %v5982
    %v5984 = vrot.slane %v5983, 2
    %v5985 = vadd.f32 %v5983, %v5984
    %v5986 = vrot.slane %v5985, 1
    %v5987 = vadd.f32 %v5985, %v5986
    %v5988 = vmul.f32 %v5987, %v4355
    %v5990 = vsel %vm4186, %v5988, 0
    %5992 = vmatprep.subr.mxu0 0.0
    %5993 = vmatpush1.msra.mxu0 %v3991
    %5994 = vmatprep.subr.mxu0 0.0
    %5995 = vmatpush1.msra.mxu0 %v3992
    %5996 = vmatprep.subr.mxu0 0.0
    %5997 = vmatpush1.msra.mxu0 %v3993
    %5998 = vmatprep.subr.mxu0 0.0
    %5999 = vmatpush1.msra.mxu0 %v3994
    %6000 = vmatprep.subr.mxu0 0.0
    %6001 = vmatpush1.msra.mxu0 0.0
    %6002 = vmatprep.subr.mxu0 0.0
    %6003 = vmatpush1.msra.mxu0 0.0
    %6004 = vmatprep.subr.mxu0 0.0
    %6005 = vmatpush1.msra.mxu0 0.0
    %6006 = vmatprep.subr.mxu0 0.0
    %6007 = vmatpush1.msra.mxu0 0.0
    %6008 = vmatprep.subr.mxu0 0.0
    %6009 = vmatpush1.msra.mxu0 0.0
    %6010 = vmatprep.subr.mxu0 0.0
    %6011 = vmatpush1.msra.mxu0 0.0
    %6012 = vmatprep.subr.mxu0 0.0
    %6013 = vmatpush1.msra.mxu0 0.0
    %6014 = vmatprep.subr.mxu0 0.0
    %6015 = vmatpush1.msra.mxu0 0.0
    %6016 = vmatprep.subr.mxu0 0.0
    %6017 = vmatpush1.msra.mxu0 0.0
    %6018 = vmatprep.subr.mxu0 0.0
    %6019 = vmatpush1.msra.mxu0 0.0
    %6020 = vmatprep.subr.mxu0 0.0
    %6021 = vmatpush1.msra.mxu0 0.0
    %6022 = vmatprep.subr.mxu0 0.0
    %6023 = vmatpush1.msra.mxu0 0.0
    %6024 = vmatprep.subr.mxu0 0.0
    %6025 = vmatpush1.msra.mxu0 0.0
    %6026 = vmatprep.subr.mxu0 0.0
    %6027 = vmatpush1.msra.mxu0 0.0
    %6028 = vmatprep.subr.mxu0 0.0
    %6029 = vmatpush1.msra.mxu0 0.0
    %6030 = vmatprep.subr.mxu0 0.0
    %6031 = vmatpush1.msra.mxu0 0.0
    %6032 = vmatprep.subr.mxu0 0.0
    %6033 = vmatpush1.msra.mxu0 0.0
    %6034 = vmatprep.subr.mxu0 0.0
    %6035 = vmatpush1.msra.mxu0 0.0
    %6036 = vmatprep.subr.mxu0 0.0
    %6037 = vmatpush1.msra.mxu0 0.0
    %6038 = vmatprep.subr.mxu0 0.0
    %6039 = vmatpush1.msra.mxu0 0.0
    %6040 = vmatprep.subr.mxu0 0.0
    %6041 = vmatpush1.msra.mxu0 0.0
    %6042 = vmatprep.subr.mxu0 0.0
    %6043 = vmatpush1.msra.mxu0 0.0
    %6044 = vmatprep.subr.mxu0 0.0
    %6045 = vmatpush1.msra.mxu0 0.0
    %6046 = vmatprep.subr.mxu0 0.0
    %6047 = vmatpush1.msra.mxu0 0.0
    %6048 = vmatprep.subr.mxu0 0.0
    %6049 = vmatpush1.msra.mxu0 0.0
    %6050 = vmatprep.subr.mxu0 0.0
    %6051 = vmatpush1.msra.mxu0 0.0
    %6052 = vmatprep.subr.mxu0 0.0
    %6053 = vmatpush1.msra.mxu0 0.0
    %6054 = vmatprep.subr.mxu0 0.0
    %6055 = vmatpush1.msra.mxu0 0.0
    %6056 = vmatprep.mubr.f32.mxu0 0.0
    %6057 = vmatmul.mubr.f32.gmra.mrb[0].mxu0 %v5990
    %v6058 = vpop.f32.mrb[0].mxu0
    %v6059 = vadd.f32 0.0, %v6058
    %v6060 = vpop.f32.mrb[0].mxu0
    %6061 = vdwg.mxu0
    %v6062 = vadd.f32 %v5813, %v6059
    %6063 = vrot.lane.b32.xlu0 %v5327, 32
    %v6064 = vpop.permute.xlu0 %6063
    %6065 = vrot.lane.b32.xlu0 %v5255, 32
    %v6066 = vpop.permute.xlu0 %6065
    %v6067 = vsel %vm4186, %v6064, 0
    %v6069 = vsel %vm4186, %v6066, 0
    %6071 = vmatprep.subr.mxu0 0.0
    %6072 = vmatpush1.xpose.msra.mxu0 %v6069
    %6073 = vmatprep.subr.mxu0 0.0
    %6074 = vmatpush1.xpose.msra.mxu0 0.0
    %6075 = vmatprep.subr.mxu0 0.0
    %6076 = vmatpush1.xpose.msra.mxu0 0.0
    %6077 = vmatprep.subr.mxu0 0.0
    %6078 = vmatpush1.xpose.msra.mxu0 0.0
    %6079 = vmatprep.subr.mxu0 0.0
    %6080 = vmatpush1.xpose.msra.mxu0 0.0
    %6081 = vmatprep.subr.mxu0 0.0
    %6082 = vmatpush1.xpose.msra.mxu0 0.0
    %6083 = vmatprep.subr.mxu0 0.0
    %6084 = vmatpush1.xpose.msra.mxu0 0.0
    %6085 = vmatprep.subr.mxu0 0.0
    %6086 = vmatpush1.xpose.msra.mxu0 0.0
    %6087 = vmatprep.subr.mxu0 0.0
    %6088 = vmatpush1.xpose.msra.mxu0 0.0
    %6089 = vmatprep.subr.mxu0 0.0
    %6090 = vmatpush1.xpose.msra.mxu0 0.0
    %6091 = vmatprep.subr.mxu0 0.0
    %6092 = vmatpush1.xpose.msra.mxu0 0.0
    %6093 = vmatprep.subr.mxu0 0.0
    %6094 = vmatpush1.xpose.msra.mxu0 0.0
    %6095 = vmatprep.subr.mxu0 0.0
    %6096 = vmatpush1.xpose.msra.mxu0 0.0
    %6097 = vmatprep.subr.mxu0 0.0
    %6098 = vmatpush1.xpose.msra.mxu0 0.0
    %6099 = vmatprep.subr.mxu0 0.0
    %6100 = vmatpush1.xpose.msra.mxu0 0.0
    %6101 = vmatprep.subr.mxu0 0.0
    %6102 = vmatpush1.xpose.msra.mxu0 0.0
    %6103 = vmatprep.subr.mxu0 0.0
    %6104 = vmatpush1.xpose.msra.mxu0 0.0
    %6105 = vmatprep.subr.mxu0 0.0
    %6106 = vmatpush1.xpose.msra.mxu0 0.0
    %6107 = vmatprep.subr.mxu0 0.0
    %6108 = vmatpush1.xpose.msra.mxu0 0.0
    %6109 = vmatprep.subr.mxu0 0.0
    %6110 = vmatpush1.xpose.msra.mxu0 0.0
    %6111 = vmatprep.subr.mxu0 0.0
    %6112 = vmatpush1.xpose.msra.mxu0 0.0
    %6113 = vmatprep.subr.mxu0 0.0
    %6114 = vmatpush1.xpose.msra.mxu0 0.0
    %6115 = vmatprep.subr.mxu0 0.0
    %6116 = vmatpush1.xpose.msra.mxu0 0.0
    %6117 = vmatprep.subr.mxu0 0.0
    %6118 = vmatpush1.xpose.msra.mxu0 0.0
    %6119 = vmatprep.subr.mxu0 0.0
    %6120 = vmatpush1.xpose.msra.mxu0 0.0
    %6121 = vmatprep.subr.mxu0 0.0
    %6122 = vmatpush1.xpose.msra.mxu0 0.0
    %6123 = vmatprep.subr.mxu0 0.0
    %6124 = vmatpush1.xpose.msra.mxu0 0.0
    %6125 = vmatprep.subr.mxu0 0.0
    %6126 = vmatpush1.xpose.msra.mxu0 0.0
    %6127 = vmatprep.subr.mxu0 0.0
    %6128 = vmatpush1.xpose.msra.mxu0 0.0
    %6129 = vmatprep.subr.mxu0 0.0
    %6130 = vmatpush1.xpose.msra.mxu0 0.0
    %6131 = vmatprep.subr.mxu0 0.0
    %6132 = vmatpush1.xpose.msra.mxu0 0.0
    %6133 = vmatprep.subr.mxu0 0.0
    %6134 = vmatpush1.xpose.msra.mxu0 0.0
    %6135 = vmatprep.mubr.f32.mxu0 0.0
    %6136 = vmatmul.mubr.f32.gmra.mrb[0].mxu0 %v6067
    %v6137 = vpop.f32.mrb[0].mxu0
    %v6138 = vadd.f32 0.0, %v6137
    %v6139 = vpop.f32.mrb[0].mxu0
    %6140 = vdwg.mxu0
    %v6141 = vsel %vm4263, %v6138, -inf
    %6142 = vmax.xlane.f32.xlu0 %v6141
    %v6143 = vpop.xlane.xlu0 %6142
    %v6144 = vsub.f32 %v6138, %v6143
    %v6145 = vmul.f32 %v6144, 1.442695
    %v6146 = vpow.pop %v6145
    %v6147 = vsel %vm4263, %v6146, 0.0
    %6148 = vadd.xlane.f32.xlu0 %v6147
    %v6149 = vpop.xlane.xlu0 %6148
    %v6150 = vrcp.pop %v6149
    %v6151 = vmul.f32 %v6146, %v6150
    %6152 = vrot.lane.b32.xlu0 %v5324, 32
    %v6153 = vpop.permute.xlu0 %6152
    %v6156 = vsel %vm4263, %v6151, 0
    %6158 = vmatprep.subr.mxu0 0.0
    %6159 = vmatpush1.msra.mxu0 %v6153
    %6160 = vmatprep.subr.mxu0 0.0
    %6161 = vmatpush1.msra.mxu0 0.0
    %6162 = vmatprep.subr.mxu0 0.0
    %6163 = vmatpush1.msra.mxu0 0.0
    %6164 = vmatprep.subr.mxu0 0.0
    %6165 = vmatpush1.msra.mxu0 0.0
    %6166 = vmatprep.subr.mxu0 0.0
    %6167 = vmatpush1.msra.mxu0 0.0
    %6168 = vmatprep.subr.mxu0 0.0
    %6169 = vmatpush1.msra.mxu0 0.0
    %6170 = vmatprep.subr.mxu0 0.0
    %6171 = vmatpush1.msra.mxu0 0.0
    %6172 = vmatprep.subr.mxu0 0.0
    %6173 = vmatpush1.msra.mxu0 0.0
    %6174 = vmatprep.subr.mxu0 0.0
    %6175 = vmatpush1.msra.mxu0 0.0
    %6176 = vmatprep.subr.mxu0 0.0
    %6177 = vmatpush1.msra.mxu0 0.0
    %6178 = vmatprep.subr.mxu0 0.0
    %6179 = vmatpush1.msra.mxu0 0.0
    %6180 = vmatprep.subr.mxu0 0.0
    %6181 = vmatpush1.msra.mxu0 0.0
    %6182 = vmatprep.subr.mxu0 0.0
    %6183 = vmatpush1.msra.mxu0 0.0
    %6184 = vmatprep.subr.mxu0 0.0
    %6185 = vmatpush1.msra.mxu0 0.0
    %6186 = vmatprep.subr.mxu0 0.0
    %6187 = vmatpush1.msra.mxu0 0.0
    %6188 = vmatprep.subr.mxu0 0.0
    %6189 = vmatpush1.msra.mxu0 0.0
    %6190 = vmatprep.subr.mxu0 0.0
    %6191 = vmatpush1.msra.mxu0 0.0
    %6192 = vmatprep.subr.mxu0 0.0
    %6193 = vmatpush1.msra.mxu0 0.0
    %6194 = vmatprep.subr.mxu0 0.0
    %6195 = vmatpush1.msra.mxu0 0.0
    %6196 = vmatprep.subr.mxu0 0.0
    %6197 = vmatpush1.msra.mxu0 0.0
    %6198 = vmatprep.subr.mxu0 0.0
    %6199 = vmatpush1.msra.mxu0 0.0
    %6200 = vmatprep.subr.mxu0 0.0
    %6201 = vmatpush1.msra.mxu0 0.0
    %6202 = vmatprep.subr.mxu0 0.0
    %6203 = vmatpush1.msra.mxu0 0.0
    %6204 = vmatprep.subr.mxu0 0.0
    %6205 = vmatpush1.msra.mxu0 0.0
    %6206 = vmatprep.subr.mxu0 0.0
    %6207 = vmatpush1.msra.mxu0 0.0
    %6208 = vmatprep.subr.mxu0 0.0
    %6209 = vmatpush1.msra.mxu0 0.0
    %6210 = vmatprep.subr.mxu0 0.0
    %6211 = vmatpush1.msra.mxu0 0.0
    %6212 = vmatprep.subr.mxu0 0.0
    %6213 = vmatpush1.msra.mxu0 0.0
    %6214 = vmatprep.subr.mxu0 0.0
    %6215 = vmatpush1.msra.mxu0 0.0
    %6216 = vmatprep.subr.mxu0 0.0
    %6217 = vmatpush1.msra.mxu0 0.0
    %6218 = vmatprep.subr.mxu0 0.0
    %6219 = vmatpush1.msra.mxu0 0.0
    %6220 = vmatprep.subr.mxu0 0.0
    %6221 = vmatpush1.msra.mxu0 0.0
    %6222 = vmatprep.mubr.f32.mxu0 0.0
    %6223 = vmatmul.mubr.f32.gmra.mrb[0].mxu0 %v6156
    %v6224 = vpop.f32.mrb[0].mxu0
    %v6225 = vadd.f32 0.0, %v6224
    %v6226 = vpop.f32.mrb[0].mxu0
    %6227 = vdwg.mxu0
    %v6228 = vsel %vm4186, %v6225, 0.0
    %v6229 = vrot.slane %v6228, 4
    %v6230 = vadd.f32 %v6228, %v6229
    %v6231 = vrot.slane %v6230, 2
    %v6232 = vadd.f32 %v6230, %v6231
    %v6233 = vrot.slane %v6232, 1
    %v6234 = vadd.f32 %v6232, %v6233
    %v6235 = vmul.f32 %v6234, %v4355
    %v6237 = vsel %vm4186, %v6235, 0
    %6239 = vmatprep.subr.mxu0 0.0
    %6240 = vmatpush1.msra.mxu0 %v3995
    %6241 = vmatprep.subr.mxu0 0.0
    %6242 = vmatpush1.msra.mxu0 %v3996
    %6243 = vmatprep.subr.mxu0 0.0
    %6244 = vmatpush1.msra.mxu0 %v3997
    %6245 = vmatprep.subr.mxu0 0.0
    %6246 = vmatpush1.msra.mxu0 %v3998
    %6247 = vmatprep.subr.mxu0 0.0
    %6248 = vmatpush1.msra.mxu0 0.0
    %6249 = vmatprep.subr.mxu0 0.0
    %6250 = vmatpush1.msra.mxu0 0.0
    %6251 = vmatprep.subr.mxu0 0.0
    %6252 = vmatpush1.msra.mxu0 0.0
    %6253 = vmatprep.subr.mxu0 0.0
    %6254 = vmatpush1.msra.mxu0 0.0
    %6255 = vmatprep.subr.mxu0 0.0
    %6256 = vmatpush1.msra.mxu0 0.0
    %6257 = vmatprep.subr.mxu0 0.0
    %6258 = vmatpush1.msra.mxu0 0.0
    %6259 = vmatprep.subr.mxu0 0.0
    %6260 = vmatpush1.msra.mxu0 0.0
    %6261 = vmatprep.subr.mxu0 0.0
    %6262 = vmatpush1.msra.mxu0 0.0
    %6263 = vmatprep.subr.mxu0 0.0
    %6264 = vmatpush1.msra.mxu0 0.0
    %6265 = vmatprep.subr.mxu0 0.0
    %6266 = vmatpush1.msra.mxu0 0.0
    %6267 = vmatprep.subr.mxu0 0.0
    %6268 = vmatpush1.msra.mxu0 0.0
    %6269 = vmatprep.subr.mxu0 0.0
    %6270 = vmatpush1.msra.mxu0 0.0
    %6271 = vmatprep.subr.mxu0 0.0
    %6272 = vmatpush1.msra.mxu0 0.0
    %6273 = vmatprep.subr.mxu0 0.0
    %6274 = vmatpush1.msra.mxu0 0.0
    %6275 = vmatprep.subr.mxu0 0.0
    %6276 = vmatpush1.msra.mxu0 0.0
    %6277 = vmatprep.subr.mxu0 0.0
    %6278 = vmatpush1.msra.mxu0 0.0
    %6279 = vmatprep.subr.mxu0 0.0
    %6280 = vmatpush1.msra.mxu0 0.0
    %6281 = vmatprep.subr.mxu0 0.0
    %6282 = vmatpush1.msra.mxu0 0.0
    %6283 = vmatprep.subr.mxu0 0.0
    %6284 = vmatpush1.msra.mxu0 0.0
    %6285 = vmatprep.subr.mxu0 0.0
    %6286 = vmatpush1.msra.mxu0 0.0
    %6287 = vmatprep.subr.mxu0 0.0
    %6288 = vmatpush1.msra.mxu0 0.0
    %6289 = vmatprep.subr.mxu0 0.0
    %6290 = vmatpush1.msra.mxu0 0.0
    %6291 = vmatprep.subr.mxu0 0.0
    %6292 = vmatpush1.msra.mxu0 0.0
    %6293 = vmatprep.subr.mxu0 0.0
    %6294 = vmatpush1.msra.mxu0 0.0
    %6295 = vmatprep.subr.mxu0 0.0
    %6296 = vmatpush1.msra.mxu0 0.0
    %6297 = vmatprep.subr.mxu0 0.0
    %6298 = vmatpush1.msra.mxu0 0.0
    %6299 = vmatprep.subr.mxu0 0.0
    %6300 = vmatpush1.msra.mxu0 0.0
    %6301 = vmatprep.subr.mxu0 0.0
    %6302 = vmatpush1.msra.mxu0 0.0
    %6303 = vmatprep.mubr.f32.mxu0 0.0
    %6304 = vmatmul.mubr.f32.gmra.mrb[0].mxu0 %v6237
    %v6305 = vpop.f32.mrb[0].mxu0
    %v6306 = vadd.f32 0.0, %v6305
    %v6307 = vpop.f32.mrb[0].mxu0
    %6308 = vdwg.mxu0
    %v6309 = vadd.f32 %v6062, %v6306
    %v6311 = vrot.slane %v6309, 7
    %vm6313 = vcmask 1040384
    %v6314 = vsel %vm6313, %v5170, %v6311
    %v6315 = vld [vmem:[%s13] sm:$0x1]
    %v6317 = vlaneseq
    %v6318 = vshrl.u32 %v6317, 7
    %v6319 = vsub.s32 0, %v6318
    %v6320 = vrot.slane %v6315, %v6319
    %v6322 = vadd.f32 %v6314, %v6320
    %v6323 = vld [vmem:[%s14] sm:$0xff]
    %v6324 = vld [vmem:[%s14 + $0x8] sm:$0xff]
    %v6325 = vld [vmem:[%s14 + $0x10] sm:$0xff]
    %v6326 = vld [vmem:[%s14 + $0x18] sm:$0xff]
    %v6327 = vld [vmem:[%s14 + $0x20] sm:$0xff]
    %v6328 = vld [vmem:[%s14 + $0x28] sm:$0xff]
    %v6329 = vld [vmem:[%s14 + $0x30] sm:$0xff]
    %v6330 = vld [vmem:[%s14 + $0x38] sm:$0xff]
    %v6331 = vld [vmem:[%s14 + $0x40] sm:$0xff]
    %v6332 = vld [vmem:[%s14 + $0x48] sm:$0xff]
    %v6333 = vld [vmem:[%s14 + $0x50] sm:$0xff]
    %v6334 = vld [vmem:[%s14 + $0x58] sm:$0xff]
    %v6335 = vld [vmem:[%s14 + $0x60] sm:$0xff]
    %v6336 = vld [vmem:[%s14 + $0x68] sm:$0xff]
    %v6337 = vld [vmem:[%s14 + $0x70] sm:$0xff]
    %v6338 = vld [vmem:[%s14 + $0x78] sm:$0xff]
    %v6339 = vld [vmem:[%s15] sm:$0x1]
    %v6341 = vlaneseq
    %v6342 = vshrl.u32 %v6341, 7
    %v6343 = vsub.s32 0, %v6342
    %v6344 = vrot.slane %v6339, %v6343
    %6346 = vmatprep.subr.mxu0 0.0
    %6347 = vmatpush1.msra.mxu0 %v6323
    %6348 = vmatprep.subr.mxu0 0.0
    %6349 = vmatpush1.msra.mxu0 %v6324
    %6350 = vmatprep.subr.mxu0 0.0
    %6351 = vmatpush1.msra.mxu0 %v6325
    %6352 = vmatprep.subr.mxu0 0.0
    %6353 = vmatpush1.msra.mxu0 %v6326
    %6354 = vmatprep.subr.mxu0 0.0
    %6355 = vmatpush1.msra.mxu0 %v6327
    %6356 = vmatprep.subr.mxu0 0.0
    %6357 = vmatpush1.msra.mxu0 %v6328
    %6358 = vmatprep.subr.mxu0 0.0
    %6359 = vmatpush1.msra.mxu0 %v6329
    %6360 = vmatprep.subr.mxu0 0.0
    %6361 = vmatpush1.msra.mxu0 %v6330
    %6362 = vmatprep.subr.mxu0 0.0
    %6363 = vmatpush1.msra.mxu0 %v6331
    %6364 = vmatprep.subr.mxu0 0.0
    %6365 = vmatpush1.msra.mxu0 %v6332
    %6366 = vmatprep.subr.mxu0 0.0
    %6367 = vmatpush1.msra.mxu0 %v6333
    %6368 = vmatprep.subr.mxu0 0.0
    %6369 = vmatpush1.msra.mxu0 %v6334
    %6370 = vmatprep.subr.mxu0 0.0
    %6371 = vmatpush1.msra.mxu0 %v6335
    %6372 = vmatprep.subr.mxu0 0.0
    %6373 = vmatpush1.msra.mxu0 %v6336
    %6374 = vmatprep.subr.mxu0 0.0
    %6375 = vmatpush1.msra.mxu0 %v6337
    %6376 = vmatprep.subr.mxu0 0.0
    %6377 = vmatpush1.msra.mxu0 %v6338
    %6378 = vmatprep.subr.mxu0 0.0
    %6379 = vmatpush1.msra.mxu0 0.0
    %6380 = vmatprep.subr.mxu0 0.0
    %6381 = vmatpush1.msra.mxu0 0.0
    %6382 = vmatprep.subr.mxu0 0.0
    %6383 = vmatpush1.msra.mxu0 0.0
    %6384 = vmatprep.subr.mxu0 0.0
    %6385 = vmatpush1.msra.mxu0 0.0
    %6386 = vmatprep.subr.mxu0 0.0
    %6387 = vmatpush1.msra.mxu0 0.0
    %6388 = vmatprep.subr.mxu0 0.0
    %6389 = vmatpush1.msra.mxu0 0.0
    %6390 = vmatprep.subr.mxu0 0.0
    %6391 = vmatpush1.msra.mxu0 0.0
    %6392 = vmatprep.subr.mxu0 0.0
    %6393 = vmatpush1.msra.mxu0 0.0
    %6394 = vmatprep.subr.mxu0 0.0
    %6395 = vmatpush1.msra.mxu0 0.0
    %6396 = vmatprep.subr.mxu0 0.0
    %6397 = vmatpush1.msra.mxu0 0.0
    %6398 = vmatprep.subr.mxu0 0.0
    %6399 = vmatpush1.msra.mxu0 0.0
    %6400 = vmatprep.subr.mxu0 0.0
    %6401 = vmatpush1.msra.mxu0 0.0
    %6402 = vmatprep.subr.mxu0 0.0
    %6403 = vmatpush1.msra.mxu0 0.0
    %6404 = vmatprep.subr.mxu0 0.0
    %6405 = vmatpush1.msra.mxu0 0.0
    %6406 = vmatprep.subr.mxu0 0.0
    %6407 = vmatpush1.msra.mxu0 0.0
    %6408 = vmatprep.subr.mxu0 0.0
    %6409 = vmatpush1.msra.mxu0 0.0
    %6410 = vmatprep.mubr.f32.mxu0 0.0
    %6411 = vmatmul.mubr.f32.gmra.mrb[0].mxu0 %v6322
    %v6412 = vpop.f32.mrb[0].mxu0
    %v6413 = vadd.f32 %v6344, %v6412
    %v6414 = vpop.f32.mrb[0].mxu0
    %6415 = vdwg.mxu0
    %v6416 = vmax.f32 %v6413, 0.0
    %v6417 = vld [vmem:[%s16] sm:$0xff]
    %v6418 = vld [vmem:[%s16 + $0x8] sm:$0xff]
    %v6419 = vld [vmem:[%s16 + $0x10] sm:$0xff]
    %v6420 = vld [vmem:[%s16 + $0x18] sm:$0xff]
    %v6421 = vld [vmem:[%s16 + $0x20] sm:$0xff]
    %v6422 = vld [vmem:[%s16 + $0x28] sm:$0xff]
    %v6423 = vld [vmem:[%s16 + $0x30] sm:$0xff]
    %v6424 = vld [vmem:[%s16 + $0x38] sm:$0xff]
    %v6425 = vld [vmem:[%s17] sm:$0x1]
    %v6427 = vlaneseq
    %v6428 = vshrl.u32 %v6427, 7
    %v6429 = vsub.s32 0, %v6428
    %v6430 = vrot.slane %v6425, %v6429
    %vm6432 = vcmask 523264
    %v6434 = vsel %vm6432, %v6416, 0
    %6436 = vmatprep.subr.mxu0 0.0
    %6437 = vmatpush1.msra.mxu0 %v6417
    %6438 = vmatprep.subr.mxu0 0.0
    %6439 = vmatpush1.msra.mxu0 %v6418
    %6440 = vmatprep.subr.mxu0 0.0
    %6441 = vmatpush1.msra.mxu0 %v6419
    %6442 = vmatprep.subr.mxu0 0.0
    %6443 = vmatpush1.msra.mxu0 %v6420
    %6444 = vmatprep.subr.mxu0 0.0
    %6445 = vmatpush1.msra.mxu0 %v6421
    %6446 = vmatprep.subr.mxu0 0.0
    %6447 = vmatpush1.msra.mxu0 %v6422
    %6448 = vmatprep.subr.mxu0 0.0
    %6449 = vmatpush1.msra.mxu0 %v6423
    %6450 = vmatprep.subr.mxu0 0.0
    %6451 = vmatpush1.msra.mxu0 %v6424
    %6452 = vmatprep.subr.mxu0 0.0
    %6453 = vmatpush1.msra.mxu0 0.0
    %6454 = vmatprep.subr.mxu0 0.0
    %6455 = vmatpush1.msra.mxu0 0.0
    %6456 = vmatprep.subr.mxu0 0.0
    %6457 = vmatpush1.msra.mxu0 0.0
    %6458 = vmatprep.subr.mxu0 0.0
    %6459 = vmatpush1.msra.mxu0 0.0
    %6460 = vmatprep.subr.mxu0 0.0
    %6461 = vmatpush1.msra.mxu0 0.0
    %6462 = vmatprep.subr.mxu0 0.0
    %6463 = vmatpush1.msra.mxu0 0.0
    %6464 = vmatprep.subr.mxu0 0.0
    %6465 = vmatpush1.msra.mxu0 0.0
    %6466 = vmatprep.subr.mxu0 0.0
    %6467 = vmatpush1.msra.mxu0 0.0
    %6468 = vmatprep.subr.mxu0 0.0
    %6469 = vmatpush1.msra.mxu0 0.0
    %6470 = vmatprep.subr.mxu0 0.0
    %6471 = vmatpush1.msra.mxu0 0.0
    %6472 = vmatprep.subr.mxu0 0.0
    %6473 = vmatpush1.msra.mxu0 0.0
    %6474 = vmatprep.subr.mxu0 0.0
    %6475 = vmatpush1.msra.mxu0 0.0
    %6476 = vmatprep.subr.mxu0 0.0
    %6477 = vmatpush1.msra.mxu0 0.0
    %6478 = vmatprep.subr.mxu0 0.0
    %6479 = vmatpush1.msra.mxu0 0.0
    %6480 = vmatprep.subr.mxu0 0.0
    %6481 = vmatpush1.msra.mxu0 0.0
    %6482 = vmatprep.subr.mxu0 0.0
    %6483 = vmatpush1.msra.mxu0 0.0
    %6484 = vmatprep.subr.mxu0 0.0
    %6485 = vmatpush1.msra.mxu0 0.0
    %6486 = vmatprep.subr.mxu0 0.0
    %6487 = vmatpush1.msra.mxu0 0.0
    %6488 = vmatprep.subr.mxu0 0.0
    %6489 = vmatpush1.msra.mxu0 0.0
    %6490 = vmatprep.subr.mxu0 0.0
    %6491 = vmatpush1.msra.mxu0 0.0
    %6492 = vmatprep.subr.mxu0 0.0
    %6493 = vmatpush1.msra.mxu0 0.0
    %6494 = vmatprep.subr.mxu0 0.0
    %6495 = vmatpush1.msra.mxu0 0.0
    %6496 = vmatprep.subr.mxu0 0.0
    %6497 = vmatpush1.msra.mxu0 0.0
    %6498 = vmatprep.subr.mxu0 0.0
    %6499 = vmatpush1.msra.mxu0 0.0
    %6500 = vmatprep.mubr.f32.mxu0 0.0
    %6501 = vmatmul.mubr.f32.gmra.mrb[0].mxu0 %v6434
    %v6502 = vpop.f32.mrb[0].mxu0
    %v6503 = vadd.f32 %v6430, %v6502
    %v6504 = vpop.f32.mrb[0].mxu0
    %6505 = vdwg.mxu0
    %vm6506 = vcmask 517120
    %6507 = vst.msk [vmem:[#allocation14] sm:$0x3] %vm6506, %v6503
    // Predicated region
    $region90: #{model_forward.1} parent=1 // pred_check
      _
    $region91: #{model_forward.1} parent=1 // pred_check_branch
      %6509 = sbr.rel (0) target = $region93
    $region92: #{model_forward.1} parent=1 // pred_region
      %s6511 = ssub.s32 32, 32
      %6512 = vsyncadd [#allocation8], %s6511
      %s6514 = sshll.u32 [#allocation14], 4
      %s6515 = int_to_ptr.vmem [resolvable:$true] %s6514
      %6517 = dma.vmem_to_hbm [thread:$0]  %s6515, 32, %s18, [#allocation8]
    $region93: #{model_forward.1} parent=1 // pred_fallthru
      _
    // Predicated region
    $region94: #{model_forward.1} parent=1 // pred_check
      _
    $region95: #{model_forward.1} parent=1 // pred_check_branch
      %6519 = sbr.rel (0) target = $region97
    $region96: #{model_forward.1} parent=1 // pred_region
      %6520 = dma.done [#allocation8], 32
    $region97: #{model_forward.1} parent=1 // pred_fallthru
      _
    %6521 = vsyncpa [#allocation7], 1
    %6522 = vsyncpa [#allocation10], 1
    %6523 = vsyncpa [#allocation13], 1
    %6524 = vsyncpa [#allocation8], 1

</llo_original>
